<compile_context>
chip_gen: v5e
topology: v5e:2x2
jax: 0.10.0
libtpu: 0.0.40
codegen_flags: <defaults>
</compile_context>

<pallas_src>
import numpy as np

import jax
import jax.numpy as jnp
from jax.experimental import pallas as pl
from jax.experimental.pallas import tpu as pltpu

_VMEM_LIMIT = 32 * 1024 * 1024


# ----------------------------------------------------------------------------
# Host-side constant: one-hot matrix that (a) gathers the pooled rows out of
# the shifted-max result and (b) embeds them into the next stage's zero-padded
# row layout (or into (B, C) flatten rows for the last stage).
# ----------------------------------------------------------------------------
def _pool_embed_matrix(batch, hw, flatten=False):
    hp = wp = hw + 2
    npool = batch * hp * wp - 3 * wp - 3
    ho = wo = hw // 2
    if flatten:
        assert ho == 1 and wo == 1
        n_dst = batch
    else:
        hp2 = wp2 = ho + 2
        n_dst = batch * hp2 * wp2
    s = np.zeros((n_dst, npool), np.float32)
    for b in range(batch):
        for i in range(ho):
            for j in range(wo):
                src = b * hp * wp + (2 * i) * wp + (2 * j)
                dst = b if flatten else b * hp2 * wp2 + (1 + i) * wp2 + (1 + j)
                s[dst, src] = 1.0
    return s


# ----------------------------------------------------------------------------
# In-kernel conv stage: Conv3x3(pad=1) + bias + PReLU + MaxPool2, all in VMEM.
#   a_ref : (B*(hw+2)^2, cin)  zero-padded input image rows, order (b, y, x)
#   w_ref : (9*cin, cout)      tap-major conv weights (ky, kx, cin)
#   yf_ref: (Nv, cout)         scratch for the pre-pool conv output
#   s_ref : (n_dst, Npool)     one-hot gather / zero-pad-embed matrix
# Returns s_ref @ pooled  (f32), i.e. the next stage's padded input rows.
# ----------------------------------------------------------------------------
def _conv_pool_stage(a_ref, w_ref, b_ref, alpha, yf_ref, s_ref, *, hw, cin):
    wp = hw + 2
    ntot = a_ref.shape[0]
    nv = ntot - (2 * wp + 2)          # rows for which all 9 shifted reads fit

    acc = None
    for ky in range(3):
        for kx in range(3):
            k = ky * 3 + kx
            off = ky * wp + kx
            a_s = a_ref[pl.ds(off, nv), :]
            w_k = w_ref[k * cin:(k + 1) * cin, :]
            if cin == 1:
                # Cin=1: 9 VPU fused multiply-adds (f32), skip the MXU entirely.
                c = a_s * w_k
            else:
                c = jnp.dot(a_s.astype(jnp.bfloat16), w_k,
                            preferred_element_type=jnp.float32)
            acc = c if acc is None else acc + c

    y = acc + b_ref[...]                          # bias (f32)
    y = jnp.where(y >= 0.0, y, alpha * y)         # PReLU (f32)
    yf_ref[...] = y

    # 2x2 max-pool = max over 4 row-shifted slices (offsets 0, 1, wp, wp+1).
    npool = nv - wp - 1
    p = jnp.maximum(
        jnp.maximum(yf_ref[pl.ds(0, npool), :], yf_ref[pl.ds(1, npool), :]),
        jnp.maximum(yf_ref[pl.ds(wp, npool), :], yf_ref[pl.ds(wp + 1, npool), :]))

    # Gather the valid pooled rows and embed into the next padded layout (MXU).
    return jnp.dot(s_ref[...], p.astype(jnp.bfloat16),
                   preferred_element_type=jnp.float32)


# ----------------------------------------------------------------------------
# Single fused kernel: conv stack + MLP.  All intermediates stay in VMEM.
# ----------------------------------------------------------------------------
def _fused_forward_kernel(x_ref, w1_ref, b1_ref, s1_ref,
                          w2_ref, b2_ref, s2_ref,
                          w3_ref, b3_ref, s3_ref,
                          lw0, lw1, lw2, lw3, lw4, lw5, lw6,
                          lb0, lb1, lb2, lb3, lb4, lb5, lb6,
                          alpha_ref, out_ref,
                          yf1_ref, a2_ref, yf2_ref, a3_ref, yf3_ref):
    # conv stage 1: (B,8,8,1) -> padded (B,6,6,32) rows
    a2_ref[...] = _conv_pool_stage(x_ref, w1_ref, b1_ref, alpha_ref[0],
                                   yf1_ref, s1_ref, hw=8, cin=1)
    # conv stage 2: (B,4,4,32) -> padded (B,4,4,64) rows
    a3_ref[...] = _conv_pool_stage(a2_ref, w2_ref, b2_ref, alpha_ref[1],
                                   yf2_ref, s2_ref, hw=4, cin=32)
    # conv stage 3: (B,2,2,64) -> (B,128) flatten rows
    h = _conv_pool_stage(a3_ref, w3_ref, b3_ref, alpha_ref[2],
                         yf3_ref, s3_ref, hw=2, cin=64)

    # MLP: 6x (Linear + folded-BN + PReLU), Dropout(0.5) = identity at eval,
    # final Linear (padded to 128 output lanes).
    ws = (lw0, lw1, lw2, lw3, lw4, lw5, lw6)
    bs = (lb0, lb1, lb2, lb3, lb4, lb5, lb6)
    hh = h.astype(jnp.bfloat16)
    for i in range(6):
        y = jnp.dot(hh, ws[i][...], preferred_element_type=jnp.float32) + bs[i][...]
        a = alpha_ref[3 + i]
        y = jnp.where(y >= 0.0, y, a * y)         # PReLU (f32)
        hh = y.astype(jnp.bfloat16)
    y = jnp.dot(hh, ws[6][...], preferred_element_type=jnp.float32) + bs[6][...]
    out_ref[...] = y


# ----------------------------------------------------------------------------
# Parameter construction (deterministic, PyTorch-default-like where easy)
# ----------------------------------------------------------------------------
def make_params(key):
    params = {}
    conv_dims = [(1, 32), (32, 64), (64, 128)]
    lin_dims = [(128, 256), (256, 512), (512, 1024),
                (1024, 512), (512, 256), (256, 128), (128, 50)]

    keys = jax.random.split(key, 2 * (len(conv_dims) + len(lin_dims)))
    ki = 0
    for li, (cin, cout) in enumerate(conv_dims):
        params[f"conv{li}_w"] = 0.05 * jax.random.normal(
            keys[ki], (3, 3, cin, cout), jnp.float32); ki += 1
        params[f"conv{li}_b"] = 0.01 * jax.random.normal(
            keys[ki], (cout,), jnp.float32); ki += 1
        params[f"conv{li}_alpha"] = jnp.array([0.25], jnp.float32)   # nn.PReLU()

    for li, (din, dout) in enumerate(lin_dims):
        params[f"lin{li}_w"] = 0.05 * jax.random.normal(
            keys[ki], (din, dout), jnp.float32); ki += 1
        params[f"lin{li}_b"] = 0.01 * jax.random.normal(
            keys[ki], (dout,), jnp.float32); ki += 1
        if li < len(lin_dims) - 1:   # all but the final Linear have BN + PReLU
            params[f"bn{li}_gamma"] = jnp.ones((dout,), jnp.float32)
            params[f"bn{li}_beta"] = jnp.zeros((dout,), jnp.float32)
            params[f"bn{li}_mean"] = jnp.zeros((dout,), jnp.float32)
            params[f"bn{li}_var"] = jnp.ones((dout,), jnp.float32)
            params[f"lin{li}_alpha"] = jnp.array([0.25], jnp.float32)
    return params


# ----------------------------------------------------------------------------
# Forward pass: one pallas_call for the whole network.
# ----------------------------------------------------------------------------
def forward(params, x_nchw):
    B, C, H, W = x_nchw.shape
    assert C == 1 and H == 8 and W == 8, \
        "MyModel's Flatten->Linear(128,.) implies (B, 1, 8, 8) inputs"
    eps = 1e-5

    # Stage-1 padded input as 2-D rows (b, y_pad, x_pad) x 1 channel.
    xpad = jnp.pad(x_nchw.reshape(B, H, W).astype(jnp.float32),
                   ((0, 0), (1, 1), (1, 1)))
    x_rows = xpad.reshape(B * (H + 2) * (W + 2), 1)

    # Conv weights as tap-major GEMM matrices; stage 1 stays f32 (VPU path).
    w1 = params["conv0_w"].reshape(9 * 1, 32).astype(jnp.float32)
    w2 = params["conv1_w"].reshape(9 * 32, 64).astype(jnp.bfloat16)
    w3 = params["conv2_w"].reshape(9 * 64, 128).astype(jnp.bfloat16)
    b1 = params["conv0_b"].reshape(1, 32).astype(jnp.float32)
    b2 = params["conv1_b"].reshape(1, 64).astype(jnp.float32)
    b3 = params["conv2_b"].reshape(1, 128).astype(jnp.float32)

    # Constant pool-gather / zero-pad-embed matrices.
    s1 = jnp.asarray(_pool_embed_matrix(B, 8), jnp.bfloat16)
    s2 = jnp.asarray(_pool_embed_matrix(B, 4), jnp.bfloat16)
    s3 = jnp.asarray(_pool_embed_matrix(B, 2, flatten=True), jnp.bfloat16)

    # Fold BatchNorm1d (eval) into the linear weights / biases.
    lws, lbs = [], []
    alphas = [params[f"conv{li}_alpha"].reshape(()) for li in range(3)]
    for li in range(6):
        scale = params[f"bn{li}_gamma"] * jax.lax.rsqrt(params[f"bn{li}_var"] + eps)
        w_f = params[f"lin{li}_w"] * scale[None, :]
        b_f = (params[f"lin{li}_b"] - params[f"bn{li}_mean"]) * scale \
            + params[f"bn{li}_beta"]
        lws.append(w_f.astype(jnp.bfloat16))
        lbs.append(b_f.reshape(1, -1).astype(jnp.float32))
        alphas.append(params[f"lin{li}_alpha"].reshape(()))
    # Final Linear(128, 50): pad N -> 128 for a lane-dense output store.
    w6, b6 = params["lin6_w"], params["lin6_b"]
    n_out = w6.shape[1]
    n_pad = 128
    lws.append(jnp.pad(w6, ((0, 0), (0, n_pad - n_out))).astype(jnp.bfloat16))
    lbs.append(jnp.pad(b6, (0, n_pad - n_out)).reshape(1, n_pad).astype(jnp.float32))
    alphas = jnp.stack(alphas).astype(jnp.float32)          # (9,) SMEM scalars

    # Scratch sizes (rows in padded-image row space).
    ntot2, ntot3 = B * 6 * 6, B * 4 * 4
    nv1, nv2, nv3 = B * 10 * 10 - 22, ntot2 - 14, ntot3 - 10

    inputs = [x_rows, w1, b1, s1, w2, b2, s2, w3, b3, s3] + lws + lbs + [alphas]
    in_specs = ([pl.BlockSpec(t.shape, lambda i: (0, 0)) for t in inputs[:-1]]
                + [pl.BlockSpec(memory_space=pltpu.SMEM)])   # PReLU alphas

    # TODO(synk): for large batches, tile the leading row dimension over a
    # "parallel" grid axis (engages v7x's 2nd TensorCore); at B=2 it is moot.
    out = pl.pallas_call(
        _fused_forward_kernel,
        grid=(1,),
        out_shape=jax.ShapeDtypeStruct((B, n_pad), jnp.float32),
        in_specs=in_specs,
        out_specs=pl.BlockSpec((B, n_pad), lambda i: (0, 0)),
        scratch_shapes=[
            pltpu.VMEM((nv1, 32), jnp.float32),    # pre-pool conv1 output
            pltpu.VMEM((ntot2, 32), jnp.float32),  # padded stage-2 input
            pltpu.VMEM((nv2, 64), jnp.float32),    # pre-pool conv2 output
            pltpu.VMEM((ntot3, 64), jnp.float32),  # padded stage-3 input
            pltpu.VMEM((nv3, 128), jnp.float32),   # pre-pool conv3 output
        ],
        compiler_params=pltpu.CompilerParams(
            dimension_semantics=("arbitrary",),
            vmem_limit_bytes=_VMEM_LIMIT),
    )(*inputs)
    return out[:, :n_out]


if __name__ == "__main__":
    key = jax.random.PRNGKey(0)
    pkey, xkey = jax.random.split(key)
    params = make_params(pkey)

    # MyModel implies (B, 1, 8, 8): three maxpool2 -> 1x1 spatial, 128 features.
    x = jax.random.normal(xkey, (2, 1, 8, 8), jnp.float32)

    out = jax.jit(forward)(params, x)
    out = jax.block_until_ready(out)
    assert out.shape == (2, 50), out.shape
    assert jnp.all(jnp.isfinite(out))
    print("KERNEL_OK")
</pallas_src>

<mosaic_0001>
module attributes {stable_mosaic.version = 11 : i64} {
  func.func @_fused_forward_kernel(%arg0: i32, %arg1: memref<200x1xf32, #tpu.memory_space<vmem>>, %arg2: memref<9x32xf32, #tpu.memory_space<vmem>>, %arg3: memref<1x32xf32, #tpu.memory_space<vmem>>, %arg4: memref<72x167xbf16, #tpu.memory_space<vmem>>, %arg5: memref<288x64xbf16, #tpu.memory_space<vmem>>, %arg6: memref<1x64xf32, #tpu.memory_space<vmem>>, %arg7: memref<32x51xbf16, #tpu.memory_space<vmem>>, %arg8: memref<576x128xbf16, #tpu.memory_space<vmem>>, %arg9: memref<1x128xf32, #tpu.memory_space<vmem>>, %arg10: memref<2x17xbf16, #tpu.memory_space<vmem>>, %arg11: memref<128x256xbf16, #tpu.memory_space<vmem>>, %arg12: memref<256x512xbf16, #tpu.memory_space<vmem>>, %arg13: memref<512x1024xbf16, #tpu.memory_space<vmem>>, %arg14: memref<1024x512xbf16, #tpu.memory_space<vmem>>, %arg15: memref<512x256xbf16, #tpu.memory_space<vmem>>, %arg16: memref<256x128xbf16, #tpu.memory_space<vmem>>, %arg17: memref<128x128xbf16, #tpu.memory_space<vmem>>, %arg18: memref<1x256xf32, #tpu.memory_space<vmem>>, %arg19: memref<1x512xf32, #tpu.memory_space<vmem>>, %arg20: memref<1x1024xf32, #tpu.memory_space<vmem>>, %arg21: memref<1x512xf32, #tpu.memory_space<vmem>>, %arg22: memref<1x256xf32, #tpu.memory_space<vmem>>, %arg23: memref<1x128xf32, #tpu.memory_space<vmem>>, %arg24: memref<1x128xf32, #tpu.memory_space<vmem>>, %arg25: memref<9xf32, #tpu.memory_space<smem>>, %arg26: memref<2x128xf32, #tpu.memory_space<vmem>>, %arg27: memref<178x32xf32, #tpu.memory_space<vmem>>, %arg28: memref<72x32xf32, #tpu.memory_space<vmem>>, %arg29: memref<58x64xf32, #tpu.memory_space<vmem>>, %arg30: memref<32x64xf32, #tpu.memory_space<vmem>>, %arg31: memref<22x128xf32, #tpu.memory_space<vmem>>) attributes {dimension_semantics = [#tpu.dimension_semantics<arbitrary>], iteration_bounds = array<i64: 1>, scalar_prefetch = 0 : i64, scratch_operands = 5 : i64, tpu.core_type = #tpu.core_type<tc>, window_params = [{pipeline_mode = #tpu.pipeline_mode<synchronous>, transform_indices = @transform_0, window_bounds = array<i64: 200, 1>}, {pipeline_mode = #tpu.pipeline_mode<synchronous>, transform_indices = @transform_1, window_bounds = array<i64: 9, 32>}, {pipeline_mode = #tpu.pipeline_mode<synchronous>, transform_indices = @transform_2, window_bounds = array<i64: 1, 32>}, {pipeline_mode = #tpu.pipeline_mode<synchronous>, transform_indices = @transform_3, window_bounds = array<i64: 72, 167>}, {pipeline_mode = #tpu.pipeline_mode<synchronous>, transform_indices = @transform_4, window_bounds = array<i64: 288, 64>}, {pipeline_mode = #tpu.pipeline_mode<synchronous>, transform_indices = @transform_5, window_bounds = array<i64: 1, 64>}, {pipeline_mode = #tpu.pipeline_mode<synchronous>, transform_indices = @transform_6, window_bounds = array<i64: 32, 51>}, {pipeline_mode = #tpu.pipeline_mode<synchronous>, transform_indices = @transform_7, window_bounds = array<i64: 576, 128>}, {pipeline_mode = #tpu.pipeline_mode<synchronous>, transform_indices = @transform_8, window_bounds = array<i64: 1, 128>}, {pipeline_mode = #tpu.pipeline_mode<synchronous>, transform_indices = @transform_9, window_bounds = array<i64: 2, 17>}, {pipeline_mode = #tpu.pipeline_mode<synchronous>, transform_indices = @transform_10, window_bounds = array<i64: 128, 256>}, {pipeline_mode = #tpu.pipeline_mode<synchronous>, transform_indices = @transform_11, window_bounds = array<i64: 256, 512>}, {pipeline_mode = #tpu.pipeline_mode<synchronous>, transform_indices = @transform_12, window_bounds = array<i64: 512, 1024>}, {pipeline_mode = #tpu.pipeline_mode<synchronous>, transform_indices = @transform_13, window_bounds = array<i64: 1024, 512>}, {pipeline_mode = #tpu.pipeline_mode<synchronous>, transform_indices = @transform_14, window_bounds = array<i64: 512, 256>}, {pipeline_mode = #tpu.pipeline_mode<synchronous>, transform_indices = @transform_15, window_bounds = array<i64: 256, 128>}, {pipeline_mode = #tpu.pipeline_mode<synchronous>, transform_indices = @transform_16, window_bounds = array<i64: 128, 128>}, {pipeline_mode = #tpu.pipeline_mode<synchronous>, transform_indices = @transform_17, window_bounds = array<i64: 1, 256>}, {pipeline_mode = #tpu.pipeline_mode<synchronous>, transform_indices = @transform_18, window_bounds = array<i64: 1, 512>}, {pipeline_mode = #tpu.pipeline_mode<synchronous>, transform_indices = @transform_19, window_bounds = array<i64: 1, 1024>}, {pipeline_mode = #tpu.pipeline_mode<synchronous>, transform_indices = @transform_20, window_bounds = array<i64: 1, 512>}, {pipeline_mode = #tpu.pipeline_mode<synchronous>, transform_indices = @transform_21, window_bounds = array<i64: 1, 256>}, {pipeline_mode = #tpu.pipeline_mode<synchronous>, transform_indices = @transform_22, window_bounds = array<i64: 1, 128>}, {pipeline_mode = #tpu.pipeline_mode<synchronous>, transform_indices = @transform_23, window_bounds = array<i64: 1, 128>}, {transform_indices = @transform_24, window_bounds = array<i64: 9>}, {pipeline_mode = #tpu.pipeline_mode<synchronous>, transform_indices = @transform_25, window_bounds = array<i64: 2, 128>}]} {
    %c0 = arith.constant 0 : index
    %0 = memref.load %arg25[%c0] : memref<9xf32, #tpu.memory_space<smem>>
    %c0_0 = arith.constant 0 : index
    %c0_1 = arith.constant 0 : index
    %1 = vector.load %arg1[%c0_0, %c0_1] : memref<200x1xf32, #tpu.memory_space<vmem>>, vector<178x1xf32>
    %c0_2 = arith.constant 0 : index
    %c0_3 = arith.constant 0 : index
    %2 = vector.load %arg2[%c0_2, %c0_3] : memref<9x32xf32, #tpu.memory_space<vmem>>, vector<1x32xf32>
    %3 = vector.broadcast %1 : vector<178x1xf32> to vector<178x32xf32>
    %4 = vector.broadcast %2 : vector<1x32xf32> to vector<178x32xf32>
    %5 = arith.mulf %3, %4 : vector<178x32xf32>
    %c1 = arith.constant 1 : index
    %c0_4 = arith.constant 0 : index
    %6 = vector.load %arg1[%c1, %c0_4] : memref<200x1xf32, #tpu.memory_space<vmem>>, vector<178x1xf32>
    %c1_5 = arith.constant 1 : index
    %c0_6 = arith.constant 0 : index
    %7 = vector.load %arg2[%c1_5, %c0_6] : memref<9x32xf32, #tpu.memory_space<vmem>>, vector<1x32xf32>
    %8 = vector.broadcast %6 : vector<178x1xf32> to vector<178x32xf32>
    %9 = vector.broadcast %7 : vector<1x32xf32> to vector<178x32xf32>
    %10 = arith.mulf %8, %9 : vector<178x32xf32>
    %11 = arith.addf %5, %10 : vector<178x32xf32>
    %c2 = arith.constant 2 : index
    %c0_7 = arith.constant 0 : index
    %12 = vector.load %arg1[%c2, %c0_7] : memref<200x1xf32, #tpu.memory_space<vmem>>, vector<178x1xf32>
    %c2_8 = arith.constant 2 : index
    %c0_9 = arith.constant 0 : index
    %13 = vector.load %arg2[%c2_8, %c0_9] : memref<9x32xf32, #tpu.memory_space<vmem>>, vector<1x32xf32>
    %14 = vector.broadcast %12 : vector<178x1xf32> to vector<178x32xf32>
    %15 = vector.broadcast %13 : vector<1x32xf32> to vector<178x32xf32>
    %16 = arith.mulf %14, %15 : vector<178x32xf32>
    %17 = arith.addf %11, %16 : vector<178x32xf32>
    %c10 = arith.constant 10 : index
    %c0_10 = arith.constant 0 : index
    %18 = vector.load %arg1[%c10, %c0_10] : memref<200x1xf32, #tpu.memory_space<vmem>>, vector<178x1xf32>
    %c3 = arith.constant 3 : index
    %c0_11 = arith.constant 0 : index
    %19 = vector.load %arg2[%c3, %c0_11] : memref<9x32xf32, #tpu.memory_space<vmem>>, vector<1x32xf32>
    %20 = vector.broadcast %18 : vector<178x1xf32> to vector<178x32xf32>
    %21 = vector.broadcast %19 : vector<1x32xf32> to vector<178x32xf32>
    %22 = arith.mulf %20, %21 : vector<178x32xf32>
    %23 = arith.addf %17, %22 : vector<178x32xf32>
    %c11 = arith.constant 11 : index
    %c0_12 = arith.constant 0 : index
    %24 = vector.load %arg1[%c11, %c0_12] : memref<200x1xf32, #tpu.memory_space<vmem>>, vector<178x1xf32>
    %c4 = arith.constant 4 : index
    %c0_13 = arith.constant 0 : index
    %25 = vector.load %arg2[%c4, %c0_13] : memref<9x32xf32, #tpu.memory_space<vmem>>, vector<1x32xf32>
    %26 = vector.broadcast %24 : vector<178x1xf32> to vector<178x32xf32>
    %27 = vector.broadcast %25 : vector<1x32xf32> to vector<178x32xf32>
    %28 = arith.mulf %26, %27 : vector<178x32xf32>
    %29 = arith.addf %23, %28 : vector<178x32xf32>
    %c12 = arith.constant 12 : index
    %c0_14 = arith.constant 0 : index
    %30 = vector.load %arg1[%c12, %c0_14] : memref<200x1xf32, #tpu.memory_space<vmem>>, vector<178x1xf32>
    %c5 = arith.constant 5 : index
    %c0_15 = arith.constant 0 : index
    %31 = vector.load %arg2[%c5, %c0_15] : memref<9x32xf32, #tpu.memory_space<vmem>>, vector<1x32xf32>
    %32 = vector.broadcast %30 : vector<178x1xf32> to vector<178x32xf32>
    %33 = vector.broadcast %31 : vector<1x32xf32> to vector<178x32xf32>
    %34 = arith.mulf %32, %33 : vector<178x32xf32>
    %35 = arith.addf %29, %34 : vector<178x32xf32>
    %c20 = arith.constant 20 : index
    %c0_16 = arith.constant 0 : index
    %36 = vector.load %arg1[%c20, %c0_16] : memref<200x1xf32, #tpu.memory_space<vmem>>, vector<178x1xf32>
    %c6 = arith.constant 6 : index
    %c0_17 = arith.constant 0 : index
    %37 = vector.load %arg2[%c6, %c0_17] : memref<9x32xf32, #tpu.memory_space<vmem>>, vector<1x32xf32>
    %38 = vector.broadcast %36 : vector<178x1xf32> to vector<178x32xf32>
    %39 = vector.broadcast %37 : vector<1x32xf32> to vector<178x32xf32>
    %40 = arith.mulf %38, %39 : vector<178x32xf32>
    %41 = arith.addf %35, %40 : vector<178x32xf32>
    %c21 = arith.constant 21 : index
    %c0_18 = arith.constant 0 : index
    %42 = vector.load %arg1[%c21, %c0_18] : memref<200x1xf32, #tpu.memory_space<vmem>>, vector<178x1xf32>
    %c7 = arith.constant 7 : index
    %c0_19 = arith.constant 0 : index
    %43 = vector.load %arg2[%c7, %c0_19] : memref<9x32xf32, #tpu.memory_space<vmem>>, vector<1x32xf32>
    %44 = vector.broadcast %42 : vector<178x1xf32> to vector<178x32xf32>
    %45 = vector.broadcast %43 : vector<1x32xf32> to vector<178x32xf32>
    %46 = arith.mulf %44, %45 : vector<178x32xf32>
    %47 = arith.addf %41, %46 : vector<178x32xf32>
    %c22 = arith.constant 22 : index
    %c0_20 = arith.constant 0 : index
    %48 = vector.load %arg1[%c22, %c0_20] : memref<200x1xf32, #tpu.memory_space<vmem>>, vector<178x1xf32>
    %c8 = arith.constant 8 : index
    %c0_21 = arith.constant 0 : index
    %49 = vector.load %arg2[%c8, %c0_21] : memref<9x32xf32, #tpu.memory_space<vmem>>, vector<1x32xf32>
    %50 = vector.broadcast %48 : vector<178x1xf32> to vector<178x32xf32>
    %51 = vector.broadcast %49 : vector<1x32xf32> to vector<178x32xf32>
    %52 = arith.mulf %50, %51 : vector<178x32xf32>
    %53 = arith.addf %47, %52 : vector<178x32xf32>
    %c0_22 = arith.constant 0 : index
    %c0_23 = arith.constant 0 : index
    %54 = vector.load %arg3[%c0_22, %c0_23] : memref<1x32xf32, #tpu.memory_space<vmem>>, vector<1x32xf32>
    %55 = vector.broadcast %54 : vector<1x32xf32> to vector<178x32xf32>
    %56 = arith.addf %53, %55 : vector<178x32xf32>
    %cst = arith.constant 0.000000e+00 : f32
    %57 = vector.broadcast %cst : f32 to vector<178x32xf32>
    %58 = arith.cmpf oge, %56, %57 : vector<178x32xf32>
    %59 = vector.broadcast %0 : f32 to vector<178x32xf32>
    %60 = arith.mulf %59, %56 : vector<178x32xf32>
    %61 = arith.select %58, %56, %60 : vector<178x32xi1>, vector<178x32xf32>
    %c0_24 = arith.constant 0 : index
    %c0_25 = arith.constant 0 : index
    %62 = vector.load %arg27[%c0_24, %c0_25] : memref<178x32xf32, #tpu.memory_space<vmem>>, vector<178x32xf32>
    tpu.vector_store %arg27[%c0_24, %c0_25], %61 {strides = array<i32>} : memref<178x32xf32, #tpu.memory_space<vmem>>, vector<178x32xf32>,
    %c0_26 = arith.constant 0 : index
    %c0_27 = arith.constant 0 : index
    %63 = vector.load %arg27[%c0_26, %c0_27] : memref<178x32xf32, #tpu.memory_space<vmem>>, vector<167x32xf32>
    %c1_28 = arith.constant 1 : index
    %c0_29 = arith.constant 0 : index
    %64 = vector.load %arg27[%c1_28, %c0_29] : memref<178x32xf32, #tpu.memory_space<vmem>>, vector<167x32xf32>
    %65 = arith.maximumf %63, %64 : vector<167x32xf32>
    %c10_30 = arith.constant 10 : index
    %c0_31 = arith.constant 0 : index
    %66 = vector.load %arg27[%c10_30, %c0_31] : memref<178x32xf32, #tpu.memory_space<vmem>>, vector<167x32xf32>
    %c11_32 = arith.constant 11 : index
    %c0_33 = arith.constant 0 : index
    %67 = vector.load %arg27[%c11_32, %c0_33] : memref<178x32xf32, #tpu.memory_space<vmem>>, vector<167x32xf32>
    %68 = arith.maximumf %66, %67 : vector<167x32xf32>
    %69 = arith.maximumf %65, %68 : vector<167x32xf32>
    %c0_34 = arith.constant 0 : index
    %c0_35 = arith.constant 0 : index
    %70 = vector.load %arg4[%c0_34, %c0_35] : memref<72x167xbf16, #tpu.memory_space<vmem>>, vector<72x167xbf16>
    %71 = arith.truncf %69 : vector<167x32xf32> to vector<167x32xbf16>
    %cst_36 = arith.constant dense<0.000000e+00> : vector<72x32xf32>
    %72 = tpu.matmul %70, %71, %cst_36 {dimension_numbers = #tpu.dot_dimension_numbers<[1], [0], [0], [1], [0, 0, 1, 1], [], []>} : vector<72x167xbf16>, vector<167x32xbf16>, vector<72x32xf32> -> vector<72x32xf32>
    %c0_37 = arith.constant 0 : index
    %c0_38 = arith.constant 0 : index
    %73 = vector.load %arg28[%c0_37, %c0_38] : memref<72x32xf32, #tpu.memory_space<vmem>>, vector<72x32xf32>
    tpu.vector_store %arg28[%c0_37, %c0_38], %72 {strides = array<i32>} : memref<72x32xf32, #tpu.memory_space<vmem>>, vector<72x32xf32>,
    %c1_39 = arith.constant 1 : index
    %74 = memref.load %arg25[%c1_39] : memref<9xf32, #tpu.memory_space<smem>>
    %c0_40 = arith.constant 0 : index
    %c0_41 = arith.constant 0 : index
    %75 = vector.load %arg28[%c0_40, %c0_41] : memref<72x32xf32, #tpu.memory_space<vmem>>, vector<58x32xf32>
    %c0_42 = arith.constant 0 : index
    %c0_43 = arith.constant 0 : index
    %76 = vector.load %arg5[%c0_42, %c0_43] : memref<288x64xbf16, #tpu.memory_space<vmem>>, vector<32x64xbf16>
    %77 = arith.truncf %75 : vector<58x32xf32> to vector<58x32xbf16>
    %cst_44 = arith.constant dense<0.000000e+00> : vector<58x64xf32>
    %78 = tpu.matmul %77, %76, %cst_44 {dimension_numbers = #tpu.dot_dimension_numbers<[1], [0], [0], [1], [0, 0, 1, 1], [], []>} : vector<58x32xbf16>, vector<32x64xbf16>, vector<58x64xf32> -> vector<58x64xf32>
    %c1_45 = arith.constant 1 : index
    %c0_46 = arith.constant 0 : index
    %79 = vector.load %arg28[%c1_45, %c0_46] : memref<72x32xf32, #tpu.memory_space<vmem>>, vector<58x32xf32>
    %c32 = arith.constant 32 : index
    %c0_47 = arith.constant 0 : index
    %80 = vector.load %arg5[%c32, %c0_47] : memref<288x64xbf16, #tpu.memory_space<vmem>>, vector<32x64xbf16>
    %81 = arith.truncf %79 : vector<58x32xf32> to vector<58x32xbf16>
    %cst_48 = arith.constant dense<0.000000e+00> : vector<58x64xf32>
    %82 = tpu.matmul %81, %80, %cst_48 {dimension_numbers = #tpu.dot_dimension_numbers<[1], [0], [0], [1], [0, 0, 1, 1], [], []>} : vector<58x32xbf16>, vector<32x64xbf16>, vector<58x64xf32> -> vector<58x64xf32>
    %83 = arith.addf %78, %82 : vector<58x64xf32>
    %c2_49 = arith.constant 2 : index
    %c0_50 = arith.constant 0 : index
    %84 = vector.load %arg28[%c2_49, %c0_50] : memref<72x32xf32, #tpu.memory_space<vmem>>, vector<58x32xf32>
    %c64 = arith.constant 64 : index
    %c0_51 = arith.constant 0 : index
    %85 = vector.load %arg5[%c64, %c0_51] : memref<288x64xbf16, #tpu.memory_space<vmem>>, vector<32x64xbf16>
    %86 = arith.truncf %84 : vector<58x32xf32> to vector<58x32xbf16>
    %cst_52 = arith.constant dense<0.000000e+00> : vector<58x64xf32>
    %87 = tpu.matmul %86, %85, %cst_52 {dimension_numbers = #tpu.dot_dimension_numbers<[1], [0], [0], [1], [0, 0, 1, 1], [], []>} : vector<58x32xbf16>, vector<32x64xbf16>, vector<58x64xf32> -> vector<58x64xf32>
    %88 = arith.addf %83, %87 : vector<58x64xf32>
    %c6_53 = arith.constant 6 : index
    %c0_54 = arith.constant 0 : index
    %89 = vector.load %arg28[%c6_53, %c0_54] : memref<72x32xf32, #tpu.memory_space<vmem>>, vector<58x32xf32>
    %c96 = arith.constant 96 : index
    %c0_55 = arith.constant 0 : index
    %90 = vector.load %arg5[%c96, %c0_55] : memref<288x64xbf16, #tpu.memory_space<vmem>>, vector<32x64xbf16>
    %91 = arith.truncf %89 : vector<58x32xf32> to vector<58x32xbf16>
    %cst_56 = arith.constant dense<0.000000e+00> : vector<58x64xf32>
    %92 = tpu.matmul %91, %90, %cst_56 {dimension_numbers = #tpu.dot_dimension_numbers<[1], [0], [0], [1], [0, 0, 1, 1], [], []>} : vector<58x32xbf16>, vector<32x64xbf16>, vector<58x64xf32> -> vector<58x64xf32>
    %93 = arith.addf %88, %92 : vector<58x64xf32>
    %c7_57 = arith.constant 7 : index
    %c0_58 = arith.constant 0 : index
    %94 = vector.load %arg28[%c7_57, %c0_58] : memref<72x32xf32, #tpu.memory_space<vmem>>, vector<58x32xf32>
    %c128 = arith.constant 128 : index
    %c0_59 = arith.constant 0 : index
    %95 = vector.load %arg5[%c128, %c0_59] : memref<288x64xbf16, #tpu.memory_space<vmem>>, vector<32x64xbf16>
    %96 = arith.truncf %94 : vector<58x32xf32> to vector<58x32xbf16>
    %cst_60 = arith.constant dense<0.000000e+00> : vector<58x64xf32>
    %97 = tpu.matmul %96, %95, %cst_60 {dimension_numbers = #tpu.dot_dimension_numbers<[1], [0], [0], [1], [0, 0, 1, 1], [], []>} : vector<58x32xbf16>, vector<32x64xbf16>, vector<58x64xf32> -> vector<58x64xf32>
    %98 = arith.addf %93, %97 : vector<58x64xf32>
    %c8_61 = arith.constant 8 : index
    %c0_62 = arith.constant 0 : index
    %99 = vector.load %arg28[%c8_61, %c0_62] : memref<72x32xf32, #tpu.memory_space<vmem>>, vector<58x32xf32>
    %c160 = arith.constant 160 : index
    %c0_63 = arith.constant 0 : index
    %100 = vector.load %arg5[%c160, %c0_63] : memref<288x64xbf16, #tpu.memory_space<vmem>>, vector<32x64xbf16>
    %101 = arith.truncf %99 : vector<58x32xf32> to vector<58x32xbf16>
    %cst_64 = arith.constant dense<0.000000e+00> : vector<58x64xf32>
    %102 = tpu.matmul %101, %100, %cst_64 {dimension_numbers = #tpu.dot_dimension_numbers<[1], [0], [0], [1], [0, 0, 1, 1], [], []>} : vector<58x32xbf16>, vector<32x64xbf16>, vector<58x64xf32> -> vector<58x64xf32>
    %103 = arith.addf %98, %102 : vector<58x64xf32>
    %c12_65 = arith.constant 12 : index
    %c0_66 = arith.constant 0 : index
    %104 = vector.load %arg28[%c12_65, %c0_66] : memref<72x32xf32, #tpu.memory_space<vmem>>, vector<58x32xf32>
    %c192 = arith.constant 192 : index
    %c0_67 = arith.constant 0 : index
    %105 = vector.load %arg5[%c192, %c0_67] : memref<288x64xbf16, #tpu.memory_space<vmem>>, vector<32x64xbf16>
    %106 = arith.truncf %104 : vector<58x32xf32> to vector<58x32xbf16>
    %cst_68 = arith.constant dense<0.000000e+00> : vector<58x64xf32>
    %107 = tpu.matmul %106, %105, %cst_68 {dimension_numbers = #tpu.dot_dimension_numbers<[1], [0], [0], [1], [0, 0, 1, 1], [], []>} : vector<58x32xbf16>, vector<32x64xbf16>, vector<58x64xf32> -> vector<58x64xf32>
    %108 = arith.addf %103, %107 : vector<58x64xf32>
    %c13 = arith.constant 13 : index
    %c0_69 = arith.constant 0 : index
    %109 = vector.load %arg28[%c13, %c0_69] : memref<72x32xf32, #tpu.memory_space<vmem>>, vector<58x32xf32>
    %c224 = arith.constant 224 : index
    %c0_70 = arith.constant 0 : index
    %110 = vector.load %arg5[%c224, %c0_70] : memref<288x64xbf16, #tpu.memory_space<vmem>>, vector<32x64xbf16>
    %111 = arith.truncf %109 : vector<58x32xf32> to vector<58x32xbf16>
    %cst_71 = arith.constant dense<0.000000e+00> : vector<58x64xf32>
    %112 = tpu.matmul %111, %110, %cst_71 {dimension_numbers = #tpu.dot_dimension_numbers<[1], [0], [0], [1], [0, 0, 1, 1], [], []>} : vector<58x32xbf16>, vector<32x64xbf16>, vector<58x64xf32> -> vector<58x64xf32>
    %113 = arith.addf %108, %112 : vector<58x64xf32>
    %c14 = arith.constant 14 : index
    %c0_72 = arith.constant 0 : index
    %114 = vector.load %arg28[%c14, %c0_72] : memref<72x32xf32, #tpu.memory_space<vmem>>, vector<58x32xf32>
    %c256 = arith.constant 256 : index
    %c0_73 = arith.constant 0 : index
    %115 = vector.load %arg5[%c256, %c0_73] : memref<288x64xbf16, #tpu.memory_space<vmem>>, vector<32x64xbf16>
    %116 = arith.truncf %114 : vector<58x32xf32> to vector<58x32xbf16>
    %cst_74 = arith.constant dense<0.000000e+00> : vector<58x64xf32>
    %117 = tpu.matmul %116, %115, %cst_74 {dimension_numbers = #tpu.dot_dimension_numbers<[1], [0], [0], [1], [0, 0, 1, 1], [], []>} : vector<58x32xbf16>, vector<32x64xbf16>, vector<58x64xf32> -> vector<58x64xf32>
    %118 = arith.addf %113, %117 : vector<58x64xf32>
    %c0_75 = arith.constant 0 : index
    %c0_76 = arith.constant 0 : index
    %119 = vector.load %arg6[%c0_75, %c0_76] : memref<1x64xf32, #tpu.memory_space<vmem>>, vector<1x64xf32>
    %120 = vector.broadcast %119 : vector<1x64xf32> to vector<58x64xf32>
    %121 = arith.addf %118, %120 : vector<58x64xf32>
    %cst_77 = arith.constant 0.000000e+00 : f32
    %122 = vector.broadcast %cst_77 : f32 to vector<58x64xf32>
    %123 = arith.cmpf oge, %121, %122 : vector<58x64xf32>
    %124 = vector.broadcast %74 : f32 to vector<58x64xf32>
    %125 = arith.mulf %124, %121 : vector<58x64xf32>
    %126 = arith.select %123, %121, %125 : vector<58x64xi1>, vector<58x64xf32>
    %c0_78 = arith.constant 0 : index
    %c0_79 = arith.constant 0 : index
    %127 = vector.load %arg29[%c0_78, %c0_79] : memref<58x64xf32, #tpu.memory_space<vmem>>, vector<58x64xf32>
    tpu.vector_store %arg29[%c0_78, %c0_79], %126 {strides = array<i32>} : memref<58x64xf32, #tpu.memory_space<vmem>>, vector<58x64xf32>,
    %c0_80 = arith.constant 0 : index
    %c0_81 = arith.constant 0 : index
    %128 = vector.load %arg29[%c0_80, %c0_81] : memref<58x64xf32, #tpu.memory_space<vmem>>, vector<51x64xf32>
    %c1_82 = arith.constant 1 : index
    %c0_83 = arith.constant 0 : index
    %129 = vector.load %arg29[%c1_82, %c0_83] : memref<58x64xf32, #tpu.memory_space<vmem>>, vector<51x64xf32>
    %130 = arith.maximumf %128, %129 : vector<51x64xf32>
    %c6_84 = arith.constant 6 : index
    %c0_85 = arith.constant 0 : index
    %131 = vector.load %arg29[%c6_84, %c0_85] : memref<58x64xf32, #tpu.memory_space<vmem>>, vector<51x64xf32>
    %c7_86 = arith.constant 7 : index
    %c0_87 = arith.constant 0 : index
    %132 = vector.load %arg29[%c7_86, %c0_87] : memref<58x64xf32, #tpu.memory_space<vmem>>, vector<51x64xf32>
    %133 = arith.maximumf %131, %132 : vector<51x64xf32>
    %134 = arith.maximumf %130, %133 : vector<51x64xf32>
    %c0_88 = arith.constant 0 : index
    %c0_89 = arith.constant 0 : index
    %135 = vector.load %arg7[%c0_88, %c0_89] : memref<32x51xbf16, #tpu.memory_space<vmem>>, vector<32x51xbf16>
    %136 = arith.truncf %134 : vector<51x64xf32> to vector<51x64xbf16>
    %cst_90 = arith.constant dense<0.000000e+00> : vector<32x64xf32>
    %137 = tpu.matmul %135, %136, %cst_90 {dimension_numbers = #tpu.dot_dimension_numbers<[1], [0], [0], [1], [0, 0, 1, 1], [], []>} : vector<32x51xbf16>, vector<51x64xbf16>, vector<32x64xf32> -> vector<32x64xf32>
    %c0_91 = arith.constant 0 : index
    %c0_92 = arith.constant 0 : index
    %138 = vector.load %arg30[%c0_91, %c0_92] : memref<32x64xf32, #tpu.memory_space<vmem>>, vector<32x64xf32>
    tpu.vector_store %arg30[%c0_91, %c0_92], %137 {strides = array<i32>} : memref<32x64xf32, #tpu.memory_space<vmem>>, vector<32x64xf32>,
    %c2_93 = arith.constant 2 : index
    %139 = memref.load %arg25[%c2_93] : memref<9xf32, #tpu.memory_space<smem>>
    %c0_94 = arith.constant 0 : index
    %c0_95 = arith.constant 0 : index
    %140 = vector.load %arg30[%c0_94, %c0_95] : memref<32x64xf32, #tpu.memory_space<vmem>>, vector<22x64xf32>
    %c0_96 = arith.constant 0 : index
    %c0_97 = arith.constant 0 : index
    %141 = vector.load %arg8[%c0_96, %c0_97] : memref<576x128xbf16, #tpu.memory_space<vmem>>, vector<64x128xbf16>
    %142 = arith.truncf %140 : vector<22x64xf32> to vector<22x64xbf16>
    %cst_98 = arith.constant dense<0.000000e+00> : vector<22x128xf32>
    %143 = tpu.matmul %142, %141, %cst_98 {dimension_numbers = #tpu.dot_dimension_numbers<[1], [0], [0], [1], [0, 0, 1, 1], [], []>} : vector<22x64xbf16>, vector<64x128xbf16>, vector<22x128xf32> -> vector<22x128xf32>
    %c1_99 = arith.constant 1 : index
    %c0_100 = arith.constant 0 : index
    %144 = vector.load %arg30[%c1_99, %c0_100] : memref<32x64xf32, #tpu.memory_space<vmem>>, vector<22x64xf32>
    %c64_101 = arith.constant 64 : index
    %c0_102 = arith.constant 0 : index
    %145 = vector.load %arg8[%c64_101, %c0_102] : memref<576x128xbf16, #tpu.memory_space<vmem>>, vector<64x128xbf16>
    %146 = arith.truncf %144 : vector<22x64xf32> to vector<22x64xbf16>
    %cst_103 = arith.constant dense<0.000000e+00> : vector<22x128xf32>
    %147 = tpu.matmul %146, %145, %cst_103 {dimension_numbers = #tpu.dot_dimension_numbers<[1], [0], [0], [1], [0, 0, 1, 1], [], []>} : vector<22x64xbf16>, vector<64x128xbf16>, vector<22x128xf32> -> vector<22x128xf32>
    %148 = arith.addf %143, %147 : vector<22x128xf32>
    %c2_104 = arith.constant 2 : index
    %c0_105 = arith.constant 0 : index
    %149 = vector.load %arg30[%c2_104, %c0_105] : memref<32x64xf32, #tpu.memory_space<vmem>>, vector<22x64xf32>
    %c128_106 = arith.constant 128 : index
    %c0_107 = arith.constant 0 : index
    %150 = vector.load %arg8[%c128_106, %c0_107] : memref<576x128xbf16, #tpu.memory_space<vmem>>, vector<64x128xbf16>
    %151 = arith.truncf %149 : vector<22x64xf32> to vector<22x64xbf16>
    %cst_108 = arith.constant dense<0.000000e+00> : vector<22x128xf32>
    %152 = tpu.matmul %151, %150, %cst_108 {dimension_numbers = #tpu.dot_dimension_numbers<[1], [0], [0], [1], [0, 0, 1, 1], [], []>} : vector<22x64xbf16>, vector<64x128xbf16>, vector<22x128xf32> -> vector<22x128xf32>
    %153 = arith.addf %148, %152 : vector<22x128xf32>
    %c4_109 = arith.constant 4 : index
    %c0_110 = arith.constant 0 : index
    %154 = vector.load %arg30[%c4_109, %c0_110] : memref<32x64xf32, #tpu.memory_space<vmem>>, vector<22x64xf32>
    %c192_111 = arith.constant 192 : index
    %c0_112 = arith.constant 0 : index
    %155 = vector.load %arg8[%c192_111, %c0_112] : memref<576x128xbf16, #tpu.memory_space<vmem>>, vector<64x128xbf16>
    %156 = arith.truncf %154 : vector<22x64xf32> to vector<22x64xbf16>
    %cst_113 = arith.constant dense<0.000000e+00> : vector<22x128xf32>
    %157 = tpu.matmul %156, %155, %cst_113 {dimension_numbers = #tpu.dot_dimension_numbers<[1], [0], [0], [1], [0, 0, 1, 1], [], []>} : vector<22x64xbf16>, vector<64x128xbf16>, vector<22x128xf32> -> vector<22x128xf32>
    %158 = arith.addf %153, %157 : vector<22x128xf32>
    %c5_114 = arith.constant 5 : index
    %c0_115 = arith.constant 0 : index
    %159 = vector.load %arg30[%c5_114, %c0_115] : memref<32x64xf32, #tpu.memory_space<vmem>>, vector<22x64xf32>
    %c256_116 = arith.constant 256 : index
    %c0_117 = arith.constant 0 : index
    %160 = vector.load %arg8[%c256_116, %c0_117] : memref<576x128xbf16, #tpu.memory_space<vmem>>, vector<64x128xbf16>
    %161 = arith.truncf %159 : vector<22x64xf32> to vector<22x64xbf16>
    %cst_118 = arith.constant dense<0.000000e+00> : vector<22x128xf32>
    %162 = tpu.matmul %161, %160, %cst_118 {dimension_numbers = #tpu.dot_dimension_numbers<[1], [0], [0], [1], [0, 0, 1, 1], [], []>} : vector<22x64xbf16>, vector<64x128xbf16>, vector<22x128xf32> -> vector<22x128xf32>
    %163 = arith.addf %158, %162 : vector<22x128xf32>
    %c6_119 = arith.constant 6 : index
    %c0_120 = arith.constant 0 : index
    %164 = vector.load %arg30[%c6_119, %c0_120] : memref<32x64xf32, #tpu.memory_space<vmem>>, vector<22x64xf32>
    %c320 = arith.constant 320 : index
    %c0_121 = arith.constant 0 : index
    %165 = vector.load %arg8[%c320, %c0_121] : memref<576x128xbf16, #tpu.memory_space<vmem>>, vector<64x128xbf16>
    %166 = arith.truncf %164 : vector<22x64xf32> to vector<22x64xbf16>
    %cst_122 = arith.constant dense<0.000000e+00> : vector<22x128xf32>
    %167 = tpu.matmul %166, %165, %cst_122 {dimension_numbers = #tpu.dot_dimension_numbers<[1], [0], [0], [1], [0, 0, 1, 1], [], []>} : vector<22x64xbf16>, vector<64x128xbf16>, vector<22x128xf32> -> vector<22x128xf32>
    %168 = arith.addf %163, %167 : vector<22x128xf32>
    %c8_123 = arith.constant 8 : index
    %c0_124 = arith.constant 0 : index
    %169 = vector.load %arg30[%c8_123, %c0_124] : memref<32x64xf32, #tpu.memory_space<vmem>>, vector<22x64xf32>
    %c384 = arith.constant 384 : index
    %c0_125 = arith.constant 0 : index
    %170 = vector.load %arg8[%c384, %c0_125] : memref<576x128xbf16, #tpu.memory_space<vmem>>, vector<64x128xbf16>
    %171 = arith.truncf %169 : vector<22x64xf32> to vector<22x64xbf16>
    %cst_126 = arith.constant dense<0.000000e+00> : vector<22x128xf32>
    %172 = tpu.matmul %171, %170, %cst_126 {dimension_numbers = #tpu.dot_dimension_numbers<[1], [0], [0], [1], [0, 0, 1, 1], [], []>} : vector<22x64xbf16>, vector<64x128xbf16>, vector<22x128xf32> -> vector<22x128xf32>
    %173 = arith.addf %168, %172 : vector<22x128xf32>
    %c9 = arith.constant 9 : index
    %c0_127 = arith.constant 0 : index
    %174 = vector.load %arg30[%c9, %c0_127] : memref<32x64xf32, #tpu.memory_space<vmem>>, vector<22x64xf32>
    %c448 = arith.constant 448 : index
    %c0_128 = arith.constant 0 : index
    %175 = vector.load %arg8[%c448, %c0_128] : memref<576x128xbf16, #tpu.memory_space<vmem>>, vector<64x128xbf16>
    %176 = arith.truncf %174 : vector<22x64xf32> to vector<22x64xbf16>
    %cst_129 = arith.constant dense<0.000000e+00> : vector<22x128xf32>
    %177 = tpu.matmul %176, %175, %cst_129 {dimension_numbers = #tpu.dot_dimension_numbers<[1], [0], [0], [1], [0, 0, 1, 1], [], []>} : vector<22x64xbf16>, vector<64x128xbf16>, vector<22x128xf32> -> vector<22x128xf32>
    %178 = arith.addf %173, %177 : vector<22x128xf32>
    %c10_130 = arith.constant 10 : index
    %c0_131 = arith.constant 0 : index
    %179 = vector.load %arg30[%c10_130, %c0_131] : memref<32x64xf32, #tpu.memory_space<vmem>>, vector<22x64xf32>
    %c512 = arith.constant 512 : index
    %c0_132 = arith.constant 0 : index
    %180 = vector.load %arg8[%c512, %c0_132] : memref<576x128xbf16, #tpu.memory_space<vmem>>, vector<64x128xbf16>
    %181 = arith.truncf %179 : vector<22x64xf32> to vector<22x64xbf16>
    %cst_133 = arith.constant dense<0.000000e+00> : vector<22x128xf32>
    %182 = tpu.matmul %181, %180, %cst_133 {dimension_numbers = #tpu.dot_dimension_numbers<[1], [0], [0], [1], [0, 0, 1, 1], [], []>} : vector<22x64xbf16>, vector<64x128xbf16>, vector<22x128xf32> -> vector<22x128xf32>
    %183 = arith.addf %178, %182 : vector<22x128xf32>
    %c0_134 = arith.constant 0 : index
    %c0_135 = arith.constant 0 : index
    %184 = vector.load %arg9[%c0_134, %c0_135] : memref<1x128xf32, #tpu.memory_space<vmem>>, vector<1x128xf32>
    %185 = vector.broadcast %184 : vector<1x128xf32> to vector<22x128xf32>
    %186 = arith.addf %183, %185 : vector<22x128xf32>
    %cst_136 = arith.constant 0.000000e+00 : f32
    %187 = vector.broadcast %cst_136 : f32 to vector<22x128xf32>
    %188 = arith.cmpf oge, %186, %187 : vector<22x128xf32>
    %189 = vector.broadcast %139 : f32 to vector<22x128xf32>
    %190 = arith.mulf %189, %186 : vector<22x128xf32>
    %191 = arith.select %188, %186, %190 : vector<22x128xi1>, vector<22x128xf32>
    %c0_137 = arith.constant 0 : index
    %c0_138 = arith.constant 0 : index
    %192 = vector.load %arg31[%c0_137, %c0_138] : memref<22x128xf32, #tpu.memory_space<vmem>>, vector<22x128xf32>
    tpu.vector_store %arg31[%c0_137, %c0_138], %191 {strides = array<i32>} : memref<22x128xf32, #tpu.memory_space<vmem>>, vector<22x128xf32>,
    %c0_139 = arith.constant 0 : index
    %c0_140 = arith.constant 0 : index
    %193 = vector.load %arg31[%c0_139, %c0_140] : memref<22x128xf32, #tpu.memory_space<vmem>>, vector<17x128xf32>
    %c1_141 = arith.constant 1 : index
    %c0_142 = arith.constant 0 : index
    %194 = vector.load %arg31[%c1_141, %c0_142] : memref<22x128xf32, #tpu.memory_space<vmem>>, vector<17x128xf32>
    %195 = arith.maximumf %193, %194 : vector<17x128xf32>
    %c4_143 = arith.constant 4 : index
    %c0_144 = arith.constant 0 : index
    %196 = vector.load %arg31[%c4_143, %c0_144] : memref<22x128xf32, #tpu.memory_space<vmem>>, vector<17x128xf32>
    %c5_145 = arith.constant 5 : index
    %c0_146 = arith.constant 0 : index
    %197 = vector.load %arg31[%c5_145, %c0_146] : memref<22x128xf32, #tpu.memory_space<vmem>>, vector<17x128xf32>
    %198 = arith.maximumf %196, %197 : vector<17x128xf32>
    %199 = arith.maximumf %195, %198 : vector<17x128xf32>
    %c0_147 = arith.constant 0 : index
    %c0_148 = arith.constant 0 : index
    %200 = vector.load %arg10[%c0_147, %c0_148] : memref<2x17xbf16, #tpu.memory_space<vmem>>, vector<2x17xbf16>
    %201 = arith.truncf %199 : vector<17x128xf32> to vector<17x128xbf16>
    %cst_149 = arith.constant dense<0.000000e+00> : vector<2x128xf32>
    %202 = tpu.matmul %200, %201, %cst_149 {dimension_numbers = #tpu.dot_dimension_numbers<[1], [0], [0], [1], [0, 0, 1, 1], [], []>} : vector<2x17xbf16>, vector<17x128xbf16>, vector<2x128xf32> -> vector<2x128xf32>
    %203 = arith.truncf %202 : vector<2x128xf32> to vector<2x128xbf16>
    %c0_150 = arith.constant 0 : index
    %c0_151 = arith.constant 0 : index
    %204 = vector.load %arg11[%c0_150, %c0_151] : memref<128x256xbf16, #tpu.memory_space<vmem>>, vector<128x256xbf16>
    %cst_152 = arith.constant dense<0.000000e+00> : vector<2x256xf32>
    %205 = tpu.matmul %203, %204, %cst_152 {dimension_numbers = #tpu.dot_dimension_numbers<[1], [0], [0], [1], [0, 0, 1, 1], [], []>} : vector<2x128xbf16>, vector<128x256xbf16>, vector<2x256xf32> -> vector<2x256xf32>
    %c0_153 = arith.constant 0 : index
    %c0_154 = arith.constant 0 : index
    %206 = vector.load %arg18[%c0_153, %c0_154] : memref<1x256xf32, #tpu.memory_space<vmem>>, vector<1x256xf32>
    %207 = vector.broadcast %206 : vector<1x256xf32> to vector<2x256xf32>
    %208 = arith.addf %205, %207 : vector<2x256xf32>
    %c3_155 = arith.constant 3 : index
    %209 = memref.load %arg25[%c3_155] : memref<9xf32, #tpu.memory_space<smem>>
    %cst_156 = arith.constant 0.000000e+00 : f32
    %210 = vector.broadcast %cst_156 : f32 to vector<2x256xf32>
    %211 = arith.cmpf oge, %208, %210 : vector<2x256xf32>
    %212 = vector.broadcast %209 : f32 to vector<2x256xf32>
    %213 = arith.mulf %212, %208 : vector<2x256xf32>
    %214 = arith.select %211, %208, %213 : vector<2x256xi1>, vector<2x256xf32>
    %215 = arith.truncf %214 : vector<2x256xf32> to vector<2x256xbf16>
    %c0_157 = arith.constant 0 : index
    %c0_158 = arith.constant 0 : index
    %216 = vector.load %arg12[%c0_157, %c0_158] : memref<256x512xbf16, #tpu.memory_space<vmem>>, vector<256x512xbf16>
    %cst_159 = arith.constant dense<0.000000e+00> : vector<2x512xf32>
    %217 = tpu.matmul %215, %216, %cst_159 {dimension_numbers = #tpu.dot_dimension_numbers<[1], [0], [0], [1], [0, 0, 1, 1], [], []>} : vector<2x256xbf16>, vector<256x512xbf16>, vector<2x512xf32> -> vector<2x512xf32>
    %c0_160 = arith.constant 0 : index
    %c0_161 = arith.constant 0 : index
    %218 = vector.load %arg19[%c0_160, %c0_161] : memref<1x512xf32, #tpu.memory_space<vmem>>, vector<1x512xf32>
    %219 = vector.broadcast %218 : vector<1x512xf32> to vector<2x512xf32>
    %220 = arith.addf %217, %219 : vector<2x512xf32>
    %c4_162 = arith.constant 4 : index
    %221 = memref.load %arg25[%c4_162] : memref<9xf32, #tpu.memory_space<smem>>
    %cst_163 = arith.constant 0.000000e+00 : f32
    %222 = vector.broadcast %cst_163 : f32 to vector<2x512xf32>
    %223 = arith.cmpf oge, %220, %222 : vector<2x512xf32>
    %224 = vector.broadcast %221 : f32 to vector<2x512xf32>
    %225 = arith.mulf %224, %220 : vector<2x512xf32>
    %226 = arith.select %223, %220, %225 : vector<2x512xi1>, vector<2x512xf32>
    %227 = arith.truncf %226 : vector<2x512xf32> to vector<2x512xbf16>
    %c0_164 = arith.constant 0 : index
    %c0_165 = arith.constant 0 : index
    %228 = vector.load %arg13[%c0_164, %c0_165] : memref<512x1024xbf16, #tpu.memory_space<vmem>>, vector<512x1024xbf16>
    %cst_166 = arith.constant dense<0.000000e+00> : vector<2x1024xf32>
    %229 = tpu.matmul %227, %228, %cst_166 {dimension_numbers = #tpu.dot_dimension_numbers<[1], [0], [0], [1], [0, 0, 1, 1], [], []>} : vector<2x512xbf16>, vector<512x1024xbf16>, vector<2x1024xf32> -> vector<2x1024xf32>
    %c0_167 = arith.constant 0 : index
    %c0_168 = arith.constant 0 : index
    %230 = vector.load %arg20[%c0_167, %c0_168] : memref<1x1024xf32, #tpu.memory_space<vmem>>, vector<1x1024xf32>
    %231 = vector.broadcast %230 : vector<1x1024xf32> to vector<2x1024xf32>
    %232 = arith.addf %229, %231 : vector<2x1024xf32>
    %c5_169 = arith.constant 5 : index
    %233 = memref.load %arg25[%c5_169] : memref<9xf32, #tpu.memory_space<smem>>
    %cst_170 = arith.constant 0.000000e+00 : f32
    %234 = vector.broadcast %cst_170 : f32 to vector<2x1024xf32>
    %235 = arith.cmpf oge, %232, %234 : vector<2x1024xf32>
    %236 = vector.broadcast %233 : f32 to vector<2x1024xf32>
    %237 = arith.mulf %236, %232 : vector<2x1024xf32>
    %238 = arith.select %235, %232, %237 : vector<2x1024xi1>, vector<2x1024xf32>
    %239 = arith.truncf %238 : vector<2x1024xf32> to vector<2x1024xbf16>
    %c0_171 = arith.constant 0 : index
    %c0_172 = arith.constant 0 : index
    %240 = vector.load %arg14[%c0_171, %c0_172] : memref<1024x512xbf16, #tpu.memory_space<vmem>>, vector<1024x512xbf16>
    %cst_173 = arith.constant dense<0.000000e+00> : vector<2x512xf32>
    %241 = tpu.matmul %239, %240, %cst_173 {dimension_numbers = #tpu.dot_dimension_numbers<[1], [0], [0], [1], [0, 0, 1, 1], [], []>} : vector<2x1024xbf16>, vector<1024x512xbf16>, vector<2x512xf32> -> vector<2x512xf32>
    %c0_174 = arith.constant 0 : index
    %c0_175 = arith.constant 0 : index
    %242 = vector.load %arg21[%c0_174, %c0_175] : memref<1x512xf32, #tpu.memory_space<vmem>>, vector<1x512xf32>
    %243 = vector.broadcast %242 : vector<1x512xf32> to vector<2x512xf32>
    %244 = arith.addf %241, %243 : vector<2x512xf32>
    %c6_176 = arith.constant 6 : index
    %245 = memref.load %arg25[%c6_176] : memref<9xf32, #tpu.memory_space<smem>>
    %cst_177 = arith.constant 0.000000e+00 : f32
    %246 = vector.broadcast %cst_177 : f32 to vector<2x512xf32>
    %247 = arith.cmpf oge, %244, %246 : vector<2x512xf32>
    %248 = vector.broadcast %245 : f32 to vector<2x512xf32>
    %249 = arith.mulf %248, %244 : vector<2x512xf32>
    %250 = arith.select %247, %244, %249 : vector<2x512xi1>, vector<2x512xf32>
    %251 = arith.truncf %250 : vector<2x512xf32> to vector<2x512xbf16>
    %c0_178 = arith.constant 0 : index
    %c0_179 = arith.constant 0 : index
    %252 = vector.load %arg15[%c0_178, %c0_179] : memref<512x256xbf16, #tpu.memory_space<vmem>>, vector<512x256xbf16>
    %cst_180 = arith.constant dense<0.000000e+00> : vector<2x256xf32>
    %253 = tpu.matmul %251, %252, %cst_180 {dimension_numbers = #tpu.dot_dimension_numbers<[1], [0], [0], [1], [0, 0, 1, 1], [], []>} : vector<2x512xbf16>, vector<512x256xbf16>, vector<2x256xf32> -> vector<2x256xf32>
    %c0_181 = arith.constant 0 : index
    %c0_182 = arith.constant 0 : index
    %254 = vector.load %arg22[%c0_181, %c0_182] : memref<1x256xf32, #tpu.memory_space<vmem>>, vector<1x256xf32>
    %255 = vector.broadcast %254 : vector<1x256xf32> to vector<2x256xf32>
    %256 = arith.addf %253, %255 : vector<2x256xf32>
    %c7_183 = arith.constant 7 : index
    %257 = memref.load %arg25[%c7_183] : memref<9xf32, #tpu.memory_space<smem>>
    %cst_184 = arith.constant 0.000000e+00 : f32
    %258 = vector.broadcast %cst_184 : f32 to vector<2x256xf32>
    %259 = arith.cmpf oge, %256, %258 : vector<2x256xf32>
    %260 = vector.broadcast %257 : f32 to vector<2x256xf32>
    %261 = arith.mulf %260, %256 : vector<2x256xf32>
    %262 = arith.select %259, %256, %261 : vector<2x256xi1>, vector<2x256xf32>
    %263 = arith.truncf %262 : vector<2x256xf32> to vector<2x256xbf16>
    %c0_185 = arith.constant 0 : index
    %c0_186 = arith.constant 0 : index
    %264 = vector.load %arg16[%c0_185, %c0_186] : memref<256x128xbf16, #tpu.memory_space<vmem>>, vector<256x128xbf16>
    %cst_187 = arith.constant dense<0.000000e+00> : vector<2x128xf32>
    %265 = tpu.matmul %263, %264, %cst_187 {dimension_numbers = #tpu.dot_dimension_numbers<[1], [0], [0], [1], [0, 0, 1, 1], [], []>} : vector<2x256xbf16>, vector<256x128xbf16>, vector<2x128xf32> -> vector<2x128xf32>
    %c0_188 = arith.constant 0 : index
    %c0_189 = arith.constant 0 : index
    %266 = vector.load %arg23[%c0_188, %c0_189] : memref<1x128xf32, #tpu.memory_space<vmem>>, vector<1x128xf32>
    %267 = vector.broadcast %266 : vector<1x128xf32> to vector<2x128xf32>
    %268 = arith.addf %265, %267 : vector<2x128xf32>
    %c8_190 = arith.constant 8 : index
    %269 = memref.load %arg25[%c8_190] : memref<9xf32, #tpu.memory_space<smem>>
    %cst_191 = arith.constant 0.000000e+00 : f32
    %270 = vector.broadcast %cst_191 : f32 to vector<2x128xf32>
    %271 = arith.cmpf oge, %268, %270 : vector<2x128xf32>
    %272 = vector.broadcast %269 : f32 to vector<2x128xf32>
    %273 = arith.mulf %272, %268 : vector<2x128xf32>
    %274 = arith.select %271, %268, %273 : vector<2x128xi1>, vector<2x128xf32>
    %275 = arith.truncf %274 : vector<2x128xf32> to vector<2x128xbf16>
    %c0_192 = arith.constant 0 : index
    %c0_193 = arith.constant 0 : index
    %276 = vector.load %arg17[%c0_192, %c0_193] : memref<128x128xbf16, #tpu.memory_space<vmem>>, vector<128x128xbf16>
    %cst_194 = arith.constant dense<0.000000e+00> : vector<2x128xf32>
    %277 = tpu.matmul %275, %276, %cst_194 {dimension_numbers = #tpu.dot_dimension_numbers<[1], [0], [0], [1], [0, 0, 1, 1], [], []>} : vector<2x128xbf16>, vector<128x128xbf16>, vector<2x128xf32> -> vector<2x128xf32>
    %c0_195 = arith.constant 0 : index
    %c0_196 = arith.constant 0 : index
    %278 = vector.load %arg24[%c0_195, %c0_196] : memref<1x128xf32, #tpu.memory_space<vmem>>, vector<1x128xf32>
    %279 = vector.broadcast %278 : vector<1x128xf32> to vector<2x128xf32>
    %280 = arith.addf %277, %279 : vector<2x128xf32>
    %c0_197 = arith.constant 0 : index
    %c0_198 = arith.constant 0 : index
    %281 = vector.load %arg26[%c0_197, %c0_198] : memref<2x128xf32, #tpu.memory_space<vmem>>, vector<2x128xf32>
    tpu.vector_store %arg26[%c0_197, %c0_198], %280 {strides = array<i32>} : memref<2x128xf32, #tpu.memory_space<vmem>>, vector<2x128xf32>,
    return
  }
  func.func @transform_0(%arg0: i32) -> (i32, i32) {
    %c0_i32 = arith.constant 0 : i32
    %c0_i32_0 = arith.constant 0 : i32
    %c0_i32_1 = arith.constant 0 : i32
    return %c0_i32, %c0_i32_0 : i32, i32
  }
  func.func @transform_1(%arg0: i32) -> (i32, i32) {
    %c0_i32 = arith.constant 0 : i32
    %c0_i32_0 = arith.constant 0 : i32
    %c0_i32_1 = arith.constant 0 : i32
    return %c0_i32, %c0_i32_0 : i32, i32
  }
  func.func @transform_2(%arg0: i32) -> (i32, i32) {
    %c0_i32 = arith.constant 0 : i32
    %c0_i32_0 = arith.constant 0 : i32
    %c0_i32_1 = arith.constant 0 : i32
    return %c0_i32, %c0_i32_0 : i32, i32
  }
  func.func @transform_3(%arg0: i32) -> (i32, i32) {
    %c0_i32 = arith.constant 0 : i32
    %c0_i32_0 = arith.constant 0 : i32
    %c0_i32_1 = arith.constant 0 : i32
    return %c0_i32, %c0_i32_0 : i32, i32
  }
  func.func @transform_4(%arg0: i32) -> (i32, i32) {
    %c0_i32 = arith.constant 0 : i32
    %c0_i32_0 = arith.constant 0 : i32
    %c0_i32_1 = arith.constant 0 : i32
    return %c0_i32, %c0_i32_0 : i32, i32
  }
  func.func @transform_5(%arg0: i32) -> (i32, i32) {
    %c0_i32 = arith.constant 0 : i32
    %c0_i32_0 = arith.constant 0 : i32
    %c0_i32_1 = arith.constant 0 : i32
    return %c0_i32, %c0_i32_0 : i32, i32
  }
  func.func @transform_6(%arg0: i32) -> (i32, i32) {
    %c0_i32 = arith.constant 0 : i32
    %c0_i32_0 = arith.constant 0 : i32
    %c0_i32_1 = arith.constant 0 : i32
    return %c0_i32, %c0_i32_0 : i32, i32
  }
  func.func @transform_7(%arg0: i32) -> (i32, i32) {
    %c0_i32 = arith.constant 0 : i32
    %c0_i32_0 = arith.constant 0 : i32
    %c0_i32_1 = arith.constant 0 : i32
    return %c0_i32, %c0_i32_0 : i32, i32
  }
  func.func @transform_8(%arg0: i32) -> (i32, i32) {
    %c0_i32 = arith.constant 0 : i32
    %c0_i32_0 = arith.constant 0 : i32
    %c0_i32_1 = arith.constant 0 : i32
    return %c0_i32, %c0_i32_0 : i32, i32
  }
  func.func @transform_9(%arg0: i32) -> (i32, i32) {
    %c0_i32 = arith.constant 0 : i32
    %c0_i32_0 = arith.constant 0 : i32
    %c0_i32_1 = arith.constant 0 : i32
    return %c0_i32, %c0_i32_0 : i32, i32
  }
  func.func @transform_10(%arg0: i32) -> (i32, i32) {
    %c0_i32 = arith.constant 0 : i32
    %c0_i32_0 = arith.constant 0 : i32
    %c0_i32_1 = arith.constant 0 : i32
    return %c0_i32, %c0_i32_0 : i32, i32
  }
  func.func @transform_11(%arg0: i32) -> (i32, i32) {
    %c0_i32 = arith.constant 0 : i32
    %c0_i32_0 = arith.constant 0 : i32
    %c0_i32_1 = arith.constant 0 : i32
    return %c0_i32, %c0_i32_0 : i32, i32
  }
  func.func @transform_12(%arg0: i32) -> (i32, i32) {
    %c0_i32 = arith.constant 0 : i32
    %c0_i32_0 = arith.constant 0 : i32
    %c0_i32_1 = arith.constant 0 : i32
    return %c0_i32, %c0_i32_0 : i32, i32
  }
  func.func @transform_13(%arg0: i32) -> (i32, i32) {
    %c0_i32 = arith.constant 0 : i32
    %c0_i32_0 = arith.constant 0 : i32
    %c0_i32_1 = arith.constant 0 : i32
    return %c0_i32, %c0_i32_0 : i32, i32
  }
  func.func @transform_14(%arg0: i32) -> (i32, i32) {
    %c0_i32 = arith.constant 0 : i32
    %c0_i32_0 = arith.constant 0 : i32
    %c0_i32_1 = arith.constant 0 : i32
    return %c0_i32, %c0_i32_0 : i32, i32
  }
  func.func @transform_15(%arg0: i32) -> (i32, i32) {
    %c0_i32 = arith.constant 0 : i32
    %c0_i32_0 = arith.constant 0 : i32
    %c0_i32_1 = arith.constant 0 : i32
    return %c0_i32, %c0_i32_0 : i32, i32
  }
  func.func @transform_16(%arg0: i32) -> (i32, i32) {
    %c0_i32 = arith.constant 0 : i32
    %c0_i32_0 = arith.constant 0 : i32
    %c0_i32_1 = arith.constant 0 : i32
    return %c0_i32, %c0_i32_0 : i32, i32
  }
  func.func @transform_17(%arg0: i32) -> (i32, i32) {
    %c0_i32 = arith.constant 0 : i32
    %c0_i32_0 = arith.constant 0 : i32
    %c0_i32_1 = arith.constant 0 : i32
    return %c0_i32, %c0_i32_0 : i32, i32
  }
  func.func @transform_18(%arg0: i32) -> (i32, i32) {
    %c0_i32 = arith.constant 0 : i32
    %c0_i32_0 = arith.constant 0 : i32
    %c0_i32_1 = arith.constant 0 : i32
    return %c0_i32, %c0_i32_0 : i32, i32
  }
  func.func @transform_19(%arg0: i32) -> (i32, i32) {
    %c0_i32 = arith.constant 0 : i32
    %c0_i32_0 = arith.constant 0 : i32
    %c0_i32_1 = arith.constant 0 : i32
    return %c0_i32, %c0_i32_0 : i32, i32
  }
  func.func @transform_20(%arg0: i32) -> (i32, i32) {
    %c0_i32 = arith.constant 0 : i32
    %c0_i32_0 = arith.constant 0 : i32
    %c0_i32_1 = arith.constant 0 : i32
    return %c0_i32, %c0_i32_0 : i32, i32
  }
  func.func @transform_21(%arg0: i32) -> (i32, i32) {
    %c0_i32 = arith.constant 0 : i32
    %c0_i32_0 = arith.constant 0 : i32
    %c0_i32_1 = arith.constant 0 : i32
    return %c0_i32, %c0_i32_0 : i32, i32
  }
  func.func @transform_22(%arg0: i32) -> (i32, i32) {
    %c0_i32 = arith.constant 0 : i32
    %c0_i32_0 = arith.constant 0 : i32
    %c0_i32_1 = arith.constant 0 : i32
    return %c0_i32, %c0_i32_0 : i32, i32
  }
  func.func @transform_23(%arg0: i32) -> (i32, i32) {
    %c0_i32 = arith.constant 0 : i32
    %c0_i32_0 = arith.constant 0 : i32
    %c0_i32_1 = arith.constant 0 : i32
    return %c0_i32, %c0_i32_0 : i32, i32
  }
  func.func @transform_24(%arg0: i32) -> i32 {
    %c0_i32 = arith.constant 0 : i32
    %c0_i32_0 = arith.constant 0 : i32
    return %c0_i32 : i32
  }
  func.func @transform_25(%arg0: i32) -> (i32, i32) {
    %c0_i32 = arith.constant 0 : i32
    %c0_i32_0 = arith.constant 0 : i32
    %c0_i32_1 = arith.constant 0 : i32
    return %c0_i32, %c0_i32_0 : i32, i32
  }
}

</mosaic_0001>

<llo_original>
// kernel: forward.1
$region0: #{forward.1}
  #allocation0 [shape = 'u32[]', space=smem, size = 0x4, offset = 0x4, fixed_abs, tag = 'smem constant byte address 0x4 - core index']
  #allocation1 [shape = 'u32[72,128]{1,0:T(1,128)}', space=vmem, size = 0x9000, scoped, tag = 'internal scratch']
  #allocation2 [shape = 'f32[178,32]{1,0:T(8,128)}', space=vmem, size = 0x17000, scoped, tag = 'scratch operand']
  #allocation3 [shape = 'f32[72,32]{1,0:T(8,128)}', space=vmem, size = 0x9000, scoped, tag = 'scratch operand']
  #allocation4 [shape = 'f32[58,64]{1,0:T(8,128)}', space=vmem, size = 0x8000, scoped, tag = 'scratch operand']
  #allocation5 [shape = 'f32[32,64]{1,0:T(8,128)}', space=vmem, size = 0x4000, scoped, tag = 'scratch operand']
  #allocation6 [shape = 'f32[22,128]{1,0:T(8,128)}', space=vmem, size = 0x3000, scoped, tag = 'scratch operand']
  %s0 = inlined_call_operand.vmem [shape: f32[200,1], index: 0, kind: input, shape index: {}]
  %s1 = inlined_call_operand.vmem [shape: f32[9,32], index: 1, kind: input, shape index: {}]
  %s2 = inlined_call_operand.vmem [shape: f32[1,32], index: 2, kind: input, shape index: {}]
  %s3 = inlined_call_operand.vmem [shape: bf16[72,167], index: 3, kind: input, shape index: {}]
  %s4 = inlined_call_operand.vmem [shape: bf16[288,64], index: 4, kind: input, shape index: {}]
  %s5 = inlined_call_operand.vmem [shape: f32[1,64], index: 5, kind: input, shape index: {}]
  %s6 = inlined_call_operand.vmem [shape: bf16[32,51], index: 6, kind: input, shape index: {}]
  %s7 = inlined_call_operand.vmem [shape: bf16[576,128], index: 7, kind: input, shape index: {}]
  %s8 = inlined_call_operand.vmem [shape: f32[1,128], index: 8, kind: input, shape index: {}]
  %s9 = inlined_call_operand.vmem [shape: bf16[2,17], index: 9, kind: input, shape index: {}]
  %s10 = inlined_call_operand.vmem [shape: bf16[128,256], index: 10, kind: input, shape index: {}]
  %s11 = inlined_call_operand.vmem [shape: bf16[256,512], index: 11, kind: input, shape index: {}]
  %s12 = inlined_call_operand.vmem [shape: bf16[512,1024], index: 12, kind: input, shape index: {}]
  %s13 = inlined_call_operand.vmem [shape: bf16[1024,512], index: 13, kind: input, shape index: {}]
  %s14 = inlined_call_operand.vmem [shape: bf16[512,256], index: 14, kind: input, shape index: {}]
  %s15 = inlined_call_operand.vmem [shape: bf16[256,128], index: 15, kind: input, shape index: {}]
  %s16 = inlined_call_operand.vmem [shape: bf16[128,128], index: 16, kind: input, shape index: {}]
  %s17 = inlined_call_operand.vmem [shape: f32[1,256], index: 17, kind: input, shape index: {}]
  %s18 = inlined_call_operand.vmem [shape: f32[1,512], index: 18, kind: input, shape index: {}]
  %s19 = inlined_call_operand.vmem [shape: f32[1,1024], index: 19, kind: input, shape index: {}]
  %s20 = inlined_call_operand.vmem [shape: f32[1,512], index: 20, kind: input, shape index: {}]
  %s21 = inlined_call_operand.vmem [shape: f32[1,256], index: 21, kind: input, shape index: {}]
  %s22 = inlined_call_operand.vmem [shape: f32[1,128], index: 22, kind: input, shape index: {}]
  %s23 = inlined_call_operand.vmem [shape: f32[1,128], index: 23, kind: input, shape index: {}]
  %s24 = inlined_call_operand.vmem [shape: f32[9], index: 24, kind: input, shape index: {}]
  %s25 = inlined_call_operand.hbm [shape: f32[2,128], index: 25, kind: output, shape index: {}]
  %s26 = sld [smem:[#allocation0]]
  $region114: #{forward.1} parent=0
    _
  %s28 = ssub.s32 1, %s26
  %s29 = scalar_select 0, %s28, %s26
  $region1: #{forward.1} parent=0
    #allocation7 [shape = 'u8[512]{0}', space=smem, size = 0x200, scoped, tag = 'input window, operand 24, single buffered']
    #allocation8 [shape = 's32[1]{0}', space=sflag, size = 0x4, scoped, tag = 'scoped memory for forward.1']
    #allocation9 [shape = 's32[1]{0}', space=sflag, size = 0x4, scoped, tag = 'scoped memory for forward.1']
    #allocation10 [shape = 'u8[1024]{0}', space=vmem, size = 0x400, scoped, tag = 'output window, operand 0, single buffered']
    %30 = vsyncpa [#allocation9], 0
    %31 = vsyncpa [#allocation8], 0
    // Predicated region
    $region2: #{forward.1} parent=1 // pred_check
      _
    $region3: #{forward.1} parent=1 // pred_check_branch
      %33 = sbr.rel (0) target = $region5
    $region4: #{forward.1} parent=1 // pred_region
      _
    $region5: #{forward.1} parent=1 // pred_fallthru
      _
    // Predicated region
    $region6: #{forward.1} parent=1 // pred_check
      _
    $region7: #{forward.1} parent=1 // pred_check_branch
      %35 = sbr.rel (0) target = $region9
    $region8: #{forward.1} parent=1 // pred_region
      _
    $region9: #{forward.1} parent=1 // pred_fallthru
      _
    // Predicated region
    $region10: #{forward.1} parent=1 // pred_check
      _
    $region11: #{forward.1} parent=1 // pred_check_branch
      %37 = sbr.rel (0) target = $region13
    $region12: #{forward.1} parent=1 // pred_region
      _
    $region13: #{forward.1} parent=1 // pred_fallthru
      _
    // Predicated region
    $region14: #{forward.1} parent=1 // pred_check
      _
    $region15: #{forward.1} parent=1 // pred_check_branch
      %39 = sbr.rel (0) target = $region17
    $region16: #{forward.1} parent=1 // pred_region
      _
    $region17: #{forward.1} parent=1 // pred_fallthru
      _
    // Predicated region
    $region18: #{forward.1} parent=1 // pred_check
      _
    $region19: #{forward.1} parent=1 // pred_check_branch
      %41 = sbr.rel (0) target = $region21
    $region20: #{forward.1} parent=1 // pred_region
      _
    $region21: #{forward.1} parent=1 // pred_fallthru
      _
    // Predicated region
    $region22: #{forward.1} parent=1 // pred_check
      _
    $region23: #{forward.1} parent=1 // pred_check_branch
      %43 = sbr.rel (0) target = $region25
    $region24: #{forward.1} parent=1 // pred_region
      _
    $region25: #{forward.1} parent=1 // pred_fallthru
      _
    // Predicated region
    $region26: #{forward.1} parent=1 // pred_check
      _
    $region27: #{forward.1} parent=1 // pred_check_branch
      %45 = sbr.rel (0) target = $region29
    $region28: #{forward.1} parent=1 // pred_region
      _
    $region29: #{forward.1} parent=1 // pred_fallthru
      _
    // Predicated region
    $region30: #{forward.1} parent=1 // pred_check
      _
    $region31: #{forward.1} parent=1 // pred_check_branch
      %47 = sbr.rel (0) target = $region33
    $region32: #{forward.1} parent=1 // pred_region
      _
    $region33: #{forward.1} parent=1 // pred_fallthru
      _
    // Predicated region
    $region34: #{forward.1} parent=1 // pred_check
      _
    $region35: #{forward.1} parent=1 // pred_check_branch
      %49 = sbr.rel (0) target = $region37
    $region36: #{forward.1} parent=1 // pred_region
      _
    $region37: #{forward.1} parent=1 // pred_fallthru
      _
    // Predicated region
    $region38: #{forward.1} parent=1 // pred_check
      _
    $region39: #{forward.1} parent=1 // pred_check_branch
      %51 = sbr.rel (0) target = $region41
    $region40: #{forward.1} parent=1 // pred_region
      _
    $region41: #{forward.1} parent=1 // pred_fallthru
      _
    // Predicated region
    $region42: #{forward.1} parent=1 // pred_check
      _
    $region43: #{forward.1} parent=1 // pred_check_branch
      %53 = sbr.rel (0) target = $region45
    $region44: #{forward.1} parent=1 // pred_region
      _
    $region45: #{forward.1} parent=1 // pred_fallthru
      _
    // Predicated region
    $region46: #{forward.1} parent=1 // pred_check
      _
    $region47: #{forward.1} parent=1 // pred_check_branch
      %55 = sbr.rel (0) target = $region49
    $region48: #{forward.1} parent=1 // pred_region
      _
    $region49: #{forward.1} parent=1 // pred_fallthru
      _
    // Predicated region
    $region50: #{forward.1} parent=1 // pred_check
      _
    $region51: #{forward.1} parent=1 // pred_check_branch
      %57 = sbr.rel (0) target = $region53
    $region52: #{forward.1} parent=1 // pred_region
      _
    $region53: #{forward.1} parent=1 // pred_fallthru
      _
    // Predicated region
    $region54: #{forward.1} parent=1 // pred_check
      _
    $region55: #{forward.1} parent=1 // pred_check_branch
      %59 = sbr.rel (0) target = $region57
    $region56: #{forward.1} parent=1 // pred_region
      _
    $region57: #{forward.1} parent=1 // pred_fallthru
      _
    // Predicated region
    $region58: #{forward.1} parent=1 // pred_check
      _
    $region59: #{forward.1} parent=1 // pred_check_branch
      %61 = sbr.rel (0) target = $region61
    $region60: #{forward.1} parent=1 // pred_region
      _
    $region61: #{forward.1} parent=1 // pred_fallthru
      _
    // Predicated region
    $region62: #{forward.1} parent=1 // pred_check
      _
    $region63: #{forward.1} parent=1 // pred_check_branch
      %63 = sbr.rel (0) target = $region65
    $region64: #{forward.1} parent=1 // pred_region
      _
    $region65: #{forward.1} parent=1 // pred_fallthru
      _
    // Predicated region
    $region66: #{forward.1} parent=1 // pred_check
      _
    $region67: #{forward.1} parent=1 // pred_check_branch
      %65 = sbr.rel (0) target = $region69
    $region68: #{forward.1} parent=1 // pred_region
      _
    $region69: #{forward.1} parent=1 // pred_fallthru
      _
    // Predicated region
    $region70: #{forward.1} parent=1 // pred_check
      _
    $region71: #{forward.1} parent=1 // pred_check_branch
      %67 = sbr.rel (0) target = $region73
    $region72: #{forward.1} parent=1 // pred_region
      _
    $region73: #{forward.1} parent=1 // pred_fallthru
      _
    // Predicated region
    $region74: #{forward.1} parent=1 // pred_check
      _
    $region75: #{forward.1} parent=1 // pred_check_branch
      %69 = sbr.rel (0) target = $region77
    $region76: #{forward.1} parent=1 // pred_region
      _
    $region77: #{forward.1} parent=1 // pred_fallthru
      _
    // Predicated region
    $region78: #{forward.1} parent=1 // pred_check
      _
    $region79: #{forward.1} parent=1 // pred_check_branch
      %71 = sbr.rel (0) target = $region81
    $region80: #{forward.1} parent=1 // pred_region
      _
    $region81: #{forward.1} parent=1 // pred_fallthru
      _
    // Predicated region
    $region82: #{forward.1} parent=1 // pred_check
      _
    $region83: #{forward.1} parent=1 // pred_check_branch
      %73 = sbr.rel (0) target = $region85
    $region84: #{forward.1} parent=1 // pred_region
      _
    $region85: #{forward.1} parent=1 // pred_fallthru
      _
    // Predicated region
    $region86: #{forward.1} parent=1 // pred_check
      _
    $region87: #{forward.1} parent=1 // pred_check_branch
      %75 = sbr.rel (0) target = $region89
    $region88: #{forward.1} parent=1 // pred_region
      _
    $region89: #{forward.1} parent=1 // pred_fallthru
      _
    // Predicated region
    $region90: #{forward.1} parent=1 // pred_check
      _
    $region91: #{forward.1} parent=1 // pred_check_branch
      %77 = sbr.rel (0) target = $region93
    $region92: #{forward.1} parent=1 // pred_region
      _
    $region93: #{forward.1} parent=1 // pred_fallthru
      _
    // Predicated region
    $region94: #{forward.1} parent=1 // pred_check
      _
    $region95: #{forward.1} parent=1 // pred_check_branch
      %79 = sbr.rel (0) target = $region97
    $region96: #{forward.1} parent=1 // pred_region
      _
    $region97: #{forward.1} parent=1 // pred_fallthru
      _
    // Predicated region
    $region98: #{forward.1} parent=1 // pred_check
      _
    $region99: #{forward.1} parent=1 // pred_check_branch
      %81 = sbr.rel (0) target = $region101
    $region100: #{forward.1} parent=1 // pred_region
      %83 = vsyncadd [#allocation9], 0
      %s85 = sshll.u32 %s24, 4
      %s86 = int_to_ptr.vmem [resolvable:$true] %s85
      %88 = dma.vmem_to_smem %s86, 16, [#allocation7], [#allocation9]
    $region101: #{forward.1} parent=1 // pred_fallthru
      _
    // Predicated region
    $region102: #{forward.1} parent=1 // pred_check
      _
    $region103: #{forward.1} parent=1 // pred_check_branch
      %90 = sbr.rel (0) target = $region105
    $region104: #{forward.1} parent=1 // pred_region
      %92 = dma.done [#allocation9], 16
    $region105: #{forward.1} parent=1 // pred_fallthru
      _
    %93 = sfence
    %s95 = sld [smem:[#allocation7]]
    %v96 = vld [vmem:[%s0] sm:$0xff]
    %v97 = vld [vmem:[%s0 + $0x8] sm:$0xff]
    %v98 = vld [vmem:[%s0 + $0x10] sm:$0xff]
    %v99 = vld [vmem:[%s0 + $0x18] sm:$0xff]
    %v100 = vld [vmem:[%s0 + $0x20] sm:$0xff]
    %v101 = vld [vmem:[%s0 + $0x28] sm:$0xff]
    %v102 = vld [vmem:[%s0 + $0x30] sm:$0xff]
    %v103 = vld [vmem:[%s0 + $0x38] sm:$0xff]
    %v104 = vld [vmem:[%s0 + $0x40] sm:$0xff]
    %v105 = vld [vmem:[%s0 + $0x48] sm:$0xff]
    %v106 = vld [vmem:[%s0 + $0x50] sm:$0xff]
    %v107 = vld [vmem:[%s0 + $0x58] sm:$0xff]
    %v108 = vld [vmem:[%s0 + $0x60] sm:$0xff]
    %v109 = vld [vmem:[%s0 + $0x68] sm:$0xff]
    %v110 = vld [vmem:[%s0 + $0x70] sm:$0xff]
    %v111 = vld [vmem:[%s0 + $0x78] sm:$0xff]
    %v112 = vld [vmem:[%s0 + $0x80] sm:$0xff]
    %v113 = vld [vmem:[%s0 + $0x88] sm:$0xff]
    %v114 = vld [vmem:[%s0 + $0x90] sm:$0xff]
    %v115 = vld [vmem:[%s0 + $0x98] sm:$0xff]
    %v116 = vld [vmem:[%s0 + $0xa0] sm:$0xff]
    %v117 = vld [vmem:[%s0 + $0xa8] sm:$0xff]
    %v118 = vld [vmem:[%s0 + $0xb0] sm:$0x3]
    %v119 = vld [vmem:[%s1] sm:$0x1]
    %121 = vset.pattern.permute.xlu0 0
    %122 = vperm.xlu0 %121, %v96
    %v123 = vpop.permute.xlu0 %122
    %126 = vset.pattern.permute.xlu0 0
    %127 = vperm.xlu0 %126, %v97
    %v128 = vpop.permute.xlu0 %127
    %131 = vset.pattern.permute.xlu0 0
    %132 = vperm.xlu0 %131, %v98
    %v133 = vpop.permute.xlu0 %132
    %136 = vset.pattern.permute.xlu0 0
    %137 = vperm.xlu0 %136, %v99
    %v138 = vpop.permute.xlu0 %137
    %141 = vset.pattern.permute.xlu0 0
    %142 = vperm.xlu0 %141, %v100
    %v143 = vpop.permute.xlu0 %142
    %146 = vset.pattern.permute.xlu0 0
    %147 = vperm.xlu0 %146, %v101
    %v148 = vpop.permute.xlu0 %147
    %151 = vset.pattern.permute.xlu0 0
    %152 = vperm.xlu0 %151, %v102
    %v153 = vpop.permute.xlu0 %152
    %156 = vset.pattern.permute.xlu0 0
    %157 = vperm.xlu0 %156, %v103
    %v158 = vpop.permute.xlu0 %157
    %161 = vset.pattern.permute.xlu0 0
    %162 = vperm.xlu0 %161, %v104
    %v163 = vpop.permute.xlu0 %162
    %166 = vset.pattern.permute.xlu0 0
    %167 = vperm.xlu0 %166, %v105
    %v168 = vpop.permute.xlu0 %167
    %171 = vset.pattern.permute.xlu0 0
    %172 = vperm.xlu0 %171, %v106
    %v173 = vpop.permute.xlu0 %172
    %176 = vset.pattern.permute.xlu0 0
    %177 = vperm.xlu0 %176, %v107
    %v178 = vpop.permute.xlu0 %177
    %181 = vset.pattern.permute.xlu0 0
    %182 = vperm.xlu0 %181, %v108
    %v183 = vpop.permute.xlu0 %182
    %186 = vset.pattern.permute.xlu0 0
    %187 = vperm.xlu0 %186, %v109
    %v188 = vpop.permute.xlu0 %187
    %191 = vset.pattern.permute.xlu0 0
    %192 = vperm.xlu0 %191, %v110
    %v193 = vpop.permute.xlu0 %192
    %196 = vset.pattern.permute.xlu0 0
    %197 = vperm.xlu0 %196, %v111
    %v198 = vpop.permute.xlu0 %197
    %201 = vset.pattern.permute.xlu0 0
    %202 = vperm.xlu0 %201, %v112
    %v203 = vpop.permute.xlu0 %202
    %206 = vset.pattern.permute.xlu0 0
    %207 = vperm.xlu0 %206, %v113
    %v208 = vpop.permute.xlu0 %207
    %211 = vset.pattern.permute.xlu0 0
    %212 = vperm.xlu0 %211, %v114
    %v213 = vpop.permute.xlu0 %212
    %216 = vset.pattern.permute.xlu0 0
    %217 = vperm.xlu0 %216, %v115
    %v218 = vpop.permute.xlu0 %217
    %221 = vset.pattern.permute.xlu0 0
    %222 = vperm.xlu0 %221, %v116
    %v223 = vpop.permute.xlu0 %222
    %226 = vset.pattern.permute.xlu0 0
    %227 = vperm.xlu0 %226, %v117
    %v228 = vpop.permute.xlu0 %227
    %231 = vset.pattern.permute.xlu0 0
    %232 = vperm.xlu0 %231, %v118
    %v233 = vpop.permute.xlu0 %232
    %v235 = vperm.slane %v119, 0
    %v236 = vmul.f32 %v123, %v235
    %v237 = vmul.f32 %v128, %v235
    %v238 = vmul.f32 %v133, %v235
    %v239 = vmul.f32 %v138, %v235
    %v240 = vmul.f32 %v143, %v235
    %v241 = vmul.f32 %v148, %v235
    %v242 = vmul.f32 %v153, %v235
    %v243 = vmul.f32 %v158, %v235
    %v244 = vmul.f32 %v163, %v235
    %v245 = vmul.f32 %v168, %v235
    %v246 = vmul.f32 %v173, %v235
    %v247 = vmul.f32 %v178, %v235
    %v248 = vmul.f32 %v183, %v235
    %v249 = vmul.f32 %v188, %v235
    %v250 = vmul.f32 %v193, %v235
    %v251 = vmul.f32 %v198, %v235
    %v252 = vmul.f32 %v203, %v235
    %v253 = vmul.f32 %v208, %v235
    %v254 = vmul.f32 %v213, %v235
    %v255 = vmul.f32 %v218, %v235
    %v256 = vmul.f32 %v223, %v235
    %v257 = vmul.f32 %v228, %v235
    %v258 = vmul.f32 %v233, %v235
    %v259 = vld [vmem:[%s0 + $0x1] sm:$0xff]
    %v260 = vld [vmem:[%s0 + $0x9] sm:$0xff]
    %v261 = vld [vmem:[%s0 + $0x11] sm:$0xff]
    %v262 = vld [vmem:[%s0 + $0x19] sm:$0xff]
    %v263 = vld [vmem:[%s0 + $0x21] sm:$0xff]
    %v264 = vld [vmem:[%s0 + $0x29] sm:$0xff]
    %v265 = vld [vmem:[%s0 + $0x31] sm:$0xff]
    %v266 = vld [vmem:[%s0 + $0x39] sm:$0xff]
    %v267 = vld [vmem:[%s0 + $0x41] sm:$0xff]
    %v268 = vld [vmem:[%s0 + $0x49] sm:$0xff]
    %v269 = vld [vmem:[%s0 + $0x51] sm:$0xff]
    %v270 = vld [vmem:[%s0 + $0x59] sm:$0xff]
    %v271 = vld [vmem:[%s0 + $0x61] sm:$0xff]
    %v272 = vld [vmem:[%s0 + $0x69] sm:$0xff]
    %v273 = vld [vmem:[%s0 + $0x71] sm:$0xff]
    %v274 = vld [vmem:[%s0 + $0x79] sm:$0xff]
    %v275 = vld [vmem:[%s0 + $0x81] sm:$0xff]
    %v276 = vld [vmem:[%s0 + $0x89] sm:$0xff]
    %v277 = vld [vmem:[%s0 + $0x91] sm:$0xff]
    %v278 = vld [vmem:[%s0 + $0x99] sm:$0xff]
    %v279 = vld [vmem:[%s0 + $0xa1] sm:$0xff]
    %v280 = vld [vmem:[%s0 + $0xa9] sm:$0xff]
    %v281 = vld [vmem:[%s0 + $0xb1] sm:$0x3]
    %v282 = vld [vmem:[%s1 + $0x1] sm:$0x1]
    %284 = vset.pattern.permute.xlu0 0
    %285 = vperm.xlu0 %284, %v259
    %v286 = vpop.permute.xlu0 %285
    %289 = vset.pattern.permute.xlu0 0
    %290 = vperm.xlu0 %289, %v260
    %v291 = vpop.permute.xlu0 %290
    %294 = vset.pattern.permute.xlu0 0
    %295 = vperm.xlu0 %294, %v261
    %v296 = vpop.permute.xlu0 %295
    %299 = vset.pattern.permute.xlu0 0
    %300 = vperm.xlu0 %299, %v262
    %v301 = vpop.permute.xlu0 %300
    %304 = vset.pattern.permute.xlu0 0
    %305 = vperm.xlu0 %304, %v263
    %v306 = vpop.permute.xlu0 %305
    %309 = vset.pattern.permute.xlu0 0
    %310 = vperm.xlu0 %309, %v264
    %v311 = vpop.permute.xlu0 %310
    %314 = vset.pattern.permute.xlu0 0
    %315 = vperm.xlu0 %314, %v265
    %v316 = vpop.permute.xlu0 %315
    %319 = vset.pattern.permute.xlu0 0
    %320 = vperm.xlu0 %319, %v266
    %v321 = vpop.permute.xlu0 %320
    %324 = vset.pattern.permute.xlu0 0
    %325 = vperm.xlu0 %324, %v267
    %v326 = vpop.permute.xlu0 %325
    %329 = vset.pattern.permute.xlu0 0
    %330 = vperm.xlu0 %329, %v268
    %v331 = vpop.permute.xlu0 %330
    %334 = vset.pattern.permute.xlu0 0
    %335 = vperm.xlu0 %334, %v269
    %v336 = vpop.permute.xlu0 %335
    %339 = vset.pattern.permute.xlu0 0
    %340 = vperm.xlu0 %339, %v270
    %v341 = vpop.permute.xlu0 %340
    %344 = vset.pattern.permute.xlu0 0
    %345 = vperm.xlu0 %344, %v271
    %v346 = vpop.permute.xlu0 %345
    %349 = vset.pattern.permute.xlu0 0
    %350 = vperm.xlu0 %349, %v272
    %v351 = vpop.permute.xlu0 %350
    %354 = vset.pattern.permute.xlu0 0
    %355 = vperm.xlu0 %354, %v273
    %v356 = vpop.permute.xlu0 %355
    %359 = vset.pattern.permute.xlu0 0
    %360 = vperm.xlu0 %359, %v274
    %v361 = vpop.permute.xlu0 %360
    %364 = vset.pattern.permute.xlu0 0
    %365 = vperm.xlu0 %364, %v275
    %v366 = vpop.permute.xlu0 %365
    %369 = vset.pattern.permute.xlu0 0
    %370 = vperm.xlu0 %369, %v276
    %v371 = vpop.permute.xlu0 %370
    %374 = vset.pattern.permute.xlu0 0
    %375 = vperm.xlu0 %374, %v277
    %v376 = vpop.permute.xlu0 %375
    %379 = vset.pattern.permute.xlu0 0
    %380 = vperm.xlu0 %379, %v278
    %v381 = vpop.permute.xlu0 %380
    %384 = vset.pattern.permute.xlu0 0
    %385 = vperm.xlu0 %384, %v279
    %v386 = vpop.permute.xlu0 %385
    %389 = vset.pattern.permute.xlu0 0
    %390 = vperm.xlu0 %389, %v280
    %v391 = vpop.permute.xlu0 %390
    %394 = vset.pattern.permute.xlu0 0
    %395 = vperm.xlu0 %394, %v281
    %v396 = vpop.permute.xlu0 %395
    %v398 = vperm.slane %v282, 0
    %v399 = vmul.f32 %v286, %v398
    %v400 = vmul.f32 %v291, %v398
    %v401 = vmul.f32 %v296, %v398
    %v402 = vmul.f32 %v301, %v398
    %v403 = vmul.f32 %v306, %v398
    %v404 = vmul.f32 %v311, %v398
    %v405 = vmul.f32 %v316, %v398
    %v406 = vmul.f32 %v321, %v398
    %v407 = vmul.f32 %v326, %v398
    %v408 = vmul.f32 %v331, %v398
    %v409 = vmul.f32 %v336, %v398
    %v410 = vmul.f32 %v341, %v398
    %v411 = vmul.f32 %v346, %v398
    %v412 = vmul.f32 %v351, %v398
    %v413 = vmul.f32 %v356, %v398
    %v414 = vmul.f32 %v361, %v398
    %v415 = vmul.f32 %v366, %v398
    %v416 = vmul.f32 %v371, %v398
    %v417 = vmul.f32 %v376, %v398
    %v418 = vmul.f32 %v381, %v398
    %v419 = vmul.f32 %v386, %v398
    %v420 = vmul.f32 %v391, %v398
    %v421 = vmul.f32 %v396, %v398
    %v422 = vadd.f32 %v236, %v399
    %v423 = vadd.f32 %v237, %v400
    %v424 = vadd.f32 %v238, %v401
    %v425 = vadd.f32 %v239, %v402
    %v426 = vadd.f32 %v240, %v403
    %v427 = vadd.f32 %v241, %v404
    %v428 = vadd.f32 %v242, %v405
    %v429 = vadd.f32 %v243, %v406
    %v430 = vadd.f32 %v244, %v407
    %v431 = vadd.f32 %v245, %v408
    %v432 = vadd.f32 %v246, %v409
    %v433 = vadd.f32 %v247, %v410
    %v434 = vadd.f32 %v248, %v411
    %v435 = vadd.f32 %v249, %v412
    %v436 = vadd.f32 %v250, %v413
    %v437 = vadd.f32 %v251, %v414
    %v438 = vadd.f32 %v252, %v415
    %v439 = vadd.f32 %v253, %v416
    %v440 = vadd.f32 %v254, %v417
    %v441 = vadd.f32 %v255, %v418
    %v442 = vadd.f32 %v256, %v419
    %v443 = vadd.f32 %v257, %v420
    %v444 = vadd.f32 %v258, %v421
    %v445 = vld [vmem:[%s0 + $0x2] sm:$0xff]
    %v446 = vld [vmem:[%s0 + $0xa] sm:$0xff]
    %v447 = vld [vmem:[%s0 + $0x12] sm:$0xff]
    %v448 = vld [vmem:[%s0 + $0x1a] sm:$0xff]
    %v449 = vld [vmem:[%s0 + $0x22] sm:$0xff]
    %v450 = vld [vmem:[%s0 + $0x2a] sm:$0xff]
    %v451 = vld [vmem:[%s0 + $0x32] sm:$0xff]
    %v452 = vld [vmem:[%s0 + $0x3a] sm:$0xff]
    %v453 = vld [vmem:[%s0 + $0x42] sm:$0xff]
    %v454 = vld [vmem:[%s0 + $0x4a] sm:$0xff]
    %v455 = vld [vmem:[%s0 + $0x52] sm:$0xff]
    %v456 = vld [vmem:[%s0 + $0x5a] sm:$0xff]
    %v457 = vld [vmem:[%s0 + $0x62] sm:$0xff]
    %v458 = vld [vmem:[%s0 + $0x6a] sm:$0xff]
    %v459 = vld [vmem:[%s0 + $0x72] sm:$0xff]
    %v460 = vld [vmem:[%s0 + $0x7a] sm:$0xff]
    %v461 = vld [vmem:[%s0 + $0x82] sm:$0xff]
    %v462 = vld [vmem:[%s0 + $0x8a] sm:$0xff]
    %v463 = vld [vmem:[%s0 + $0x92] sm:$0xff]
    %v464 = vld [vmem:[%s0 + $0x9a] sm:$0xff]
    %v465 = vld [vmem:[%s0 + $0xa2] sm:$0xff]
    %v466 = vld [vmem:[%s0 + $0xaa] sm:$0xff]
    %v467 = vld [vmem:[%s0 + $0xb2] sm:$0x3]
    %v468 = vld [vmem:[%s1 + $0x2] sm:$0x1]
    %470 = vset.pattern.permute.xlu0 0
    %471 = vperm.xlu0 %470, %v445
    %v472 = vpop.permute.xlu0 %471
    %475 = vset.pattern.permute.xlu0 0
    %476 = vperm.xlu0 %475, %v446
    %v477 = vpop.permute.xlu0 %476
    %480 = vset.pattern.permute.xlu0 0
    %481 = vperm.xlu0 %480, %v447
    %v482 = vpop.permute.xlu0 %481
    %485 = vset.pattern.permute.xlu0 0
    %486 = vperm.xlu0 %485, %v448
    %v487 = vpop.permute.xlu0 %486
    %490 = vset.pattern.permute.xlu0 0
    %491 = vperm.xlu0 %490, %v449
    %v492 = vpop.permute.xlu0 %491
    %495 = vset.pattern.permute.xlu0 0
    %496 = vperm.xlu0 %495, %v450
    %v497 = vpop.permute.xlu0 %496
    %500 = vset.pattern.permute.xlu0 0
    %501 = vperm.xlu0 %500, %v451
    %v502 = vpop.permute.xlu0 %501
    %505 = vset.pattern.permute.xlu0 0
    %506 = vperm.xlu0 %505, %v452
    %v507 = vpop.permute.xlu0 %506
    %510 = vset.pattern.permute.xlu0 0
    %511 = vperm.xlu0 %510, %v453
    %v512 = vpop.permute.xlu0 %511
    %515 = vset.pattern.permute.xlu0 0
    %516 = vperm.xlu0 %515, %v454
    %v517 = vpop.permute.xlu0 %516
    %520 = vset.pattern.permute.xlu0 0
    %521 = vperm.xlu0 %520, %v455
    %v522 = vpop.permute.xlu0 %521
    %525 = vset.pattern.permute.xlu0 0
    %526 = vperm.xlu0 %525, %v456
    %v527 = vpop.permute.xlu0 %526
    %530 = vset.pattern.permute.xlu0 0
    %531 = vperm.xlu0 %530, %v457
    %v532 = vpop.permute.xlu0 %531
    %535 = vset.pattern.permute.xlu0 0
    %536 = vperm.xlu0 %535, %v458
    %v537 = vpop.permute.xlu0 %536
    %540 = vset.pattern.permute.xlu0 0
    %541 = vperm.xlu0 %540, %v459
    %v542 = vpop.permute.xlu0 %541
    %545 = vset.pattern.permute.xlu0 0
    %546 = vperm.xlu0 %545, %v460
    %v547 = vpop.permute.xlu0 %546
    %550 = vset.pattern.permute.xlu0 0
    %551 = vperm.xlu0 %550, %v461
    %v552 = vpop.permute.xlu0 %551
    %555 = vset.pattern.permute.xlu0 0
    %556 = vperm.xlu0 %555, %v462
    %v557 = vpop.permute.xlu0 %556
    %560 = vset.pattern.permute.xlu0 0
    %561 = vperm.xlu0 %560, %v463
    %v562 = vpop.permute.xlu0 %561
    %565 = vset.pattern.permute.xlu0 0
    %566 = vperm.xlu0 %565, %v464
    %v567 = vpop.permute.xlu0 %566
    %570 = vset.pattern.permute.xlu0 0
    %571 = vperm.xlu0 %570, %v465
    %v572 = vpop.permute.xlu0 %571
    %575 = vset.pattern.permute.xlu0 0
    %576 = vperm.xlu0 %575, %v466
    %v577 = vpop.permute.xlu0 %576
    %580 = vset.pattern.permute.xlu0 0
    %581 = vperm.xlu0 %580, %v467
    %v582 = vpop.permute.xlu0 %581
    %v584 = vperm.slane %v468, 0
    %v585 = vmul.f32 %v472, %v584
    %v586 = vmul.f32 %v477, %v584
    %v587 = vmul.f32 %v482, %v584
    %v588 = vmul.f32 %v487, %v584
    %v589 = vmul.f32 %v492, %v584
    %v590 = vmul.f32 %v497, %v584
    %v591 = vmul.f32 %v502, %v584
    %v592 = vmul.f32 %v507, %v584
    %v593 = vmul.f32 %v512, %v584
    %v594 = vmul.f32 %v517, %v584
    %v595 = vmul.f32 %v522, %v584
    %v596 = vmul.f32 %v527, %v584
    %v597 = vmul.f32 %v532, %v584
    %v598 = vmul.f32 %v537, %v584
    %v599 = vmul.f32 %v542, %v584
    %v600 = vmul.f32 %v547, %v584
    %v601 = vmul.f32 %v552, %v584
    %v602 = vmul.f32 %v557, %v584
    %v603 = vmul.f32 %v562, %v584
    %v604 = vmul.f32 %v567, %v584
    %v605 = vmul.f32 %v572, %v584
    %v606 = vmul.f32 %v577, %v584
    %v607 = vmul.f32 %v582, %v584
    %v608 = vadd.f32 %v422, %v585
    %v609 = vadd.f32 %v423, %v586
    %v610 = vadd.f32 %v424, %v587
    %v611 = vadd.f32 %v425, %v588
    %v612 = vadd.f32 %v426, %v589
    %v613 = vadd.f32 %v427, %v590
    %v614 = vadd.f32 %v428, %v591
    %v615 = vadd.f32 %v429, %v592
    %v616 = vadd.f32 %v430, %v593
    %v617 = vadd.f32 %v431, %v594
    %v618 = vadd.f32 %v432, %v595
    %v619 = vadd.f32 %v433, %v596
    %v620 = vadd.f32 %v434, %v597
    %v621 = vadd.f32 %v435, %v598
    %v622 = vadd.f32 %v436, %v599
    %v623 = vadd.f32 %v437, %v600
    %v624 = vadd.f32 %v438, %v601
    %v625 = vadd.f32 %v439, %v602
    %v626 = vadd.f32 %v440, %v603
    %v627 = vadd.f32 %v441, %v604
    %v628 = vadd.f32 %v442, %v605
    %v629 = vadd.f32 %v443, %v606
    %v630 = vadd.f32 %v444, %v607
    %v631 = vld [vmem:[%s0 + $0xa] sm:$0xff]
    %v632 = vld [vmem:[%s0 + $0x12] sm:$0xff]
    %v633 = vld [vmem:[%s0 + $0x1a] sm:$0xff]
    %v634 = vld [vmem:[%s0 + $0x22] sm:$0xff]
    %v635 = vld [vmem:[%s0 + $0x2a] sm:$0xff]
    %v636 = vld [vmem:[%s0 + $0x32] sm:$0xff]
    %v637 = vld [vmem:[%s0 + $0x3a] sm:$0xff]
    %v638 = vld [vmem:[%s0 + $0x42] sm:$0xff]
    %v639 = vld [vmem:[%s0 + $0x4a] sm:$0xff]
    %v640 = vld [vmem:[%s0 + $0x52] sm:$0xff]
    %v641 = vld [vmem:[%s0 + $0x5a] sm:$0xff]
    %v642 = vld [vmem:[%s0 + $0x62] sm:$0xff]
    %v643 = vld [vmem:[%s0 + $0x6a] sm:$0xff]
    %v644 = vld [vmem:[%s0 + $0x72] sm:$0xff]
    %v645 = vld [vmem:[%s0 + $0x7a] sm:$0xff]
    %v646 = vld [vmem:[%s0 + $0x82] sm:$0xff]
    %v647 = vld [vmem:[%s0 + $0x8a] sm:$0xff]
    %v648 = vld [vmem:[%s0 + $0x92] sm:$0xff]
    %v649 = vld [vmem:[%s0 + $0x9a] sm:$0xff]
    %v650 = vld [vmem:[%s0 + $0xa2] sm:$0xff]
    %v651 = vld [vmem:[%s0 + $0xaa] sm:$0xff]
    %v652 = vld [vmem:[%s0 + $0xb2] sm:$0xff]
    %v653 = vld [vmem:[%s0 + $0xba] sm:$0x3]
    %v654 = vld [vmem:[%s1 + $0x3] sm:$0x1]
    %656 = vset.pattern.permute.xlu0 0
    %657 = vperm.xlu0 %656, %v631
    %v658 = vpop.permute.xlu0 %657
    %661 = vset.pattern.permute.xlu0 0
    %662 = vperm.xlu0 %661, %v632
    %v663 = vpop.permute.xlu0 %662
    %666 = vset.pattern.permute.xlu0 0
    %667 = vperm.xlu0 %666, %v633
    %v668 = vpop.permute.xlu0 %667
    %671 = vset.pattern.permute.xlu0 0
    %672 = vperm.xlu0 %671, %v634
    %v673 = vpop.permute.xlu0 %672
    %676 = vset.pattern.permute.xlu0 0
    %677 = vperm.xlu0 %676, %v635
    %v678 = vpop.permute.xlu0 %677
    %681 = vset.pattern.permute.xlu0 0
    %682 = vperm.xlu0 %681, %v636
    %v683 = vpop.permute.xlu0 %682
    %686 = vset.pattern.permute.xlu0 0
    %687 = vperm.xlu0 %686, %v637
    %v688 = vpop.permute.xlu0 %687
    %691 = vset.pattern.permute.xlu0 0
    %692 = vperm.xlu0 %691, %v638
    %v693 = vpop.permute.xlu0 %692
    %696 = vset.pattern.permute.xlu0 0
    %697 = vperm.xlu0 %696, %v639
    %v698 = vpop.permute.xlu0 %697
    %701 = vset.pattern.permute.xlu0 0
    %702 = vperm.xlu0 %701, %v640
    %v703 = vpop.permute.xlu0 %702
    %706 = vset.pattern.permute.xlu0 0
    %707 = vperm.xlu0 %706, %v641
    %v708 = vpop.permute.xlu0 %707
    %711 = vset.pattern.permute.xlu0 0
    %712 = vperm.xlu0 %711, %v642
    %v713 = vpop.permute.xlu0 %712
    %716 = vset.pattern.permute.xlu0 0
    %717 = vperm.xlu0 %716, %v643
    %v718 = vpop.permute.xlu0 %717
    %721 = vset.pattern.permute.xlu0 0
    %722 = vperm.xlu0 %721, %v644
    %v723 = vpop.permute.xlu0 %722
    %726 = vset.pattern.permute.xlu0 0
    %727 = vperm.xlu0 %726, %v645
    %v728 = vpop.permute.xlu0 %727
    %731 = vset.pattern.permute.xlu0 0
    %732 = vperm.xlu0 %731, %v646
    %v733 = vpop.permute.xlu0 %732
    %736 = vset.pattern.permute.xlu0 0
    %737 = vperm.xlu0 %736, %v647
    %v738 = vpop.permute.xlu0 %737
    %741 = vset.pattern.permute.xlu0 0
    %742 = vperm.xlu0 %741, %v648
    %v743 = vpop.permute.xlu0 %742
    %746 = vset.pattern.permute.xlu0 0
    %747 = vperm.xlu0 %746, %v649
    %v748 = vpop.permute.xlu0 %747
    %751 = vset.pattern.permute.xlu0 0
    %752 = vperm.xlu0 %751, %v650
    %v753 = vpop.permute.xlu0 %752
    %756 = vset.pattern.permute.xlu0 0
    %757 = vperm.xlu0 %756, %v651
    %v758 = vpop.permute.xlu0 %757
    %761 = vset.pattern.permute.xlu0 0
    %762 = vperm.xlu0 %761, %v652
    %v763 = vpop.permute.xlu0 %762
    %766 = vset.pattern.permute.xlu0 0
    %767 = vperm.xlu0 %766, %v653
    %v768 = vpop.permute.xlu0 %767
    %v770 = vperm.slane %v654, 0
    %v771 = vmul.f32 %v658, %v770
    %v772 = vmul.f32 %v663, %v770
    %v773 = vmul.f32 %v668, %v770
    %v774 = vmul.f32 %v673, %v770
    %v775 = vmul.f32 %v678, %v770
    %v776 = vmul.f32 %v683, %v770
    %v777 = vmul.f32 %v688, %v770
    %v778 = vmul.f32 %v693, %v770
    %v779 = vmul.f32 %v698, %v770
    %v780 = vmul.f32 %v703, %v770
    %v781 = vmul.f32 %v708, %v770
    %v782 = vmul.f32 %v713, %v770
    %v783 = vmul.f32 %v718, %v770
    %v784 = vmul.f32 %v723, %v770
    %v785 = vmul.f32 %v728, %v770
    %v786 = vmul.f32 %v733, %v770
    %v787 = vmul.f32 %v738, %v770
    %v788 = vmul.f32 %v743, %v770
    %v789 = vmul.f32 %v748, %v770
    %v790 = vmul.f32 %v753, %v770
    %v791 = vmul.f32 %v758, %v770
    %v792 = vmul.f32 %v763, %v770
    %v793 = vmul.f32 %v768, %v770
    %v794 = vadd.f32 %v608, %v771
    %v795 = vadd.f32 %v609, %v772
    %v796 = vadd.f32 %v610, %v773
    %v797 = vadd.f32 %v611, %v774
    %v798 = vadd.f32 %v612, %v775
    %v799 = vadd.f32 %v613, %v776
    %v800 = vadd.f32 %v614, %v777
    %v801 = vadd.f32 %v615, %v778
    %v802 = vadd.f32 %v616, %v779
    %v803 = vadd.f32 %v617, %v780
    %v804 = vadd.f32 %v618, %v781
    %v805 = vadd.f32 %v619, %v782
    %v806 = vadd.f32 %v620, %v783
    %v807 = vadd.f32 %v621, %v784
    %v808 = vadd.f32 %v622, %v785
    %v809 = vadd.f32 %v623, %v786
    %v810 = vadd.f32 %v624, %v787
    %v811 = vadd.f32 %v625, %v788
    %v812 = vadd.f32 %v626, %v789
    %v813 = vadd.f32 %v627, %v790
    %v814 = vadd.f32 %v628, %v791
    %v815 = vadd.f32 %v629, %v792
    %v816 = vadd.f32 %v630, %v793
    %v817 = vld [vmem:[%s0 + $0xb] sm:$0xff]
    %v818 = vld [vmem:[%s0 + $0x13] sm:$0xff]
    %v819 = vld [vmem:[%s0 + $0x1b] sm:$0xff]
    %v820 = vld [vmem:[%s0 + $0x23] sm:$0xff]
    %v821 = vld [vmem:[%s0 + $0x2b] sm:$0xff]
    %v822 = vld [vmem:[%s0 + $0x33] sm:$0xff]
    %v823 = vld [vmem:[%s0 + $0x3b] sm:$0xff]
    %v824 = vld [vmem:[%s0 + $0x43] sm:$0xff]
    %v825 = vld [vmem:[%s0 + $0x4b] sm:$0xff]
    %v826 = vld [vmem:[%s0 + $0x53] sm:$0xff]
    %v827 = vld [vmem:[%s0 + $0x5b] sm:$0xff]
    %v828 = vld [vmem:[%s0 + $0x63] sm:$0xff]
    %v829 = vld [vmem:[%s0 + $0x6b] sm:$0xff]
    %v830 = vld [vmem:[%s0 + $0x73] sm:$0xff]
    %v831 = vld [vmem:[%s0 + $0x7b] sm:$0xff]
    %v832 = vld [vmem:[%s0 + $0x83] sm:$0xff]
    %v833 = vld [vmem:[%s0 + $0x8b] sm:$0xff]
    %v834 = vld [vmem:[%s0 + $0x93] sm:$0xff]
    %v835 = vld [vmem:[%s0 + $0x9b] sm:$0xff]
    %v836 = vld [vmem:[%s0 + $0xa3] sm:$0xff]
    %v837 = vld [vmem:[%s0 + $0xab] sm:$0xff]
    %v838 = vld [vmem:[%s0 + $0xb3] sm:$0xff]
    %v839 = vld [vmem:[%s0 + $0xbb] sm:$0x3]
    %v840 = vld [vmem:[%s1 + $0x4] sm:$0x1]
    %842 = vset.pattern.permute.xlu0 0
    %843 = vperm.xlu0 %842, %v817
    %v844 = vpop.permute.xlu0 %843
    %847 = vset.pattern.permute.xlu0 0
    %848 = vperm.xlu0 %847, %v818
    %v849 = vpop.permute.xlu0 %848
    %852 = vset.pattern.permute.xlu0 0
    %853 = vperm.xlu0 %852, %v819
    %v854 = vpop.permute.xlu0 %853
    %857 = vset.pattern.permute.xlu0 0
    %858 = vperm.xlu0 %857, %v820
    %v859 = vpop.permute.xlu0 %858
    %862 = vset.pattern.permute.xlu0 0
    %863 = vperm.xlu0 %862, %v821
    %v864 = vpop.permute.xlu0 %863
    %867 = vset.pattern.permute.xlu0 0
    %868 = vperm.xlu0 %867, %v822
    %v869 = vpop.permute.xlu0 %868
    %872 = vset.pattern.permute.xlu0 0
    %873 = vperm.xlu0 %872, %v823
    %v874 = vpop.permute.xlu0 %873
    %877 = vset.pattern.permute.xlu0 0
    %878 = vperm.xlu0 %877, %v824
    %v879 = vpop.permute.xlu0 %878
    %882 = vset.pattern.permute.xlu0 0
    %883 = vperm.xlu0 %882, %v825
    %v884 = vpop.permute.xlu0 %883
    %887 = vset.pattern.permute.xlu0 0
    %888 = vperm.xlu0 %887, %v826
    %v889 = vpop.permute.xlu0 %888
    %892 = vset.pattern.permute.xlu0 0
    %893 = vperm.xlu0 %892, %v827
    %v894 = vpop.permute.xlu0 %893
    %897 = vset.pattern.permute.xlu0 0
    %898 = vperm.xlu0 %897, %v828
    %v899 = vpop.permute.xlu0 %898
    %902 = vset.pattern.permute.xlu0 0
    %903 = vperm.xlu0 %902, %v829
    %v904 = vpop.permute.xlu0 %903
    %907 = vset.pattern.permute.xlu0 0
    %908 = vperm.xlu0 %907, %v830
    %v909 = vpop.permute.xlu0 %908
    %912 = vset.pattern.permute.xlu0 0
    %913 = vperm.xlu0 %912, %v831
    %v914 = vpop.permute.xlu0 %913
    %917 = vset.pattern.permute.xlu0 0
    %918 = vperm.xlu0 %917, %v832
    %v919 = vpop.permute.xlu0 %918
    %922 = vset.pattern.permute.xlu0 0
    %923 = vperm.xlu0 %922, %v833
    %v924 = vpop.permute.xlu0 %923
    %927 = vset.pattern.permute.xlu0 0
    %928 = vperm.xlu0 %927, %v834
    %v929 = vpop.permute.xlu0 %928
    %932 = vset.pattern.permute.xlu0 0
    %933 = vperm.xlu0 %932, %v835
    %v934 = vpop.permute.xlu0 %933
    %937 = vset.pattern.permute.xlu0 0
    %938 = vperm.xlu0 %937, %v836
    %v939 = vpop.permute.xlu0 %938
    %942 = vset.pattern.permute.xlu0 0
    %943 = vperm.xlu0 %942, %v837
    %v944 = vpop.permute.xlu0 %943
    %947 = vset.pattern.permute.xlu0 0
    %948 = vperm.xlu0 %947, %v838
    %v949 = vpop.permute.xlu0 %948
    %952 = vset.pattern.permute.xlu0 0
    %953 = vperm.xlu0 %952, %v839
    %v954 = vpop.permute.xlu0 %953
    %v956 = vperm.slane %v840, 0
    %v957 = vmul.f32 %v844, %v956
    %v958 = vmul.f32 %v849, %v956
    %v959 = vmul.f32 %v854, %v956
    %v960 = vmul.f32 %v859, %v956
    %v961 = vmul.f32 %v864, %v956
    %v962 = vmul.f32 %v869, %v956
    %v963 = vmul.f32 %v874, %v956
    %v964 = vmul.f32 %v879, %v956
    %v965 = vmul.f32 %v884, %v956
    %v966 = vmul.f32 %v889, %v956
    %v967 = vmul.f32 %v894, %v956
    %v968 = vmul.f32 %v899, %v956
    %v969 = vmul.f32 %v904, %v956
    %v970 = vmul.f32 %v909, %v956
    %v971 = vmul.f32 %v914, %v956
    %v972 = vmul.f32 %v919, %v956
    %v973 = vmul.f32 %v924, %v956
    %v974 = vmul.f32 %v929, %v956
    %v975 = vmul.f32 %v934, %v956
    %v976 = vmul.f32 %v939, %v956
    %v977 = vmul.f32 %v944, %v956
    %v978 = vmul.f32 %v949, %v956
    %v979 = vmul.f32 %v954, %v956
    %v980 = vadd.f32 %v794, %v957
    %v981 = vadd.f32 %v795, %v958
    %v982 = vadd.f32 %v796, %v959
    %v983 = vadd.f32 %v797, %v960
    %v984 = vadd.f32 %v798, %v961
    %v985 = vadd.f32 %v799, %v962
    %v986 = vadd.f32 %v800, %v963
    %v987 = vadd.f32 %v801, %v964
    %v988 = vadd.f32 %v802, %v965
    %v989 = vadd.f32 %v803, %v966
    %v990 = vadd.f32 %v804, %v967
    %v991 = vadd.f32 %v805, %v968
    %v992 = vadd.f32 %v806, %v969
    %v993 = vadd.f32 %v807, %v970
    %v994 = vadd.f32 %v808, %v971
    %v995 = vadd.f32 %v809, %v972
    %v996 = vadd.f32 %v810, %v973
    %v997 = vadd.f32 %v811, %v974
    %v998 = vadd.f32 %v812, %v975
    %v999 = vadd.f32 %v813, %v976
    %v1000 = vadd.f32 %v814, %v977
    %v1001 = vadd.f32 %v815, %v978
    %v1002 = vadd.f32 %v816, %v979
    %v1003 = vld [vmem:[%s0 + $0xc] sm:$0xff]
    %v1004 = vld [vmem:[%s0 + $0x14] sm:$0xff]
    %v1005 = vld [vmem:[%s0 + $0x1c] sm:$0xff]
    %v1006 = vld [vmem:[%s0 + $0x24] sm:$0xff]
    %v1007 = vld [vmem:[%s0 + $0x2c] sm:$0xff]
    %v1008 = vld [vmem:[%s0 + $0x34] sm:$0xff]
    %v1009 = vld [vmem:[%s0 + $0x3c] sm:$0xff]
    %v1010 = vld [vmem:[%s0 + $0x44] sm:$0xff]
    %v1011 = vld [vmem:[%s0 + $0x4c] sm:$0xff]
    %v1012 = vld [vmem:[%s0 + $0x54] sm:$0xff]
    %v1013 = vld [vmem:[%s0 + $0x5c] sm:$0xff]
    %v1014 = vld [vmem:[%s0 + $0x64] sm:$0xff]
    %v1015 = vld [vmem:[%s0 + $0x6c] sm:$0xff]
    %v1016 = vld [vmem:[%s0 + $0x74] sm:$0xff]
    %v1017 = vld [vmem:[%s0 + $0x7c] sm:$0xff]
    %v1018 = vld [vmem:[%s0 + $0x84] sm:$0xff]
    %v1019 = vld [vmem:[%s0 + $0x8c] sm:$0xff]
    %v1020 = vld [vmem:[%s0 + $0x94] sm:$0xff]
    %v1021 = vld [vmem:[%s0 + $0x9c] sm:$0xff]
    %v1022 = vld [vmem:[%s0 + $0xa4] sm:$0xff]
    %v1023 = vld [vmem:[%s0 + $0xac] sm:$0xff]
    %v1024 = vld [vmem:[%s0 + $0xb4] sm:$0xff]
    %v1025 = vld [vmem:[%s0 + $0xbc] sm:$0x3]
    %v1026 = vld [vmem:[%s1 + $0x5] sm:$0x1]
    %1028 = vset.pattern.permute.xlu0 0
    %1029 = vperm.xlu0 %1028, %v1003
    %v1030 = vpop.permute.xlu0 %1029
    %1033 = vset.pattern.permute.xlu0 0
    %1034 = vperm.xlu0 %1033, %v1004
    %v1035 = vpop.permute.xlu0 %1034
    %1038 = vset.pattern.permute.xlu0 0
    %1039 = vperm.xlu0 %1038, %v1005
    %v1040 = vpop.permute.xlu0 %1039
    %1043 = vset.pattern.permute.xlu0 0
    %1044 = vperm.xlu0 %1043, %v1006
    %v1045 = vpop.permute.xlu0 %1044
    %1048 = vset.pattern.permute.xlu0 0
    %1049 = vperm.xlu0 %1048, %v1007
    %v1050 = vpop.permute.xlu0 %1049
    %1053 = vset.pattern.permute.xlu0 0
    %1054 = vperm.xlu0 %1053, %v1008
    %v1055 = vpop.permute.xlu0 %1054
    %1058 = vset.pattern.permute.xlu0 0
    %1059 = vperm.xlu0 %1058, %v1009
    %v1060 = vpop.permute.xlu0 %1059
    %1063 = vset.pattern.permute.xlu0 0
    %1064 = vperm.xlu0 %1063, %v1010
    %v1065 = vpop.permute.xlu0 %1064
    %1068 = vset.pattern.permute.xlu0 0
    %1069 = vperm.xlu0 %1068, %v1011
    %v1070 = vpop.permute.xlu0 %1069
    %1073 = vset.pattern.permute.xlu0 0
    %1074 = vperm.xlu0 %1073, %v1012
    %v1075 = vpop.permute.xlu0 %1074
    %1078 = vset.pattern.permute.xlu0 0
    %1079 = vperm.xlu0 %1078, %v1013
    %v1080 = vpop.permute.xlu0 %1079
    %1083 = vset.pattern.permute.xlu0 0
    %1084 = vperm.xlu0 %1083, %v1014
    %v1085 = vpop.permute.xlu0 %1084
    %1088 = vset.pattern.permute.xlu0 0
    %1089 = vperm.xlu0 %1088, %v1015
    %v1090 = vpop.permute.xlu0 %1089
    %1093 = vset.pattern.permute.xlu0 0
    %1094 = vperm.xlu0 %1093, %v1016
    %v1095 = vpop.permute.xlu0 %1094
    %1098 = vset.pattern.permute.xlu0 0
    %1099 = vperm.xlu0 %1098, %v1017
    %v1100 = vpop.permute.xlu0 %1099
    %1103 = vset.pattern.permute.xlu0 0
    %1104 = vperm.xlu0 %1103, %v1018
    %v1105 = vpop.permute.xlu0 %1104
    %1108 = vset.pattern.permute.xlu0 0
    %1109 = vperm.xlu0 %1108, %v1019
    %v1110 = vpop.permute.xlu0 %1109
    %1113 = vset.pattern.permute.xlu0 0
    %1114 = vperm.xlu0 %1113, %v1020
    %v1115 = vpop.permute.xlu0 %1114
    %1118 = vset.pattern.permute.xlu0 0
    %1119 = vperm.xlu0 %1118, %v1021
    %v1120 = vpop.permute.xlu0 %1119
    %1123 = vset.pattern.permute.xlu0 0
    %1124 = vperm.xlu0 %1123, %v1022
    %v1125 = vpop.permute.xlu0 %1124
    %1128 = vset.pattern.permute.xlu0 0
    %1129 = vperm.xlu0 %1128, %v1023
    %v1130 = vpop.permute.xlu0 %1129
    %1133 = vset.pattern.permute.xlu0 0
    %1134 = vperm.xlu0 %1133, %v1024
    %v1135 = vpop.permute.xlu0 %1134
    %1138 = vset.pattern.permute.xlu0 0
    %1139 = vperm.xlu0 %1138, %v1025
    %v1140 = vpop.permute.xlu0 %1139
    %v1142 = vperm.slane %v1026, 0
    %v1143 = vmul.f32 %v1030, %v1142
    %v1144 = vmul.f32 %v1035, %v1142
    %v1145 = vmul.f32 %v1040, %v1142
    %v1146 = vmul.f32 %v1045, %v1142
    %v1147 = vmul.f32 %v1050, %v1142
    %v1148 = vmul.f32 %v1055, %v1142
    %v1149 = vmul.f32 %v1060, %v1142
    %v1150 = vmul.f32 %v1065, %v1142
    %v1151 = vmul.f32 %v1070, %v1142
    %v1152 = vmul.f32 %v1075, %v1142
    %v1153 = vmul.f32 %v1080, %v1142
    %v1154 = vmul.f32 %v1085, %v1142
    %v1155 = vmul.f32 %v1090, %v1142
    %v1156 = vmul.f32 %v1095, %v1142
    %v1157 = vmul.f32 %v1100, %v1142
    %v1158 = vmul.f32 %v1105, %v1142
    %v1159 = vmul.f32 %v1110, %v1142
    %v1160 = vmul.f32 %v1115, %v1142
    %v1161 = vmul.f32 %v1120, %v1142
    %v1162 = vmul.f32 %v1125, %v1142
    %v1163 = vmul.f32 %v1130, %v1142
    %v1164 = vmul.f32 %v1135, %v1142
    %v1165 = vmul.f32 %v1140, %v1142
    %v1166 = vadd.f32 %v980, %v1143
    %v1167 = vadd.f32 %v981, %v1144
    %v1168 = vadd.f32 %v982, %v1145
    %v1169 = vadd.f32 %v983, %v1146
    %v1170 = vadd.f32 %v984, %v1147
    %v1171 = vadd.f32 %v985, %v1148
    %v1172 = vadd.f32 %v986, %v1149
    %v1173 = vadd.f32 %v987, %v1150
    %v1174 = vadd.f32 %v988, %v1151
    %v1175 = vadd.f32 %v989, %v1152
    %v1176 = vadd.f32 %v990, %v1153
    %v1177 = vadd.f32 %v991, %v1154
    %v1178 = vadd.f32 %v992, %v1155
    %v1179 = vadd.f32 %v993, %v1156
    %v1180 = vadd.f32 %v994, %v1157
    %v1181 = vadd.f32 %v995, %v1158
    %v1182 = vadd.f32 %v996, %v1159
    %v1183 = vadd.f32 %v997, %v1160
    %v1184 = vadd.f32 %v998, %v1161
    %v1185 = vadd.f32 %v999, %v1162
    %v1186 = vadd.f32 %v1000, %v1163
    %v1187 = vadd.f32 %v1001, %v1164
    %v1188 = vadd.f32 %v1002, %v1165
    %v1189 = vld [vmem:[%s0 + $0x14] sm:$0xff]
    %v1190 = vld [vmem:[%s0 + $0x1c] sm:$0xff]
    %v1191 = vld [vmem:[%s0 + $0x24] sm:$0xff]
    %v1192 = vld [vmem:[%s0 + $0x2c] sm:$0xff]
    %v1193 = vld [vmem:[%s0 + $0x34] sm:$0xff]
    %v1194 = vld [vmem:[%s0 + $0x3c] sm:$0xff]
    %v1195 = vld [vmem:[%s0 + $0x44] sm:$0xff]
    %v1196 = vld [vmem:[%s0 + $0x4c] sm:$0xff]
    %v1197 = vld [vmem:[%s0 + $0x54] sm:$0xff]
    %v1198 = vld [vmem:[%s0 + $0x5c] sm:$0xff]
    %v1199 = vld [vmem:[%s0 + $0x64] sm:$0xff]
    %v1200 = vld [vmem:[%s0 + $0x6c] sm:$0xff]
    %v1201 = vld [vmem:[%s0 + $0x74] sm:$0xff]
    %v1202 = vld [vmem:[%s0 + $0x7c] sm:$0xff]
    %v1203 = vld [vmem:[%s0 + $0x84] sm:$0xff]
    %v1204 = vld [vmem:[%s0 + $0x8c] sm:$0xff]
    %v1205 = vld [vmem:[%s0 + $0x94] sm:$0xff]
    %v1206 = vld [vmem:[%s0 + $0x9c] sm:$0xff]
    %v1207 = vld [vmem:[%s0 + $0xa4] sm:$0xff]
    %v1208 = vld [vmem:[%s0 + $0xac] sm:$0xff]
    %v1209 = vld [vmem:[%s0 + $0xb4] sm:$0xff]
    %v1210 = vld [vmem:[%s0 + $0xbc] sm:$0xff]
    %v1211 = vld [vmem:[%s0 + $0xc4] sm:$0x3]
    %v1212 = vld [vmem:[%s1 + $0x6] sm:$0x1]
    %1214 = vset.pattern.permute.xlu0 0
    %1215 = vperm.xlu0 %1214, %v1189
    %v1216 = vpop.permute.xlu0 %1215
    %1219 = vset.pattern.permute.xlu0 0
    %1220 = vperm.xlu0 %1219, %v1190
    %v1221 = vpop.permute.xlu0 %1220
    %1224 = vset.pattern.permute.xlu0 0
    %1225 = vperm.xlu0 %1224, %v1191
    %v1226 = vpop.permute.xlu0 %1225
    %1229 = vset.pattern.permute.xlu0 0
    %1230 = vperm.xlu0 %1229, %v1192
    %v1231 = vpop.permute.xlu0 %1230
    %1234 = vset.pattern.permute.xlu0 0
    %1235 = vperm.xlu0 %1234, %v1193
    %v1236 = vpop.permute.xlu0 %1235
    %1239 = vset.pattern.permute.xlu0 0
    %1240 = vperm.xlu0 %1239, %v1194
    %v1241 = vpop.permute.xlu0 %1240
    %1244 = vset.pattern.permute.xlu0 0
    %1245 = vperm.xlu0 %1244, %v1195
    %v1246 = vpop.permute.xlu0 %1245
    %1249 = vset.pattern.permute.xlu0 0
    %1250 = vperm.xlu0 %1249, %v1196
    %v1251 = vpop.permute.xlu0 %1250
    %1254 = vset.pattern.permute.xlu0 0
    %1255 = vperm.xlu0 %1254, %v1197
    %v1256 = vpop.permute.xlu0 %1255
    %1259 = vset.pattern.permute.xlu0 0
    %1260 = vperm.xlu0 %1259, %v1198
    %v1261 = vpop.permute.xlu0 %1260
    %1264 = vset.pattern.permute.xlu0 0
    %1265 = vperm.xlu0 %1264, %v1199
    %v1266 = vpop.permute.xlu0 %1265
    %1269 = vset.pattern.permute.xlu0 0
    %1270 = vperm.xlu0 %1269, %v1200
    %v1271 = vpop.permute.xlu0 %1270
    %1274 = vset.pattern.permute.xlu0 0
    %1275 = vperm.xlu0 %1274, %v1201
    %v1276 = vpop.permute.xlu0 %1275
    %1279 = vset.pattern.permute.xlu0 0
    %1280 = vperm.xlu0 %1279, %v1202
    %v1281 = vpop.permute.xlu0 %1280
    %1284 = vset.pattern.permute.xlu0 0
    %1285 = vperm.xlu0 %1284, %v1203
    %v1286 = vpop.permute.xlu0 %1285
    %1289 = vset.pattern.permute.xlu0 0
    %1290 = vperm.xlu0 %1289, %v1204
    %v1291 = vpop.permute.xlu0 %1290
    %1294 = vset.pattern.permute.xlu0 0
    %1295 = vperm.xlu0 %1294, %v1205
    %v1296 = vpop.permute.xlu0 %1295
    %1299 = vset.pattern.permute.xlu0 0
    %1300 = vperm.xlu0 %1299, %v1206
    %v1301 = vpop.permute.xlu0 %1300
    %1304 = vset.pattern.permute.xlu0 0
    %1305 = vperm.xlu0 %1304, %v1207
    %v1306 = vpop.permute.xlu0 %1305
    %1309 = vset.pattern.permute.xlu0 0
    %1310 = vperm.xlu0 %1309, %v1208
    %v1311 = vpop.permute.xlu0 %1310
    %1314 = vset.pattern.permute.xlu0 0
    %1315 = vperm.xlu0 %1314, %v1209
    %v1316 = vpop.permute.xlu0 %1315
    %1319 = vset.pattern.permute.xlu0 0
    %1320 = vperm.xlu0 %1319, %v1210
    %v1321 = vpop.permute.xlu0 %1320
    %1324 = vset.pattern.permute.xlu0 0
    %1325 = vperm.xlu0 %1324, %v1211
    %v1326 = vpop.permute.xlu0 %1325
    %v1328 = vperm.slane %v1212, 0
    %v1329 = vmul.f32 %v1216, %v1328
    %v1330 = vmul.f32 %v1221, %v1328
    %v1331 = vmul.f32 %v1226, %v1328
    %v1332 = vmul.f32 %v1231, %v1328
    %v1333 = vmul.f32 %v1236, %v1328
    %v1334 = vmul.f32 %v1241, %v1328
    %v1335 = vmul.f32 %v1246, %v1328
    %v1336 = vmul.f32 %v1251, %v1328
    %v1337 = vmul.f32 %v1256, %v1328
    %v1338 = vmul.f32 %v1261, %v1328
    %v1339 = vmul.f32 %v1266, %v1328
    %v1340 = vmul.f32 %v1271, %v1328
    %v1341 = vmul.f32 %v1276, %v1328
    %v1342 = vmul.f32 %v1281, %v1328
    %v1343 = vmul.f32 %v1286, %v1328
    %v1344 = vmul.f32 %v1291, %v1328
    %v1345 = vmul.f32 %v1296, %v1328
    %v1346 = vmul.f32 %v1301, %v1328
    %v1347 = vmul.f32 %v1306, %v1328
    %v1348 = vmul.f32 %v1311, %v1328
    %v1349 = vmul.f32 %v1316, %v1328
    %v1350 = vmul.f32 %v1321, %v1328
    %v1351 = vmul.f32 %v1326, %v1328
    %v1352 = vadd.f32 %v1166, %v1329
    %v1353 = vadd.f32 %v1167, %v1330
    %v1354 = vadd.f32 %v1168, %v1331
    %v1355 = vadd.f32 %v1169, %v1332
    %v1356 = vadd.f32 %v1170, %v1333
    %v1357 = vadd.f32 %v1171, %v1334
    %v1358 = vadd.f32 %v1172, %v1335
    %v1359 = vadd.f32 %v1173, %v1336
    %v1360 = vadd.f32 %v1174, %v1337
    %v1361 = vadd.f32 %v1175, %v1338
    %v1362 = vadd.f32 %v1176, %v1339
    %v1363 = vadd.f32 %v1177, %v1340
    %v1364 = vadd.f32 %v1178, %v1341
    %v1365 = vadd.f32 %v1179, %v1342
    %v1366 = vadd.f32 %v1180, %v1343
    %v1367 = vadd.f32 %v1181, %v1344
    %v1368 = vadd.f32 %v1182, %v1345
    %v1369 = vadd.f32 %v1183, %v1346
    %v1370 = vadd.f32 %v1184, %v1347
    %v1371 = vadd.f32 %v1185, %v1348
    %v1372 = vadd.f32 %v1186, %v1349
    %v1373 = vadd.f32 %v1187, %v1350
    %v1374 = vadd.f32 %v1188, %v1351
    %v1375 = vld [vmem:[%s0 + $0x15] sm:$0xff]
    %v1376 = vld [vmem:[%s0 + $0x1d] sm:$0xff]
    %v1377 = vld [vmem:[%s0 + $0x25] sm:$0xff]
    %v1378 = vld [vmem:[%s0 + $0x2d] sm:$0xff]
    %v1379 = vld [vmem:[%s0 + $0x35] sm:$0xff]
    %v1380 = vld [vmem:[%s0 + $0x3d] sm:$0xff]
    %v1381 = vld [vmem:[%s0 + $0x45] sm:$0xff]
    %v1382 = vld [vmem:[%s0 + $0x4d] sm:$0xff]
    %v1383 = vld [vmem:[%s0 + $0x55] sm:$0xff]
    %v1384 = vld [vmem:[%s0 + $0x5d] sm:$0xff]
    %v1385 = vld [vmem:[%s0 + $0x65] sm:$0xff]
    %v1386 = vld [vmem:[%s0 + $0x6d] sm:$0xff]
    %v1387 = vld [vmem:[%s0 + $0x75] sm:$0xff]
    %v1388 = vld [vmem:[%s0 + $0x7d] sm:$0xff]
    %v1389 = vld [vmem:[%s0 + $0x85] sm:$0xff]
    %v1390 = vld [vmem:[%s0 + $0x8d] sm:$0xff]
    %v1391 = vld [vmem:[%s0 + $0x95] sm:$0xff]
    %v1392 = vld [vmem:[%s0 + $0x9d] sm:$0xff]
    %v1393 = vld [vmem:[%s0 + $0xa5] sm:$0xff]
    %v1394 = vld [vmem:[%s0 + $0xad] sm:$0xff]
    %v1395 = vld [vmem:[%s0 + $0xb5] sm:$0xff]
    %v1396 = vld [vmem:[%s0 + $0xbd] sm:$0xff]
    %v1397 = vld [vmem:[%s0 + $0xc5] sm:$0x3]
    %v1398 = vld [vmem:[%s1 + $0x7] sm:$0x1]
    %1400 = vset.pattern.permute.xlu0 0
    %1401 = vperm.xlu0 %1400, %v1375
    %v1402 = vpop.permute.xlu0 %1401
    %1405 = vset.pattern.permute.xlu0 0
    %1406 = vperm.xlu0 %1405, %v1376
    %v1407 = vpop.permute.xlu0 %1406
    %1410 = vset.pattern.permute.xlu0 0
    %1411 = vperm.xlu0 %1410, %v1377
    %v1412 = vpop.permute.xlu0 %1411
    %1415 = vset.pattern.permute.xlu0 0
    %1416 = vperm.xlu0 %1415, %v1378
    %v1417 = vpop.permute.xlu0 %1416
    %1420 = vset.pattern.permute.xlu0 0
    %1421 = vperm.xlu0 %1420, %v1379
    %v1422 = vpop.permute.xlu0 %1421
    %1425 = vset.pattern.permute.xlu0 0
    %1426 = vperm.xlu0 %1425, %v1380
    %v1427 = vpop.permute.xlu0 %1426
    %1430 = vset.pattern.permute.xlu0 0
    %1431 = vperm.xlu0 %1430, %v1381
    %v1432 = vpop.permute.xlu0 %1431
    %1435 = vset.pattern.permute.xlu0 0
    %1436 = vperm.xlu0 %1435, %v1382
    %v1437 = vpop.permute.xlu0 %1436
    %1440 = vset.pattern.permute.xlu0 0
    %1441 = vperm.xlu0 %1440, %v1383
    %v1442 = vpop.permute.xlu0 %1441
    %1445 = vset.pattern.permute.xlu0 0
    %1446 = vperm.xlu0 %1445, %v1384
    %v1447 = vpop.permute.xlu0 %1446
    %1450 = vset.pattern.permute.xlu0 0
    %1451 = vperm.xlu0 %1450, %v1385
    %v1452 = vpop.permute.xlu0 %1451
    %1455 = vset.pattern.permute.xlu0 0
    %1456 = vperm.xlu0 %1455, %v1386
    %v1457 = vpop.permute.xlu0 %1456
    %1460 = vset.pattern.permute.xlu0 0
    %1461 = vperm.xlu0 %1460, %v1387
    %v1462 = vpop.permute.xlu0 %1461
    %1465 = vset.pattern.permute.xlu0 0
    %1466 = vperm.xlu0 %1465, %v1388
    %v1467 = vpop.permute.xlu0 %1466
    %1470 = vset.pattern.permute.xlu0 0
    %1471 = vperm.xlu0 %1470, %v1389
    %v1472 = vpop.permute.xlu0 %1471
    %1475 = vset.pattern.permute.xlu0 0
    %1476 = vperm.xlu0 %1475, %v1390
    %v1477 = vpop.permute.xlu0 %1476
    %1480 = vset.pattern.permute.xlu0 0
    %1481 = vperm.xlu0 %1480, %v1391
    %v1482 = vpop.permute.xlu0 %1481
    %1485 = vset.pattern.permute.xlu0 0
    %1486 = vperm.xlu0 %1485, %v1392
    %v1487 = vpop.permute.xlu0 %1486
    %1490 = vset.pattern.permute.xlu0 0
    %1491 = vperm.xlu0 %1490, %v1393
    %v1492 = vpop.permute.xlu0 %1491
    %1495 = vset.pattern.permute.xlu0 0
    %1496 = vperm.xlu0 %1495, %v1394
    %v1497 = vpop.permute.xlu0 %1496
    %1500 = vset.pattern.permute.xlu0 0
    %1501 = vperm.xlu0 %1500, %v1395
    %v1502 = vpop.permute.xlu0 %1501
    %1505 = vset.pattern.permute.xlu0 0
    %1506 = vperm.xlu0 %1505, %v1396
    %v1507 = vpop.permute.xlu0 %1506
    %1510 = vset.pattern.permute.xlu0 0
    %1511 = vperm.xlu0 %1510, %v1397
    %v1512 = vpop.permute.xlu0 %1511
    %v1514 = vperm.slane %v1398, 0
    %v1515 = vmul.f32 %v1402, %v1514
    %v1516 = vmul.f32 %v1407, %v1514
    %v1517 = vmul.f32 %v1412, %v1514
    %v1518 = vmul.f32 %v1417, %v1514
    %v1519 = vmul.f32 %v1422, %v1514
    %v1520 = vmul.f32 %v1427, %v1514
    %v1521 = vmul.f32 %v1432, %v1514
    %v1522 = vmul.f32 %v1437, %v1514
    %v1523 = vmul.f32 %v1442, %v1514
    %v1524 = vmul.f32 %v1447, %v1514
    %v1525 = vmul.f32 %v1452, %v1514
    %v1526 = vmul.f32 %v1457, %v1514
    %v1527 = vmul.f32 %v1462, %v1514
    %v1528 = vmul.f32 %v1467, %v1514
    %v1529 = vmul.f32 %v1472, %v1514
    %v1530 = vmul.f32 %v1477, %v1514
    %v1531 = vmul.f32 %v1482, %v1514
    %v1532 = vmul.f32 %v1487, %v1514
    %v1533 = vmul.f32 %v1492, %v1514
    %v1534 = vmul.f32 %v1497, %v1514
    %v1535 = vmul.f32 %v1502, %v1514
    %v1536 = vmul.f32 %v1507, %v1514
    %v1537 = vmul.f32 %v1512, %v1514
    %v1538 = vadd.f32 %v1352, %v1515
    %v1539 = vadd.f32 %v1353, %v1516
    %v1540 = vadd.f32 %v1354, %v1517
    %v1541 = vadd.f32 %v1355, %v1518
    %v1542 = vadd.f32 %v1356, %v1519
    %v1543 = vadd.f32 %v1357, %v1520
    %v1544 = vadd.f32 %v1358, %v1521
    %v1545 = vadd.f32 %v1359, %v1522
    %v1546 = vadd.f32 %v1360, %v1523
    %v1547 = vadd.f32 %v1361, %v1524
    %v1548 = vadd.f32 %v1362, %v1525
    %v1549 = vadd.f32 %v1363, %v1526
    %v1550 = vadd.f32 %v1364, %v1527
    %v1551 = vadd.f32 %v1365, %v1528
    %v1552 = vadd.f32 %v1366, %v1529
    %v1553 = vadd.f32 %v1367, %v1530
    %v1554 = vadd.f32 %v1368, %v1531
    %v1555 = vadd.f32 %v1369, %v1532
    %v1556 = vadd.f32 %v1370, %v1533
    %v1557 = vadd.f32 %v1371, %v1534
    %v1558 = vadd.f32 %v1372, %v1535
    %v1559 = vadd.f32 %v1373, %v1536
    %v1560 = vadd.f32 %v1374, %v1537
    %v1561 = vld [vmem:[%s0 + $0x16] sm:$0xff]
    %v1562 = vld [vmem:[%s0 + $0x1e] sm:$0xff]
    %v1563 = vld [vmem:[%s0 + $0x26] sm:$0xff]
    %v1564 = vld [vmem:[%s0 + $0x2e] sm:$0xff]
    %v1565 = vld [vmem:[%s0 + $0x36] sm:$0xff]
    %v1566 = vld [vmem:[%s0 + $0x3e] sm:$0xff]
    %v1567 = vld [vmem:[%s0 + $0x46] sm:$0xff]
    %v1568 = vld [vmem:[%s0 + $0x4e] sm:$0xff]
    %v1569 = vld [vmem:[%s0 + $0x56] sm:$0xff]
    %v1570 = vld [vmem:[%s0 + $0x5e] sm:$0xff]
    %v1571 = vld [vmem:[%s0 + $0x66] sm:$0xff]
    %v1572 = vld [vmem:[%s0 + $0x6e] sm:$0xff]
    %v1573 = vld [vmem:[%s0 + $0x76] sm:$0xff]
    %v1574 = vld [vmem:[%s0 + $0x7e] sm:$0xff]
    %v1575 = vld [vmem:[%s0 + $0x86] sm:$0xff]
    %v1576 = vld [vmem:[%s0 + $0x8e] sm:$0xff]
    %v1577 = vld [vmem:[%s0 + $0x96] sm:$0xff]
    %v1578 = vld [vmem:[%s0 + $0x9e] sm:$0xff]
    %v1579 = vld [vmem:[%s0 + $0xa6] sm:$0xff]
    %v1580 = vld [vmem:[%s0 + $0xae] sm:$0xff]
    %v1581 = vld [vmem:[%s0 + $0xb6] sm:$0xff]
    %v1582 = vld [vmem:[%s0 + $0xbe] sm:$0xff]
    %v1583 = vld [vmem:[%s0 + $0xc6] sm:$0x3]
    %v1584 = vld [vmem:[%s1 + $0x8] sm:$0x1]
    %1586 = vset.pattern.permute.xlu0 0
    %1587 = vperm.xlu0 %1586, %v1561
    %v1588 = vpop.permute.xlu0 %1587
    %1591 = vset.pattern.permute.xlu0 0
    %1592 = vperm.xlu0 %1591, %v1562
    %v1593 = vpop.permute.xlu0 %1592
    %1596 = vset.pattern.permute.xlu0 0
    %1597 = vperm.xlu0 %1596, %v1563
    %v1598 = vpop.permute.xlu0 %1597
    %1601 = vset.pattern.permute.xlu0 0
    %1602 = vperm.xlu0 %1601, %v1564
    %v1603 = vpop.permute.xlu0 %1602
    %1606 = vset.pattern.permute.xlu0 0
    %1607 = vperm.xlu0 %1606, %v1565
    %v1608 = vpop.permute.xlu0 %1607
    %1611 = vset.pattern.permute.xlu0 0
    %1612 = vperm.xlu0 %1611, %v1566
    %v1613 = vpop.permute.xlu0 %1612
    %1616 = vset.pattern.permute.xlu0 0
    %1617 = vperm.xlu0 %1616, %v1567
    %v1618 = vpop.permute.xlu0 %1617
    %1621 = vset.pattern.permute.xlu0 0
    %1622 = vperm.xlu0 %1621, %v1568
    %v1623 = vpop.permute.xlu0 %1622
    %1626 = vset.pattern.permute.xlu0 0
    %1627 = vperm.xlu0 %1626, %v1569
    %v1628 = vpop.permute.xlu0 %1627
    %1631 = vset.pattern.permute.xlu0 0
    %1632 = vperm.xlu0 %1631, %v1570
    %v1633 = vpop.permute.xlu0 %1632
    %1636 = vset.pattern.permute.xlu0 0
    %1637 = vperm.xlu0 %1636, %v1571
    %v1638 = vpop.permute.xlu0 %1637
    %1641 = vset.pattern.permute.xlu0 0
    %1642 = vperm.xlu0 %1641, %v1572
    %v1643 = vpop.permute.xlu0 %1642
    %1646 = vset.pattern.permute.xlu0 0
    %1647 = vperm.xlu0 %1646, %v1573
    %v1648 = vpop.permute.xlu0 %1647
    %1651 = vset.pattern.permute.xlu0 0
    %1652 = vperm.xlu0 %1651, %v1574
    %v1653 = vpop.permute.xlu0 %1652
    %1656 = vset.pattern.permute.xlu0 0
    %1657 = vperm.xlu0 %1656, %v1575
    %v1658 = vpop.permute.xlu0 %1657
    %1661 = vset.pattern.permute.xlu0 0
    %1662 = vperm.xlu0 %1661, %v1576
    %v1663 = vpop.permute.xlu0 %1662
    %1666 = vset.pattern.permute.xlu0 0
    %1667 = vperm.xlu0 %1666, %v1577
    %v1668 = vpop.permute.xlu0 %1667
    %1671 = vset.pattern.permute.xlu0 0
    %1672 = vperm.xlu0 %1671, %v1578
    %v1673 = vpop.permute.xlu0 %1672
    %1676 = vset.pattern.permute.xlu0 0
    %1677 = vperm.xlu0 %1676, %v1579
    %v1678 = vpop.permute.xlu0 %1677
    %1681 = vset.pattern.permute.xlu0 0
    %1682 = vperm.xlu0 %1681, %v1580
    %v1683 = vpop.permute.xlu0 %1682
    %1686 = vset.pattern.permute.xlu0 0
    %1687 = vperm.xlu0 %1686, %v1581
    %v1688 = vpop.permute.xlu0 %1687
    %1691 = vset.pattern.permute.xlu0 0
    %1692 = vperm.xlu0 %1691, %v1582
    %v1693 = vpop.permute.xlu0 %1692
    %1696 = vset.pattern.permute.xlu0 0
    %1697 = vperm.xlu0 %1696, %v1583
    %v1698 = vpop.permute.xlu0 %1697
    %v1700 = vperm.slane %v1584, 0
    %v1701 = vmul.f32 %v1588, %v1700
    %v1702 = vmul.f32 %v1593, %v1700
    %v1703 = vmul.f32 %v1598, %v1700
    %v1704 = vmul.f32 %v1603, %v1700
    %v1705 = vmul.f32 %v1608, %v1700
    %v1706 = vmul.f32 %v1613, %v1700
    %v1707 = vmul.f32 %v1618, %v1700
    %v1708 = vmul.f32 %v1623, %v1700
    %v1709 = vmul.f32 %v1628, %v1700
    %v1710 = vmul.f32 %v1633, %v1700
    %v1711 = vmul.f32 %v1638, %v1700
    %v1712 = vmul.f32 %v1643, %v1700
    %v1713 = vmul.f32 %v1648, %v1700
    %v1714 = vmul.f32 %v1653, %v1700
    %v1715 = vmul.f32 %v1658, %v1700
    %v1716 = vmul.f32 %v1663, %v1700
    %v1717 = vmul.f32 %v1668, %v1700
    %v1718 = vmul.f32 %v1673, %v1700
    %v1719 = vmul.f32 %v1678, %v1700
    %v1720 = vmul.f32 %v1683, %v1700
    %v1721 = vmul.f32 %v1688, %v1700
    %v1722 = vmul.f32 %v1693, %v1700
    %v1723 = vmul.f32 %v1698, %v1700
    %v1724 = vadd.f32 %v1538, %v1701
    %v1725 = vadd.f32 %v1539, %v1702
    %v1726 = vadd.f32 %v1540, %v1703
    %v1727 = vadd.f32 %v1541, %v1704
    %v1728 = vadd.f32 %v1542, %v1705
    %v1729 = vadd.f32 %v1543, %v1706
    %v1730 = vadd.f32 %v1544, %v1707
    %v1731 = vadd.f32 %v1545, %v1708
    %v1732 = vadd.f32 %v1546, %v1709
    %v1733 = vadd.f32 %v1547, %v1710
    %v1734 = vadd.f32 %v1548, %v1711
    %v1735 = vadd.f32 %v1549, %v1712
    %v1736 = vadd.f32 %v1550, %v1713
    %v1737 = vadd.f32 %v1551, %v1714
    %v1738 = vadd.f32 %v1552, %v1715
    %v1739 = vadd.f32 %v1553, %v1716
    %v1740 = vadd.f32 %v1554, %v1717
    %v1741 = vadd.f32 %v1555, %v1718
    %v1742 = vadd.f32 %v1556, %v1719
    %v1743 = vadd.f32 %v1557, %v1720
    %v1744 = vadd.f32 %v1558, %v1721
    %v1745 = vadd.f32 %v1559, %v1722
    %v1746 = vadd.f32 %v1560, %v1723
    %v1747 = vld [vmem:[%s2] sm:$0x1]
    %v1749 = vperm.slane %v1747, 0
    %v1751 = vadd.f32 %v1724, %v1749
    %v1752 = vadd.f32 %v1725, %v1749
    %v1753 = vadd.f32 %v1726, %v1749
    %v1754 = vadd.f32 %v1727, %v1749
    %v1755 = vadd.f32 %v1728, %v1749
    %v1756 = vadd.f32 %v1729, %v1749
    %v1757 = vadd.f32 %v1730, %v1749
    %v1758 = vadd.f32 %v1731, %v1749
    %v1759 = vadd.f32 %v1732, %v1749
    %v1760 = vadd.f32 %v1733, %v1749
    %v1761 = vadd.f32 %v1734, %v1749
    %v1762 = vadd.f32 %v1735, %v1749
    %v1763 = vadd.f32 %v1736, %v1749
    %v1764 = vadd.f32 %v1737, %v1749
    %v1765 = vadd.f32 %v1738, %v1749
    %v1766 = vadd.f32 %v1739, %v1749
    %v1767 = vadd.f32 %v1740, %v1749
    %v1768 = vadd.f32 %v1741, %v1749
    %v1769 = vadd.f32 %v1742, %v1749
    %v1770 = vadd.f32 %v1743, %v1749
    %v1771 = vadd.f32 %v1744, %v1749
    %v1772 = vadd.f32 %v1745, %v1749
    %v1773 = vadd.f32 %v1746, %v1749
    %vm1774 = vcmp.ge.f32.partialorder %v1751, 0.0
    %vm1775 = vcmp.ge.f32.partialorder %v1752, 0.0
    %vm1776 = vcmp.ge.f32.partialorder %v1753, 0.0
    %vm1777 = vcmp.ge.f32.partialorder %v1754, 0.0
    %vm1778 = vcmp.ge.f32.partialorder %v1755, 0.0
    %vm1779 = vcmp.ge.f32.partialorder %v1756, 0.0
    %vm1780 = vcmp.ge.f32.partialorder %v1757, 0.0
    %vm1781 = vcmp.ge.f32.partialorder %v1758, 0.0
    %vm1782 = vcmp.ge.f32.partialorder %v1759, 0.0
    %vm1783 = vcmp.ge.f32.partialorder %v1760, 0.0
    %vm1784 = vcmp.ge.f32.partialorder %v1761, 0.0
    %vm1785 = vcmp.ge.f32.partialorder %v1762, 0.0
    %vm1786 = vcmp.ge.f32.partialorder %v1763, 0.0
    %vm1787 = vcmp.ge.f32.partialorder %v1764, 0.0
    %vm1788 = vcmp.ge.f32.partialorder %v1765, 0.0
    %vm1789 = vcmp.ge.f32.partialorder %v1766, 0.0
    %vm1790 = vcmp.ge.f32.partialorder %v1767, 0.0
    %vm1791 = vcmp.ge.f32.partialorder %v1768, 0.0
    %vm1792 = vcmp.ge.f32.partialorder %v1769, 0.0
    %vm1793 = vcmp.ge.f32.partialorder %v1770, 0.0
    %vm1794 = vcmp.ge.f32.partialorder %v1771, 0.0
    %vm1795 = vcmp.ge.f32.partialorder %v1772, 0.0
    %vm1796 = vcmp.ge.f32.partialorder %v1773, 0.0
    %v1797 = vstv %s95
    %v1798 = vmul.f32 %v1797, %v1751
    %v1799 = vmul.f32 %v1797, %v1752
    %v1800 = vmul.f32 %v1797, %v1753
    %v1801 = vmul.f32 %v1797, %v1754
    %v1802 = vmul.f32 %v1797, %v1755
    %v1803 = vmul.f32 %v1797, %v1756
    %v1804 = vmul.f32 %v1797, %v1757
    %v1805 = vmul.f32 %v1797, %v1758
    %v1806 = vmul.f32 %v1797, %v1759
    %v1807 = vmul.f32 %v1797, %v1760
    %v1808 = vmul.f32 %v1797, %v1761
    %v1809 = vmul.f32 %v1797, %v1762
    %v1810 = vmul.f32 %v1797, %v1763
    %v1811 = vmul.f32 %v1797, %v1764
    %v1812 = vmul.f32 %v1797, %v1765
    %v1813 = vmul.f32 %v1797, %v1766
    %v1814 = vmul.f32 %v1797, %v1767
    %v1815 = vmul.f32 %v1797, %v1768
    %v1816 = vmul.f32 %v1797, %v1769
    %v1817 = vmul.f32 %v1797, %v1770
    %v1818 = vmul.f32 %v1797, %v1771
    %v1819 = vmul.f32 %v1797, %v1772
    %v1820 = vmul.f32 %v1797, %v1773
    %v1821 = vsel %vm1774, %v1751, %v1798
    %v1822 = vsel %vm1775, %v1752, %v1799
    %v1823 = vsel %vm1776, %v1753, %v1800
    %v1824 = vsel %vm1777, %v1754, %v1801
    %v1825 = vsel %vm1778, %v1755, %v1802
    %v1826 = vsel %vm1779, %v1756, %v1803
    %v1827 = vsel %vm1780, %v1757, %v1804
    %v1828 = vsel %vm1781, %v1758, %v1805
    %v1829 = vsel %vm1782, %v1759, %v1806
    %v1830 = vsel %vm1783, %v1760, %v1807
    %v1831 = vsel %vm1784, %v1761, %v1808
    %v1832 = vsel %vm1785, %v1762, %v1809
    %v1833 = vsel %vm1786, %v1763, %v1810
    %v1834 = vsel %vm1787, %v1764, %v1811
    %v1835 = vsel %vm1788, %v1765, %v1812
    %v1836 = vsel %vm1789, %v1766, %v1813
    %v1837 = vsel %vm1790, %v1767, %v1814
    %v1838 = vsel %vm1791, %v1768, %v1815
    %v1839 = vsel %vm1792, %v1769, %v1816
    %v1840 = vsel %vm1793, %v1770, %v1817
    %v1841 = vsel %vm1794, %v1771, %v1818
    %v1842 = vsel %vm1795, %v1772, %v1819
    %v1843 = vsel %vm1796, %v1773, %v1820
    %vm1844 = vcmask 261120
    %1845 = vst.msk [vmem:[#allocation2] sm:$0xff] %vm1844, %v1821
    %1846 = vst.msk [vmem:[#allocation2 + $0x8] sm:$0xff] %vm1844, %v1822
    %1847 = vst.msk [vmem:[#allocation2 + $0x10] sm:$0xff] %vm1844, %v1823
    %1848 = vst.msk [vmem:[#allocation2 + $0x18] sm:$0xff] %vm1844, %v1824
    %1849 = vst.msk [vmem:[#allocation2 + $0x20] sm:$0xff] %vm1844, %v1825
    %1850 = vst.msk [vmem:[#allocation2 + $0x28] sm:$0xff] %vm1844, %v1826
    %1851 = vst.msk [vmem:[#allocation2 + $0x30] sm:$0xff] %vm1844, %v1827
    %1852 = vst.msk [vmem:[#allocation2 + $0x38] sm:$0xff] %vm1844, %v1828
    %1853 = vst.msk [vmem:[#allocation2 + $0x40] sm:$0xff] %vm1844, %v1829
    %1854 = vst.msk [vmem:[#allocation2 + $0x48] sm:$0xff] %vm1844, %v1830
    %1855 = vst.msk [vmem:[#allocation2 + $0x50] sm:$0xff] %vm1844, %v1831
    %1856 = vst.msk [vmem:[#allocation2 + $0x58] sm:$0xff] %vm1844, %v1832
    %1857 = vst.msk [vmem:[#allocation2 + $0x60] sm:$0xff] %vm1844, %v1833
    %1858 = vst.msk [vmem:[#allocation2 + $0x68] sm:$0xff] %vm1844, %v1834
    %1859 = vst.msk [vmem:[#allocation2 + $0x70] sm:$0xff] %vm1844, %v1835
    %1860 = vst.msk [vmem:[#allocation2 + $0x78] sm:$0xff] %vm1844, %v1836
    %1861 = vst.msk [vmem:[#allocation2 + $0x80] sm:$0xff] %vm1844, %v1837
    %1862 = vst.msk [vmem:[#allocation2 + $0x88] sm:$0xff] %vm1844, %v1838
    %1863 = vst.msk [vmem:[#allocation2 + $0x90] sm:$0xff] %vm1844, %v1839
    %1864 = vst.msk [vmem:[#allocation2 + $0x98] sm:$0xff] %vm1844, %v1840
    %1865 = vst.msk [vmem:[#allocation2 + $0xa0] sm:$0xff] %vm1844, %v1841
    %1866 = vst.msk [vmem:[#allocation2 + $0xa8] sm:$0xff] %vm1844, %v1842
    %vm1867 = vcmask 254976
    %1868 = vst.msk [vmem:[#allocation2 + $0xb0] sm:$0x3] %vm1867, %v1843
    %v1869 = vld [vmem:[#allocation2] sm:$0xff]
    %v1870 = vld [vmem:[#allocation2 + $0x8] sm:$0xff]
    %v1871 = vld [vmem:[#allocation2 + $0x10] sm:$0xff]
    %v1872 = vld [vmem:[#allocation2 + $0x18] sm:$0xff]
    %v1873 = vld [vmem:[#allocation2 + $0x20] sm:$0xff]
    %v1874 = vld [vmem:[#allocation2 + $0x28] sm:$0xff]
    %v1875 = vld [vmem:[#allocation2 + $0x30] sm:$0xff]
    %v1876 = vld [vmem:[#allocation2 + $0x38] sm:$0xff]
    %v1877 = vld [vmem:[#allocation2 + $0x40] sm:$0xff]
    %v1878 = vld [vmem:[#allocation2 + $0x48] sm:$0xff]
    %v1879 = vld [vmem:[#allocation2 + $0x50] sm:$0xff]
    %v1880 = vld [vmem:[#allocation2 + $0x58] sm:$0xff]
    %v1881 = vld [vmem:[#allocation2 + $0x60] sm:$0xff]
    %v1882 = vld [vmem:[#allocation2 + $0x68] sm:$0xff]
    %v1883 = vld [vmem:[#allocation2 + $0x70] sm:$0xff]
    %v1884 = vld [vmem:[#allocation2 + $0x78] sm:$0xff]
    %v1885 = vld [vmem:[#allocation2 + $0x80] sm:$0xff]
    %v1886 = vld [vmem:[#allocation2 + $0x88] sm:$0xff]
    %v1887 = vld [vmem:[#allocation2 + $0x90] sm:$0xff]
    %v1888 = vld [vmem:[#allocation2 + $0x98] sm:$0xff]
    %v1889 = vld [vmem:[#allocation2 + $0xa0] sm:$0x7f]
    %v1890 = vld [vmem:[#allocation2 + $0x1] sm:$0xff]
    %v1891 = vld [vmem:[#allocation2 + $0x9] sm:$0xff]
    %v1892 = vld [vmem:[#allocation2 + $0x11] sm:$0xff]
    %v1893 = vld [vmem:[#allocation2 + $0x19] sm:$0xff]
    %v1894 = vld [vmem:[#allocation2 + $0x21] sm:$0xff]
    %v1895 = vld [vmem:[#allocation2 + $0x29] sm:$0xff]
    %v1896 = vld [vmem:[#allocation2 + $0x31] sm:$0xff]
    %v1897 = vld [vmem:[#allocation2 + $0x39] sm:$0xff]
    %v1898 = vld [vmem:[#allocation2 + $0x41] sm:$0xff]
    %v1899 = vld [vmem:[#allocation2 + $0x49] sm:$0xff]
    %v1900 = vld [vmem:[#allocation2 + $0x51] sm:$0xff]
    %v1901 = vld [vmem:[#allocation2 + $0x59] sm:$0xff]
    %v1902 = vld [vmem:[#allocation2 + $0x61] sm:$0xff]
    %v1903 = vld [vmem:[#allocation2 + $0x69] sm:$0xff]
    %v1904 = vld [vmem:[#allocation2 + $0x71] sm:$0xff]
    %v1905 = vld [vmem:[#allocation2 + $0x79] sm:$0xff]
    %v1906 = vld [vmem:[#allocation2 + $0x81] sm:$0xff]
    %v1907 = vld [vmem:[#allocation2 + $0x89] sm:$0xff]
    %v1908 = vld [vmem:[#allocation2 + $0x91] sm:$0xff]
    %v1909 = vld [vmem:[#allocation2 + $0x99] sm:$0xff]
    %v1910 = vld [vmem:[#allocation2 + $0xa1] sm:$0x7f]
    %v1911 = vmax.f32 %v1869, %v1890
    %v1912 = vmax.f32 %v1870, %v1891
    %v1913 = vmax.f32 %v1871, %v1892
    %v1914 = vmax.f32 %v1872, %v1893
    %v1915 = vmax.f32 %v1873, %v1894
    %v1916 = vmax.f32 %v1874, %v1895
    %v1917 = vmax.f32 %v1875, %v1896
    %v1918 = vmax.f32 %v1876, %v1897
    %v1919 = vmax.f32 %v1877, %v1898
    %v1920 = vmax.f32 %v1878, %v1899
    %v1921 = vmax.f32 %v1879, %v1900
    %v1922 = vmax.f32 %v1880, %v1901
    %v1923 = vmax.f32 %v1881, %v1902
    %v1924 = vmax.f32 %v1882, %v1903
    %v1925 = vmax.f32 %v1883, %v1904
    %v1926 = vmax.f32 %v1884, %v1905
    %v1927 = vmax.f32 %v1885, %v1906
    %v1928 = vmax.f32 %v1886, %v1907
    %v1929 = vmax.f32 %v1887, %v1908
    %v1930 = vmax.f32 %v1888, %v1909
    %v1931 = vmax.f32 %v1889, %v1910
    %v1932 = vld [vmem:[#allocation2 + $0xa] sm:$0xff]
    %v1933 = vld [vmem:[#allocation2 + $0x12] sm:$0xff]
    %v1934 = vld [vmem:[#allocation2 + $0x1a] sm:$0xff]
    %v1935 = vld [vmem:[#allocation2 + $0x22] sm:$0xff]
    %v1936 = vld [vmem:[#allocation2 + $0x2a] sm:$0xff]
    %v1937 = vld [vmem:[#allocation2 + $0x32] sm:$0xff]
    %v1938 = vld [vmem:[#allocation2 + $0x3a] sm:$0xff]
    %v1939 = vld [vmem:[#allocation2 + $0x42] sm:$0xff]
    %v1940 = vld [vmem:[#allocation2 + $0x4a] sm:$0xff]
    %v1941 = vld [vmem:[#allocation2 + $0x52] sm:$0xff]
    %v1942 = vld [vmem:[#allocation2 + $0x5a] sm:$0xff]
    %v1943 = vld [vmem:[#allocation2 + $0x62] sm:$0xff]
    %v1944 = vld [vmem:[#allocation2 + $0x6a] sm:$0xff]
    %v1945 = vld [vmem:[#allocation2 + $0x72] sm:$0xff]
    %v1946 = vld [vmem:[#allocation2 + $0x7a] sm:$0xff]
    %v1947 = vld [vmem:[#allocation2 + $0x82] sm:$0xff]
    %v1948 = vld [vmem:[#allocation2 + $0x8a] sm:$0xff]
    %v1949 = vld [vmem:[#allocation2 + $0x92] sm:$0xff]
    %v1950 = vld [vmem:[#allocation2 + $0x9a] sm:$0xff]
    %v1951 = vld [vmem:[#allocation2 + $0xa2] sm:$0xff]
    %v1952 = vld [vmem:[#allocation2 + $0xaa] sm:$0x7f]
    %v1953 = vld [vmem:[#allocation2 + $0xb] sm:$0xff]
    %v1954 = vld [vmem:[#allocation2 + $0x13] sm:$0xff]
    %v1955 = vld [vmem:[#allocation2 + $0x1b] sm:$0xff]
    %v1956 = vld [vmem:[#allocation2 + $0x23] sm:$0xff]
    %v1957 = vld [vmem:[#allocation2 + $0x2b] sm:$0xff]
    %v1958 = vld [vmem:[#allocation2 + $0x33] sm:$0xff]
    %v1959 = vld [vmem:[#allocation2 + $0x3b] sm:$0xff]
    %v1960 = vld [vmem:[#allocation2 + $0x43] sm:$0xff]
    %v1961 = vld [vmem:[#allocation2 + $0x4b] sm:$0xff]
    %v1962 = vld [vmem:[#allocation2 + $0x53] sm:$0xff]
    %v1963 = vld [vmem:[#allocation2 + $0x5b] sm:$0xff]
    %v1964 = vld [vmem:[#allocation2 + $0x63] sm:$0xff]
    %v1965 = vld [vmem:[#allocation2 + $0x6b] sm:$0xff]
    %v1966 = vld [vmem:[#allocation2 + $0x73] sm:$0xff]
    %v1967 = vld [vmem:[#allocation2 + $0x7b] sm:$0xff]
    %v1968 = vld [vmem:[#allocation2 + $0x83] sm:$0xff]
    %v1969 = vld [vmem:[#allocation2 + $0x8b] sm:$0xff]
    %v1970 = vld [vmem:[#allocation2 + $0x93] sm:$0xff]
    %v1971 = vld [vmem:[#allocation2 + $0x9b] sm:$0xff]
    %v1972 = vld [vmem:[#allocation2 + $0xa3] sm:$0xff]
    %v1973 = vld [vmem:[#allocation2 + $0xab] sm:$0x7f]
    %v1974 = vmax.f32 %v1932, %v1953
    %v1975 = vmax.f32 %v1933, %v1954
    %v1976 = vmax.f32 %v1934, %v1955
    %v1977 = vmax.f32 %v1935, %v1956
    %v1978 = vmax.f32 %v1936, %v1957
    %v1979 = vmax.f32 %v1937, %v1958
    %v1980 = vmax.f32 %v1938, %v1959
    %v1981 = vmax.f32 %v1939, %v1960
    %v1982 = vmax.f32 %v1940, %v1961
    %v1983 = vmax.f32 %v1941, %v1962
    %v1984 = vmax.f32 %v1942, %v1963
    %v1985 = vmax.f32 %v1943, %v1964
    %v1986 = vmax.f32 %v1944, %v1965
    %v1987 = vmax.f32 %v1945, %v1966
    %v1988 = vmax.f32 %v1946, %v1967
    %v1989 = vmax.f32 %v1947, %v1968
    %v1990 = vmax.f32 %v1948, %v1969
    %v1991 = vmax.f32 %v1949, %v1970
    %v1992 = vmax.f32 %v1950, %v1971
    %v1993 = vmax.f32 %v1951, %v1972
    %v1994 = vmax.f32 %v1952, %v1973
    %v1995 = vmax.f32 %v1911, %v1974
    %v1996 = vmax.f32 %v1912, %v1975
    %v1997 = vmax.f32 %v1913, %v1976
    %v1998 = vmax.f32 %v1914, %v1977
    %v1999 = vmax.f32 %v1915, %v1978
    %v2000 = vmax.f32 %v1916, %v1979
    %v2001 = vmax.f32 %v1917, %v1980
    %v2002 = vmax.f32 %v1918, %v1981
    %v2003 = vmax.f32 %v1919, %v1982
    %v2004 = vmax.f32 %v1920, %v1983
    %v2005 = vmax.f32 %v1921, %v1984
    %v2006 = vmax.f32 %v1922, %v1985
    %v2007 = vmax.f32 %v1923, %v1986
    %v2008 = vmax.f32 %v1924, %v1987
    %v2009 = vmax.f32 %v1925, %v1988
    %v2010 = vmax.f32 %v1926, %v1989
    %v2011 = vmax.f32 %v1927, %v1990
    %v2012 = vmax.f32 %v1928, %v1991
    %v2013 = vmax.f32 %v1929, %v1992
    %v2014 = vmax.f32 %v1930, %v1993
    %v2015 = vmax.f32 %v1931, %v1994
    %v2016 = vld [vmem:[%s3] sm:$0xff]
    %v2017 = vld [vmem:[%s3 + $0x8] sm:$0xff]
    %v2018 = vld [vmem:[%s3 + $0x10] sm:$0xff]
    %v2019 = vld [vmem:[%s3 + $0x18] sm:$0xff]
    %v2020 = vld [vmem:[%s3 + $0x20] sm:$0xff]
    %v2021 = vld [vmem:[%s3 + $0x28] sm:$0xff]
    %v2022 = vld [vmem:[%s3 + $0x30] sm:$0xff]
    %v2023 = vld [vmem:[%s3 + $0x38] sm:$0xff]
    %v2024 = vld [vmem:[%s3 + $0x40] sm:$0xff]
    %v2025 = vpack.c.bf16 %v1996, %v1995
    %v2026 = vpack.c.bf16 %v1998, %v1997
    %v2027 = vpack.c.bf16 %v2000, %v1999
    %v2028 = vpack.c.bf16 %v2002, %v2001
    %v2029 = vpack.c.bf16 %v2004, %v2003
    %v2030 = vpack.c.bf16 %v2006, %v2005
    %v2031 = vpack.c.bf16 %v2008, %v2007
    %v2032 = vpack.c.bf16 %v2010, %v2009
    %v2033 = vpack.c.bf16 %v2012, %v2011
    %v2034 = vpack.c.bf16 %v2014, %v2013
    %v2035 = vpack.c.bf16 %v2015, %v2015
    %v2045 = vunpack.c.l.b16 %v2016
    %v2046 = vunpack.c.h.b16 %v2016
    %v2047 = vunpack.c.l.b16 %v2017
    %v2048 = vunpack.c.h.b16 %v2017
    %v2049 = vunpack.c.l.b16 %v2018
    %v2050 = vunpack.c.h.b16 %v2018
    %v2051 = vunpack.c.l.b16 %v2019
    %v2052 = vunpack.c.h.b16 %v2019
    %v2053 = vunpack.c.l.b16 %v2020
    %v2054 = vunpack.c.h.b16 %v2020
    %v2055 = vunpack.c.l.b16 %v2021
    %v2056 = vunpack.c.h.b16 %v2021
    %v2057 = vunpack.c.l.b16 %v2022
    %v2058 = vunpack.c.h.b16 %v2022
    %v2059 = vunpack.c.l.b16 %v2023
    %v2060 = vunpack.c.h.b16 %v2023
    %v2061 = vunpack.c.l.b16 %v2024
    %v2062 = vunpack.c.h.b16 %v2024
    %v2063 = vpack.c.b16 %v2047, %v2045
    %v2064 = vpack.c.b16 %v2048, %v2046
    %v2065 = vpack.c.b16 %v2051, %v2049
    %v2066 = vpack.c.b16 %v2052, %v2050
    %v2067 = vpack.c.b16 %v2055, %v2053
    %v2068 = vpack.c.b16 %v2056, %v2054
    %v2069 = vpack.c.b16 %v2059, %v2057
    %v2070 = vpack.c.b16 %v2060, %v2058
    %v2071 = vpack.c.b16 %v2061, %v2061
    %v2072 = vpack.c.b16 %v2062, %v2062
    %vm2078 = vcmask 318464
    %v2080 = vsel %vm2078, %v2064, 0
    %v2083 = vsel %vm2078, %v2066, 0
    %v2086 = vsel %vm2078, %v2068, 0
    %v2089 = vsel %vm2078, %v2070, 0
    %v2092 = vsel %vm2078, %v2072, 0
    %vm2094 = vcmask 1042432
    %vm2095 = vcmask 1043456
    %v2096 = vsel %vm2094, 4294967295, 65535
    %v2097 = vsel %vm2095, %v2096, 0
    %v2099 = vand.u32 %v2035, %v2097
    %2101 = vmatpush.bf16.msra.mxu0 %v2032
    %2102 = vmatpush.bf16.msra.mxu0 %v2031
    %2103 = vmatpush.bf16.msra.mxu0 %v2030
    %2104 = vmatpush.bf16.msra.mxu0 %v2029
    %2105 = vmatpush.bf16.msra.mxu0 %v2028
    %2106 = vmatpush.bf16.msra.mxu0 %v2027
    %2107 = vmatpush.bf16.msra.mxu0 %v2026
    %2108 = vmatpush.bf16.msra.mxu0 %v2025
    %2109 = vmatmul.bf16.gmra.mxu0 %v2063
    %v2110 = vpop.f32.mrf.mxu0
    %v2111 = vadd.f32 0.0, %v2110
    %v2112 = vpop.f32.mrf.mxu0
    %v2113 = vadd.f32 0.0, %v2112
    %2114 = vmatmul.bf16.gmra.mxu0 %v2065
    %v2115 = vpop.f32.mrf.mxu0
    %v2116 = vadd.f32 0.0, %v2115
    %v2117 = vpop.f32.mrf.mxu0
    %v2118 = vadd.f32 0.0, %v2117
    %2119 = vmatmul.bf16.gmra.mxu0 %v2067
    %v2120 = vpop.f32.mrf.mxu0
    %v2121 = vadd.f32 0.0, %v2120
    %v2122 = vpop.f32.mrf.mxu0
    %v2123 = vadd.f32 0.0, %v2122
    %2124 = vmatmul.bf16.gmra.mxu0 %v2069
    %v2125 = vpop.f32.mrf.mxu0
    %v2126 = vadd.f32 0.0, %v2125
    %v2127 = vpop.f32.mrf.mxu0
    %v2128 = vadd.f32 0.0, %v2127
    %2129 = vmatmul.bf16.gmra.mxu0 %v2071
    %v2130 = vpop.f32.mrf.mxu0
    %v2131 = vadd.f32 0.0, %v2130
    %v2132 = vpop.f32.mrf.mxu0
    %2133 = vdwg.mxu0
    %2134 = vmatpush.bf16.msra.mxu0 0
    %2135 = vmatpush.bf16.msra.mxu0 0
    %2136 = vmatpush.bf16.msra.mxu0 0
    %2137 = vmatpush.bf16.msra.mxu0 0
    %2138 = vmatpush.bf16.msra.mxu0 0
    %2139 = vmatpush.bf16.msra.mxu0 %v2099
    %2140 = vmatpush.bf16.msra.mxu0 %v2034
    %2141 = vmatpush.bf16.msra.mxu0 %v2033
    %2142 = vmatmul.bf16.gmra.mxu0 %v2080
    %v2143 = vpop.f32.mrf.mxu0
    %v2144 = vadd.f32 %v2111, %v2143
    %v2145 = vpop.f32.mrf.mxu0
    %v2146 = vadd.f32 %v2113, %v2145
    %2147 = vmatmul.bf16.gmra.mxu0 %v2083
    %v2148 = vpop.f32.mrf.mxu0
    %v2149 = vadd.f32 %v2116, %v2148
    %v2150 = vpop.f32.mrf.mxu0
    %v2151 = vadd.f32 %v2118, %v2150
    %2152 = vmatmul.bf16.gmra.mxu0 %v2086
    %v2153 = vpop.f32.mrf.mxu0
    %v2154 = vadd.f32 %v2121, %v2153
    %v2155 = vpop.f32.mrf.mxu0
    %v2156 = vadd.f32 %v2123, %v2155
    %2157 = vmatmul.bf16.gmra.mxu0 %v2089
    %v2158 = vpop.f32.mrf.mxu0
    %v2159 = vadd.f32 %v2126, %v2158
    %v2160 = vpop.f32.mrf.mxu0
    %v2161 = vadd.f32 %v2128, %v2160
    %2162 = vmatmul.bf16.gmra.mxu0 %v2092
    %v2163 = vpop.f32.mrf.mxu0
    %v2164 = vadd.f32 %v2131, %v2163
    %v2165 = vpop.f32.mrf.mxu0
    %2166 = vdwg.mxu0
    %2167 = vst.msk [vmem:[#allocation3] sm:$0xff] %vm1844, %v2144
    %2168 = vst.msk [vmem:[#allocation3 + $0x8] sm:$0xff] %vm1844, %v2146
    %2169 = vst.msk [vmem:[#allocation3 + $0x10] sm:$0xff] %vm1844, %v2149
    %2170 = vst.msk [vmem:[#allocation3 + $0x18] sm:$0xff] %vm1844, %v2151
    %2171 = vst.msk [vmem:[#allocation3 + $0x20] sm:$0xff] %vm1844, %v2154
    %2172 = vst.msk [vmem:[#allocation3 + $0x28] sm:$0xff] %vm1844, %v2156
    %2173 = vst.msk [vmem:[#allocation3 + $0x30] sm:$0xff] %vm1844, %v2159
    %2174 = vst.msk [vmem:[#allocation3 + $0x38] sm:$0xff] %vm1844, %v2161
    %2175 = vst.msk [vmem:[#allocation3 + $0x40] sm:$0xff] %vm1844, %v2164
    %s2176 = sld [smem:[#allocation7 + $0x1]]
    %v2177 = vld [vmem:[#allocation3] sm:$0xff]
    %v2178 = vld [vmem:[#allocation3 + $0x8] sm:$0xff]
    %v2179 = vld [vmem:[#allocation3 + $0x10] sm:$0xff]
    %v2180 = vld [vmem:[#allocation3 + $0x18] sm:$0xff]
    %v2181 = vld [vmem:[#allocation3 + $0x20] sm:$0xff]
    %v2182 = vld [vmem:[#allocation3 + $0x28] sm:$0xff]
    %v2183 = vld [vmem:[#allocation3 + $0x30] sm:$0xff]
    %v2184 = vld [vmem:[#allocation3 + $0x38] sm:$0x3]
    %v2185 = vld [vmem:[%s4] sm:$0xf]
    %v2186 = vld [vmem:[%s4 + $0x4] sm:$0xf]
    %v2187 = vld [vmem:[%s4 + $0x8] sm:$0xf]
    %v2188 = vld [vmem:[%s4 + $0xc] sm:$0xf]
    %v2189 = vpack.c.bf16 %v2178, %v2177
    %v2190 = vpack.c.bf16 %v2180, %v2179
    %v2191 = vpack.c.bf16 %v2182, %v2181
    %v2192 = vpack.c.bf16 %v2184, %v2183
    %v2193 = vld [vmem:[#allocation3 + $0x1] sm:$0xff]
    %v2194 = vld [vmem:[#allocation3 + $0x9] sm:$0xff]
    %v2195 = vld [vmem:[#allocation3 + $0x11] sm:$0xff]
    %v2196 = vld [vmem:[#allocation3 + $0x19] sm:$0xff]
    %v2197 = vld [vmem:[#allocation3 + $0x21] sm:$0xff]
    %v2198 = vld [vmem:[#allocation3 + $0x29] sm:$0xff]
    %v2199 = vld [vmem:[#allocation3 + $0x31] sm:$0xff]
    %v2200 = vld [vmem:[#allocation3 + $0x39] sm:$0x3]
    %v2201 = vld [vmem:[%s4 + $0x10] sm:$0xf]
    %v2202 = vld [vmem:[%s4 + $0x14] sm:$0xf]
    %v2203 = vld [vmem:[%s4 + $0x18] sm:$0xf]
    %v2204 = vld [vmem:[%s4 + $0x1c] sm:$0xf]
    %v2205 = vpack.c.bf16 %v2194, %v2193
    %v2206 = vpack.c.bf16 %v2196, %v2195
    %v2207 = vpack.c.bf16 %v2198, %v2197
    %v2208 = vpack.c.bf16 %v2200, %v2199
    %v2213 = vunpack.c.l.b16 %v2201
    %v2214 = vunpack.c.l.b16 %v2202
    %v2215 = vunpack.c.l.b16 %v2203
    %v2216 = vunpack.c.l.b16 %v2204
    %v2217 = vpack.c.b16 %v2214, %v2213
    %v2218 = vpack.c.b16 %v2216, %v2215
    %v2222 = vsel %vm1844, %v2205, 0
    %v2225 = vsel %vm1844, %v2206, 0
    %v2228 = vsel %vm1844, %v2207, 0
    %v2231 = vsel %vm1844, %v2208, 0
    %2233 = vmatpush.bf16.msra.mxu0 0
    %2234 = vmatpush.bf16.msra.mxu0 0
    %2235 = vmatpush.bf16.msra.mxu0 0
    %2236 = vmatpush.bf16.msra.mxu0 0
    %2237 = vmatpush.bf16.msra.mxu0 0
    %2238 = vmatpush.bf16.msra.mxu0 0
    %2239 = vmatpush.bf16.msra.mxu0 %v2218
    %2240 = vmatpush.bf16.msra.mxu0 %v2217
    %2241 = vmatmul.bf16.gmra.mxu0 %v2222
    %v2242 = vpop.f32.mrf.mxu0
    %v2243 = vadd.f32 0.0, %v2242
    %v2244 = vpop.f32.mrf.mxu0
    %v2245 = vadd.f32 0.0, %v2244
    %2246 = vmatmul.bf16.gmra.mxu0 %v2225
    %v2247 = vpop.f32.mrf.mxu0
    %v2248 = vadd.f32 0.0, %v2247
    %v2249 = vpop.f32.mrf.mxu0
    %v2250 = vadd.f32 0.0, %v2249
    %2251 = vmatmul.bf16.gmra.mxu0 %v2228
    %v2252 = vpop.f32.mrf.mxu0
    %v2253 = vadd.f32 0.0, %v2252
    %v2254 = vpop.f32.mrf.mxu0
    %v2255 = vadd.f32 0.0, %v2254
    %2256 = vmatmul.bf16.gmra.mxu0 %v2231
    %v2257 = vpop.f32.mrf.mxu0
    %v2258 = vadd.f32 0.0, %v2257
    %v2259 = vpop.f32.mrf.mxu0
    %v2260 = vadd.f32 0.0, %v2259
    %2261 = vdwg.mxu0
    %v2266 = vunpack.c.l.b16 %v2185
    %v2267 = vunpack.c.l.b16 %v2186
    %v2268 = vunpack.c.l.b16 %v2187
    %v2269 = vunpack.c.l.b16 %v2188
    %v2270 = vpack.c.b16 %v2267, %v2266
    %v2271 = vpack.c.b16 %v2269, %v2268
    %v2275 = vsel %vm1844, %v2189, 0
    %v2278 = vsel %vm1844, %v2190, 0
    %v2281 = vsel %vm1844, %v2191, 0
    %v2284 = vsel %vm1844, %v2192, 0
    %2286 = vmatpush.bf16.msra.mxu0 0
    %2287 = vmatpush.bf16.msra.mxu0 0
    %2288 = vmatpush.bf16.msra.mxu0 0
    %2289 = vmatpush.bf16.msra.mxu0 0
    %2290 = vmatpush.bf16.msra.mxu0 0
    %2291 = vmatpush.bf16.msra.mxu0 0
    %2292 = vmatpush.bf16.msra.mxu0 %v2271
    %2293 = vmatpush.bf16.msra.mxu0 %v2270
    %2294 = vmatmul.bf16.gmra.mxu0 %v2275
    %v2295 = vpop.f32.mrf.mxu0
    %v2296 = vadd.f32 %v2243, %v2295
    %v2297 = vpop.f32.mrf.mxu0
    %v2298 = vadd.f32 %v2245, %v2297
    %2299 = vmatmul.bf16.gmra.mxu0 %v2278
    %v2300 = vpop.f32.mrf.mxu0
    %v2301 = vadd.f32 %v2248, %v2300
    %v2302 = vpop.f32.mrf.mxu0
    %v2303 = vadd.f32 %v2250, %v2302
    %2304 = vmatmul.bf16.gmra.mxu0 %v2281
    %v2305 = vpop.f32.mrf.mxu0
    %v2306 = vadd.f32 %v2253, %v2305
    %v2307 = vpop.f32.mrf.mxu0
    %v2308 = vadd.f32 %v2255, %v2307
    %2309 = vmatmul.bf16.gmra.mxu0 %v2284
    %v2310 = vpop.f32.mrf.mxu0
    %v2311 = vadd.f32 %v2258, %v2310
    %v2312 = vpop.f32.mrf.mxu0
    %v2313 = vadd.f32 %v2260, %v2312
    %2314 = vdwg.mxu0
    %v2315 = vld [vmem:[#allocation3 + $0x2] sm:$0xff]
    %v2316 = vld [vmem:[#allocation3 + $0xa] sm:$0xff]
    %v2317 = vld [vmem:[#allocation3 + $0x12] sm:$0xff]
    %v2318 = vld [vmem:[#allocation3 + $0x1a] sm:$0xff]
    %v2319 = vld [vmem:[#allocation3 + $0x22] sm:$0xff]
    %v2320 = vld [vmem:[#allocation3 + $0x2a] sm:$0xff]
    %v2321 = vld [vmem:[#allocation3 + $0x32] sm:$0xff]
    %v2322 = vld [vmem:[#allocation3 + $0x3a] sm:$0x3]
    %v2323 = vld [vmem:[%s4 + $0x20] sm:$0xf]
    %v2324 = vld [vmem:[%s4 + $0x24] sm:$0xf]
    %v2325 = vld [vmem:[%s4 + $0x28] sm:$0xf]
    %v2326 = vld [vmem:[%s4 + $0x2c] sm:$0xf]
    %v2327 = vpack.c.bf16 %v2316, %v2315
    %v2328 = vpack.c.bf16 %v2318, %v2317
    %v2329 = vpack.c.bf16 %v2320, %v2319
    %v2330 = vpack.c.bf16 %v2322, %v2321
    %v2335 = vunpack.c.l.b16 %v2323
    %v2336 = vunpack.c.l.b16 %v2324
    %v2337 = vunpack.c.l.b16 %v2325
    %v2338 = vunpack.c.l.b16 %v2326
    %v2339 = vpack.c.b16 %v2336, %v2335
    %v2340 = vpack.c.b16 %v2338, %v2337
    %v2344 = vsel %vm1844, %v2327, 0
    %v2347 = vsel %vm1844, %v2328, 0
    %v2350 = vsel %vm1844, %v2329, 0
    %v2353 = vsel %vm1844, %v2330, 0
    %2355 = vmatpush.bf16.msra.mxu0 0
    %2356 = vmatpush.bf16.msra.mxu0 0
    %2357 = vmatpush.bf16.msra.mxu0 0
    %2358 = vmatpush.bf16.msra.mxu0 0
    %2359 = vmatpush.bf16.msra.mxu0 0
    %2360 = vmatpush.bf16.msra.mxu0 0
    %2361 = vmatpush.bf16.msra.mxu0 %v2340
    %2362 = vmatpush.bf16.msra.mxu0 %v2339
    %2363 = vmatmul.bf16.gmra.mxu0 %v2344
    %v2364 = vpop.f32.mrf.mxu0
    %v2365 = vadd.f32 0.0, %v2364
    %v2366 = vpop.f32.mrf.mxu0
    %v2367 = vadd.f32 0.0, %v2366
    %2368 = vmatmul.bf16.gmra.mxu0 %v2347
    %v2369 = vpop.f32.mrf.mxu0
    %v2370 = vadd.f32 0.0, %v2369
    %v2371 = vpop.f32.mrf.mxu0
    %v2372 = vadd.f32 0.0, %v2371
    %2373 = vmatmul.bf16.gmra.mxu0 %v2350
    %v2374 = vpop.f32.mrf.mxu0
    %v2375 = vadd.f32 0.0, %v2374
    %v2376 = vpop.f32.mrf.mxu0
    %v2377 = vadd.f32 0.0, %v2376
    %2378 = vmatmul.bf16.gmra.mxu0 %v2353
    %v2379 = vpop.f32.mrf.mxu0
    %v2380 = vadd.f32 0.0, %v2379
    %v2381 = vpop.f32.mrf.mxu0
    %v2382 = vadd.f32 0.0, %v2381
    %2383 = vdwg.mxu0
    %v2384 = vadd.f32 %v2296, %v2365
    %v2385 = vadd.f32 %v2298, %v2367
    %v2386 = vadd.f32 %v2301, %v2370
    %v2387 = vadd.f32 %v2303, %v2372
    %v2388 = vadd.f32 %v2306, %v2375
    %v2389 = vadd.f32 %v2308, %v2377
    %v2390 = vadd.f32 %v2311, %v2380
    %v2391 = vadd.f32 %v2313, %v2382
    %v2392 = vld [vmem:[#allocation3 + $0x6] sm:$0xff]
    %v2393 = vld [vmem:[#allocation3 + $0xe] sm:$0xff]
    %v2394 = vld [vmem:[#allocation3 + $0x16] sm:$0xff]
    %v2395 = vld [vmem:[#allocation3 + $0x1e] sm:$0xff]
    %v2396 = vld [vmem:[#allocation3 + $0x26] sm:$0xff]
    %v2397 = vld [vmem:[#allocation3 + $0x2e] sm:$0xff]
    %v2398 = vld [vmem:[#allocation3 + $0x36] sm:$0xff]
    %v2399 = vld [vmem:[#allocation3 + $0x3e] sm:$0x3]
    %v2400 = vld [vmem:[%s4 + $0x30] sm:$0xf]
    %v2401 = vld [vmem:[%s4 + $0x34] sm:$0xf]
    %v2402 = vld [vmem:[%s4 + $0x38] sm:$0xf]
    %v2403 = vld [vmem:[%s4 + $0x3c] sm:$0xf]
    %v2404 = vpack.c.bf16 %v2393, %v2392
    %v2405 = vpack.c.bf16 %v2395, %v2394
    %v2406 = vpack.c.bf16 %v2397, %v2396
    %v2407 = vpack.c.bf16 %v2399, %v2398
    %v2412 = vunpack.c.l.b16 %v2400
    %v2413 = vunpack.c.l.b16 %v2401
    %v2414 = vunpack.c.l.b16 %v2402
    %v2415 = vunpack.c.l.b16 %v2403
    %v2416 = vpack.c.b16 %v2413, %v2412
    %v2417 = vpack.c.b16 %v2415, %v2414
    %v2421 = vsel %vm1844, %v2404, 0
    %v2424 = vsel %vm1844, %v2405, 0
    %v2427 = vsel %vm1844, %v2406, 0
    %v2430 = vsel %vm1844, %v2407, 0
    %2432 = vmatpush.bf16.msra.mxu0 0
    %2433 = vmatpush.bf16.msra.mxu0 0
    %2434 = vmatpush.bf16.msra.mxu0 0
    %2435 = vmatpush.bf16.msra.mxu0 0
    %2436 = vmatpush.bf16.msra.mxu0 0
    %2437 = vmatpush.bf16.msra.mxu0 0
    %2438 = vmatpush.bf16.msra.mxu0 %v2417
    %2439 = vmatpush.bf16.msra.mxu0 %v2416
    %2440 = vmatmul.bf16.gmra.mxu0 %v2421
    %v2441 = vpop.f32.mrf.mxu0
    %v2442 = vadd.f32 0.0, %v2441
    %v2443 = vpop.f32.mrf.mxu0
    %v2444 = vadd.f32 0.0, %v2443
    %2445 = vmatmul.bf16.gmra.mxu0 %v2424
    %v2446 = vpop.f32.mrf.mxu0
    %v2447 = vadd.f32 0.0, %v2446
    %v2448 = vpop.f32.mrf.mxu0
    %v2449 = vadd.f32 0.0, %v2448
    %2450 = vmatmul.bf16.gmra.mxu0 %v2427
    %v2451 = vpop.f32.mrf.mxu0
    %v2452 = vadd.f32 0.0, %v2451
    %v2453 = vpop.f32.mrf.mxu0
    %v2454 = vadd.f32 0.0, %v2453
    %2455 = vmatmul.bf16.gmra.mxu0 %v2430
    %v2456 = vpop.f32.mrf.mxu0
    %v2457 = vadd.f32 0.0, %v2456
    %v2458 = vpop.f32.mrf.mxu0
    %v2459 = vadd.f32 0.0, %v2458
    %2460 = vdwg.mxu0
    %v2461 = vadd.f32 %v2384, %v2442
    %v2462 = vadd.f32 %v2385, %v2444
    %v2463 = vadd.f32 %v2386, %v2447
    %v2464 = vadd.f32 %v2387, %v2449
    %v2465 = vadd.f32 %v2388, %v2452
    %v2466 = vadd.f32 %v2389, %v2454
    %v2467 = vadd.f32 %v2390, %v2457
    %v2468 = vadd.f32 %v2391, %v2459
    %v2469 = vld [vmem:[#allocation3 + $0x7] sm:$0xff]
    %v2470 = vld [vmem:[#allocation3 + $0xf] sm:$0xff]
    %v2471 = vld [vmem:[#allocation3 + $0x17] sm:$0xff]
    %v2472 = vld [vmem:[#allocation3 + $0x1f] sm:$0xff]
    %v2473 = vld [vmem:[#allocation3 + $0x27] sm:$0xff]
    %v2474 = vld [vmem:[#allocation3 + $0x2f] sm:$0xff]
    %v2475 = vld [vmem:[#allocation3 + $0x37] sm:$0xff]
    %v2476 = vld [vmem:[#allocation3 + $0x3f] sm:$0x3]
    %v2477 = vld [vmem:[%s4 + $0x40] sm:$0xf]
    %v2478 = vld [vmem:[%s4 + $0x44] sm:$0xf]
    %v2479 = vld [vmem:[%s4 + $0x48] sm:$0xf]
    %v2480 = vld [vmem:[%s4 + $0x4c] sm:$0xf]
    %v2481 = vpack.c.bf16 %v2470, %v2469
    %v2482 = vpack.c.bf16 %v2472, %v2471
    %v2483 = vpack.c.bf16 %v2474, %v2473
    %v2484 = vpack.c.bf16 %v2476, %v2475
    %v2489 = vunpack.c.l.b16 %v2477
    %v2490 = vunpack.c.l.b16 %v2478
    %v2491 = vunpack.c.l.b16 %v2479
    %v2492 = vunpack.c.l.b16 %v2480
    %v2493 = vpack.c.b16 %v2490, %v2489
    %v2494 = vpack.c.b16 %v2492, %v2491
    %v2498 = vsel %vm1844, %v2481, 0
    %v2501 = vsel %vm1844, %v2482, 0
    %v2504 = vsel %vm1844, %v2483, 0
    %v2507 = vsel %vm1844, %v2484, 0
    %2509 = vmatpush.bf16.msra.mxu0 0
    %2510 = vmatpush.bf16.msra.mxu0 0
    %2511 = vmatpush.bf16.msra.mxu0 0
    %2512 = vmatpush.bf16.msra.mxu0 0
    %2513 = vmatpush.bf16.msra.mxu0 0
    %2514 = vmatpush.bf16.msra.mxu0 0
    %2515 = vmatpush.bf16.msra.mxu0 %v2494
    %2516 = vmatpush.bf16.msra.mxu0 %v2493
    %2517 = vmatmul.bf16.gmra.mxu0 %v2498
    %v2518 = vpop.f32.mrf.mxu0
    %v2519 = vadd.f32 0.0, %v2518
    %v2520 = vpop.f32.mrf.mxu0
    %v2521 = vadd.f32 0.0, %v2520
    %2522 = vmatmul.bf16.gmra.mxu0 %v2501
    %v2523 = vpop.f32.mrf.mxu0
    %v2524 = vadd.f32 0.0, %v2523
    %v2525 = vpop.f32.mrf.mxu0
    %v2526 = vadd.f32 0.0, %v2525
    %2527 = vmatmul.bf16.gmra.mxu0 %v2504
    %v2528 = vpop.f32.mrf.mxu0
    %v2529 = vadd.f32 0.0, %v2528
    %v2530 = vpop.f32.mrf.mxu0
    %v2531 = vadd.f32 0.0, %v2530
    %2532 = vmatmul.bf16.gmra.mxu0 %v2507
    %v2533 = vpop.f32.mrf.mxu0
    %v2534 = vadd.f32 0.0, %v2533
    %v2535 = vpop.f32.mrf.mxu0
    %v2536 = vadd.f32 0.0, %v2535
    %2537 = vdwg.mxu0
    %v2538 = vadd.f32 %v2461, %v2519
    %v2539 = vadd.f32 %v2462, %v2521
    %v2540 = vadd.f32 %v2463, %v2524
    %v2541 = vadd.f32 %v2464, %v2526
    %v2542 = vadd.f32 %v2465, %v2529
    %v2543 = vadd.f32 %v2466, %v2531
    %v2544 = vadd.f32 %v2467, %v2534
    %v2545 = vadd.f32 %v2468, %v2536
    %v2546 = vld [vmem:[#allocation3 + $0x8] sm:$0xff]
    %v2547 = vld [vmem:[#allocation3 + $0x10] sm:$0xff]
    %v2548 = vld [vmem:[#allocation3 + $0x18] sm:$0xff]
    %v2549 = vld [vmem:[#allocation3 + $0x20] sm:$0xff]
    %v2550 = vld [vmem:[#allocation3 + $0x28] sm:$0xff]
    %v2551 = vld [vmem:[#allocation3 + $0x30] sm:$0xff]
    %v2552 = vld [vmem:[#allocation3 + $0x38] sm:$0xff]
    %v2553 = vld [vmem:[#allocation3 + $0x40] sm:$0x3]
    %v2554 = vld [vmem:[%s4 + $0x50] sm:$0xf]
    %v2555 = vld [vmem:[%s4 + $0x54] sm:$0xf]
    %v2556 = vld [vmem:[%s4 + $0x58] sm:$0xf]
    %v2557 = vld [vmem:[%s4 + $0x5c] sm:$0xf]
    %v2558 = vpack.c.bf16 %v2547, %v2546
    %v2559 = vpack.c.bf16 %v2549, %v2548
    %v2560 = vpack.c.bf16 %v2551, %v2550
    %v2561 = vpack.c.bf16 %v2553, %v2552
    %v2566 = vunpack.c.l.b16 %v2554
    %v2567 = vunpack.c.l.b16 %v2555
    %v2568 = vunpack.c.l.b16 %v2556
    %v2569 = vunpack.c.l.b16 %v2557
    %v2570 = vpack.c.b16 %v2567, %v2566
    %v2571 = vpack.c.b16 %v2569, %v2568
    %v2575 = vsel %vm1844, %v2558, 0
    %v2578 = vsel %vm1844, %v2559, 0
    %v2581 = vsel %vm1844, %v2560, 0
    %v2584 = vsel %vm1844, %v2561, 0
    %2586 = vmatpush.bf16.msra.mxu0 0
    %2587 = vmatpush.bf16.msra.mxu0 0
    %2588 = vmatpush.bf16.msra.mxu0 0
    %2589 = vmatpush.bf16.msra.mxu0 0
    %2590 = vmatpush.bf16.msra.mxu0 0
    %2591 = vmatpush.bf16.msra.mxu0 0
    %2592 = vmatpush.bf16.msra.mxu0 %v2571
    %2593 = vmatpush.bf16.msra.mxu0 %v2570
    %2594 = vmatmul.bf16.gmra.mxu0 %v2575
    %v2595 = vpop.f32.mrf.mxu0
    %v2596 = vadd.f32 0.0, %v2595
    %v2597 = vpop.f32.mrf.mxu0
    %v2598 = vadd.f32 0.0, %v2597
    %2599 = vmatmul.bf16.gmra.mxu0 %v2578
    %v2600 = vpop.f32.mrf.mxu0
    %v2601 = vadd.f32 0.0, %v2600
    %v2602 = vpop.f32.mrf.mxu0
    %v2603 = vadd.f32 0.0, %v2602
    %2604 = vmatmul.bf16.gmra.mxu0 %v2581
    %v2605 = vpop.f32.mrf.mxu0
    %v2606 = vadd.f32 0.0, %v2605
    %v2607 = vpop.f32.mrf.mxu0
    %v2608 = vadd.f32 0.0, %v2607
    %2609 = vmatmul.bf16.gmra.mxu0 %v2584
    %v2610 = vpop.f32.mrf.mxu0
    %v2611 = vadd.f32 0.0, %v2610
    %v2612 = vpop.f32.mrf.mxu0
    %v2613 = vadd.f32 0.0, %v2612
    %2614 = vdwg.mxu0
    %v2615 = vadd.f32 %v2538, %v2596
    %v2616 = vadd.f32 %v2539, %v2598
    %v2617 = vadd.f32 %v2540, %v2601
    %v2618 = vadd.f32 %v2541, %v2603
    %v2619 = vadd.f32 %v2542, %v2606
    %v2620 = vadd.f32 %v2543, %v2608
    %v2621 = vadd.f32 %v2544, %v2611
    %v2622 = vadd.f32 %v2545, %v2613
    %v2623 = vld [vmem:[#allocation3 + $0xc] sm:$0xff]
    %v2624 = vld [vmem:[#allocation3 + $0x14] sm:$0xff]
    %v2625 = vld [vmem:[#allocation3 + $0x1c] sm:$0xff]
    %v2626 = vld [vmem:[#allocation3 + $0x24] sm:$0xff]
    %v2627 = vld [vmem:[#allocation3 + $0x2c] sm:$0xff]
    %v2628 = vld [vmem:[#allocation3 + $0x34] sm:$0xff]
    %v2629 = vld [vmem:[#allocation3 + $0x3c] sm:$0xff]
    %v2630 = vld [vmem:[#allocation3 + $0x44] sm:$0x3]
    %v2631 = vld [vmem:[%s4 + $0x60] sm:$0xf]
    %v2632 = vld [vmem:[%s4 + $0x64] sm:$0xf]
    %v2633 = vld [vmem:[%s4 + $0x68] sm:$0xf]
    %v2634 = vld [vmem:[%s4 + $0x6c] sm:$0xf]
    %v2635 = vpack.c.bf16 %v2624, %v2623
    %v2636 = vpack.c.bf16 %v2626, %v2625
    %v2637 = vpack.c.bf16 %v2628, %v2627
    %v2638 = vpack.c.bf16 %v2630, %v2629
    %v2643 = vunpack.c.l.b16 %v2631
    %v2644 = vunpack.c.l.b16 %v2632
    %v2645 = vunpack.c.l.b16 %v2633
    %v2646 = vunpack.c.l.b16 %v2634
    %v2647 = vpack.c.b16 %v2644, %v2643
    %v2648 = vpack.c.b16 %v2646, %v2645
    %v2652 = vsel %vm1844, %v2635, 0
    %v2655 = vsel %vm1844, %v2636, 0
    %v2658 = vsel %vm1844, %v2637, 0
    %v2661 = vsel %vm1844, %v2638, 0
    %2663 = vmatpush.bf16.msra.mxu0 0
    %2664 = vmatpush.bf16.msra.mxu0 0
    %2665 = vmatpush.bf16.msra.mxu0 0
    %2666 = vmatpush.bf16.msra.mxu0 0
    %2667 = vmatpush.bf16.msra.mxu0 0
    %2668 = vmatpush.bf16.msra.mxu0 0
    %2669 = vmatpush.bf16.msra.mxu0 %v2648
    %2670 = vmatpush.bf16.msra.mxu0 %v2647
    %2671 = vmatmul.bf16.gmra.mxu0 %v2652
    %v2672 = vpop.f32.mrf.mxu0
    %v2673 = vadd.f32 0.0, %v2672
    %v2674 = vpop.f32.mrf.mxu0
    %v2675 = vadd.f32 0.0, %v2674
    %2676 = vmatmul.bf16.gmra.mxu0 %v2655
    %v2677 = vpop.f32.mrf.mxu0
    %v2678 = vadd.f32 0.0, %v2677
    %v2679 = vpop.f32.mrf.mxu0
    %v2680 = vadd.f32 0.0, %v2679
    %2681 = vmatmul.bf16.gmra.mxu0 %v2658
    %v2682 = vpop.f32.mrf.mxu0
    %v2683 = vadd.f32 0.0, %v2682
    %v2684 = vpop.f32.mrf.mxu0
    %v2685 = vadd.f32 0.0, %v2684
    %2686 = vmatmul.bf16.gmra.mxu0 %v2661
    %v2687 = vpop.f32.mrf.mxu0
    %v2688 = vadd.f32 0.0, %v2687
    %v2689 = vpop.f32.mrf.mxu0
    %v2690 = vadd.f32 0.0, %v2689
    %2691 = vdwg.mxu0
    %v2692 = vadd.f32 %v2615, %v2673
    %v2693 = vadd.f32 %v2616, %v2675
    %v2694 = vadd.f32 %v2617, %v2678
    %v2695 = vadd.f32 %v2618, %v2680
    %v2696 = vadd.f32 %v2619, %v2683
    %v2697 = vadd.f32 %v2620, %v2685
    %v2698 = vadd.f32 %v2621, %v2688
    %v2699 = vadd.f32 %v2622, %v2690
    %v2700 = vld [vmem:[#allocation3 + $0xd] sm:$0xff]
    %v2701 = vld [vmem:[#allocation3 + $0x15] sm:$0xff]
    %v2702 = vld [vmem:[#allocation3 + $0x1d] sm:$0xff]
    %v2703 = vld [vmem:[#allocation3 + $0x25] sm:$0xff]
    %v2704 = vld [vmem:[#allocation3 + $0x2d] sm:$0xff]
    %v2705 = vld [vmem:[#allocation3 + $0x35] sm:$0xff]
    %v2706 = vld [vmem:[#allocation3 + $0x3d] sm:$0xff]
    %v2707 = vld [vmem:[#allocation3 + $0x45] sm:$0x3]
    %v2708 = vld [vmem:[%s4 + $0x70] sm:$0xf]
    %v2709 = vld [vmem:[%s4 + $0x74] sm:$0xf]
    %v2710 = vld [vmem:[%s4 + $0x78] sm:$0xf]
    %v2711 = vld [vmem:[%s4 + $0x7c] sm:$0xf]
    %v2712 = vpack.c.bf16 %v2701, %v2700
    %v2713 = vpack.c.bf16 %v2703, %v2702
    %v2714 = vpack.c.bf16 %v2705, %v2704
    %v2715 = vpack.c.bf16 %v2707, %v2706
    %v2720 = vunpack.c.l.b16 %v2708
    %v2721 = vunpack.c.l.b16 %v2709
    %v2722 = vunpack.c.l.b16 %v2710
    %v2723 = vunpack.c.l.b16 %v2711
    %v2724 = vpack.c.b16 %v2721, %v2720
    %v2725 = vpack.c.b16 %v2723, %v2722
    %v2729 = vsel %vm1844, %v2712, 0
    %v2732 = vsel %vm1844, %v2713, 0
    %v2735 = vsel %vm1844, %v2714, 0
    %v2738 = vsel %vm1844, %v2715, 0
    %2740 = vmatpush.bf16.msra.mxu0 0
    %2741 = vmatpush.bf16.msra.mxu0 0
    %2742 = vmatpush.bf16.msra.mxu0 0
    %2743 = vmatpush.bf16.msra.mxu0 0
    %2744 = vmatpush.bf16.msra.mxu0 0
    %2745 = vmatpush.bf16.msra.mxu0 0
    %2746 = vmatpush.bf16.msra.mxu0 %v2725
    %2747 = vmatpush.bf16.msra.mxu0 %v2724
    %2748 = vmatmul.bf16.gmra.mxu0 %v2729
    %v2749 = vpop.f32.mrf.mxu0
    %v2750 = vadd.f32 0.0, %v2749
    %v2751 = vpop.f32.mrf.mxu0
    %v2752 = vadd.f32 0.0, %v2751
    %2753 = vmatmul.bf16.gmra.mxu0 %v2732
    %v2754 = vpop.f32.mrf.mxu0
    %v2755 = vadd.f32 0.0, %v2754
    %v2756 = vpop.f32.mrf.mxu0
    %v2757 = vadd.f32 0.0, %v2756
    %2758 = vmatmul.bf16.gmra.mxu0 %v2735
    %v2759 = vpop.f32.mrf.mxu0
    %v2760 = vadd.f32 0.0, %v2759
    %v2761 = vpop.f32.mrf.mxu0
    %v2762 = vadd.f32 0.0, %v2761
    %2763 = vmatmul.bf16.gmra.mxu0 %v2738
    %v2764 = vpop.f32.mrf.mxu0
    %v2765 = vadd.f32 0.0, %v2764
    %v2766 = vpop.f32.mrf.mxu0
    %v2767 = vadd.f32 0.0, %v2766
    %2768 = vdwg.mxu0
    %v2769 = vadd.f32 %v2692, %v2750
    %v2770 = vadd.f32 %v2693, %v2752
    %v2771 = vadd.f32 %v2694, %v2755
    %v2772 = vadd.f32 %v2695, %v2757
    %v2773 = vadd.f32 %v2696, %v2760
    %v2774 = vadd.f32 %v2697, %v2762
    %v2775 = vadd.f32 %v2698, %v2765
    %v2776 = vadd.f32 %v2699, %v2767
    %v2777 = vld [vmem:[#allocation3 + $0xe] sm:$0xff]
    %v2778 = vld [vmem:[#allocation3 + $0x16] sm:$0xff]
    %v2779 = vld [vmem:[#allocation3 + $0x1e] sm:$0xff]
    %v2780 = vld [vmem:[#allocation3 + $0x26] sm:$0xff]
    %v2781 = vld [vmem:[#allocation3 + $0x2e] sm:$0xff]
    %v2782 = vld [vmem:[#allocation3 + $0x36] sm:$0xff]
    %v2783 = vld [vmem:[#allocation3 + $0x3e] sm:$0xff]
    %v2784 = vld [vmem:[#allocation3 + $0x46] sm:$0x3]
    %v2785 = vld [vmem:[%s4 + $0x80] sm:$0xf]
    %v2786 = vld [vmem:[%s4 + $0x84] sm:$0xf]
    %v2787 = vld [vmem:[%s4 + $0x88] sm:$0xf]
    %v2788 = vld [vmem:[%s4 + $0x8c] sm:$0xf]
    %v2789 = vpack.c.bf16 %v2778, %v2777
    %v2790 = vpack.c.bf16 %v2780, %v2779
    %v2791 = vpack.c.bf16 %v2782, %v2781
    %v2792 = vpack.c.bf16 %v2784, %v2783
    %v2797 = vunpack.c.l.b16 %v2785
    %v2798 = vunpack.c.l.b16 %v2786
    %v2799 = vunpack.c.l.b16 %v2787
    %v2800 = vunpack.c.l.b16 %v2788
    %v2801 = vpack.c.b16 %v2798, %v2797
    %v2802 = vpack.c.b16 %v2800, %v2799
    %v2806 = vsel %vm1844, %v2789, 0
    %v2809 = vsel %vm1844, %v2790, 0
    %v2812 = vsel %vm1844, %v2791, 0
    %v2815 = vsel %vm1844, %v2792, 0
    %2817 = vmatpush.bf16.msra.mxu0 0
    %2818 = vmatpush.bf16.msra.mxu0 0
    %2819 = vmatpush.bf16.msra.mxu0 0
    %2820 = vmatpush.bf16.msra.mxu0 0
    %2821 = vmatpush.bf16.msra.mxu0 0
    %2822 = vmatpush.bf16.msra.mxu0 0
    %2823 = vmatpush.bf16.msra.mxu0 %v2802
    %2824 = vmatpush.bf16.msra.mxu0 %v2801
    %2825 = vmatmul.bf16.gmra.mxu0 %v2806
    %v2826 = vpop.f32.mrf.mxu0
    %v2827 = vadd.f32 0.0, %v2826
    %v2828 = vpop.f32.mrf.mxu0
    %v2829 = vadd.f32 0.0, %v2828
    %2830 = vmatmul.bf16.gmra.mxu0 %v2809
    %v2831 = vpop.f32.mrf.mxu0
    %v2832 = vadd.f32 0.0, %v2831
    %v2833 = vpop.f32.mrf.mxu0
    %v2834 = vadd.f32 0.0, %v2833
    %2835 = vmatmul.bf16.gmra.mxu0 %v2812
    %v2836 = vpop.f32.mrf.mxu0
    %v2837 = vadd.f32 0.0, %v2836
    %v2838 = vpop.f32.mrf.mxu0
    %v2839 = vadd.f32 0.0, %v2838
    %2840 = vmatmul.bf16.gmra.mxu0 %v2815
    %v2841 = vpop.f32.mrf.mxu0
    %v2842 = vadd.f32 0.0, %v2841
    %v2843 = vpop.f32.mrf.mxu0
    %v2844 = vadd.f32 0.0, %v2843
    %2845 = vdwg.mxu0
    %v2846 = vadd.f32 %v2769, %v2827
    %v2847 = vadd.f32 %v2770, %v2829
    %v2848 = vadd.f32 %v2771, %v2832
    %v2849 = vadd.f32 %v2772, %v2834
    %v2850 = vadd.f32 %v2773, %v2837
    %v2851 = vadd.f32 %v2774, %v2839
    %v2852 = vadd.f32 %v2775, %v2842
    %v2853 = vadd.f32 %v2776, %v2844
    %v2854 = vld [vmem:[%s5] sm:$0x1]
    %v2856 = vperm.slane %v2854, 0
    %v2858 = vadd.f32 %v2846, %v2856
    %v2859 = vadd.f32 %v2847, %v2856
    %v2860 = vadd.f32 %v2848, %v2856
    %v2861 = vadd.f32 %v2849, %v2856
    %v2862 = vadd.f32 %v2850, %v2856
    %v2863 = vadd.f32 %v2851, %v2856
    %v2864 = vadd.f32 %v2852, %v2856
    %v2865 = vadd.f32 %v2853, %v2856
    %vm2866 = vcmp.ge.f32.partialorder %v2858, 0.0
    %vm2867 = vcmp.ge.f32.partialorder %v2859, 0.0
    %vm2868 = vcmp.ge.f32.partialorder %v2860, 0.0
    %vm2869 = vcmp.ge.f32.partialorder %v2861, 0.0
    %vm2870 = vcmp.ge.f32.partialorder %v2862, 0.0
    %vm2871 = vcmp.ge.f32.partialorder %v2863, 0.0
    %vm2872 = vcmp.ge.f32.partialorder %v2864, 0.0
    %vm2873 = vcmp.ge.f32.partialorder %v2865, 0.0
    %v2874 = vstv %s2176
    %v2875 = vmul.f32 %v2874, %v2858
    %v2876 = vmul.f32 %v2874, %v2859
    %v2877 = vmul.f32 %v2874, %v2860
    %v2878 = vmul.f32 %v2874, %v2861
    %v2879 = vmul.f32 %v2874, %v2862
    %v2880 = vmul.f32 %v2874, %v2863
    %v2881 = vmul.f32 %v2874, %v2864
    %v2882 = vmul.f32 %v2874, %v2865
    %v2883 = vsel %vm2866, %v2858, %v2875
    %v2884 = vsel %vm2867, %v2859, %v2876
    %v2885 = vsel %vm2868, %v2860, %v2877
    %v2886 = vsel %vm2869, %v2861, %v2878
    %v2887 = vsel %vm2870, %v2862, %v2879
    %v2888 = vsel %vm2871, %v2863, %v2880
    %v2889 = vsel %vm2872, %v2864, %v2881
    %v2890 = vsel %vm2873, %v2865, %v2882
    %vm2891 = vcmask 523264
    %2892 = vst.msk [vmem:[#allocation4] sm:$0xff] %vm2891, %v2883
    %2893 = vst.msk [vmem:[#allocation4 + $0x8] sm:$0xff] %vm2891, %v2884
    %2894 = vst.msk [vmem:[#allocation4 + $0x10] sm:$0xff] %vm2891, %v2885
    %2895 = vst.msk [vmem:[#allocation4 + $0x18] sm:$0xff] %vm2891, %v2886
    %2896 = vst.msk [vmem:[#allocation4 + $0x20] sm:$0xff] %vm2891, %v2887
    %2897 = vst.msk [vmem:[#allocation4 + $0x28] sm:$0xff] %vm2891, %v2888
    %2898 = vst.msk [vmem:[#allocation4 + $0x30] sm:$0xff] %vm2891, %v2889
    %vm2899 = vcmask 517120
    %2900 = vst.msk [vmem:[#allocation4 + $0x38] sm:$0x3] %vm2899, %v2890
    %v2901 = vld [vmem:[#allocation4] sm:$0xff]
    %v2902 = vld [vmem:[#allocation4 + $0x8] sm:$0xff]
    %v2903 = vld [vmem:[#allocation4 + $0x10] sm:$0xff]
    %v2904 = vld [vmem:[#allocation4 + $0x18] sm:$0xff]
    %v2905 = vld [vmem:[#allocation4 + $0x20] sm:$0xff]
    %v2906 = vld [vmem:[#allocation4 + $0x28] sm:$0xff]
    %v2907 = vld [vmem:[#allocation4 + $0x30] sm:$0x7]
    %v2908 = vld [vmem:[#allocation4 + $0x1] sm:$0xff]
    %v2909 = vld [vmem:[#allocation4 + $0x9] sm:$0xff]
    %v2910 = vld [vmem:[#allocation4 + $0x11] sm:$0xff]
    %v2911 = vld [vmem:[#allocation4 + $0x19] sm:$0xff]
    %v2912 = vld [vmem:[#allocation4 + $0x21] sm:$0xff]
    %v2913 = vld [vmem:[#allocation4 + $0x29] sm:$0xff]
    %v2914 = vld [vmem:[#allocation4 + $0x31] sm:$0x7]
    %v2915 = vmax.f32 %v2901, %v2908
    %v2916 = vmax.f32 %v2902, %v2909
    %v2917 = vmax.f32 %v2903, %v2910
    %v2918 = vmax.f32 %v2904, %v2911
    %v2919 = vmax.f32 %v2905, %v2912
    %v2920 = vmax.f32 %v2906, %v2913
    %v2921 = vmax.f32 %v2907, %v2914
    %v2922 = vld [vmem:[#allocation4 + $0x6] sm:$0xff]
    %v2923 = vld [vmem:[#allocation4 + $0xe] sm:$0xff]
    %v2924 = vld [vmem:[#allocation4 + $0x16] sm:$0xff]
    %v2925 = vld [vmem:[#allocation4 + $0x1e] sm:$0xff]
    %v2926 = vld [vmem:[#allocation4 + $0x26] sm:$0xff]
    %v2927 = vld [vmem:[#allocation4 + $0x2e] sm:$0xff]
    %v2928 = vld [vmem:[#allocation4 + $0x36] sm:$0x7]
    %v2929 = vld [vmem:[#allocation4 + $0x7] sm:$0xff]
    %v2930 = vld [vmem:[#allocation4 + $0xf] sm:$0xff]
    %v2931 = vld [vmem:[#allocation4 + $0x17] sm:$0xff]
    %v2932 = vld [vmem:[#allocation4 + $0x1f] sm:$0xff]
    %v2933 = vld [vmem:[#allocation4 + $0x27] sm:$0xff]
    %v2934 = vld [vmem:[#allocation4 + $0x2f] sm:$0xff]
    %v2935 = vld [vmem:[#allocation4 + $0x37] sm:$0x7]
    %v2936 = vmax.f32 %v2922, %v2929
    %v2937 = vmax.f32 %v2923, %v2930
    %v2938 = vmax.f32 %v2924, %v2931
    %v2939 = vmax.f32 %v2925, %v2932
    %v2940 = vmax.f32 %v2926, %v2933
    %v2941 = vmax.f32 %v2927, %v2934
    %v2942 = vmax.f32 %v2928, %v2935
    %v2943 = vmax.f32 %v2915, %v2936
    %v2944 = vmax.f32 %v2916, %v2937
    %v2945 = vmax.f32 %v2917, %v2938
    %v2946 = vmax.f32 %v2918, %v2939
    %v2947 = vmax.f32 %v2919, %v2940
    %v2948 = vmax.f32 %v2920, %v2941
    %v2949 = vmax.f32 %v2921, %v2942
    %v2950 = vld [vmem:[%s6] sm:$0xf]
    %v2951 = vld [vmem:[%s6 + $0x4] sm:$0xf]
    %v2952 = vld [vmem:[%s6 + $0x8] sm:$0xf]
    %v2953 = vld [vmem:[%s6 + $0xc] sm:$0xf]
    %v2954 = vpack.c.bf16 %v2944, %v2943
    %v2955 = vpack.c.bf16 %v2946, %v2945
    %v2956 = vpack.c.bf16 %v2948, %v2947
    %v2957 = vpack.c.bf16 %v2949, %v2949
    %v2962 = vunpack.c.l.b16 %v2950
    %v2963 = vunpack.c.l.b16 %v2951
    %v2964 = vunpack.c.l.b16 %v2952
    %v2965 = vunpack.c.l.b16 %v2953
    %v2966 = vpack.c.b16 %v2963, %v2962
    %v2967 = vpack.c.b16 %v2965, %v2964
    %vm2968 = vcmask 416768
    %v2970 = vsel %vm2968, %v2966, 0
    %v2973 = vsel %vm2968, %v2967, 0
    %vm2975 = vcmask 1040384
    %vm2976 = vcmask 1041408
    %v2977 = vsel %vm2975, 4294967295, 65535
    %v2978 = vsel %vm2976, %v2977, 0
    %v2980 = vand.u32 %v2957, %v2978
    %2982 = vmatpush.bf16.msra.mxu0 0
    %2983 = vmatpush.bf16.msra.mxu0 0
    %2984 = vmatpush.bf16.msra.mxu0 0
    %2985 = vmatpush.bf16.msra.mxu0 0
    %2986 = vmatpush.bf16.msra.mxu0 %v2980
    %2987 = vmatpush.bf16.msra.mxu0 %v2956
    %2988 = vmatpush.bf16.msra.mxu0 %v2955
    %2989 = vmatpush.bf16.msra.mxu0 %v2954
    %2990 = vmatmul.bf16.gmra.mxu0 %v2970
    %v2991 = vpop.f32.mrf.mxu0
    %v2992 = vadd.f32 0.0, %v2991
    %v2993 = vpop.f32.mrf.mxu0
    %v2994 = vadd.f32 0.0, %v2993
    %2995 = vmatmul.bf16.gmra.mxu0 %v2973
    %v2996 = vpop.f32.mrf.mxu0
    %v2997 = vadd.f32 0.0, %v2996
    %v2998 = vpop.f32.mrf.mxu0
    %v2999 = vadd.f32 0.0, %v2998
    %3000 = vdwg.mxu0
    %3001 = vst.msk [vmem:[#allocation5] sm:$0xff] %vm2891, %v2992
    %3002 = vst.msk [vmem:[#allocation5 + $0x8] sm:$0xff] %vm2891, %v2994
    %3003 = vst.msk [vmem:[#allocation5 + $0x10] sm:$0xff] %vm2891, %v2997
    %3004 = vst.msk [vmem:[#allocation5 + $0x18] sm:$0xff] %vm2891, %v2999
    %s3005 = sld [smem:[#allocation7 + $0x2]]
    %v3006 = vld [vmem:[#allocation5] sm:$0xff]
    %v3007 = vld [vmem:[#allocation5 + $0x8] sm:$0xff]
    %v3008 = vld [vmem:[#allocation5 + $0x10] sm:$0x3f]
    %v3009 = vld [vmem:[%s7] sm:$0xf]
    %v3010 = vld [vmem:[%s7 + $0x4] sm:$0xf]
    %v3011 = vld [vmem:[%s7 + $0x8] sm:$0xf]
    %v3012 = vld [vmem:[%s7 + $0xc] sm:$0xf]
    %v3013 = vld [vmem:[%s7 + $0x10] sm:$0xf]
    %v3014 = vld [vmem:[%s7 + $0x14] sm:$0xf]
    %v3015 = vld [vmem:[%s7 + $0x18] sm:$0xf]
    %v3016 = vld [vmem:[%s7 + $0x1c] sm:$0xf]
    %v3017 = vpack.c.bf16 %v3007, %v3006
    %v3018 = vpack.c.bf16 %v3008, %v3008
    %v3019 = vld [vmem:[#allocation5 + $0x1] sm:$0xff]
    %v3020 = vld [vmem:[#allocation5 + $0x9] sm:$0xff]
    %v3021 = vld [vmem:[#allocation5 + $0x11] sm:$0x3f]
    %v3022 = vld [vmem:[%s7 + $0x20] sm:$0xf]
    %v3023 = vld [vmem:[%s7 + $0x24] sm:$0xf]
    %v3024 = vld [vmem:[%s7 + $0x28] sm:$0xf]
    %v3025 = vld [vmem:[%s7 + $0x2c] sm:$0xf]
    %v3026 = vld [vmem:[%s7 + $0x30] sm:$0xf]
    %v3027 = vld [vmem:[%s7 + $0x34] sm:$0xf]
    %v3028 = vld [vmem:[%s7 + $0x38] sm:$0xf]
    %v3029 = vld [vmem:[%s7 + $0x3c] sm:$0xf]
    %v3030 = vpack.c.bf16 %v3020, %v3019
    %v3031 = vpack.c.bf16 %v3021, %v3021
    %v3040 = vunpack.c.l.b16 %v3022
    %v3041 = vunpack.c.l.b16 %v3023
    %v3042 = vunpack.c.l.b16 %v3024
    %v3043 = vunpack.c.l.b16 %v3025
    %v3044 = vunpack.c.l.b16 %v3026
    %v3045 = vunpack.c.l.b16 %v3027
    %v3046 = vunpack.c.l.b16 %v3028
    %v3047 = vunpack.c.l.b16 %v3029
    %v3048 = vpack.c.b16 %v3041, %v3040
    %v3049 = vpack.c.b16 %v3043, %v3042
    %v3050 = vpack.c.b16 %v3045, %v3044
    %v3051 = vpack.c.b16 %v3047, %v3046
    %v3057 = vsel %vm2891, %v3030, 0
    %v3060 = vsel %vm2891, %v3031, 0
    %3062 = vmatpush.bf16.msra.mxu0 0
    %3063 = vmatpush.bf16.msra.mxu0 0
    %3064 = vmatpush.bf16.msra.mxu0 0
    %3065 = vmatpush.bf16.msra.mxu0 0
    %3066 = vmatpush.bf16.msra.mxu0 %v3051
    %3067 = vmatpush.bf16.msra.mxu0 %v3050
    %3068 = vmatpush.bf16.msra.mxu0 %v3049
    %3069 = vmatpush.bf16.msra.mxu0 %v3048
    %3070 = vmatmul.bf16.gmra.mxu0 %v3057
    %v3071 = vpop.f32.mrf.mxu0
    %v3072 = vadd.f32 0.0, %v3071
    %v3073 = vpop.f32.mrf.mxu0
    %v3074 = vadd.f32 0.0, %v3073
    %3075 = vmatmul.bf16.gmra.mxu0 %v3060
    %v3076 = vpop.f32.mrf.mxu0
    %v3077 = vadd.f32 0.0, %v3076
    %v3078 = vpop.f32.mrf.mxu0
    %3079 = vdwg.mxu0
    %v3088 = vunpack.c.l.b16 %v3009
    %v3089 = vunpack.c.l.b16 %v3010
    %v3090 = vunpack.c.l.b16 %v3011
    %v3091 = vunpack.c.l.b16 %v3012
    %v3092 = vunpack.c.l.b16 %v3013
    %v3093 = vunpack.c.l.b16 %v3014
    %v3094 = vunpack.c.l.b16 %v3015
    %v3095 = vunpack.c.l.b16 %v3016
    %v3096 = vpack.c.b16 %v3089, %v3088
    %v3097 = vpack.c.b16 %v3091, %v3090
    %v3098 = vpack.c.b16 %v3093, %v3092
    %v3099 = vpack.c.b16 %v3095, %v3094
    %v3105 = vsel %vm2891, %v3017, 0
    %v3108 = vsel %vm2891, %v3018, 0
    %3110 = vmatpush.bf16.msra.mxu0 0
    %3111 = vmatpush.bf16.msra.mxu0 0
    %3112 = vmatpush.bf16.msra.mxu0 0
    %3113 = vmatpush.bf16.msra.mxu0 0
    %3114 = vmatpush.bf16.msra.mxu0 %v3099
    %3115 = vmatpush.bf16.msra.mxu0 %v3098
    %3116 = vmatpush.bf16.msra.mxu0 %v3097
    %3117 = vmatpush.bf16.msra.mxu0 %v3096
    %3118 = vmatmul.bf16.gmra.mxu0 %v3105
    %v3119 = vpop.f32.mrf.mxu0
    %v3120 = vadd.f32 %v3072, %v3119
    %v3121 = vpop.f32.mrf.mxu0
    %v3122 = vadd.f32 %v3074, %v3121
    %3123 = vmatmul.bf16.gmra.mxu0 %v3108
    %v3124 = vpop.f32.mrf.mxu0
    %v3125 = vadd.f32 %v3077, %v3124
    %v3126 = vpop.f32.mrf.mxu0
    %3127 = vdwg.mxu0
    %v3128 = vld [vmem:[#allocation5 + $0x2] sm:$0xff]
    %v3129 = vld [vmem:[#allocation5 + $0xa] sm:$0xff]
    %v3130 = vld [vmem:[#allocation5 + $0x12] sm:$0x3f]
    %v3131 = vld [vmem:[%s7 + $0x40] sm:$0xf]
    %v3132 = vld [vmem:[%s7 + $0x44] sm:$0xf]
    %v3133 = vld [vmem:[%s7 + $0x48] sm:$0xf]
    %v3134 = vld [vmem:[%s7 + $0x4c] sm:$0xf]
    %v3135 = vld [vmem:[%s7 + $0x50] sm:$0xf]
    %v3136 = vld [vmem:[%s7 + $0x54] sm:$0xf]
    %v3137 = vld [vmem:[%s7 + $0x58] sm:$0xf]
    %v3138 = vld [vmem:[%s7 + $0x5c] sm:$0xf]
    %v3139 = vpack.c.bf16 %v3129, %v3128
    %v3140 = vpack.c.bf16 %v3130, %v3130
    %v3149 = vunpack.c.l.b16 %v3131
    %v3150 = vunpack.c.l.b16 %v3132
    %v3151 = vunpack.c.l.b16 %v3133
    %v3152 = vunpack.c.l.b16 %v3134
    %v3153 = vunpack.c.l.b16 %v3135
    %v3154 = vunpack.c.l.b16 %v3136
    %v3155 = vunpack.c.l.b16 %v3137
    %v3156 = vunpack.c.l.b16 %v3138
    %v3157 = vpack.c.b16 %v3150, %v3149
    %v3158 = vpack.c.b16 %v3152, %v3151
    %v3159 = vpack.c.b16 %v3154, %v3153
    %v3160 = vpack.c.b16 %v3156, %v3155
    %v3166 = vsel %vm2891, %v3139, 0
    %v3169 = vsel %vm2891, %v3140, 0
    %3171 = vmatpush.bf16.msra.mxu0 0
    %3172 = vmatpush.bf16.msra.mxu0 0
    %3173 = vmatpush.bf16.msra.mxu0 0
    %3174 = vmatpush.bf16.msra.mxu0 0
    %3175 = vmatpush.bf16.msra.mxu0 %v3160
    %3176 = vmatpush.bf16.msra.mxu0 %v3159
    %3177 = vmatpush.bf16.msra.mxu0 %v3158
    %3178 = vmatpush.bf16.msra.mxu0 %v3157
    %3179 = vmatmul.bf16.gmra.mxu0 %v3166
    %v3180 = vpop.f32.mrf.mxu0
    %v3181 = vadd.f32 0.0, %v3180
    %v3182 = vpop.f32.mrf.mxu0
    %v3183 = vadd.f32 0.0, %v3182
    %3184 = vmatmul.bf16.gmra.mxu0 %v3169
    %v3185 = vpop.f32.mrf.mxu0
    %v3186 = vadd.f32 0.0, %v3185
    %v3187 = vpop.f32.mrf.mxu0
    %3188 = vdwg.mxu0
    %v3189 = vadd.f32 %v3120, %v3181
    %v3190 = vadd.f32 %v3122, %v3183
    %v3191 = vadd.f32 %v3125, %v3186
    %v3192 = vld [vmem:[#allocation5 + $0x4] sm:$0xff]
    %v3193 = vld [vmem:[#allocation5 + $0xc] sm:$0xff]
    %v3194 = vld [vmem:[#allocation5 + $0x14] sm:$0x3f]
    %v3195 = vld [vmem:[%s7 + $0x60] sm:$0xf]
    %v3196 = vld [vmem:[%s7 + $0x64] sm:$0xf]
    %v3197 = vld [vmem:[%s7 + $0x68] sm:$0xf]
    %v3198 = vld [vmem:[%s7 + $0x6c] sm:$0xf]
    %v3199 = vld [vmem:[%s7 + $0x70] sm:$0xf]
    %v3200 = vld [vmem:[%s7 + $0x74] sm:$0xf]
    %v3201 = vld [vmem:[%s7 + $0x78] sm:$0xf]
    %v3202 = vld [vmem:[%s7 + $0x7c] sm:$0xf]
    %v3203 = vpack.c.bf16 %v3193, %v3192
    %v3204 = vpack.c.bf16 %v3194, %v3194
    %v3213 = vunpack.c.l.b16 %v3195
    %v3214 = vunpack.c.l.b16 %v3196
    %v3215 = vunpack.c.l.b16 %v3197
    %v3216 = vunpack.c.l.b16 %v3198
    %v3217 = vunpack.c.l.b16 %v3199
    %v3218 = vunpack.c.l.b16 %v3200
    %v3219 = vunpack.c.l.b16 %v3201
    %v3220 = vunpack.c.l.b16 %v3202
    %v3221 = vpack.c.b16 %v3214, %v3213
    %v3222 = vpack.c.b16 %v3216, %v3215
    %v3223 = vpack.c.b16 %v3218, %v3217
    %v3224 = vpack.c.b16 %v3220, %v3219
    %v3230 = vsel %vm2891, %v3203, 0
    %v3233 = vsel %vm2891, %v3204, 0
    %3235 = vmatpush.bf16.msra.mxu0 0
    %3236 = vmatpush.bf16.msra.mxu0 0
    %3237 = vmatpush.bf16.msra.mxu0 0
    %3238 = vmatpush.bf16.msra.mxu0 0
    %3239 = vmatpush.bf16.msra.mxu0 %v3224
    %3240 = vmatpush.bf16.msra.mxu0 %v3223
    %3241 = vmatpush.bf16.msra.mxu0 %v3222
    %3242 = vmatpush.bf16.msra.mxu0 %v3221
    %3243 = vmatmul.bf16.gmra.mxu0 %v3230
    %v3244 = vpop.f32.mrf.mxu0
    %v3245 = vadd.f32 0.0, %v3244
    %v3246 = vpop.f32.mrf.mxu0
    %v3247 = vadd.f32 0.0, %v3246
    %3248 = vmatmul.bf16.gmra.mxu0 %v3233
    %v3249 = vpop.f32.mrf.mxu0
    %v3250 = vadd.f32 0.0, %v3249
    %v3251 = vpop.f32.mrf.mxu0
    %3252 = vdwg.mxu0
    %v3253 = vadd.f32 %v3189, %v3245
    %v3254 = vadd.f32 %v3190, %v3247
    %v3255 = vadd.f32 %v3191, %v3250
    %v3256 = vld [vmem:[#allocation5 + $0x5] sm:$0xff]
    %v3257 = vld [vmem:[#allocation5 + $0xd] sm:$0xff]
    %v3258 = vld [vmem:[#allocation5 + $0x15] sm:$0x3f]
    %v3259 = vld [vmem:[%s7 + $0x80] sm:$0xf]
    %v3260 = vld [vmem:[%s7 + $0x84] sm:$0xf]
    %v3261 = vld [vmem:[%s7 + $0x88] sm:$0xf]
    %v3262 = vld [vmem:[%s7 + $0x8c] sm:$0xf]
    %v3263 = vld [vmem:[%s7 + $0x90] sm:$0xf]
    %v3264 = vld [vmem:[%s7 + $0x94] sm:$0xf]
    %v3265 = vld [vmem:[%s7 + $0x98] sm:$0xf]
    %v3266 = vld [vmem:[%s7 + $0x9c] sm:$0xf]
    %v3267 = vpack.c.bf16 %v3257, %v3256
    %v3268 = vpack.c.bf16 %v3258, %v3258
    %v3277 = vunpack.c.l.b16 %v3259
    %v3278 = vunpack.c.l.b16 %v3260
    %v3279 = vunpack.c.l.b16 %v3261
    %v3280 = vunpack.c.l.b16 %v3262
    %v3281 = vunpack.c.l.b16 %v3263
    %v3282 = vunpack.c.l.b16 %v3264
    %v3283 = vunpack.c.l.b16 %v3265
    %v3284 = vunpack.c.l.b16 %v3266
    %v3285 = vpack.c.b16 %v3278, %v3277
    %v3286 = vpack.c.b16 %v3280, %v3279
    %v3287 = vpack.c.b16 %v3282, %v3281
    %v3288 = vpack.c.b16 %v3284, %v3283
    %v3294 = vsel %vm2891, %v3267, 0
    %v3297 = vsel %vm2891, %v3268, 0
    %3299 = vmatpush.bf16.msra.mxu0 0
    %3300 = vmatpush.bf16.msra.mxu0 0
    %3301 = vmatpush.bf16.msra.mxu0 0
    %3302 = vmatpush.bf16.msra.mxu0 0
    %3303 = vmatpush.bf16.msra.mxu0 %v3288
    %3304 = vmatpush.bf16.msra.mxu0 %v3287
    %3305 = vmatpush.bf16.msra.mxu0 %v3286
    %3306 = vmatpush.bf16.msra.mxu0 %v3285
    %3307 = vmatmul.bf16.gmra.mxu0 %v3294
    %v3308 = vpop.f32.mrf.mxu0
    %v3309 = vadd.f32 0.0, %v3308
    %v3310 = vpop.f32.mrf.mxu0
    %v3311 = vadd.f32 0.0, %v3310
    %3312 = vmatmul.bf16.gmra.mxu0 %v3297
    %v3313 = vpop.f32.mrf.mxu0
    %v3314 = vadd.f32 0.0, %v3313
    %v3315 = vpop.f32.mrf.mxu0
    %3316 = vdwg.mxu0
    %v3317 = vadd.f32 %v3253, %v3309
    %v3318 = vadd.f32 %v3254, %v3311
    %v3319 = vadd.f32 %v3255, %v3314
    %v3320 = vld [vmem:[#allocation5 + $0x6] sm:$0xff]
    %v3321 = vld [vmem:[#allocation5 + $0xe] sm:$0xff]
    %v3322 = vld [vmem:[#allocation5 + $0x16] sm:$0x3f]
    %v3323 = vld [vmem:[%s7 + $0xa0] sm:$0xf]
    %v3324 = vld [vmem:[%s7 + $0xa4] sm:$0xf]
    %v3325 = vld [vmem:[%s7 + $0xa8] sm:$0xf]
    %v3326 = vld [vmem:[%s7 + $0xac] sm:$0xf]
    %v3327 = vld [vmem:[%s7 + $0xb0] sm:$0xf]
    %v3328 = vld [vmem:[%s7 + $0xb4] sm:$0xf]
    %v3329 = vld [vmem:[%s7 + $0xb8] sm:$0xf]
    %v3330 = vld [vmem:[%s7 + $0xbc] sm:$0xf]
    %v3331 = vpack.c.bf16 %v3321, %v3320
    %v3332 = vpack.c.bf16 %v3322, %v3322
    %v3341 = vunpack.c.l.b16 %v3323
    %v3342 = vunpack.c.l.b16 %v3324
    %v3343 = vunpack.c.l.b16 %v3325
    %v3344 = vunpack.c.l.b16 %v3326
    %v3345 = vunpack.c.l.b16 %v3327
    %v3346 = vunpack.c.l.b16 %v3328
    %v3347 = vunpack.c.l.b16 %v3329
    %v3348 = vunpack.c.l.b16 %v3330
    %v3349 = vpack.c.b16 %v3342, %v3341
    %v3350 = vpack.c.b16 %v3344, %v3343
    %v3351 = vpack.c.b16 %v3346, %v3345
    %v3352 = vpack.c.b16 %v3348, %v3347
    %v3358 = vsel %vm2891, %v3331, 0
    %v3361 = vsel %vm2891, %v3332, 0
    %3363 = vmatpush.bf16.msra.mxu0 0
    %3364 = vmatpush.bf16.msra.mxu0 0
    %3365 = vmatpush.bf16.msra.mxu0 0
    %3366 = vmatpush.bf16.msra.mxu0 0
    %3367 = vmatpush.bf16.msra.mxu0 %v3352
    %3368 = vmatpush.bf16.msra.mxu0 %v3351
    %3369 = vmatpush.bf16.msra.mxu0 %v3350
    %3370 = vmatpush.bf16.msra.mxu0 %v3349
    %3371 = vmatmul.bf16.gmra.mxu0 %v3358
    %v3372 = vpop.f32.mrf.mxu0
    %v3373 = vadd.f32 0.0, %v3372
    %v3374 = vpop.f32.mrf.mxu0
    %v3375 = vadd.f32 0.0, %v3374
    %3376 = vmatmul.bf16.gmra.mxu0 %v3361
    %v3377 = vpop.f32.mrf.mxu0
    %v3378 = vadd.f32 0.0, %v3377
    %v3379 = vpop.f32.mrf.mxu0
    %3380 = vdwg.mxu0
    %v3381 = vadd.f32 %v3317, %v3373
    %v3382 = vadd.f32 %v3318, %v3375
    %v3383 = vadd.f32 %v3319, %v3378
    %v3384 = vld [vmem:[#allocation5 + $0x8] sm:$0xff]
    %v3385 = vld [vmem:[#allocation5 + $0x10] sm:$0xff]
    %v3386 = vld [vmem:[#allocation5 + $0x18] sm:$0x3f]
    %v3387 = vld [vmem:[%s7 + $0xc0] sm:$0xf]
    %v3388 = vld [vmem:[%s7 + $0xc4] sm:$0xf]
    %v3389 = vld [vmem:[%s7 + $0xc8] sm:$0xf]
    %v3390 = vld [vmem:[%s7 + $0xcc] sm:$0xf]
    %v3391 = vld [vmem:[%s7 + $0xd0] sm:$0xf]
    %v3392 = vld [vmem:[%s7 + $0xd4] sm:$0xf]
    %v3393 = vld [vmem:[%s7 + $0xd8] sm:$0xf]
    %v3394 = vld [vmem:[%s7 + $0xdc] sm:$0xf]
    %v3395 = vpack.c.bf16 %v3385, %v3384
    %v3396 = vpack.c.bf16 %v3386, %v3386
    %v3405 = vunpack.c.l.b16 %v3387
    %v3406 = vunpack.c.l.b16 %v3388
    %v3407 = vunpack.c.l.b16 %v3389
    %v3408 = vunpack.c.l.b16 %v3390
    %v3409 = vunpack.c.l.b16 %v3391
    %v3410 = vunpack.c.l.b16 %v3392
    %v3411 = vunpack.c.l.b16 %v3393
    %v3412 = vunpack.c.l.b16 %v3394
    %v3413 = vpack.c.b16 %v3406, %v3405
    %v3414 = vpack.c.b16 %v3408, %v3407
    %v3415 = vpack.c.b16 %v3410, %v3409
    %v3416 = vpack.c.b16 %v3412, %v3411
    %v3422 = vsel %vm2891, %v3395, 0
    %v3425 = vsel %vm2891, %v3396, 0
    %3427 = vmatpush.bf16.msra.mxu0 0
    %3428 = vmatpush.bf16.msra.mxu0 0
    %3429 = vmatpush.bf16.msra.mxu0 0
    %3430 = vmatpush.bf16.msra.mxu0 0
    %3431 = vmatpush.bf16.msra.mxu0 %v3416
    %3432 = vmatpush.bf16.msra.mxu0 %v3415
    %3433 = vmatpush.bf16.msra.mxu0 %v3414
    %3434 = vmatpush.bf16.msra.mxu0 %v3413
    %3435 = vmatmul.bf16.gmra.mxu0 %v3422
    %v3436 = vpop.f32.mrf.mxu0
    %v3437 = vadd.f32 0.0, %v3436
    %v3438 = vpop.f32.mrf.mxu0
    %v3439 = vadd.f32 0.0, %v3438
    %3440 = vmatmul.bf16.gmra.mxu0 %v3425
    %v3441 = vpop.f32.mrf.mxu0
    %v3442 = vadd.f32 0.0, %v3441
    %v3443 = vpop.f32.mrf.mxu0
    %3444 = vdwg.mxu0
    %v3445 = vadd.f32 %v3381, %v3437
    %v3446 = vadd.f32 %v3382, %v3439
    %v3447 = vadd.f32 %v3383, %v3442
    %v3448 = vld [vmem:[#allocation5 + $0x9] sm:$0xff]
    %v3449 = vld [vmem:[#allocation5 + $0x11] sm:$0xff]
    %v3450 = vld [vmem:[#allocation5 + $0x19] sm:$0x3f]
    %v3451 = vld [vmem:[%s7 + $0xe0] sm:$0xf]
    %v3452 = vld [vmem:[%s7 + $0xe4] sm:$0xf]
    %v3453 = vld [vmem:[%s7 + $0xe8] sm:$0xf]
    %v3454 = vld [vmem:[%s7 + $0xec] sm:$0xf]
    %v3455 = vld [vmem:[%s7 + $0xf0] sm:$0xf]
    %v3456 = vld [vmem:[%s7 + $0xf4] sm:$0xf]
    %v3457 = vld [vmem:[%s7 + $0xf8] sm:$0xf]
    %v3458 = vld [vmem:[%s7 + $0xfc] sm:$0xf]
    %v3459 = vpack.c.bf16 %v3449, %v3448
    %v3460 = vpack.c.bf16 %v3450, %v3450
    %v3469 = vunpack.c.l.b16 %v3451
    %v3470 = vunpack.c.l.b16 %v3452
    %v3471 = vunpack.c.l.b16 %v3453
    %v3472 = vunpack.c.l.b16 %v3454
    %v3473 = vunpack.c.l.b16 %v3455
    %v3474 = vunpack.c.l.b16 %v3456
    %v3475 = vunpack.c.l.b16 %v3457
    %v3476 = vunpack.c.l.b16 %v3458
    %v3477 = vpack.c.b16 %v3470, %v3469
    %v3478 = vpack.c.b16 %v3472, %v3471
    %v3479 = vpack.c.b16 %v3474, %v3473
    %v3480 = vpack.c.b16 %v3476, %v3475
    %v3486 = vsel %vm2891, %v3459, 0
    %v3489 = vsel %vm2891, %v3460, 0
    %3491 = vmatpush.bf16.msra.mxu0 0
    %3492 = vmatpush.bf16.msra.mxu0 0
    %3493 = vmatpush.bf16.msra.mxu0 0
    %3494 = vmatpush.bf16.msra.mxu0 0
    %3495 = vmatpush.bf16.msra.mxu0 %v3480
    %3496 = vmatpush.bf16.msra.mxu0 %v3479
    %3497 = vmatpush.bf16.msra.mxu0 %v3478
    %3498 = vmatpush.bf16.msra.mxu0 %v3477
    %3499 = vmatmul.bf16.gmra.mxu0 %v3486
    %v3500 = vpop.f32.mrf.mxu0
    %v3501 = vadd.f32 0.0, %v3500
    %v3502 = vpop.f32.mrf.mxu0
    %v3503 = vadd.f32 0.0, %v3502
    %3504 = vmatmul.bf16.gmra.mxu0 %v3489
    %v3505 = vpop.f32.mrf.mxu0
    %v3506 = vadd.f32 0.0, %v3505
    %v3507 = vpop.f32.mrf.mxu0
    %3508 = vdwg.mxu0
    %v3509 = vadd.f32 %v3445, %v3501
    %v3510 = vadd.f32 %v3446, %v3503
    %v3511 = vadd.f32 %v3447, %v3506
    %v3512 = vld [vmem:[#allocation5 + $0xa] sm:$0xff]
    %v3513 = vld [vmem:[#allocation5 + $0x12] sm:$0xff]
    %v3514 = vld [vmem:[#allocation5 + $0x1a] sm:$0x3f]
    %v3515 = vld [vmem:[%s7 + $0x100] sm:$0xf]
    %v3516 = vld [vmem:[%s7 + $0x104] sm:$0xf]
    %v3517 = vld [vmem:[%s7 + $0x108] sm:$0xf]
    %v3518 = vld [vmem:[%s7 + $0x10c] sm:$0xf]
    %v3519 = vld [vmem:[%s7 + $0x110] sm:$0xf]
    %v3520 = vld [vmem:[%s7 + $0x114] sm:$0xf]
    %v3521 = vld [vmem:[%s7 + $0x118] sm:$0xf]
    %v3522 = vld [vmem:[%s7 + $0x11c] sm:$0xf]
    %v3523 = vpack.c.bf16 %v3513, %v3512
    %v3524 = vpack.c.bf16 %v3514, %v3514
    %v3533 = vunpack.c.l.b16 %v3515
    %v3534 = vunpack.c.l.b16 %v3516
    %v3535 = vunpack.c.l.b16 %v3517
    %v3536 = vunpack.c.l.b16 %v3518
    %v3537 = vunpack.c.l.b16 %v3519
    %v3538 = vunpack.c.l.b16 %v3520
    %v3539 = vunpack.c.l.b16 %v3521
    %v3540 = vunpack.c.l.b16 %v3522
    %v3541 = vpack.c.b16 %v3534, %v3533
    %v3542 = vpack.c.b16 %v3536, %v3535
    %v3543 = vpack.c.b16 %v3538, %v3537
    %v3544 = vpack.c.b16 %v3540, %v3539
    %v3550 = vsel %vm2891, %v3523, 0
    %v3553 = vsel %vm2891, %v3524, 0
    %3555 = vmatpush.bf16.msra.mxu0 0
    %3556 = vmatpush.bf16.msra.mxu0 0
    %3557 = vmatpush.bf16.msra.mxu0 0
    %3558 = vmatpush.bf16.msra.mxu0 0
    %3559 = vmatpush.bf16.msra.mxu0 %v3544
    %3560 = vmatpush.bf16.msra.mxu0 %v3543
    %3561 = vmatpush.bf16.msra.mxu0 %v3542
    %3562 = vmatpush.bf16.msra.mxu0 %v3541
    %3563 = vmatmul.bf16.gmra.mxu0 %v3550
    %v3564 = vpop.f32.mrf.mxu0
    %v3565 = vadd.f32 0.0, %v3564
    %v3566 = vpop.f32.mrf.mxu0
    %v3567 = vadd.f32 0.0, %v3566
    %3568 = vmatmul.bf16.gmra.mxu0 %v3553
    %v3569 = vpop.f32.mrf.mxu0
    %v3570 = vadd.f32 0.0, %v3569
    %v3571 = vpop.f32.mrf.mxu0
    %3572 = vdwg.mxu0
    %v3573 = vadd.f32 %v3509, %v3565
    %v3574 = vadd.f32 %v3510, %v3567
    %v3575 = vadd.f32 %v3511, %v3570
    %v3576 = vld [vmem:[%s8] sm:$0x1]
    %v3578 = vperm.slane %v3576, 0
    %v3580 = vadd.f32 %v3573, %v3578
    %v3581 = vadd.f32 %v3574, %v3578
    %v3582 = vadd.f32 %v3575, %v3578
    %vm3583 = vcmp.ge.f32.partialorder %v3580, 0.0
    %vm3584 = vcmp.ge.f32.partialorder %v3581, 0.0
    %vm3585 = vcmp.ge.f32.partialorder %v3582, 0.0
    %v3586 = vstv %s3005
    %v3587 = vmul.f32 %v3586, %v3580
    %v3588 = vmul.f32 %v3586, %v3581
    %v3589 = vmul.f32 %v3586, %v3582
    %v3590 = vsel %vm3583, %v3580, %v3587
    %v3591 = vsel %vm3584, %v3581, %v3588
    %v3592 = vsel %vm3585, %v3582, %v3589
    %3593 = vst [vmem:[#allocation6] sm:$0xff] %v3590
    %3594 = vst [vmem:[#allocation6 + $0x8] sm:$0xff] %v3591
    %3595 = vst [vmem:[#allocation6 + $0x10] sm:$0x3f] %v3592
    %v3596 = vld [vmem:[#allocation6] sm:$0xff]
    %v3597 = vld [vmem:[#allocation6 + $0x8] sm:$0xff]
    %v3598 = vld [vmem:[#allocation6 + $0x10] sm:$0x1]
    %v3599 = vld [vmem:[#allocation6 + $0x1] sm:$0xff]
    %v3600 = vld [vmem:[#allocation6 + $0x9] sm:$0xff]
    %v3601 = vld [vmem:[#allocation6 + $0x11] sm:$0x1]
    %v3602 = vmax.f32 %v3596, %v3599
    %v3603 = vmax.f32 %v3597, %v3600
    %v3604 = vmax.f32 %v3598, %v3601
    %v3605 = vld [vmem:[#allocation6 + $0x4] sm:$0xff]
    %v3606 = vld [vmem:[#allocation6 + $0xc] sm:$0xff]
    %v3607 = vld [vmem:[#allocation6 + $0x14] sm:$0x1]
    %v3608 = vld [vmem:[#allocation6 + $0x5] sm:$0xff]
    %v3609 = vld [vmem:[#allocation6 + $0xd] sm:$0xff]
    %v3610 = vld [vmem:[#allocation6 + $0x15] sm:$0x1]
    %v3611 = vmax.f32 %v3605, %v3608
    %v3612 = vmax.f32 %v3606, %v3609
    %v3613 = vmax.f32 %v3607, %v3610
    %v3614 = vmax.f32 %v3602, %v3611
    %v3615 = vmax.f32 %v3603, %v3612
    %v3616 = vmax.f32 %v3604, %v3613
    %v3617 = vld [vmem:[%s9] sm:$0x1]
    %v3618 = vpack.c.bf16 %v3615, %v3614
    %v3619 = vpack.c.bf16 %v3616, %v3616
    %vm3620 = vcmask 138240
    %v3622 = vsel %vm3620, %v3617, 0
    %v3624 = vsel 0, 4294967295, 65535
    %v3625 = vsel %vm2975, %v3624, 0
    %v3627 = vand.u32 %v3619, %v3625
    %3629 = vmatpush.bf16.msra.mxu0 0
    %3630 = vmatpush.bf16.msra.mxu0 0
    %3631 = vmatpush.bf16.msra.mxu0 0
    %3632 = vmatpush.bf16.msra.mxu0 0
    %3633 = vmatpush.bf16.msra.mxu0 0
    %3634 = vmatpush.bf16.msra.mxu0 0
    %3635 = vmatpush.bf16.msra.mxu0 %v3627
    %3636 = vmatpush.bf16.msra.mxu0 %v3618
    %3637 = vmatmul.bf16.gmra.mxu0 %v3622
    %v3638 = vpop.f32.mrf.mxu0
    %v3639 = vadd.f32 0.0, %v3638
    %v3640 = vpop.f32.mrf.mxu0
    %3641 = vdwg.mxu0
    %v3642 = vpack.c.bf16 %v3639, %v3639
    %v3643 = vld [vmem:[%s10] sm:$0xff]
    %v3644 = vld [vmem:[%s10 + $0x8] sm:$0xff]
    %v3645 = vld [vmem:[%s10 + $0x10] sm:$0xff]
    %v3646 = vld [vmem:[%s10 + $0x18] sm:$0xff]
    %v3647 = vld [vmem:[%s10 + $0x20] sm:$0xff]
    %v3648 = vld [vmem:[%s10 + $0x28] sm:$0xff]
    %v3649 = vld [vmem:[%s10 + $0x30] sm:$0xff]
    %v3650 = vld [vmem:[%s10 + $0x38] sm:$0xff]
    %v3651 = vld [vmem:[%s10 + $0x40] sm:$0xff]
    %v3652 = vld [vmem:[%s10 + $0x48] sm:$0xff]
    %v3653 = vld [vmem:[%s10 + $0x50] sm:$0xff]
    %v3654 = vld [vmem:[%s10 + $0x58] sm:$0xff]
    %v3655 = vld [vmem:[%s10 + $0x60] sm:$0xff]
    %v3656 = vld [vmem:[%s10 + $0x68] sm:$0xff]
    %v3657 = vld [vmem:[%s10 + $0x70] sm:$0xff]
    %v3658 = vld [vmem:[%s10 + $0x78] sm:$0xff]
    %v3659 = vld [vmem:[%s17] sm:$0x3]
    %v3661 = vperm.slane %v3659, 0
    %v3662 = vperm.slane %v3659, 1
    %v3681 = vunpack.c.l.b16 %v3643
    %v3682 = vunpack.c.h.b16 %v3643
    %v3683 = vunpack.c.l.b16 %v3644
    %v3684 = vunpack.c.h.b16 %v3644
    %v3685 = vunpack.c.l.b16 %v3645
    %v3686 = vunpack.c.h.b16 %v3645
    %v3687 = vunpack.c.l.b16 %v3646
    %v3688 = vunpack.c.h.b16 %v3646
    %v3689 = vunpack.c.l.b16 %v3647
    %v3690 = vunpack.c.h.b16 %v3647
    %v3691 = vunpack.c.l.b16 %v3648
    %v3692 = vunpack.c.h.b16 %v3648
    %v3693 = vunpack.c.l.b16 %v3649
    %v3694 = vunpack.c.h.b16 %v3649
    %v3695 = vunpack.c.l.b16 %v3650
    %v3696 = vunpack.c.h.b16 %v3650
    %v3697 = vunpack.c.l.b16 %v3651
    %v3698 = vunpack.c.h.b16 %v3651
    %v3699 = vunpack.c.l.b16 %v3652
    %v3700 = vunpack.c.h.b16 %v3652
    %v3701 = vunpack.c.l.b16 %v3653
    %v3702 = vunpack.c.h.b16 %v3653
    %v3703 = vunpack.c.l.b16 %v3654
    %v3704 = vunpack.c.h.b16 %v3654
    %v3705 = vunpack.c.l.b16 %v3655
    %v3706 = vunpack.c.h.b16 %v3655
    %v3707 = vunpack.c.l.b16 %v3656
    %v3708 = vunpack.c.h.b16 %v3656
    %v3709 = vunpack.c.l.b16 %v3657
    %v3710 = vunpack.c.h.b16 %v3657
    %v3711 = vunpack.c.l.b16 %v3658
    %v3712 = vunpack.c.h.b16 %v3658
    %v3713 = vpack.c.b16 %v3683, %v3681
    %v3714 = vpack.c.b16 %v3684, %v3682
    %v3715 = vpack.c.b16 %v3687, %v3685
    %v3716 = vpack.c.b16 %v3688, %v3686
    %v3717 = vpack.c.b16 %v3691, %v3689
    %v3718 = vpack.c.b16 %v3692, %v3690
    %v3719 = vpack.c.b16 %v3695, %v3693
    %v3720 = vpack.c.b16 %v3696, %v3694
    %v3721 = vpack.c.b16 %v3699, %v3697
    %v3722 = vpack.c.b16 %v3700, %v3698
    %v3723 = vpack.c.b16 %v3703, %v3701
    %v3724 = vpack.c.b16 %v3704, %v3702
    %v3725 = vpack.c.b16 %v3707, %v3705
    %v3726 = vpack.c.b16 %v3708, %v3706
    %v3727 = vpack.c.b16 %v3711, %v3709
    %v3728 = vpack.c.b16 %v3712, %v3710
    %3745 = vmatpush.bf16.msra.mxu0 %v3727
    %3746 = vmatpush.bf16.msra.mxu0 %v3725
    %3747 = vmatpush.bf16.msra.mxu0 %v3723
    %3748 = vmatpush.bf16.msra.mxu0 %v3721
    %3749 = vmatpush.bf16.msra.mxu0 %v3719
    %3750 = vmatpush.bf16.msra.mxu0 %v3717
    %3751 = vmatpush.bf16.msra.mxu0 %v3715
    %3752 = vmatpush.bf16.msra.mxu0 %v3713
    %3753 = vmatmul.bf16.gmra.mxu0 %v3642
    %v3754 = vpop.f32.mrf.mxu0
    %v3755 = vadd.f32 %v3661, %v3754
    %v3756 = vpop.f32.mrf.mxu0
    %3757 = vdwg.mxu0
    %3758 = vmatpush.bf16.msra.mxu0 %v3728
    %3759 = vmatpush.bf16.msra.mxu0 %v3726
    %3760 = vmatpush.bf16.msra.mxu0 %v3724
    %3761 = vmatpush.bf16.msra.mxu0 %v3722
    %3762 = vmatpush.bf16.msra.mxu0 %v3720
    %3763 = vmatpush.bf16.msra.mxu0 %v3718
    %3764 = vmatpush.bf16.msra.mxu0 %v3716
    %3765 = vmatpush.bf16.msra.mxu0 %v3714
    %3766 = vmatmul.bf16.gmra.mxu0 %v3642
    %v3767 = vpop.f32.mrf.mxu0
    %v3768 = vadd.f32 %v3662, %v3767
    %v3769 = vpop.f32.mrf.mxu0
    %3770 = vdwg.mxu0
    %s3771 = sld [smem:[#allocation7 + $0x3]]
    %vm3772 = vcmp.ge.f32.partialorder %v3755, 0.0
    %vm3773 = vcmp.ge.f32.partialorder %v3768, 0.0
    %v3774 = vstv %s3771
    %v3775 = vmul.f32 %v3774, %v3755
    %v3776 = vmul.f32 %v3774, %v3768
    %v3777 = vsel %vm3772, %v3755, %v3775
    %v3778 = vsel %vm3773, %v3768, %v3776
    %v3779 = vpack.c.bf16 %v3777, %v3777
    %v3780 = vpack.c.bf16 %v3778, %v3778
    %v3781 = vld [vmem:[%s11] sm:$0xff]
    %v3782 = vld [vmem:[%s11 + $0x8] sm:$0xff]
    %v3783 = vld [vmem:[%s11 + $0x10] sm:$0xff]
    %v3784 = vld [vmem:[%s11 + $0x18] sm:$0xff]
    %v3785 = vld [vmem:[%s11 + $0x20] sm:$0xff]
    %v3786 = vld [vmem:[%s11 + $0x28] sm:$0xff]
    %v3787 = vld [vmem:[%s11 + $0x30] sm:$0xff]
    %v3788 = vld [vmem:[%s11 + $0x38] sm:$0xff]
    %v3789 = vld [vmem:[%s11 + $0x40] sm:$0xff]
    %v3790 = vld [vmem:[%s11 + $0x48] sm:$0xff]
    %v3791 = vld [vmem:[%s11 + $0x50] sm:$0xff]
    %v3792 = vld [vmem:[%s11 + $0x58] sm:$0xff]
    %v3793 = vld [vmem:[%s11 + $0x60] sm:$0xff]
    %v3794 = vld [vmem:[%s11 + $0x68] sm:$0xff]
    %v3795 = vld [vmem:[%s11 + $0x70] sm:$0xff]
    %v3796 = vld [vmem:[%s11 + $0x78] sm:$0xff]
    %v3797 = vld [vmem:[%s11 + $0x80] sm:$0xff]
    %v3798 = vld [vmem:[%s11 + $0x88] sm:$0xff]
    %v3799 = vld [vmem:[%s11 + $0x90] sm:$0xff]
    %v3800 = vld [vmem:[%s11 + $0x98] sm:$0xff]
    %v3801 = vld [vmem:[%s11 + $0xa0] sm:$0xff]
    %v3802 = vld [vmem:[%s11 + $0xa8] sm:$0xff]
    %v3803 = vld [vmem:[%s11 + $0xb0] sm:$0xff]
    %v3804 = vld [vmem:[%s11 + $0xb8] sm:$0xff]
    %v3805 = vld [vmem:[%s11 + $0xc0] sm:$0xff]
    %v3806 = vld [vmem:[%s11 + $0xc8] sm:$0xff]
    %v3807 = vld [vmem:[%s11 + $0xd0] sm:$0xff]
    %v3808 = vld [vmem:[%s11 + $0xd8] sm:$0xff]
    %v3809 = vld [vmem:[%s11 + $0xe0] sm:$0xff]
    %v3810 = vld [vmem:[%s11 + $0xe8] sm:$0xff]
    %v3811 = vld [vmem:[%s11 + $0xf0] sm:$0xff]
    %v3812 = vld [vmem:[%s11 + $0xf8] sm:$0xff]
    %v3813 = vld [vmem:[%s11 + $0x100] sm:$0xff]
    %v3814 = vld [vmem:[%s11 + $0x108] sm:$0xff]
    %v3815 = vld [vmem:[%s11 + $0x110] sm:$0xff]
    %v3816 = vld [vmem:[%s11 + $0x118] sm:$0xff]
    %v3817 = vld [vmem:[%s11 + $0x120] sm:$0xff]
    %v3818 = vld [vmem:[%s11 + $0x128] sm:$0xff]
    %v3819 = vld [vmem:[%s11 + $0x130] sm:$0xff]
    %v3820 = vld [vmem:[%s11 + $0x138] sm:$0xff]
    %v3821 = vld [vmem:[%s11 + $0x140] sm:$0xff]
    %v3822 = vld [vmem:[%s11 + $0x148] sm:$0xff]
    %v3823 = vld [vmem:[%s11 + $0x150] sm:$0xff]
    %v3824 = vld [vmem:[%s11 + $0x158] sm:$0xff]
    %v3825 = vld [vmem:[%s11 + $0x160] sm:$0xff]
    %v3826 = vld [vmem:[%s11 + $0x168] sm:$0xff]
    %v3827 = vld [vmem:[%s11 + $0x170] sm:$0xff]
    %v3828 = vld [vmem:[%s11 + $0x178] sm:$0xff]
    %v3829 = vld [vmem:[%s11 + $0x180] sm:$0xff]
    %v3830 = vld [vmem:[%s11 + $0x188] sm:$0xff]
    %v3831 = vld [vmem:[%s11 + $0x190] sm:$0xff]
    %v3832 = vld [vmem:[%s11 + $0x198] sm:$0xff]
    %v3833 = vld [vmem:[%s11 + $0x1a0] sm:$0xff]
    %v3834 = vld [vmem:[%s11 + $0x1a8] sm:$0xff]
    %v3835 = vld [vmem:[%s11 + $0x1b0] sm:$0xff]
    %v3836 = vld [vmem:[%s11 + $0x1b8] sm:$0xff]
    %v3837 = vld [vmem:[%s11 + $0x1c0] sm:$0xff]
    %v3838 = vld [vmem:[%s11 + $0x1c8] sm:$0xff]
    %v3839 = vld [vmem:[%s11 + $0x1d0] sm:$0xff]
    %v3840 = vld [vmem:[%s11 + $0x1d8] sm:$0xff]
    %v3841 = vld [vmem:[%s11 + $0x1e0] sm:$0xff]
    %v3842 = vld [vmem:[%s11 + $0x1e8] sm:$0xff]
    %v3843 = vld [vmem:[%s11 + $0x1f0] sm:$0xff]
    %v3844 = vld [vmem:[%s11 + $0x1f8] sm:$0xff]
    %v3845 = vld [vmem:[%s18] sm:$0xf]
    %v3847 = vperm.slane %v3845, 0
    %v3848 = vperm.slane %v3845, 1
    %v3849 = vperm.slane %v3845, 2
    %v3850 = vperm.slane %v3845, 3
    %v3919 = vunpack.c.l.b16 %v3781
    %v3920 = vunpack.c.h.b16 %v3781
    %v3921 = vunpack.c.l.b16 %v3782
    %v3922 = vunpack.c.h.b16 %v3782
    %v3923 = vunpack.c.l.b16 %v3783
    %v3924 = vunpack.c.h.b16 %v3783
    %v3925 = vunpack.c.l.b16 %v3784
    %v3926 = vunpack.c.h.b16 %v3784
    %v3927 = vunpack.c.l.b16 %v3785
    %v3928 = vunpack.c.h.b16 %v3785
    %v3929 = vunpack.c.l.b16 %v3786
    %v3930 = vunpack.c.h.b16 %v3786
    %v3931 = vunpack.c.l.b16 %v3787
    %v3932 = vunpack.c.h.b16 %v3787
    %v3933 = vunpack.c.l.b16 %v3788
    %v3934 = vunpack.c.h.b16 %v3788
    %v3935 = vunpack.c.l.b16 %v3789
    %v3936 = vunpack.c.h.b16 %v3789
    %v3937 = vunpack.c.l.b16 %v3790
    %v3938 = vunpack.c.h.b16 %v3790
    %v3939 = vunpack.c.l.b16 %v3791
    %v3940 = vunpack.c.h.b16 %v3791
    %v3941 = vunpack.c.l.b16 %v3792
    %v3942 = vunpack.c.h.b16 %v3792
    %v3943 = vunpack.c.l.b16 %v3793
    %v3944 = vunpack.c.h.b16 %v3793
    %v3945 = vunpack.c.l.b16 %v3794
    %v3946 = vunpack.c.h.b16 %v3794
    %v3947 = vunpack.c.l.b16 %v3795
    %v3948 = vunpack.c.h.b16 %v3795
    %v3949 = vunpack.c.l.b16 %v3796
    %v3950 = vunpack.c.h.b16 %v3796
    %v3951 = vunpack.c.l.b16 %v3797
    %v3952 = vunpack.c.h.b16 %v3797
    %v3953 = vunpack.c.l.b16 %v3798
    %v3954 = vunpack.c.h.b16 %v3798
    %v3955 = vunpack.c.l.b16 %v3799
    %v3956 = vunpack.c.h.b16 %v3799
    %v3957 = vunpack.c.l.b16 %v3800
    %v3958 = vunpack.c.h.b16 %v3800
    %v3959 = vunpack.c.l.b16 %v3801
    %v3960 = vunpack.c.h.b16 %v3801
    %v3961 = vunpack.c.l.b16 %v3802
    %v3962 = vunpack.c.h.b16 %v3802
    %v3963 = vunpack.c.l.b16 %v3803
    %v3964 = vunpack.c.h.b16 %v3803
    %v3965 = vunpack.c.l.b16 %v3804
    %v3966 = vunpack.c.h.b16 %v3804
    %v3967 = vunpack.c.l.b16 %v3805
    %v3968 = vunpack.c.h.b16 %v3805
    %v3969 = vunpack.c.l.b16 %v3806
    %v3970 = vunpack.c.h.b16 %v3806
    %v3971 = vunpack.c.l.b16 %v3807
    %v3972 = vunpack.c.h.b16 %v3807
    %v3973 = vunpack.c.l.b16 %v3808
    %v3974 = vunpack.c.h.b16 %v3808
    %v3975 = vunpack.c.l.b16 %v3809
    %v3976 = vunpack.c.h.b16 %v3809
    %v3977 = vunpack.c.l.b16 %v3810
    %v3978 = vunpack.c.h.b16 %v3810
    %v3979 = vunpack.c.l.b16 %v3811
    %v3980 = vunpack.c.h.b16 %v3811
    %v3981 = vunpack.c.l.b16 %v3812
    %v3982 = vunpack.c.h.b16 %v3812
    %v3983 = vunpack.c.l.b16 %v3813
    %v3984 = vunpack.c.h.b16 %v3813
    %v3985 = vunpack.c.l.b16 %v3814
    %v3986 = vunpack.c.h.b16 %v3814
    %v3987 = vunpack.c.l.b16 %v3815
    %v3988 = vunpack.c.h.b16 %v3815
    %v3989 = vunpack.c.l.b16 %v3816
    %v3990 = vunpack.c.h.b16 %v3816
    %v3991 = vunpack.c.l.b16 %v3817
    %v3992 = vunpack.c.h.b16 %v3817
    %v3993 = vunpack.c.l.b16 %v3818
    %v3994 = vunpack.c.h.b16 %v3818
    %v3995 = vunpack.c.l.b16 %v3819
    %v3996 = vunpack.c.h.b16 %v3819
    %v3997 = vunpack.c.l.b16 %v3820
    %v3998 = vunpack.c.h.b16 %v3820
    %v3999 = vunpack.c.l.b16 %v3821
    %v4000 = vunpack.c.h.b16 %v3821
    %v4001 = vunpack.c.l.b16 %v3822
    %v4002 = vunpack.c.h.b16 %v3822
    %v4003 = vunpack.c.l.b16 %v3823
    %v4004 = vunpack.c.h.b16 %v3823
    %v4005 = vunpack.c.l.b16 %v3824
    %v4006 = vunpack.c.h.b16 %v3824
    %v4007 = vunpack.c.l.b16 %v3825
    %v4008 = vunpack.c.h.b16 %v3825
    %v4009 = vunpack.c.l.b16 %v3826
    %v4010 = vunpack.c.h.b16 %v3826
    %v4011 = vunpack.c.l.b16 %v3827
    %v4012 = vunpack.c.h.b16 %v3827
    %v4013 = vunpack.c.l.b16 %v3828
    %v4014 = vunpack.c.h.b16 %v3828
    %v4015 = vunpack.c.l.b16 %v3829
    %v4016 = vunpack.c.h.b16 %v3829
    %v4017 = vunpack.c.l.b16 %v3830
    %v4018 = vunpack.c.h.b16 %v3830
    %v4019 = vunpack.c.l.b16 %v3831
    %v4020 = vunpack.c.h.b16 %v3831
    %v4021 = vunpack.c.l.b16 %v3832
    %v4022 = vunpack.c.h.b16 %v3832
    %v4023 = vunpack.c.l.b16 %v3833
    %v4024 = vunpack.c.h.b16 %v3833
    %v4025 = vunpack.c.l.b16 %v3834
    %v4026 = vunpack.c.h.b16 %v3834
    %v4027 = vunpack.c.l.b16 %v3835
    %v4028 = vunpack.c.h.b16 %v3835
    %v4029 = vunpack.c.l.b16 %v3836
    %v4030 = vunpack.c.h.b16 %v3836
    %v4031 = vunpack.c.l.b16 %v3837
    %v4032 = vunpack.c.h.b16 %v3837
    %v4033 = vunpack.c.l.b16 %v3838
    %v4034 = vunpack.c.h.b16 %v3838
    %v4035 = vunpack.c.l.b16 %v3839
    %v4036 = vunpack.c.h.b16 %v3839
    %v4037 = vunpack.c.l.b16 %v3840
    %v4038 = vunpack.c.h.b16 %v3840
    %v4039 = vunpack.c.l.b16 %v3841
    %v4040 = vunpack.c.h.b16 %v3841
    %v4041 = vunpack.c.l.b16 %v3842
    %v4042 = vunpack.c.h.b16 %v3842
    %v4043 = vunpack.c.l.b16 %v3843
    %v4044 = vunpack.c.h.b16 %v3843
    %v4045 = vunpack.c.l.b16 %v3844
    %v4046 = vunpack.c.h.b16 %v3844
    %v4047 = vpack.c.b16 %v3923, %v3919
    %v4048 = vpack.c.b16 %v3924, %v3920
    %v4049 = vpack.c.b16 %v3925, %v3921
    %v4050 = vpack.c.b16 %v3926, %v3922
    %v4051 = vpack.c.b16 %v3931, %v3927
    %v4052 = vpack.c.b16 %v3932, %v3928
    %v4053 = vpack.c.b16 %v3933, %v3929
    %v4054 = vpack.c.b16 %v3934, %v3930
    %v4055 = vpack.c.b16 %v3939, %v3935
    %v4056 = vpack.c.b16 %v3940, %v3936
    %v4057 = vpack.c.b16 %v3941, %v3937
    %v4058 = vpack.c.b16 %v3942, %v3938
    %v4059 = vpack.c.b16 %v3947, %v3943
    %v4060 = vpack.c.b16 %v3948, %v3944
    %v4061 = vpack.c.b16 %v3949, %v3945
    %v4062 = vpack.c.b16 %v3950, %v3946
    %v4063 = vpack.c.b16 %v3955, %v3951
    %v4064 = vpack.c.b16 %v3956, %v3952
    %v4065 = vpack.c.b16 %v3957, %v3953
    %v4066 = vpack.c.b16 %v3958, %v3954
    %v4067 = vpack.c.b16 %v3963, %v3959
    %v4068 = vpack.c.b16 %v3964, %v3960
    %v4069 = vpack.c.b16 %v3965, %v3961
    %v4070 = vpack.c.b16 %v3966, %v3962
    %v4071 = vpack.c.b16 %v3971, %v3967
    %v4072 = vpack.c.b16 %v3972, %v3968
    %v4073 = vpack.c.b16 %v3973, %v3969
    %v4074 = vpack.c.b16 %v3974, %v3970
    %v4075 = vpack.c.b16 %v3979, %v3975
    %v4076 = vpack.c.b16 %v3980, %v3976
    %v4077 = vpack.c.b16 %v3981, %v3977
    %v4078 = vpack.c.b16 %v3982, %v3978
    %v4079 = vpack.c.b16 %v3987, %v3983
    %v4080 = vpack.c.b16 %v3988, %v3984
    %v4081 = vpack.c.b16 %v3989, %v3985
    %v4082 = vpack.c.b16 %v3990, %v3986
    %v4083 = vpack.c.b16 %v3995, %v3991
    %v4084 = vpack.c.b16 %v3996, %v3992
    %v4085 = vpack.c.b16 %v3997, %v3993
    %v4086 = vpack.c.b16 %v3998, %v3994
    %v4087 = vpack.c.b16 %v4003, %v3999
    %v4088 = vpack.c.b16 %v4004, %v4000
    %v4089 = vpack.c.b16 %v4005, %v4001
    %v4090 = vpack.c.b16 %v4006, %v4002
    %v4091 = vpack.c.b16 %v4011, %v4007
    %v4092 = vpack.c.b16 %v4012, %v4008
    %v4093 = vpack.c.b16 %v4013, %v4009
    %v4094 = vpack.c.b16 %v4014, %v4010
    %v4095 = vpack.c.b16 %v4019, %v4015
    %v4096 = vpack.c.b16 %v4020, %v4016
    %v4097 = vpack.c.b16 %v4021, %v4017
    %v4098 = vpack.c.b16 %v4022, %v4018
    %v4099 = vpack.c.b16 %v4027, %v4023
    %v4100 = vpack.c.b16 %v4028, %v4024
    %v4101 = vpack.c.b16 %v4029, %v4025
    %v4102 = vpack.c.b16 %v4030, %v4026
    %v4103 = vpack.c.b16 %v4035, %v4031
    %v4104 = vpack.c.b16 %v4036, %v4032
    %v4105 = vpack.c.b16 %v4037, %v4033
    %v4106 = vpack.c.b16 %v4038, %v4034
    %v4107 = vpack.c.b16 %v4043, %v4039
    %v4108 = vpack.c.b16 %v4044, %v4040
    %v4109 = vpack.c.b16 %v4045, %v4041
    %v4110 = vpack.c.b16 %v4046, %v4042
    %4175 = vmatpush.bf16.msra.mxu0 %v4075
    %4176 = vmatpush.bf16.msra.mxu0 %v4071
    %4177 = vmatpush.bf16.msra.mxu0 %v4067
    %4178 = vmatpush.bf16.msra.mxu0 %v4063
    %4179 = vmatpush.bf16.msra.mxu0 %v4059
    %4180 = vmatpush.bf16.msra.mxu0 %v4055
    %4181 = vmatpush.bf16.msra.mxu0 %v4051
    %4182 = vmatpush.bf16.msra.mxu0 %v4047
    %4183 = vmatmul.bf16.gmra.mxu0 %v3779
    %v4184 = vpop.f32.mrf.mxu0
    %v4185 = vadd.f32 %v3847, %v4184
    %v4186 = vpop.f32.mrf.mxu0
    %4187 = vdwg.mxu0
    %4188 = vmatpush.bf16.msra.mxu0 %v4107
    %4189 = vmatpush.bf16.msra.mxu0 %v4103
    %4190 = vmatpush.bf16.msra.mxu0 %v4099
    %4191 = vmatpush.bf16.msra.mxu0 %v4095
    %4192 = vmatpush.bf16.msra.mxu0 %v4091
    %4193 = vmatpush.bf16.msra.mxu0 %v4087
    %4194 = vmatpush.bf16.msra.mxu0 %v4083
    %4195 = vmatpush.bf16.msra.mxu0 %v4079
    %4196 = vmatmul.bf16.gmra.mxu0 %v3780
    %v4197 = vpop.f32.mrf.mxu0
    %v4198 = vadd.f32 %v4185, %v4197
    %v4199 = vpop.f32.mrf.mxu0
    %4200 = vdwg.mxu0
    %4201 = vmatpush.bf16.msra.mxu0 %v4076
    %4202 = vmatpush.bf16.msra.mxu0 %v4072
    %4203 = vmatpush.bf16.msra.mxu0 %v4068
    %4204 = vmatpush.bf16.msra.mxu0 %v4064
    %4205 = vmatpush.bf16.msra.mxu0 %v4060
    %4206 = vmatpush.bf16.msra.mxu0 %v4056
    %4207 = vmatpush.bf16.msra.mxu0 %v4052
    %4208 = vmatpush.bf16.msra.mxu0 %v4048
    %4209 = vmatmul.bf16.gmra.mxu0 %v3779
    %v4210 = vpop.f32.mrf.mxu0
    %v4211 = vadd.f32 %v3848, %v4210
    %v4212 = vpop.f32.mrf.mxu0
    %4213 = vdwg.mxu0
    %4214 = vmatpush.bf16.msra.mxu0 %v4108
    %4215 = vmatpush.bf16.msra.mxu0 %v4104
    %4216 = vmatpush.bf16.msra.mxu0 %v4100
    %4217 = vmatpush.bf16.msra.mxu0 %v4096
    %4218 = vmatpush.bf16.msra.mxu0 %v4092
    %4219 = vmatpush.bf16.msra.mxu0 %v4088
    %4220 = vmatpush.bf16.msra.mxu0 %v4084
    %4221 = vmatpush.bf16.msra.mxu0 %v4080
    %4222 = vmatmul.bf16.gmra.mxu0 %v3780
    %v4223 = vpop.f32.mrf.mxu0
    %v4224 = vadd.f32 %v4211, %v4223
    %v4225 = vpop.f32.mrf.mxu0
    %4226 = vdwg.mxu0
    %4227 = vmatpush.bf16.msra.mxu0 %v4077
    %4228 = vmatpush.bf16.msra.mxu0 %v4073
    %4229 = vmatpush.bf16.msra.mxu0 %v4069
    %4230 = vmatpush.bf16.msra.mxu0 %v4065
    %4231 = vmatpush.bf16.msra.mxu0 %v4061
    %4232 = vmatpush.bf16.msra.mxu0 %v4057
    %4233 = vmatpush.bf16.msra.mxu0 %v4053
    %4234 = vmatpush.bf16.msra.mxu0 %v4049
    %4235 = vmatmul.bf16.gmra.mxu0 %v3779
    %v4236 = vpop.f32.mrf.mxu0
    %v4237 = vadd.f32 %v3849, %v4236
    %v4238 = vpop.f32.mrf.mxu0
    %4239 = vdwg.mxu0
    %4240 = vmatpush.bf16.msra.mxu0 %v4109
    %4241 = vmatpush.bf16.msra.mxu0 %v4105
    %4242 = vmatpush.bf16.msra.mxu0 %v4101
    %4243 = vmatpush.bf16.msra.mxu0 %v4097
    %4244 = vmatpush.bf16.msra.mxu0 %v4093
    %4245 = vmatpush.bf16.msra.mxu0 %v4089
    %4246 = vmatpush.bf16.msra.mxu0 %v4085
    %4247 = vmatpush.bf16.msra.mxu0 %v4081
    %4248 = vmatmul.bf16.gmra.mxu0 %v3780
    %v4249 = vpop.f32.mrf.mxu0
    %v4250 = vadd.f32 %v4237, %v4249
    %v4251 = vpop.f32.mrf.mxu0
    %4252 = vdwg.mxu0
    %4253 = vmatpush.bf16.msra.mxu0 %v4078
    %4254 = vmatpush.bf16.msra.mxu0 %v4074
    %4255 = vmatpush.bf16.msra.mxu0 %v4070
    %4256 = vmatpush.bf16.msra.mxu0 %v4066
    %4257 = vmatpush.bf16.msra.mxu0 %v4062
    %4258 = vmatpush.bf16.msra.mxu0 %v4058
    %4259 = vmatpush.bf16.msra.mxu0 %v4054
    %4260 = vmatpush.bf16.msra.mxu0 %v4050
    %4261 = vmatmul.bf16.gmra.mxu0 %v3779
    %v4262 = vpop.f32.mrf.mxu0
    %v4263 = vadd.f32 %v3850, %v4262
    %v4264 = vpop.f32.mrf.mxu0
    %4265 = vdwg.mxu0
    %4266 = vmatpush.bf16.msra.mxu0 %v4110
    %4267 = vmatpush.bf16.msra.mxu0 %v4106
    %4268 = vmatpush.bf16.msra.mxu0 %v4102
    %4269 = vmatpush.bf16.msra.mxu0 %v4098
    %4270 = vmatpush.bf16.msra.mxu0 %v4094
    %4271 = vmatpush.bf16.msra.mxu0 %v4090
    %4272 = vmatpush.bf16.msra.mxu0 %v4086
    %4273 = vmatpush.bf16.msra.mxu0 %v4082
    %4274 = vmatmul.bf16.gmra.mxu0 %v3780
    %v4275 = vpop.f32.mrf.mxu0
    %v4276 = vadd.f32 %v4263, %v4275
    %v4277 = vpop.f32.mrf.mxu0
    %4278 = vdwg.mxu0
    %s4279 = sld [smem:[#allocation7 + $0x4]]
    %vm4280 = vcmp.ge.f32.partialorder %v4198, 0.0
    %vm4281 = vcmp.ge.f32.partialorder %v4224, 0.0
    %vm4282 = vcmp.ge.f32.partialorder %v4250, 0.0
    %vm4283 = vcmp.ge.f32.partialorder %v4276, 0.0
    %v4284 = vstv %s4279
    %v4285 = vmul.f32 %v4284, %v4198
    %v4286 = vmul.f32 %v4284, %v4224
    %v4287 = vmul.f32 %v4284, %v4250
    %v4288 = vmul.f32 %v4284, %v4276
    %v4289 = vsel %vm4280, %v4198, %v4285
    %v4290 = vsel %vm4281, %v4224, %v4286
    %v4291 = vsel %vm4282, %v4250, %v4287
    %v4292 = vsel %vm4283, %v4276, %v4288
    %v4293 = vpack.c.bf16 %v4289, %v4289
    %v4294 = vpack.c.bf16 %v4290, %v4290
    %v4295 = vpack.c.bf16 %v4291, %v4291
    %v4296 = vpack.c.bf16 %v4292, %v4292
    %v4297 = vld [vmem:[%s12] sm:$0xff]
    %v4298 = vld [vmem:[%s12 + $0x8] sm:$0xff]
    %v4299 = vld [vmem:[%s12 + $0x10] sm:$0xff]
    %v4300 = vld [vmem:[%s12 + $0x18] sm:$0xff]
    %v4301 = vld [vmem:[%s12 + $0x20] sm:$0xff]
    %v4302 = vld [vmem:[%s12 + $0x28] sm:$0xff]
    %v4303 = vld [vmem:[%s12 + $0x30] sm:$0xff]
    %v4304 = vld [vmem:[%s12 + $0x38] sm:$0xff]
    %v4305 = vld [vmem:[%s12 + $0x40] sm:$0xff]
    %v4306 = vld [vmem:[%s12 + $0x48] sm:$0xff]
    %v4307 = vld [vmem:[%s12 + $0x50] sm:$0xff]
    %v4308 = vld [vmem:[%s12 + $0x58] sm:$0xff]
    %v4309 = vld [vmem:[%s12 + $0x60] sm:$0xff]
    %v4310 = vld [vmem:[%s12 + $0x68] sm:$0xff]
    %v4311 = vld [vmem:[%s12 + $0x70] sm:$0xff]
    %v4312 = vld [vmem:[%s12 + $0x78] sm:$0xff]
    %v4313 = vld [vmem:[%s12 + $0x80] sm:$0xff]
    %v4314 = vld [vmem:[%s12 + $0x88] sm:$0xff]
    %v4315 = vld [vmem:[%s12 + $0x90] sm:$0xff]
    %v4316 = vld [vmem:[%s12 + $0x98] sm:$0xff]
    %v4317 = vld [vmem:[%s12 + $0xa0] sm:$0xff]
    %v4318 = vld [vmem:[%s12 + $0xa8] sm:$0xff]
    %v4319 = vld [vmem:[%s12 + $0xb0] sm:$0xff]
    %v4320 = vld [vmem:[%s12 + $0xb8] sm:$0xff]
    %v4321 = vld [vmem:[%s12 + $0xc0] sm:$0xff]
    %v4322 = vld [vmem:[%s12 + $0xc8] sm:$0xff]
    %v4323 = vld [vmem:[%s12 + $0xd0] sm:$0xff]
    %v4324 = vld [vmem:[%s12 + $0xd8] sm:$0xff]
    %v4325 = vld [vmem:[%s12 + $0xe0] sm:$0xff]
    %v4326 = vld [vmem:[%s12 + $0xe8] sm:$0xff]
    %v4327 = vld [vmem:[%s12 + $0xf0] sm:$0xff]
    %v4328 = vld [vmem:[%s12 + $0xf8] sm:$0xff]
    %v4329 = vld [vmem:[%s12 + $0x100] sm:$0xff]
    %v4330 = vld [vmem:[%s12 + $0x108] sm:$0xff]
    %v4331 = vld [vmem:[%s12 + $0x110] sm:$0xff]
    %v4332 = vld [vmem:[%s12 + $0x118] sm:$0xff]
    %v4333 = vld [vmem:[%s12 + $0x120] sm:$0xff]
    %v4334 = vld [vmem:[%s12 + $0x128] sm:$0xff]
    %v4335 = vld [vmem:[%s12 + $0x130] sm:$0xff]
    %v4336 = vld [vmem:[%s12 + $0x138] sm:$0xff]
    %v4337 = vld [vmem:[%s12 + $0x140] sm:$0xff]
    %v4338 = vld [vmem:[%s12 + $0x148] sm:$0xff]
    %v4339 = vld [vmem:[%s12 + $0x150] sm:$0xff]
    %v4340 = vld [vmem:[%s12 + $0x158] sm:$0xff]
    %v4341 = vld [vmem:[%s12 + $0x160] sm:$0xff]
    %v4342 = vld [vmem:[%s12 + $0x168] sm:$0xff]
    %v4343 = vld [vmem:[%s12 + $0x170] sm:$0xff]
    %v4344 = vld [vmem:[%s12 + $0x178] sm:$0xff]
    %v4345 = vld [vmem:[%s12 + $0x180] sm:$0xff]
    %v4346 = vld [vmem:[%s12 + $0x188] sm:$0xff]
    %v4347 = vld [vmem:[%s12 + $0x190] sm:$0xff]
    %v4348 = vld [vmem:[%s12 + $0x198] sm:$0xff]
    %v4349 = vld [vmem:[%s12 + $0x1a0] sm:$0xff]
    %v4350 = vld [vmem:[%s12 + $0x1a8] sm:$0xff]
    %v4351 = vld [vmem:[%s12 + $0x1b0] sm:$0xff]
    %v4352 = vld [vmem:[%s12 + $0x1b8] sm:$0xff]
    %v4353 = vld [vmem:[%s12 + $0x1c0] sm:$0xff]
    %v4354 = vld [vmem:[%s12 + $0x1c8] sm:$0xff]
    %v4355 = vld [vmem:[%s12 + $0x1d0] sm:$0xff]
    %v4356 = vld [vmem:[%s12 + $0x1d8] sm:$0xff]
    %v4357 = vld [vmem:[%s12 + $0x1e0] sm:$0xff]
    %v4358 = vld [vmem:[%s12 + $0x1e8] sm:$0xff]
    %v4359 = vld [vmem:[%s12 + $0x1f0] sm:$0xff]
    %v4360 = vld [vmem:[%s12 + $0x1f8] sm:$0xff]
    %v4361 = vld [vmem:[%s12 + $0x200] sm:$0xff]
    %v4362 = vld [vmem:[%s12 + $0x208] sm:$0xff]
    %v4363 = vld [vmem:[%s12 + $0x210] sm:$0xff]
    %v4364 = vld [vmem:[%s12 + $0x218] sm:$0xff]
    %v4365 = vld [vmem:[%s12 + $0x220] sm:$0xff]
    %v4366 = vld [vmem:[%s12 + $0x228] sm:$0xff]
    %v4367 = vld [vmem:[%s12 + $0x230] sm:$0xff]
    %v4368 = vld [vmem:[%s12 + $0x238] sm:$0xff]
    %v4369 = vld [vmem:[%s12 + $0x240] sm:$0xff]
    %v4370 = vld [vmem:[%s12 + $0x248] sm:$0xff]
    %v4371 = vld [vmem:[%s12 + $0x250] sm:$0xff]
    %v4372 = vld [vmem:[%s12 + $0x258] sm:$0xff]
    %v4373 = vld [vmem:[%s12 + $0x260] sm:$0xff]
    %v4374 = vld [vmem:[%s12 + $0x268] sm:$0xff]
    %v4375 = vld [vmem:[%s12 + $0x270] sm:$0xff]
    %v4376 = vld [vmem:[%s12 + $0x278] sm:$0xff]
    %v4377 = vld [vmem:[%s12 + $0x280] sm:$0xff]
    %v4378 = vld [vmem:[%s12 + $0x288] sm:$0xff]
    %v4379 = vld [vmem:[%s12 + $0x290] sm:$0xff]
    %v4380 = vld [vmem:[%s12 + $0x298] sm:$0xff]
    %v4381 = vld [vmem:[%s12 + $0x2a0] sm:$0xff]
    %v4382 = vld [vmem:[%s12 + $0x2a8] sm:$0xff]
    %v4383 = vld [vmem:[%s12 + $0x2b0] sm:$0xff]
    %v4384 = vld [vmem:[%s12 + $0x2b8] sm:$0xff]
    %v4385 = vld [vmem:[%s12 + $0x2c0] sm:$0xff]
    %v4386 = vld [vmem:[%s12 + $0x2c8] sm:$0xff]
    %v4387 = vld [vmem:[%s12 + $0x2d0] sm:$0xff]
    %v4388 = vld [vmem:[%s12 + $0x2d8] sm:$0xff]
    %v4389 = vld [vmem:[%s12 + $0x2e0] sm:$0xff]
    %v4390 = vld [vmem:[%s12 + $0x2e8] sm:$0xff]
    %v4391 = vld [vmem:[%s12 + $0x2f0] sm:$0xff]
    %v4392 = vld [vmem:[%s12 + $0x2f8] sm:$0xff]
    %v4393 = vld [vmem:[%s12 + $0x300] sm:$0xff]
    %v4394 = vld [vmem:[%s12 + $0x308] sm:$0xff]
    %v4395 = vld [vmem:[%s12 + $0x310] sm:$0xff]
    %v4396 = vld [vmem:[%s12 + $0x318] sm:$0xff]
    %v4397 = vld [vmem:[%s12 + $0x320] sm:$0xff]
    %v4398 = vld [vmem:[%s12 + $0x328] sm:$0xff]
    %v4399 = vld [vmem:[%s12 + $0x330] sm:$0xff]
    %v4400 = vld [vmem:[%s12 + $0x338] sm:$0xff]
    %v4401 = vld [vmem:[%s12 + $0x340] sm:$0xff]
    %v4402 = vld [vmem:[%s12 + $0x348] sm:$0xff]
    %v4403 = vld [vmem:[%s12 + $0x350] sm:$0xff]
    %v4404 = vld [vmem:[%s12 + $0x358] sm:$0xff]
    %v4405 = vld [vmem:[%s12 + $0x360] sm:$0xff]
    %v4406 = vld [vmem:[%s12 + $0x368] sm:$0xff]
    %v4407 = vld [vmem:[%s12 + $0x370] sm:$0xff]
    %v4408 = vld [vmem:[%s12 + $0x378] sm:$0xff]
    %v4409 = vld [vmem:[%s12 + $0x380] sm:$0xff]
    %v4410 = vld [vmem:[%s12 + $0x388] sm:$0xff]
    %v4411 = vld [vmem:[%s12 + $0x390] sm:$0xff]
    %v4412 = vld [vmem:[%s12 + $0x398] sm:$0xff]
    %v4413 = vld [vmem:[%s12 + $0x3a0] sm:$0xff]
    %v4414 = vld [vmem:[%s12 + $0x3a8] sm:$0xff]
    %v4415 = vld [vmem:[%s12 + $0x3b0] sm:$0xff]
    %v4416 = vld [vmem:[%s12 + $0x3b8] sm:$0xff]
    %v4417 = vld [vmem:[%s12 + $0x3c0] sm:$0xff]
    %v4418 = vld [vmem:[%s12 + $0x3c8] sm:$0xff]
    %v4419 = vld [vmem:[%s12 + $0x3d0] sm:$0xff]
    %v4420 = vld [vmem:[%s12 + $0x3d8] sm:$0xff]
    %v4421 = vld [vmem:[%s12 + $0x3e0] sm:$0xff]
    %v4422 = vld [vmem:[%s12 + $0x3e8] sm:$0xff]
    %v4423 = vld [vmem:[%s12 + $0x3f0] sm:$0xff]
    %v4424 = vld [vmem:[%s12 + $0x3f8] sm:$0xff]
    %v4425 = vld [vmem:[%s12 + $0x400] sm:$0xff]
    %v4426 = vld [vmem:[%s12 + $0x408] sm:$0xff]
    %v4427 = vld [vmem:[%s12 + $0x410] sm:$0xff]
    %v4428 = vld [vmem:[%s12 + $0x418] sm:$0xff]
    %v4429 = vld [vmem:[%s12 + $0x420] sm:$0xff]
    %v4430 = vld [vmem:[%s12 + $0x428] sm:$0xff]
    %v4431 = vld [vmem:[%s12 + $0x430] sm:$0xff]
    %v4432 = vld [vmem:[%s12 + $0x438] sm:$0xff]
    %v4433 = vld [vmem:[%s12 + $0x440] sm:$0xff]
    %v4434 = vld [vmem:[%s12 + $0x448] sm:$0xff]
    %v4435 = vld [vmem:[%s12 + $0x450] sm:$0xff]
    %v4436 = vld [vmem:[%s12 + $0x458] sm:$0xff]
    %v4437 = vld [vmem:[%s12 + $0x460] sm:$0xff]
    %v4438 = vld [vmem:[%s12 + $0x468] sm:$0xff]
    %v4439 = vld [vmem:[%s12 + $0x470] sm:$0xff]
    %v4440 = vld [vmem:[%s12 + $0x478] sm:$0xff]
    %v4441 = vld [vmem:[%s12 + $0x480] sm:$0xff]
    %v4442 = vld [vmem:[%s12 + $0x488] sm:$0xff]
    %v4443 = vld [vmem:[%s12 + $0x490] sm:$0xff]
    %v4444 = vld [vmem:[%s12 + $0x498] sm:$0xff]
    %v4445 = vld [vmem:[%s12 + $0x4a0] sm:$0xff]
    %v4446 = vld [vmem:[%s12 + $0x4a8] sm:$0xff]
    %v4447 = vld [vmem:[%s12 + $0x4b0] sm:$0xff]
    %v4448 = vld [vmem:[%s12 + $0x4b8] sm:$0xff]
    %v4449 = vld [vmem:[%s12 + $0x4c0] sm:$0xff]
    %v4450 = vld [vmem:[%s12 + $0x4c8] sm:$0xff]
    %v4451 = vld [vmem:[%s12 + $0x4d0] sm:$0xff]
    %v4452 = vld [vmem:[%s12 + $0x4d8] sm:$0xff]
    %v4453 = vld [vmem:[%s12 + $0x4e0] sm:$0xff]
    %v4454 = vld [vmem:[%s12 + $0x4e8] sm:$0xff]
    %v4455 = vld [vmem:[%s12 + $0x4f0] sm:$0xff]
    %v4456 = vld [vmem:[%s12 + $0x4f8] sm:$0xff]
    %v4457 = vld [vmem:[%s12 + $0x500] sm:$0xff]
    %v4458 = vld [vmem:[%s12 + $0x508] sm:$0xff]
    %v4459 = vld [vmem:[%s12 + $0x510] sm:$0xff]
    %v4460 = vld [vmem:[%s12 + $0x518] sm:$0xff]
    %v4461 = vld [vmem:[%s12 + $0x520] sm:$0xff]
    %v4462 = vld [vmem:[%s12 + $0x528] sm:$0xff]
    %v4463 = vld [vmem:[%s12 + $0x530] sm:$0xff]
    %v4464 = vld [vmem:[%s12 + $0x538] sm:$0xff]
    %v4465 = vld [vmem:[%s12 + $0x540] sm:$0xff]
    %v4466 = vld [vmem:[%s12 + $0x548] sm:$0xff]
    %v4467 = vld [vmem:[%s12 + $0x550] sm:$0xff]
    %v4468 = vld [vmem:[%s12 + $0x558] sm:$0xff]
    %v4469 = vld [vmem:[%s12 + $0x560] sm:$0xff]
    %v4470 = vld [vmem:[%s12 + $0x568] sm:$0xff]
    %v4471 = vld [vmem:[%s12 + $0x570] sm:$0xff]
    %v4472 = vld [vmem:[%s12 + $0x578] sm:$0xff]
    %v4473 = vld [vmem:[%s12 + $0x580] sm:$0xff]
    %v4474 = vld [vmem:[%s12 + $0x588] sm:$0xff]
    %v4475 = vld [vmem:[%s12 + $0x590] sm:$0xff]
    %v4476 = vld [vmem:[%s12 + $0x598] sm:$0xff]
    %v4477 = vld [vmem:[%s12 + $0x5a0] sm:$0xff]
    %v4478 = vld [vmem:[%s12 + $0x5a8] sm:$0xff]
    %v4479 = vld [vmem:[%s12 + $0x5b0] sm:$0xff]
    %v4480 = vld [vmem:[%s12 + $0x5b8] sm:$0xff]
    %v4481 = vld [vmem:[%s12 + $0x5c0] sm:$0xff]
    %v4482 = vld [vmem:[%s12 + $0x5c8] sm:$0xff]
    %v4483 = vld [vmem:[%s12 + $0x5d0] sm:$0xff]
    %v4484 = vld [vmem:[%s12 + $0x5d8] sm:$0xff]
    %v4485 = vld [vmem:[%s12 + $0x5e0] sm:$0xff]
    %v4486 = vld [vmem:[%s12 + $0x5e8] sm:$0xff]
    %v4487 = vld [vmem:[%s12 + $0x5f0] sm:$0xff]
    %v4488 = vld [vmem:[%s12 + $0x5f8] sm:$0xff]
    %v4489 = vld [vmem:[%s12 + $0x600] sm:$0xff]
    %v4490 = vld [vmem:[%s12 + $0x608] sm:$0xff]
    %v4491 = vld [vmem:[%s12 + $0x610] sm:$0xff]
    %v4492 = vld [vmem:[%s12 + $0x618] sm:$0xff]
    %v4493 = vld [vmem:[%s12 + $0x620] sm:$0xff]
    %v4494 = vld [vmem:[%s12 + $0x628] sm:$0xff]
    %v4495 = vld [vmem:[%s12 + $0x630] sm:$0xff]
    %v4496 = vld [vmem:[%s12 + $0x638] sm:$0xff]
    %v4497 = vld [vmem:[%s12 + $0x640] sm:$0xff]
    %v4498 = vld [vmem:[%s12 + $0x648] sm:$0xff]
    %v4499 = vld [vmem:[%s12 + $0x650] sm:$0xff]
    %v4500 = vld [vmem:[%s12 + $0x658] sm:$0xff]
    %v4501 = vld [vmem:[%s12 + $0x660] sm:$0xff]
    %v4502 = vld [vmem:[%s12 + $0x668] sm:$0xff]
    %v4503 = vld [vmem:[%s12 + $0x670] sm:$0xff]
    %v4504 = vld [vmem:[%s12 + $0x678] sm:$0xff]
    %v4505 = vld [vmem:[%s12 + $0x680] sm:$0xff]
    %v4506 = vld [vmem:[%s12 + $0x688] sm:$0xff]
    %v4507 = vld [vmem:[%s12 + $0x690] sm:$0xff]
    %v4508 = vld [vmem:[%s12 + $0x698] sm:$0xff]
    %v4509 = vld [vmem:[%s12 + $0x6a0] sm:$0xff]
    %v4510 = vld [vmem:[%s12 + $0x6a8] sm:$0xff]
    %v4511 = vld [vmem:[%s12 + $0x6b0] sm:$0xff]
    %v4512 = vld [vmem:[%s12 + $0x6b8] sm:$0xff]
    %v4513 = vld [vmem:[%s12 + $0x6c0] sm:$0xff]
    %v4514 = vld [vmem:[%s12 + $0x6c8] sm:$0xff]
    %v4515 = vld [vmem:[%s12 + $0x6d0] sm:$0xff]
    %v4516 = vld [vmem:[%s12 + $0x6d8] sm:$0xff]
    %v4517 = vld [vmem:[%s12 + $0x6e0] sm:$0xff]
    %v4518 = vld [vmem:[%s12 + $0x6e8] sm:$0xff]
    %v4519 = vld [vmem:[%s12 + $0x6f0] sm:$0xff]
    %v4520 = vld [vmem:[%s12 + $0x6f8] sm:$0xff]
    %v4521 = vld [vmem:[%s12 + $0x700] sm:$0xff]
    %v4522 = vld [vmem:[%s12 + $0x708] sm:$0xff]
    %v4523 = vld [vmem:[%s12 + $0x710] sm:$0xff]
    %v4524 = vld [vmem:[%s12 + $0x718] sm:$0xff]
    %v4525 = vld [vmem:[%s12 + $0x720] sm:$0xff]
    %v4526 = vld [vmem:[%s12 + $0x728] sm:$0xff]
    %v4527 = vld [vmem:[%s12 + $0x730] sm:$0xff]
    %v4528 = vld [vmem:[%s12 + $0x738] sm:$0xff]
    %v4529 = vld [vmem:[%s12 + $0x740] sm:$0xff]
    %v4530 = vld [vmem:[%s12 + $0x748] sm:$0xff]
    %v4531 = vld [vmem:[%s12 + $0x750] sm:$0xff]
    %v4532 = vld [vmem:[%s12 + $0x758] sm:$0xff]
    %v4533 = vld [vmem:[%s12 + $0x760] sm:$0xff]
    %v4534 = vld [vmem:[%s12 + $0x768] sm:$0xff]
    %v4535 = vld [vmem:[%s12 + $0x770] sm:$0xff]
    %v4536 = vld [vmem:[%s12 + $0x778] sm:$0xff]
    %v4537 = vld [vmem:[%s12 + $0x780] sm:$0xff]
    %v4538 = vld [vmem:[%s12 + $0x788] sm:$0xff]
    %v4539 = vld [vmem:[%s12 + $0x790] sm:$0xff]
    %v4540 = vld [vmem:[%s12 + $0x798] sm:$0xff]
    %v4541 = vld [vmem:[%s12 + $0x7a0] sm:$0xff]
    %v4542 = vld [vmem:[%s12 + $0x7a8] sm:$0xff]
    %v4543 = vld [vmem:[%s12 + $0x7b0] sm:$0xff]
    %v4544 = vld [vmem:[%s12 + $0x7b8] sm:$0xff]
    %v4545 = vld [vmem:[%s12 + $0x7c0] sm:$0xff]
    %v4546 = vld [vmem:[%s12 + $0x7c8] sm:$0xff]
    %v4547 = vld [vmem:[%s12 + $0x7d0] sm:$0xff]
    %v4548 = vld [vmem:[%s12 + $0x7d8] sm:$0xff]
    %v4549 = vld [vmem:[%s12 + $0x7e0] sm:$0xff]
    %v4550 = vld [vmem:[%s12 + $0x7e8] sm:$0xff]
    %v4551 = vld [vmem:[%s12 + $0x7f0] sm:$0xff]
    %v4552 = vld [vmem:[%s12 + $0x7f8] sm:$0xff]
    %v4553 = vld [vmem:[%s19] sm:$0xff]
    %v4555 = vperm.slane %v4553, 0
    %v4556 = vperm.slane %v4553, 1
    %v4557 = vperm.slane %v4553, 2
    %v4558 = vperm.slane %v4553, 3
    %v4559 = vperm.slane %v4553, 4
    %v4560 = vperm.slane %v4553, 5
    %v4561 = vperm.slane %v4553, 6
    %v4562 = vperm.slane %v4553, 7
    %v4827 = vunpack.c.l.b16 %v4297
    %v4828 = vunpack.c.h.b16 %v4297
    %v4829 = vunpack.c.l.b16 %v4298
    %v4830 = vunpack.c.h.b16 %v4298
    %v4831 = vunpack.c.l.b16 %v4299
    %v4832 = vunpack.c.h.b16 %v4299
    %v4833 = vunpack.c.l.b16 %v4300
    %v4834 = vunpack.c.h.b16 %v4300
    %v4835 = vunpack.c.l.b16 %v4301
    %v4836 = vunpack.c.h.b16 %v4301
    %v4837 = vunpack.c.l.b16 %v4302
    %v4838 = vunpack.c.h.b16 %v4302
    %v4839 = vunpack.c.l.b16 %v4303
    %v4840 = vunpack.c.h.b16 %v4303
    %v4841 = vunpack.c.l.b16 %v4304
    %v4842 = vunpack.c.h.b16 %v4304
    %v4843 = vunpack.c.l.b16 %v4305
    %v4844 = vunpack.c.h.b16 %v4305
    %v4845 = vunpack.c.l.b16 %v4306
    %v4846 = vunpack.c.h.b16 %v4306
    %v4847 = vunpack.c.l.b16 %v4307
    %v4848 = vunpack.c.h.b16 %v4307
    %v4849 = vunpack.c.l.b16 %v4308
    %v4850 = vunpack.c.h.b16 %v4308
    %v4851 = vunpack.c.l.b16 %v4309
    %v4852 = vunpack.c.h.b16 %v4309
    %v4853 = vunpack.c.l.b16 %v4310
    %v4854 = vunpack.c.h.b16 %v4310
    %v4855 = vunpack.c.l.b16 %v4311
    %v4856 = vunpack.c.h.b16 %v4311
    %v4857 = vunpack.c.l.b16 %v4312
    %v4858 = vunpack.c.h.b16 %v4312
    %v4859 = vunpack.c.l.b16 %v4313
    %v4860 = vunpack.c.h.b16 %v4313
    %v4861 = vunpack.c.l.b16 %v4314
    %v4862 = vunpack.c.h.b16 %v4314
    %v4863 = vunpack.c.l.b16 %v4315
    %v4864 = vunpack.c.h.b16 %v4315
    %v4865 = vunpack.c.l.b16 %v4316
    %v4866 = vunpack.c.h.b16 %v4316
    %v4867 = vunpack.c.l.b16 %v4317
    %v4868 = vunpack.c.h.b16 %v4317
    %v4869 = vunpack.c.l.b16 %v4318
    %v4870 = vunpack.c.h.b16 %v4318
    %v4871 = vunpack.c.l.b16 %v4319
    %v4872 = vunpack.c.h.b16 %v4319
    %v4873 = vunpack.c.l.b16 %v4320
    %v4874 = vunpack.c.h.b16 %v4320
    %v4875 = vunpack.c.l.b16 %v4321
    %v4876 = vunpack.c.h.b16 %v4321
    %v4877 = vunpack.c.l.b16 %v4322
    %v4878 = vunpack.c.h.b16 %v4322
    %v4879 = vunpack.c.l.b16 %v4323
    %v4880 = vunpack.c.h.b16 %v4323
    %v4881 = vunpack.c.l.b16 %v4324
    %v4882 = vunpack.c.h.b16 %v4324
    %v4883 = vunpack.c.l.b16 %v4325
    %v4884 = vunpack.c.h.b16 %v4325
    %v4885 = vunpack.c.l.b16 %v4326
    %v4886 = vunpack.c.h.b16 %v4326
    %v4887 = vunpack.c.l.b16 %v4327
    %v4888 = vunpack.c.h.b16 %v4327
    %v4889 = vunpack.c.l.b16 %v4328
    %v4890 = vunpack.c.h.b16 %v4328
    %v4891 = vunpack.c.l.b16 %v4329
    %v4892 = vunpack.c.h.b16 %v4329
    %v4893 = vunpack.c.l.b16 %v4330
    %v4894 = vunpack.c.h.b16 %v4330
    %v4895 = vunpack.c.l.b16 %v4331
    %v4896 = vunpack.c.h.b16 %v4331
    %v4897 = vunpack.c.l.b16 %v4332
    %v4898 = vunpack.c.h.b16 %v4332
    %v4899 = vunpack.c.l.b16 %v4333
    %v4900 = vunpack.c.h.b16 %v4333
    %v4901 = vunpack.c.l.b16 %v4334
    %v4902 = vunpack.c.h.b16 %v4334
    %v4903 = vunpack.c.l.b16 %v4335
    %v4904 = vunpack.c.h.b16 %v4335
    %v4905 = vunpack.c.l.b16 %v4336
    %v4906 = vunpack.c.h.b16 %v4336
    %v4907 = vunpack.c.l.b16 %v4337
    %v4908 = vunpack.c.h.b16 %v4337
    %v4909 = vunpack.c.l.b16 %v4338
    %v4910 = vunpack.c.h.b16 %v4338
    %v4911 = vunpack.c.l.b16 %v4339
    %v4912 = vunpack.c.h.b16 %v4339
    %v4913 = vunpack.c.l.b16 %v4340
    %v4914 = vunpack.c.h.b16 %v4340
    %v4915 = vunpack.c.l.b16 %v4341
    %v4916 = vunpack.c.h.b16 %v4341
    %v4917 = vunpack.c.l.b16 %v4342
    %v4918 = vunpack.c.h.b16 %v4342
    %v4919 = vunpack.c.l.b16 %v4343
    %v4920 = vunpack.c.h.b16 %v4343
    %v4921 = vunpack.c.l.b16 %v4344
    %v4922 = vunpack.c.h.b16 %v4344
    %v4923 = vunpack.c.l.b16 %v4345
    %v4924 = vunpack.c.h.b16 %v4345
    %v4925 = vunpack.c.l.b16 %v4346
    %v4926 = vunpack.c.h.b16 %v4346
    %v4927 = vunpack.c.l.b16 %v4347
    %v4928 = vunpack.c.h.b16 %v4347
    %v4929 = vunpack.c.l.b16 %v4348
    %v4930 = vunpack.c.h.b16 %v4348
    %v4931 = vunpack.c.l.b16 %v4349
    %v4932 = vunpack.c.h.b16 %v4349
    %v4933 = vunpack.c.l.b16 %v4350
    %v4934 = vunpack.c.h.b16 %v4350
    %v4935 = vunpack.c.l.b16 %v4351
    %v4936 = vunpack.c.h.b16 %v4351
    %v4937 = vunpack.c.l.b16 %v4352
    %v4938 = vunpack.c.h.b16 %v4352
    %v4939 = vunpack.c.l.b16 %v4353
    %v4940 = vunpack.c.h.b16 %v4353
    %v4941 = vunpack.c.l.b16 %v4354
    %v4942 = vunpack.c.h.b16 %v4354
    %v4943 = vunpack.c.l.b16 %v4355
    %v4944 = vunpack.c.h.b16 %v4355
    %v4945 = vunpack.c.l.b16 %v4356
    %v4946 = vunpack.c.h.b16 %v4356
    %v4947 = vunpack.c.l.b16 %v4357
    %v4948 = vunpack.c.h.b16 %v4357
    %v4949 = vunpack.c.l.b16 %v4358
    %v4950 = vunpack.c.h.b16 %v4358
    %v4951 = vunpack.c.l.b16 %v4359
    %v4952 = vunpack.c.h.b16 %v4359
    %v4953 = vunpack.c.l.b16 %v4360
    %v4954 = vunpack.c.h.b16 %v4360
    %v4955 = vunpack.c.l.b16 %v4361
    %v4956 = vunpack.c.h.b16 %v4361
    %v4957 = vunpack.c.l.b16 %v4362
    %v4958 = vunpack.c.h.b16 %v4362
    %v4959 = vunpack.c.l.b16 %v4363
    %v4960 = vunpack.c.h.b16 %v4363
    %v4961 = vunpack.c.l.b16 %v4364
    %v4962 = vunpack.c.h.b16 %v4364
    %v4963 = vunpack.c.l.b16 %v4365
    %v4964 = vunpack.c.h.b16 %v4365
    %v4965 = vunpack.c.l.b16 %v4366
    %v4966 = vunpack.c.h.b16 %v4366
    %v4967 = vunpack.c.l.b16 %v4367
    %v4968 = vunpack.c.h.b16 %v4367
    %v4969 = vunpack.c.l.b16 %v4368
    %v4970 = vunpack.c.h.b16 %v4368
    %v4971 = vunpack.c.l.b16 %v4369
    %v4972 = vunpack.c.h.b16 %v4369
    %v4973 = vunpack.c.l.b16 %v4370
    %v4974 = vunpack.c.h.b16 %v4370
    %v4975 = vunpack.c.l.b16 %v4371
    %v4976 = vunpack.c.h.b16 %v4371
    %v4977 = vunpack.c.l.b16 %v4372
    %v4978 = vunpack.c.h.b16 %v4372
    %v4979 = vunpack.c.l.b16 %v4373
    %v4980 = vunpack.c.h.b16 %v4373
    %v4981 = vunpack.c.l.b16 %v4374
    %v4982 = vunpack.c.h.b16 %v4374
    %v4983 = vunpack.c.l.b16 %v4375
    %v4984 = vunpack.c.h.b16 %v4375
    %v4985 = vunpack.c.l.b16 %v4376
    %v4986 = vunpack.c.h.b16 %v4376
    %v4987 = vunpack.c.l.b16 %v4377
    %v4988 = vunpack.c.h.b16 %v4377
    %v4989 = vunpack.c.l.b16 %v4378
    %v4990 = vunpack.c.h.b16 %v4378
    %v4991 = vunpack.c.l.b16 %v4379
    %v4992 = vunpack.c.h.b16 %v4379
    %v4993 = vunpack.c.l.b16 %v4380
    %v4994 = vunpack.c.h.b16 %v4380
    %v4995 = vunpack.c.l.b16 %v4381
    %v4996 = vunpack.c.h.b16 %v4381
    %v4997 = vunpack.c.l.b16 %v4382
    %v4998 = vunpack.c.h.b16 %v4382
    %v4999 = vunpack.c.l.b16 %v4383
    %v5000 = vunpack.c.h.b16 %v4383
    %v5001 = vunpack.c.l.b16 %v4384
    %v5002 = vunpack.c.h.b16 %v4384
    %v5003 = vunpack.c.l.b16 %v4385
    %v5004 = vunpack.c.h.b16 %v4385
    %v5005 = vunpack.c.l.b16 %v4386
    %v5006 = vunpack.c.h.b16 %v4386
    %v5007 = vunpack.c.l.b16 %v4387
    %v5008 = vunpack.c.h.b16 %v4387
    %v5009 = vunpack.c.l.b16 %v4388
    %v5010 = vunpack.c.h.b16 %v4388
    %v5011 = vunpack.c.l.b16 %v4389
    %v5012 = vunpack.c.h.b16 %v4389
    %v5013 = vunpack.c.l.b16 %v4390
    %v5014 = vunpack.c.h.b16 %v4390
    %v5015 = vunpack.c.l.b16 %v4391
    %v5016 = vunpack.c.h.b16 %v4391
    %v5017 = vunpack.c.l.b16 %v4392
    %v5018 = vunpack.c.h.b16 %v4392
    %v5019 = vunpack.c.l.b16 %v4393
    %v5020 = vunpack.c.h.b16 %v4393
    %v5021 = vunpack.c.l.b16 %v4394
    %v5022 = vunpack.c.h.b16 %v4394
    %v5023 = vunpack.c.l.b16 %v4395
    %v5024 = vunpack.c.h.b16 %v4395
    %v5025 = vunpack.c.l.b16 %v4396
    %v5026 = vunpack.c.h.b16 %v4396
    %v5027 = vunpack.c.l.b16 %v4397
    %v5028 = vunpack.c.h.b16 %v4397
    %v5029 = vunpack.c.l.b16 %v4398
    %v5030 = vunpack.c.h.b16 %v4398
    %v5031 = vunpack.c.l.b16 %v4399
    %v5032 = vunpack.c.h.b16 %v4399
    %v5033 = vunpack.c.l.b16 %v4400
    %v5034 = vunpack.c.h.b16 %v4400
    %v5035 = vunpack.c.l.b16 %v4401
    %v5036 = vunpack.c.h.b16 %v4401
    %v5037 = vunpack.c.l.b16 %v4402
    %v5038 = vunpack.c.h.b16 %v4402
    %v5039 = vunpack.c.l.b16 %v4403
    %v5040 = vunpack.c.h.b16 %v4403
    %v5041 = vunpack.c.l.b16 %v4404
    %v5042 = vunpack.c.h.b16 %v4404
    %v5043 = vunpack.c.l.b16 %v4405
    %v5044 = vunpack.c.h.b16 %v4405
    %v5045 = vunpack.c.l.b16 %v4406
    %v5046 = vunpack.c.h.b16 %v4406
    %v5047 = vunpack.c.l.b16 %v4407
    %v5048 = vunpack.c.h.b16 %v4407
    %v5049 = vunpack.c.l.b16 %v4408
    %v5050 = vunpack.c.h.b16 %v4408
    %v5051 = vunpack.c.l.b16 %v4409
    %v5052 = vunpack.c.h.b16 %v4409
    %v5053 = vunpack.c.l.b16 %v4410
    %v5054 = vunpack.c.h.b16 %v4410
    %v5055 = vunpack.c.l.b16 %v4411
    %v5056 = vunpack.c.h.b16 %v4411
    %v5057 = vunpack.c.l.b16 %v4412
    %v5058 = vunpack.c.h.b16 %v4412
    %v5059 = vunpack.c.l.b16 %v4413
    %v5060 = vunpack.c.h.b16 %v4413
    %v5061 = vunpack.c.l.b16 %v4414
    %v5062 = vunpack.c.h.b16 %v4414
    %v5063 = vunpack.c.l.b16 %v4415
    %v5064 = vunpack.c.h.b16 %v4415
    %v5065 = vunpack.c.l.b16 %v4416
    %v5066 = vunpack.c.h.b16 %v4416
    %v5067 = vunpack.c.l.b16 %v4417
    %v5068 = vunpack.c.h.b16 %v4417
    %v5069 = vunpack.c.l.b16 %v4418
    %v5070 = vunpack.c.h.b16 %v4418
    %v5071 = vunpack.c.l.b16 %v4419
    %v5072 = vunpack.c.h.b16 %v4419
    %v5073 = vunpack.c.l.b16 %v4420
    %v5074 = vunpack.c.h.b16 %v4420
    %v5075 = vunpack.c.l.b16 %v4421
    %v5076 = vunpack.c.h.b16 %v4421
    %v5077 = vunpack.c.l.b16 %v4422
    %v5078 = vunpack.c.h.b16 %v4422
    %v5079 = vunpack.c.l.b16 %v4423
    %v5080 = vunpack.c.h.b16 %v4423
    %v5081 = vunpack.c.l.b16 %v4424
    %v5082 = vunpack.c.h.b16 %v4424
    %v5083 = vunpack.c.l.b16 %v4425
    %v5084 = vunpack.c.h.b16 %v4425
    %v5085 = vunpack.c.l.b16 %v4426
    %v5086 = vunpack.c.h.b16 %v4426
    %v5087 = vunpack.c.l.b16 %v4427
    %v5088 = vunpack.c.h.b16 %v4427
    %v5089 = vunpack.c.l.b16 %v4428
    %v5090 = vunpack.c.h.b16 %v4428
    %v5091 = vunpack.c.l.b16 %v4429
    %v5092 = vunpack.c.h.b16 %v4429
    %v5093 = vunpack.c.l.b16 %v4430
    %v5094 = vunpack.c.h.b16 %v4430
    %v5095 = vunpack.c.l.b16 %v4431
    %v5096 = vunpack.c.h.b16 %v4431
    %v5097 = vunpack.c.l.b16 %v4432
    %v5098 = vunpack.c.h.b16 %v4432
    %v5099 = vunpack.c.l.b16 %v4433
    %v5100 = vunpack.c.h.b16 %v4433
    %v5101 = vunpack.c.l.b16 %v4434
    %v5102 = vunpack.c.h.b16 %v4434
    %v5103 = vunpack.c.l.b16 %v4435
    %v5104 = vunpack.c.h.b16 %v4435
    %v5105 = vunpack.c.l.b16 %v4436
    %v5106 = vunpack.c.h.b16 %v4436
    %v5107 = vunpack.c.l.b16 %v4437
    %v5108 = vunpack.c.h.b16 %v4437
    %v5109 = vunpack.c.l.b16 %v4438
    %v5110 = vunpack.c.h.b16 %v4438
    %v5111 = vunpack.c.l.b16 %v4439
    %v5112 = vunpack.c.h.b16 %v4439
    %v5113 = vunpack.c.l.b16 %v4440
    %v5114 = vunpack.c.h.b16 %v4440
    %v5115 = vunpack.c.l.b16 %v4441
    %v5116 = vunpack.c.h.b16 %v4441
    %v5117 = vunpack.c.l.b16 %v4442
    %v5118 = vunpack.c.h.b16 %v4442
    %v5119 = vunpack.c.l.b16 %v4443
    %v5120 = vunpack.c.h.b16 %v4443
    %v5121 = vunpack.c.l.b16 %v4444
    %v5122 = vunpack.c.h.b16 %v4444
    %v5123 = vunpack.c.l.b16 %v4445
    %v5124 = vunpack.c.h.b16 %v4445
    %v5125 = vunpack.c.l.b16 %v4446
    %v5126 = vunpack.c.h.b16 %v4446
    %v5127 = vunpack.c.l.b16 %v4447
    %v5128 = vunpack.c.h.b16 %v4447
    %v5129 = vunpack.c.l.b16 %v4448
    %v5130 = vunpack.c.h.b16 %v4448
    %v5131 = vunpack.c.l.b16 %v4449
    %v5132 = vunpack.c.h.b16 %v4449
    %v5133 = vunpack.c.l.b16 %v4450
    %v5134 = vunpack.c.h.b16 %v4450
    %v5135 = vunpack.c.l.b16 %v4451
    %v5136 = vunpack.c.h.b16 %v4451
    %v5137 = vunpack.c.l.b16 %v4452
    %v5138 = vunpack.c.h.b16 %v4452
    %v5139 = vunpack.c.l.b16 %v4453
    %v5140 = vunpack.c.h.b16 %v4453
    %v5141 = vunpack.c.l.b16 %v4454
    %v5142 = vunpack.c.h.b16 %v4454
    %v5143 = vunpack.c.l.b16 %v4455
    %v5144 = vunpack.c.h.b16 %v4455
    %v5145 = vunpack.c.l.b16 %v4456
    %v5146 = vunpack.c.h.b16 %v4456
    %v5147 = vunpack.c.l.b16 %v4457
    %v5148 = vunpack.c.h.b16 %v4457
    %v5149 = vunpack.c.l.b16 %v4458
    %v5150 = vunpack.c.h.b16 %v4458
    %v5151 = vunpack.c.l.b16 %v4459
    %v5152 = vunpack.c.h.b16 %v4459
    %v5153 = vunpack.c.l.b16 %v4460
    %v5154 = vunpack.c.h.b16 %v4460
    %v5155 = vunpack.c.l.b16 %v4461
    %v5156 = vunpack.c.h.b16 %v4461
    %v5157 = vunpack.c.l.b16 %v4462
    %v5158 = vunpack.c.h.b16 %v4462
    %v5159 = vunpack.c.l.b16 %v4463
    %v5160 = vunpack.c.h.b16 %v4463
    %v5161 = vunpack.c.l.b16 %v4464
    %v5162 = vunpack.c.h.b16 %v4464
    %v5163 = vunpack.c.l.b16 %v4465
    %v5164 = vunpack.c.h.b16 %v4465
    %v5165 = vunpack.c.l.b16 %v4466
    %v5166 = vunpack.c.h.b16 %v4466
    %v5167 = vunpack.c.l.b16 %v4467
    %v5168 = vunpack.c.h.b16 %v4467
    %v5169 = vunpack.c.l.b16 %v4468
    %v5170 = vunpack.c.h.b16 %v4468
    %v5171 = vunpack.c.l.b16 %v4469
    %v5172 = vunpack.c.h.b16 %v4469
    %v5173 = vunpack.c.l.b16 %v4470
    %v5174 = vunpack.c.h.b16 %v4470
    %v5175 = vunpack.c.l.b16 %v4471
    %v5176 = vunpack.c.h.b16 %v4471
    %v5177 = vunpack.c.l.b16 %v4472
    %v5178 = vunpack.c.h.b16 %v4472
    %v5179 = vunpack.c.l.b16 %v4473
    %v5180 = vunpack.c.h.b16 %v4473
    %v5181 = vunpack.c.l.b16 %v4474
    %v5182 = vunpack.c.h.b16 %v4474
    %v5183 = vunpack.c.l.b16 %v4475
    %v5184 = vunpack.c.h.b16 %v4475
    %v5185 = vunpack.c.l.b16 %v4476
    %v5186 = vunpack.c.h.b16 %v4476
    %v5187 = vunpack.c.l.b16 %v4477
    %v5188 = vunpack.c.h.b16 %v4477
    %v5189 = vunpack.c.l.b16 %v4478
    %v5190 = vunpack.c.h.b16 %v4478
    %v5191 = vunpack.c.l.b16 %v4479
    %v5192 = vunpack.c.h.b16 %v4479
    %v5193 = vunpack.c.l.b16 %v4480
    %v5194 = vunpack.c.h.b16 %v4480
    %v5195 = vunpack.c.l.b16 %v4481
    %v5196 = vunpack.c.h.b16 %v4481
    %v5197 = vunpack.c.l.b16 %v4482
    %v5198 = vunpack.c.h.b16 %v4482
    %v5199 = vunpack.c.l.b16 %v4483
    %v5200 = vunpack.c.h.b16 %v4483
    %v5201 = vunpack.c.l.b16 %v4484
    %v5202 = vunpack.c.h.b16 %v4484
    %v5203 = vunpack.c.l.b16 %v4485
    %v5204 = vunpack.c.h.b16 %v4485
    %v5205 = vunpack.c.l.b16 %v4486
    %v5206 = vunpack.c.h.b16 %v4486
    %v5207 = vunpack.c.l.b16 %v4487
    %v5208 = vunpack.c.h.b16 %v4487
    %v5209 = vunpack.c.l.b16 %v4488
    %v5210 = vunpack.c.h.b16 %v4488
    %v5211 = vunpack.c.l.b16 %v4489
    %v5212 = vunpack.c.h.b16 %v4489
    %v5213 = vunpack.c.l.b16 %v4490
    %v5214 = vunpack.c.h.b16 %v4490
    %v5215 = vunpack.c.l.b16 %v4491
    %v5216 = vunpack.c.h.b16 %v4491
    %v5217 = vunpack.c.l.b16 %v4492
    %v5218 = vunpack.c.h.b16 %v4492
    %v5219 = vunpack.c.l.b16 %v4493
    %v5220 = vunpack.c.h.b16 %v4493
    %v5221 = vunpack.c.l.b16 %v4494
    %v5222 = vunpack.c.h.b16 %v4494
    %v5223 = vunpack.c.l.b16 %v4495
    %v5224 = vunpack.c.h.b16 %v4495
    %v5225 = vunpack.c.l.b16 %v4496
    %v5226 = vunpack.c.h.b16 %v4496
    %v5227 = vunpack.c.l.b16 %v4497
    %v5228 = vunpack.c.h.b16 %v4497
    %v5229 = vunpack.c.l.b16 %v4498
    %v5230 = vunpack.c.h.b16 %v4498
    %v5231 = vunpack.c.l.b16 %v4499
    %v5232 = vunpack.c.h.b16 %v4499
    %v5233 = vunpack.c.l.b16 %v4500
    %v5234 = vunpack.c.h.b16 %v4500
    %v5235 = vunpack.c.l.b16 %v4501
    %v5236 = vunpack.c.h.b16 %v4501
    %v5237 = vunpack.c.l.b16 %v4502
    %v5238 = vunpack.c.h.b16 %v4502
    %v5239 = vunpack.c.l.b16 %v4503
    %v5240 = vunpack.c.h.b16 %v4503
    %v5241 = vunpack.c.l.b16 %v4504
    %v5242 = vunpack.c.h.b16 %v4504
    %v5243 = vunpack.c.l.b16 %v4505
    %v5244 = vunpack.c.h.b16 %v4505
    %v5245 = vunpack.c.l.b16 %v4506
    %v5246 = vunpack.c.h.b16 %v4506
    %v5247 = vunpack.c.l.b16 %v4507
    %v5248 = vunpack.c.h.b16 %v4507
    %v5249 = vunpack.c.l.b16 %v4508
    %v5250 = vunpack.c.h.b16 %v4508
    %v5251 = vunpack.c.l.b16 %v4509
    %v5252 = vunpack.c.h.b16 %v4509
    %v5253 = vunpack.c.l.b16 %v4510
    %v5254 = vunpack.c.h.b16 %v4510
    %v5255 = vunpack.c.l.b16 %v4511
    %v5256 = vunpack.c.h.b16 %v4511
    %v5257 = vunpack.c.l.b16 %v4512
    %v5258 = vunpack.c.h.b16 %v4512
    %v5259 = vunpack.c.l.b16 %v4513
    %v5260 = vunpack.c.h.b16 %v4513
    %v5261 = vunpack.c.l.b16 %v4514
    %v5262 = vunpack.c.h.b16 %v4514
    %v5263 = vunpack.c.l.b16 %v4515
    %v5264 = vunpack.c.h.b16 %v4515
    %v5265 = vunpack.c.l.b16 %v4516
    %v5266 = vunpack.c.h.b16 %v4516
    %v5267 = vunpack.c.l.b16 %v4517
    %v5268 = vunpack.c.h.b16 %v4517
    %v5269 = vunpack.c.l.b16 %v4518
    %v5270 = vunpack.c.h.b16 %v4518
    %v5271 = vunpack.c.l.b16 %v4519
    %v5272 = vunpack.c.h.b16 %v4519
    %v5273 = vunpack.c.l.b16 %v4520
    %v5274 = vunpack.c.h.b16 %v4520
    %v5275 = vunpack.c.l.b16 %v4521
    %v5276 = vunpack.c.h.b16 %v4521
    %v5277 = vunpack.c.l.b16 %v4522
    %v5278 = vunpack.c.h.b16 %v4522
    %v5279 = vunpack.c.l.b16 %v4523
    %v5280 = vunpack.c.h.b16 %v4523
    %v5281 = vunpack.c.l.b16 %v4524
    %v5282 = vunpack.c.h.b16 %v4524
    %v5283 = vunpack.c.l.b16 %v4525
    %v5284 = vunpack.c.h.b16 %v4525
    %v5285 = vunpack.c.l.b16 %v4526
    %v5286 = vunpack.c.h.b16 %v4526
    %v5287 = vunpack.c.l.b16 %v4527
    %v5288 = vunpack.c.h.b16 %v4527
    %v5289 = vunpack.c.l.b16 %v4528
    %v5290 = vunpack.c.h.b16 %v4528
    %v5291 = vunpack.c.l.b16 %v4529
    %v5292 = vunpack.c.h.b16 %v4529
    %v5293 = vunpack.c.l.b16 %v4530
    %v5294 = vunpack.c.h.b16 %v4530
    %v5295 = vunpack.c.l.b16 %v4531
    %v5296 = vunpack.c.h.b16 %v4531
    %v5297 = vunpack.c.l.b16 %v4532
    %v5298 = vunpack.c.h.b16 %v4532
    %v5299 = vunpack.c.l.b16 %v4533
    %v5300 = vunpack.c.h.b16 %v4533
    %v5301 = vunpack.c.l.b16 %v4534
    %v5302 = vunpack.c.h.b16 %v4534
    %v5303 = vunpack.c.l.b16 %v4535
    %v5304 = vunpack.c.h.b16 %v4535
    %v5305 = vunpack.c.l.b16 %v4536
    %v5306 = vunpack.c.h.b16 %v4536
    %v5307 = vunpack.c.l.b16 %v4537
    %v5308 = vunpack.c.h.b16 %v4537
    %v5309 = vunpack.c.l.b16 %v4538
    %v5310 = vunpack.c.h.b16 %v4538
    %v5311 = vunpack.c.l.b16 %v4539
    %v5312 = vunpack.c.h.b16 %v4539
    %v5313 = vunpack.c.l.b16 %v4540
    %v5314 = vunpack.c.h.b16 %v4540
    %v5315 = vunpack.c.l.b16 %v4541
    %v5316 = vunpack.c.h.b16 %v4541
    %v5317 = vunpack.c.l.b16 %v4542
    %v5318 = vunpack.c.h.b16 %v4542
    %v5319 = vunpack.c.l.b16 %v4543
    %v5320 = vunpack.c.h.b16 %v4543
    %v5321 = vunpack.c.l.b16 %v4544
    %v5322 = vunpack.c.h.b16 %v4544
    %v5323 = vunpack.c.l.b16 %v4545
    %v5324 = vunpack.c.h.b16 %v4545
    %v5325 = vunpack.c.l.b16 %v4546
    %v5326 = vunpack.c.h.b16 %v4546
    %v5327 = vunpack.c.l.b16 %v4547
    %v5328 = vunpack.c.h.b16 %v4547
    %v5329 = vunpack.c.l.b16 %v4548
    %v5330 = vunpack.c.h.b16 %v4548
    %v5331 = vunpack.c.l.b16 %v4549
    %v5332 = vunpack.c.h.b16 %v4549
    %v5333 = vunpack.c.l.b16 %v4550
    %v5334 = vunpack.c.h.b16 %v4550
    %v5335 = vunpack.c.l.b16 %v4551
    %v5336 = vunpack.c.h.b16 %v4551
    %v5337 = vunpack.c.l.b16 %v4552
    %v5338 = vunpack.c.h.b16 %v4552
    %v5339 = vpack.c.b16 %v4835, %v4827
    %v5340 = vpack.c.b16 %v4836, %v4828
    %v5341 = vpack.c.b16 %v4837, %v4829
    %v5342 = vpack.c.b16 %v4838, %v4830
    %v5343 = vpack.c.b16 %v4839, %v4831
    %v5344 = vpack.c.b16 %v4840, %v4832
    %v5345 = vpack.c.b16 %v4841, %v4833
    %v5346 = vpack.c.b16 %v4842, %v4834
    %v5347 = vpack.c.b16 %v4851, %v4843
    %v5348 = vpack.c.b16 %v4852, %v4844
    %v5349 = vpack.c.b16 %v4853, %v4845
    %v5350 = vpack.c.b16 %v4854, %v4846
    %v5351 = vpack.c.b16 %v4855, %v4847
    %v5352 = vpack.c.b16 %v4856, %v4848
    %v5353 = vpack.c.b16 %v4857, %v4849
    %v5354 = vpack.c.b16 %v4858, %v4850
    %v5355 = vpack.c.b16 %v4867, %v4859
    %v5356 = vpack.c.b16 %v4868, %v4860
    %v5357 = vpack.c.b16 %v4869, %v4861
    %v5358 = vpack.c.b16 %v4870, %v4862
    %v5359 = vpack.c.b16 %v4871, %v4863
    %v5360 = vpack.c.b16 %v4872, %v4864
    %v5361 = vpack.c.b16 %v4873, %v4865
    %v5362 = vpack.c.b16 %v4874, %v4866
    %v5363 = vpack.c.b16 %v4883, %v4875
    %v5364 = vpack.c.b16 %v4884, %v4876
    %v5365 = vpack.c.b16 %v4885, %v4877
    %v5366 = vpack.c.b16 %v4886, %v4878
    %v5367 = vpack.c.b16 %v4887, %v4879
    %v5368 = vpack.c.b16 %v4888, %v4880
    %v5369 = vpack.c.b16 %v4889, %v4881
    %v5370 = vpack.c.b16 %v4890, %v4882
    %v5371 = vpack.c.b16 %v4899, %v4891
    %v5372 = vpack.c.b16 %v4900, %v4892
    %v5373 = vpack.c.b16 %v4901, %v4893
    %v5374 = vpack.c.b16 %v4902, %v4894
    %v5375 = vpack.c.b16 %v4903, %v4895
    %v5376 = vpack.c.b16 %v4904, %v4896
    %v5377 = vpack.c.b16 %v4905, %v4897
    %v5378 = vpack.c.b16 %v4906, %v4898
    %v5379 = vpack.c.b16 %v4915, %v4907
    %v5380 = vpack.c.b16 %v4916, %v4908
    %v5381 = vpack.c.b16 %v4917, %v4909
    %v5382 = vpack.c.b16 %v4918, %v4910
    %v5383 = vpack.c.b16 %v4919, %v4911
    %v5384 = vpack.c.b16 %v4920, %v4912
    %v5385 = vpack.c.b16 %v4921, %v4913
    %v5386 = vpack.c.b16 %v4922, %v4914
    %v5387 = vpack.c.b16 %v4931, %v4923
    %v5388 = vpack.c.b16 %v4932, %v4924
    %v5389 = vpack.c.b16 %v4933, %v4925
    %v5390 = vpack.c.b16 %v4934, %v4926
    %v5391 = vpack.c.b16 %v4935, %v4927
    %v5392 = vpack.c.b16 %v4936, %v4928
    %v5393 = vpack.c.b16 %v4937, %v4929
    %v5394 = vpack.c.b16 %v4938, %v4930
    %v5395 = vpack.c.b16 %v4947, %v4939
    %v5396 = vpack.c.b16 %v4948, %v4940
    %v5397 = vpack.c.b16 %v4949, %v4941
    %v5398 = vpack.c.b16 %v4950, %v4942
    %v5399 = vpack.c.b16 %v4951, %v4943
    %v5400 = vpack.c.b16 %v4952, %v4944
    %v5401 = vpack.c.b16 %v4953, %v4945
    %v5402 = vpack.c.b16 %v4954, %v4946
    %v5403 = vpack.c.b16 %v4963, %v4955
    %v5404 = vpack.c.b16 %v4964, %v4956
    %v5405 = vpack.c.b16 %v4965, %v4957
    %v5406 = vpack.c.b16 %v4966, %v4958
    %v5407 = vpack.c.b16 %v4967, %v4959
    %v5408 = vpack.c.b16 %v4968, %v4960
    %v5409 = vpack.c.b16 %v4969, %v4961
    %v5410 = vpack.c.b16 %v4970, %v4962
    %v5411 = vpack.c.b16 %v4979, %v4971
    %v5412 = vpack.c.b16 %v4980, %v4972
    %v5413 = vpack.c.b16 %v4981, %v4973
    %v5414 = vpack.c.b16 %v4982, %v4974
    %v5415 = vpack.c.b16 %v4983, %v4975
    %v5416 = vpack.c.b16 %v4984, %v4976
    %v5417 = vpack.c.b16 %v4985, %v4977
    %v5418 = vpack.c.b16 %v4986, %v4978
    %v5419 = vpack.c.b16 %v4995, %v4987
    %v5420 = vpack.c.b16 %v4996, %v4988
    %v5421 = vpack.c.b16 %v4997, %v4989
    %v5422 = vpack.c.b16 %v4998, %v4990
    %v5423 = vpack.c.b16 %v4999, %v4991
    %v5424 = vpack.c.b16 %v5000, %v4992
    %v5425 = vpack.c.b16 %v5001, %v4993
    %v5426 = vpack.c.b16 %v5002, %v4994
    %v5427 = vpack.c.b16 %v5011, %v5003
    %v5428 = vpack.c.b16 %v5012, %v5004
    %v5429 = vpack.c.b16 %v5013, %v5005
    %v5430 = vpack.c.b16 %v5014, %v5006
    %v5431 = vpack.c.b16 %v5015, %v5007
    %v5432 = vpack.c.b16 %v5016, %v5008
    %v5433 = vpack.c.b16 %v5017, %v5009
    %v5434 = vpack.c.b16 %v5018, %v5010
    %v5435 = vpack.c.b16 %v5027, %v5019
    %v5436 = vpack.c.b16 %v5028, %v5020
    %v5437 = vpack.c.b16 %v5029, %v5021
    %v5438 = vpack.c.b16 %v5030, %v5022
    %v5439 = vpack.c.b16 %v5031, %v5023
    %v5440 = vpack.c.b16 %v5032, %v5024
    %v5441 = vpack.c.b16 %v5033, %v5025
    %v5442 = vpack.c.b16 %v5034, %v5026
    %v5443 = vpack.c.b16 %v5043, %v5035
    %v5444 = vpack.c.b16 %v5044, %v5036
    %v5445 = vpack.c.b16 %v5045, %v5037
    %v5446 = vpack.c.b16 %v5046, %v5038
    %v5447 = vpack.c.b16 %v5047, %v5039
    %v5448 = vpack.c.b16 %v5048, %v5040
    %v5449 = vpack.c.b16 %v5049, %v5041
    %v5450 = vpack.c.b16 %v5050, %v5042
    %v5451 = vpack.c.b16 %v5059, %v5051
    %v5452 = vpack.c.b16 %v5060, %v5052
    %v5453 = vpack.c.b16 %v5061, %v5053
    %v5454 = vpack.c.b16 %v5062, %v5054
    %v5455 = vpack.c.b16 %v5063, %v5055
    %v5456 = vpack.c.b16 %v5064, %v5056
    %v5457 = vpack.c.b16 %v5065, %v5057
    %v5458 = vpack.c.b16 %v5066, %v5058
    %v5459 = vpack.c.b16 %v5075, %v5067
    %v5460 = vpack.c.b16 %v5076, %v5068
    %v5461 = vpack.c.b16 %v5077, %v5069
    %v5462 = vpack.c.b16 %v5078, %v5070
    %v5463 = vpack.c.b16 %v5079, %v5071
    %v5464 = vpack.c.b16 %v5080, %v5072
    %v5465 = vpack.c.b16 %v5081, %v5073
    %v5466 = vpack.c.b16 %v5082, %v5074
    %v5467 = vpack.c.b16 %v5091, %v5083
    %v5468 = vpack.c.b16 %v5092, %v5084
    %v5469 = vpack.c.b16 %v5093, %v5085
    %v5470 = vpack.c.b16 %v5094, %v5086
    %v5471 = vpack.c.b16 %v5095, %v5087
    %v5472 = vpack.c.b16 %v5096, %v5088
    %v5473 = vpack.c.b16 %v5097, %v5089
    %v5474 = vpack.c.b16 %v5098, %v5090
    %v5475 = vpack.c.b16 %v5107, %v5099
    %v5476 = vpack.c.b16 %v5108, %v5100
    %v5477 = vpack.c.b16 %v5109, %v5101
    %v5478 = vpack.c.b16 %v5110, %v5102
    %v5479 = vpack.c.b16 %v5111, %v5103
    %v5480 = vpack.c.b16 %v5112, %v5104
    %v5481 = vpack.c.b16 %v5113, %v5105
    %v5482 = vpack.c.b16 %v5114, %v5106
    %v5483 = vpack.c.b16 %v5123, %v5115
    %v5484 = vpack.c.b16 %v5124, %v5116
    %v5485 = vpack.c.b16 %v5125, %v5117
    %v5486 = vpack.c.b16 %v5126, %v5118
    %v5487 = vpack.c.b16 %v5127, %v5119
    %v5488 = vpack.c.b16 %v5128, %v5120
    %v5489 = vpack.c.b16 %v5129, %v5121
    %v5490 = vpack.c.b16 %v5130, %v5122
    %v5491 = vpack.c.b16 %v5139, %v5131
    %v5492 = vpack.c.b16 %v5140, %v5132
    %v5493 = vpack.c.b16 %v5141, %v5133
    %v5494 = vpack.c.b16 %v5142, %v5134
    %v5495 = vpack.c.b16 %v5143, %v5135
    %v5496 = vpack.c.b16 %v5144, %v5136
    %v5497 = vpack.c.b16 %v5145, %v5137
    %v5498 = vpack.c.b16 %v5146, %v5138
    %v5499 = vpack.c.b16 %v5155, %v5147
    %v5500 = vpack.c.b16 %v5156, %v5148
    %v5501 = vpack.c.b16 %v5157, %v5149
    %v5502 = vpack.c.b16 %v5158, %v5150
    %v5503 = vpack.c.b16 %v5159, %v5151
    %v5504 = vpack.c.b16 %v5160, %v5152
    %v5505 = vpack.c.b16 %v5161, %v5153
    %v5506 = vpack.c.b16 %v5162, %v5154
    %v5507 = vpack.c.b16 %v5171, %v5163
    %v5508 = vpack.c.b16 %v5172, %v5164
    %v5509 = vpack.c.b16 %v5173, %v5165
    %v5510 = vpack.c.b16 %v5174, %v5166
    %v5511 = vpack.c.b16 %v5175, %v5167
    %v5512 = vpack.c.b16 %v5176, %v5168
    %v5513 = vpack.c.b16 %v5177, %v5169
    %v5514 = vpack.c.b16 %v5178, %v5170
    %v5515 = vpack.c.b16 %v5187, %v5179
    %v5516 = vpack.c.b16 %v5188, %v5180
    %v5517 = vpack.c.b16 %v5189, %v5181
    %v5518 = vpack.c.b16 %v5190, %v5182
    %v5519 = vpack.c.b16 %v5191, %v5183
    %v5520 = vpack.c.b16 %v5192, %v5184
    %v5521 = vpack.c.b16 %v5193, %v5185
    %v5522 = vpack.c.b16 %v5194, %v5186
    %v5523 = vpack.c.b16 %v5203, %v5195
    %v5524 = vpack.c.b16 %v5204, %v5196
    %v5525 = vpack.c.b16 %v5205, %v5197
    %v5526 = vpack.c.b16 %v5206, %v5198
    %v5527 = vpack.c.b16 %v5207, %v5199
    %v5528 = vpack.c.b16 %v5208, %v5200
    %v5529 = vpack.c.b16 %v5209, %v5201
    %v5530 = vpack.c.b16 %v5210, %v5202
    %v5531 = vpack.c.b16 %v5219, %v5211
    %v5532 = vpack.c.b16 %v5220, %v5212
    %v5533 = vpack.c.b16 %v5221, %v5213
    %v5534 = vpack.c.b16 %v5222, %v5214
    %v5535 = vpack.c.b16 %v5223, %v5215
    %v5536 = vpack.c.b16 %v5224, %v5216
    %v5537 = vpack.c.b16 %v5225, %v5217
    %v5538 = vpack.c.b16 %v5226, %v5218
    %v5539 = vpack.c.b16 %v5235, %v5227
    %v5540 = vpack.c.b16 %v5236, %v5228
    %v5541 = vpack.c.b16 %v5237, %v5229
    %v5542 = vpack.c.b16 %v5238, %v5230
    %v5543 = vpack.c.b16 %v5239, %v5231
    %v5544 = vpack.c.b16 %v5240, %v5232
    %v5545 = vpack.c.b16 %v5241, %v5233
    %v5546 = vpack.c.b16 %v5242, %v5234
    %v5547 = vpack.c.b16 %v5251, %v5243
    %v5548 = vpack.c.b16 %v5252, %v5244
    %v5549 = vpack.c.b16 %v5253, %v5245
    %v5550 = vpack.c.b16 %v5254, %v5246
    %v5551 = vpack.c.b16 %v5255, %v5247
    %v5552 = vpack.c.b16 %v5256, %v5248
    %v5553 = vpack.c.b16 %v5257, %v5249
    %v5554 = vpack.c.b16 %v5258, %v5250
    %v5555 = vpack.c.b16 %v5267, %v5259
    %v5556 = vpack.c.b16 %v5268, %v5260
    %v5557 = vpack.c.b16 %v5269, %v5261
    %v5558 = vpack.c.b16 %v5270, %v5262
    %v5559 = vpack.c.b16 %v5271, %v5263
    %v5560 = vpack.c.b16 %v5272, %v5264
    %v5561 = vpack.c.b16 %v5273, %v5265
    %v5562 = vpack.c.b16 %v5274, %v5266
    %v5563 = vpack.c.b16 %v5283, %v5275
    %v5564 = vpack.c.b16 %v5284, %v5276
    %v5565 = vpack.c.b16 %v5285, %v5277
    %v5566 = vpack.c.b16 %v5286, %v5278
    %v5567 = vpack.c.b16 %v5287, %v5279
    %v5568 = vpack.c.b16 %v5288, %v5280
    %v5569 = vpack.c.b16 %v5289, %v5281
    %v5570 = vpack.c.b16 %v5290, %v5282
    %v5571 = vpack.c.b16 %v5299, %v5291
    %v5572 = vpack.c.b16 %v5300, %v5292
    %v5573 = vpack.c.b16 %v5301, %v5293
    %v5574 = vpack.c.b16 %v5302, %v5294
    %v5575 = vpack.c.b16 %v5303, %v5295
    %v5576 = vpack.c.b16 %v5304, %v5296
    %v5577 = vpack.c.b16 %v5305, %v5297
    %v5578 = vpack.c.b16 %v5306, %v5298
    %v5579 = vpack.c.b16 %v5315, %v5307
    %v5580 = vpack.c.b16 %v5316, %v5308
    %v5581 = vpack.c.b16 %v5317, %v5309
    %v5582 = vpack.c.b16 %v5318, %v5310
    %v5583 = vpack.c.b16 %v5319, %v5311
    %v5584 = vpack.c.b16 %v5320, %v5312
    %v5585 = vpack.c.b16 %v5321, %v5313
    %v5586 = vpack.c.b16 %v5322, %v5314
    %v5587 = vpack.c.b16 %v5331, %v5323
    %v5588 = vpack.c.b16 %v5332, %v5324
    %v5589 = vpack.c.b16 %v5333, %v5325
    %v5590 = vpack.c.b16 %v5334, %v5326
    %v5591 = vpack.c.b16 %v5335, %v5327
    %v5592 = vpack.c.b16 %v5336, %v5328
    %v5593 = vpack.c.b16 %v5337, %v5329
    %v5594 = vpack.c.b16 %v5338, %v5330
    %5851 = vmatpush.bf16.msra.mxu0 %v5395
    %5852 = vmatpush.bf16.msra.mxu0 %v5387
    %5853 = vmatpush.bf16.msra.mxu0 %v5379
    %5854 = vmatpush.bf16.msra.mxu0 %v5371
    %5855 = vmatpush.bf16.msra.mxu0 %v5363
    %5856 = vmatpush.bf16.msra.mxu0 %v5355
    %5857 = vmatpush.bf16.msra.mxu0 %v5347
    %5858 = vmatpush.bf16.msra.mxu0 %v5339
    %5859 = vmatmul.bf16.gmra.mxu0 %v4293
    %v5860 = vpop.f32.mrf.mxu0
    %v5861 = vadd.f32 %v4555, %v5860
    %v5862 = vpop.f32.mrf.mxu0
    %5863 = vdwg.mxu0
    %5864 = vmatpush.bf16.msra.mxu0 %v5459
    %5865 = vmatpush.bf16.msra.mxu0 %v5451
    %5866 = vmatpush.bf16.msra.mxu0 %v5443
    %5867 = vmatpush.bf16.msra.mxu0 %v5435
    %5868 = vmatpush.bf16.msra.mxu0 %v5427
    %5869 = vmatpush.bf16.msra.mxu0 %v5419
    %5870 = vmatpush.bf16.msra.mxu0 %v5411
    %5871 = vmatpush.bf16.msra.mxu0 %v5403
    %5872 = vmatmul.bf16.gmra.mxu0 %v4294
    %v5873 = vpop.f32.mrf.mxu0
    %v5874 = vadd.f32 %v5861, %v5873
    %v5875 = vpop.f32.mrf.mxu0
    %5876 = vdwg.mxu0
    %5877 = vmatpush.bf16.msra.mxu0 %v5523
    %5878 = vmatpush.bf16.msra.mxu0 %v5515
    %5879 = vmatpush.bf16.msra.mxu0 %v5507
    %5880 = vmatpush.bf16.msra.mxu0 %v5499
    %5881 = vmatpush.bf16.msra.mxu0 %v5491
    %5882 = vmatpush.bf16.msra.mxu0 %v5483
    %5883 = vmatpush.bf16.msra.mxu0 %v5475
    %5884 = vmatpush.bf16.msra.mxu0 %v5467
    %5885 = vmatmul.bf16.gmra.mxu0 %v4295
    %v5886 = vpop.f32.mrf.mxu0
    %v5887 = vadd.f32 %v5874, %v5886
    %v5888 = vpop.f32.mrf.mxu0
    %5889 = vdwg.mxu0
    %5890 = vmatpush.bf16.msra.mxu0 %v5587
    %5891 = vmatpush.bf16.msra.mxu0 %v5579
    %5892 = vmatpush.bf16.msra.mxu0 %v5571
    %5893 = vmatpush.bf16.msra.mxu0 %v5563
    %5894 = vmatpush.bf16.msra.mxu0 %v5555
    %5895 = vmatpush.bf16.msra.mxu0 %v5547
    %5896 = vmatpush.bf16.msra.mxu0 %v5539
    %5897 = vmatpush.bf16.msra.mxu0 %v5531
    %5898 = vmatmul.bf16.gmra.mxu0 %v4296
    %v5899 = vpop.f32.mrf.mxu0
    %v5900 = vadd.f32 %v5887, %v5899
    %v5901 = vpop.f32.mrf.mxu0
    %5902 = vdwg.mxu0
    %5903 = vmatpush.bf16.msra.mxu0 %v5396
    %5904 = vmatpush.bf16.msra.mxu0 %v5388
    %5905 = vmatpush.bf16.msra.mxu0 %v5380
    %5906 = vmatpush.bf16.msra.mxu0 %v5372
    %5907 = vmatpush.bf16.msra.mxu0 %v5364
    %5908 = vmatpush.bf16.msra.mxu0 %v5356
    %5909 = vmatpush.bf16.msra.mxu0 %v5348
    %5910 = vmatpush.bf16.msra.mxu0 %v5340
    %5911 = vmatmul.bf16.gmra.mxu0 %v4293
    %v5912 = vpop.f32.mrf.mxu0
    %v5913 = vadd.f32 %v4556, %v5912
    %v5914 = vpop.f32.mrf.mxu0
    %5915 = vdwg.mxu0
    %5916 = vmatpush.bf16.msra.mxu0 %v5460
    %5917 = vmatpush.bf16.msra.mxu0 %v5452
    %5918 = vmatpush.bf16.msra.mxu0 %v5444
    %5919 = vmatpush.bf16.msra.mxu0 %v5436
    %5920 = vmatpush.bf16.msra.mxu0 %v5428
    %5921 = vmatpush.bf16.msra.mxu0 %v5420
    %5922 = vmatpush.bf16.msra.mxu0 %v5412
    %5923 = vmatpush.bf16.msra.mxu0 %v5404
    %5924 = vmatmul.bf16.gmra.mxu0 %v4294
    %v5925 = vpop.f32.mrf.mxu0
    %v5926 = vadd.f32 %v5913, %v5925
    %v5927 = vpop.f32.mrf.mxu0
    %5928 = vdwg.mxu0
    %5929 = vmatpush.bf16.msra.mxu0 %v5524
    %5930 = vmatpush.bf16.msra.mxu0 %v5516
    %5931 = vmatpush.bf16.msra.mxu0 %v5508
    %5932 = vmatpush.bf16.msra.mxu0 %v5500
    %5933 = vmatpush.bf16.msra.mxu0 %v5492
    %5934 = vmatpush.bf16.msra.mxu0 %v5484
    %5935 = vmatpush.bf16.msra.mxu0 %v5476
    %5936 = vmatpush.bf16.msra.mxu0 %v5468
    %5937 = vmatmul.bf16.gmra.mxu0 %v4295
    %v5938 = vpop.f32.mrf.mxu0
    %v5939 = vadd.f32 %v5926, %v5938
    %v5940 = vpop.f32.mrf.mxu0
    %5941 = vdwg.mxu0
    %5942 = vmatpush.bf16.msra.mxu0 %v5588
    %5943 = vmatpush.bf16.msra.mxu0 %v5580
    %5944 = vmatpush.bf16.msra.mxu0 %v5572
    %5945 = vmatpush.bf16.msra.mxu0 %v5564
    %5946 = vmatpush.bf16.msra.mxu0 %v5556
    %5947 = vmatpush.bf16.msra.mxu0 %v5548
    %5948 = vmatpush.bf16.msra.mxu0 %v5540
    %5949 = vmatpush.bf16.msra.mxu0 %v5532
    %5950 = vmatmul.bf16.gmra.mxu0 %v4296
    %v5951 = vpop.f32.mrf.mxu0
    %v5952 = vadd.f32 %v5939, %v5951
    %v5953 = vpop.f32.mrf.mxu0
    %5954 = vdwg.mxu0
    %5955 = vmatpush.bf16.msra.mxu0 %v5397
    %5956 = vmatpush.bf16.msra.mxu0 %v5389
    %5957 = vmatpush.bf16.msra.mxu0 %v5381
    %5958 = vmatpush.bf16.msra.mxu0 %v5373
    %5959 = vmatpush.bf16.msra.mxu0 %v5365
    %5960 = vmatpush.bf16.msra.mxu0 %v5357
    %5961 = vmatpush.bf16.msra.mxu0 %v5349
    %5962 = vmatpush.bf16.msra.mxu0 %v5341
    %5963 = vmatmul.bf16.gmra.mxu0 %v4293
    %v5964 = vpop.f32.mrf.mxu0
    %v5965 = vadd.f32 %v4557, %v5964
    %v5966 = vpop.f32.mrf.mxu0
    %5967 = vdwg.mxu0
    %5968 = vmatpush.bf16.msra.mxu0 %v5461
    %5969 = vmatpush.bf16.msra.mxu0 %v5453
    %5970 = vmatpush.bf16.msra.mxu0 %v5445
    %5971 = vmatpush.bf16.msra.mxu0 %v5437
    %5972 = vmatpush.bf16.msra.mxu0 %v5429
    %5973 = vmatpush.bf16.msra.mxu0 %v5421
    %5974 = vmatpush.bf16.msra.mxu0 %v5413
    %5975 = vmatpush.bf16.msra.mxu0 %v5405
    %5976 = vmatmul.bf16.gmra.mxu0 %v4294
    %v5977 = vpop.f32.mrf.mxu0
    %v5978 = vadd.f32 %v5965, %v5977
    %v5979 = vpop.f32.mrf.mxu0
    %5980 = vdwg.mxu0
    %5981 = vmatpush.bf16.msra.mxu0 %v5525
    %5982 = vmatpush.bf16.msra.mxu0 %v5517
    %5983 = vmatpush.bf16.msra.mxu0 %v5509
    %5984 = vmatpush.bf16.msra.mxu0 %v5501
    %5985 = vmatpush.bf16.msra.mxu0 %v5493
    %5986 = vmatpush.bf16.msra.mxu0 %v5485
    %5987 = vmatpush.bf16.msra.mxu0 %v5477
    %5988 = vmatpush.bf16.msra.mxu0 %v5469
    %5989 = vmatmul.bf16.gmra.mxu0 %v4295
    %v5990 = vpop.f32.mrf.mxu0
    %v5991 = vadd.f32 %v5978, %v5990
    %v5992 = vpop.f32.mrf.mxu0
    %5993 = vdwg.mxu0
    %5994 = vmatpush.bf16.msra.mxu0 %v5589
    %5995 = vmatpush.bf16.msra.mxu0 %v5581
    %5996 = vmatpush.bf16.msra.mxu0 %v5573
    %5997 = vmatpush.bf16.msra.mxu0 %v5565
    %5998 = vmatpush.bf16.msra.mxu0 %v5557
    %5999 = vmatpush.bf16.msra.mxu0 %v5549
    %6000 = vmatpush.bf16.msra.mxu0 %v5541
    %6001 = vmatpush.bf16.msra.mxu0 %v5533
    %6002 = vmatmul.bf16.gmra.mxu0 %v4296
    %v6003 = vpop.f32.mrf.mxu0
    %v6004 = vadd.f32 %v5991, %v6003
    %v6005 = vpop.f32.mrf.mxu0
    %6006 = vdwg.mxu0
    %6007 = vmatpush.bf16.msra.mxu0 %v5398
    %6008 = vmatpush.bf16.msra.mxu0 %v5390
    %6009 = vmatpush.bf16.msra.mxu0 %v5382
    %6010 = vmatpush.bf16.msra.mxu0 %v5374
    %6011 = vmatpush.bf16.msra.mxu0 %v5366
    %6012 = vmatpush.bf16.msra.mxu0 %v5358
    %6013 = vmatpush.bf16.msra.mxu0 %v5350
    %6014 = vmatpush.bf16.msra.mxu0 %v5342
    %6015 = vmatmul.bf16.gmra.mxu0 %v4293
    %v6016 = vpop.f32.mrf.mxu0
    %v6017 = vadd.f32 %v4558, %v6016
    %v6018 = vpop.f32.mrf.mxu0
    %6019 = vdwg.mxu0
    %6020 = vmatpush.bf16.msra.mxu0 %v5462
    %6021 = vmatpush.bf16.msra.mxu0 %v5454
    %6022 = vmatpush.bf16.msra.mxu0 %v5446
    %6023 = vmatpush.bf16.msra.mxu0 %v5438
    %6024 = vmatpush.bf16.msra.mxu0 %v5430
    %6025 = vmatpush.bf16.msra.mxu0 %v5422
    %6026 = vmatpush.bf16.msra.mxu0 %v5414
    %6027 = vmatpush.bf16.msra.mxu0 %v5406
    %6028 = vmatmul.bf16.gmra.mxu0 %v4294
    %v6029 = vpop.f32.mrf.mxu0
    %v6030 = vadd.f32 %v6017, %v6029
    %v6031 = vpop.f32.mrf.mxu0
    %6032 = vdwg.mxu0
    %6033 = vmatpush.bf16.msra.mxu0 %v5526
    %6034 = vmatpush.bf16.msra.mxu0 %v5518
    %6035 = vmatpush.bf16.msra.mxu0 %v5510
    %6036 = vmatpush.bf16.msra.mxu0 %v5502
    %6037 = vmatpush.bf16.msra.mxu0 %v5494
    %6038 = vmatpush.bf16.msra.mxu0 %v5486
    %6039 = vmatpush.bf16.msra.mxu0 %v5478
    %6040 = vmatpush.bf16.msra.mxu0 %v5470
    %6041 = vmatmul.bf16.gmra.mxu0 %v4295
    %v6042 = vpop.f32.mrf.mxu0
    %v6043 = vadd.f32 %v6030, %v6042
    %v6044 = vpop.f32.mrf.mxu0
    %6045 = vdwg.mxu0
    %6046 = vmatpush.bf16.msra.mxu0 %v5590
    %6047 = vmatpush.bf16.msra.mxu0 %v5582
    %6048 = vmatpush.bf16.msra.mxu0 %v5574
    %6049 = vmatpush.bf16.msra.mxu0 %v5566
    %6050 = vmatpush.bf16.msra.mxu0 %v5558
    %6051 = vmatpush.bf16.msra.mxu0 %v5550
    %6052 = vmatpush.bf16.msra.mxu0 %v5542
    %6053 = vmatpush.bf16.msra.mxu0 %v5534
    %6054 = vmatmul.bf16.gmra.mxu0 %v4296
    %v6055 = vpop.f32.mrf.mxu0
    %v6056 = vadd.f32 %v6043, %v6055
    %v6057 = vpop.f32.mrf.mxu0
    %6058 = vdwg.mxu0
    %6059 = vmatpush.bf16.msra.mxu0 %v5399
    %6060 = vmatpush.bf16.msra.mxu0 %v5391
    %6061 = vmatpush.bf16.msra.mxu0 %v5383
    %6062 = vmatpush.bf16.msra.mxu0 %v5375
    %6063 = vmatpush.bf16.msra.mxu0 %v5367
    %6064 = vmatpush.bf16.msra.mxu0 %v5359
    %6065 = vmatpush.bf16.msra.mxu0 %v5351
    %6066 = vmatpush.bf16.msra.mxu0 %v5343
    %6067 = vmatmul.bf16.gmra.mxu0 %v4293
    %v6068 = vpop.f32.mrf.mxu0
    %v6069 = vadd.f32 %v4559, %v6068
    %v6070 = vpop.f32.mrf.mxu0
    %6071 = vdwg.mxu0
    %6072 = vmatpush.bf16.msra.mxu0 %v5463
    %6073 = vmatpush.bf16.msra.mxu0 %v5455
    %6074 = vmatpush.bf16.msra.mxu0 %v5447
    %6075 = vmatpush.bf16.msra.mxu0 %v5439
    %6076 = vmatpush.bf16.msra.mxu0 %v5431
    %6077 = vmatpush.bf16.msra.mxu0 %v5423
    %6078 = vmatpush.bf16.msra.mxu0 %v5415
    %6079 = vmatpush.bf16.msra.mxu0 %v5407
    %6080 = vmatmul.bf16.gmra.mxu0 %v4294
    %v6081 = vpop.f32.mrf.mxu0
    %v6082 = vadd.f32 %v6069, %v6081
    %v6083 = vpop.f32.mrf.mxu0
    %6084 = vdwg.mxu0
    %6085 = vmatpush.bf16.msra.mxu0 %v5527
    %6086 = vmatpush.bf16.msra.mxu0 %v5519
    %6087 = vmatpush.bf16.msra.mxu0 %v5511
    %6088 = vmatpush.bf16.msra.mxu0 %v5503
    %6089 = vmatpush.bf16.msra.mxu0 %v5495
    %6090 = vmatpush.bf16.msra.mxu0 %v5487
    %6091 = vmatpush.bf16.msra.mxu0 %v5479
    %6092 = vmatpush.bf16.msra.mxu0 %v5471
    %6093 = vmatmul.bf16.gmra.mxu0 %v4295
    %v6094 = vpop.f32.mrf.mxu0
    %v6095 = vadd.f32 %v6082, %v6094
    %v6096 = vpop.f32.mrf.mxu0
    %6097 = vdwg.mxu0
    %6098 = vmatpush.bf16.msra.mxu0 %v5591
    %6099 = vmatpush.bf16.msra.mxu0 %v5583
    %6100 = vmatpush.bf16.msra.mxu0 %v5575
    %6101 = vmatpush.bf16.msra.mxu0 %v5567
    %6102 = vmatpush.bf16.msra.mxu0 %v5559
    %6103 = vmatpush.bf16.msra.mxu0 %v5551
    %6104 = vmatpush.bf16.msra.mxu0 %v5543
    %6105 = vmatpush.bf16.msra.mxu0 %v5535
    %6106 = vmatmul.bf16.gmra.mxu0 %v4296
    %v6107 = vpop.f32.mrf.mxu0
    %v6108 = vadd.f32 %v6095, %v6107
    %v6109 = vpop.f32.mrf.mxu0
    %6110 = vdwg.mxu0
    %6111 = vmatpush.bf16.msra.mxu0 %v5400
    %6112 = vmatpush.bf16.msra.mxu0 %v5392
    %6113 = vmatpush.bf16.msra.mxu0 %v5384
    %6114 = vmatpush.bf16.msra.mxu0 %v5376
    %6115 = vmatpush.bf16.msra.mxu0 %v5368
    %6116 = vmatpush.bf16.msra.mxu0 %v5360
    %6117 = vmatpush.bf16.msra.mxu0 %v5352
    %6118 = vmatpush.bf16.msra.mxu0 %v5344
    %6119 = vmatmul.bf16.gmra.mxu0 %v4293
    %v6120 = vpop.f32.mrf.mxu0
    %v6121 = vadd.f32 %v4560, %v6120
    %v6122 = vpop.f32.mrf.mxu0
    %6123 = vdwg.mxu0
    %6124 = vmatpush.bf16.msra.mxu0 %v5464
    %6125 = vmatpush.bf16.msra.mxu0 %v5456
    %6126 = vmatpush.bf16.msra.mxu0 %v5448
    %6127 = vmatpush.bf16.msra.mxu0 %v5440
    %6128 = vmatpush.bf16.msra.mxu0 %v5432
    %6129 = vmatpush.bf16.msra.mxu0 %v5424
    %6130 = vmatpush.bf16.msra.mxu0 %v5416
    %6131 = vmatpush.bf16.msra.mxu0 %v5408
    %6132 = vmatmul.bf16.gmra.mxu0 %v4294
    %v6133 = vpop.f32.mrf.mxu0
    %v6134 = vadd.f32 %v6121, %v6133
    %v6135 = vpop.f32.mrf.mxu0
    %6136 = vdwg.mxu0
    %6137 = vmatpush.bf16.msra.mxu0 %v5528
    %6138 = vmatpush.bf16.msra.mxu0 %v5520
    %6139 = vmatpush.bf16.msra.mxu0 %v5512
    %6140 = vmatpush.bf16.msra.mxu0 %v5504
    %6141 = vmatpush.bf16.msra.mxu0 %v5496
    %6142 = vmatpush.bf16.msra.mxu0 %v5488
    %6143 = vmatpush.bf16.msra.mxu0 %v5480
    %6144 = vmatpush.bf16.msra.mxu0 %v5472
    %6145 = vmatmul.bf16.gmra.mxu0 %v4295
    %v6146 = vpop.f32.mrf.mxu0
    %v6147 = vadd.f32 %v6134, %v6146
    %v6148 = vpop.f32.mrf.mxu0
    %6149 = vdwg.mxu0
    %6150 = vmatpush.bf16.msra.mxu0 %v5592
    %6151 = vmatpush.bf16.msra.mxu0 %v5584
    %6152 = vmatpush.bf16.msra.mxu0 %v5576
    %6153 = vmatpush.bf16.msra.mxu0 %v5568
    %6154 = vmatpush.bf16.msra.mxu0 %v5560
    %6155 = vmatpush.bf16.msra.mxu0 %v5552
    %6156 = vmatpush.bf16.msra.mxu0 %v5544
    %6157 = vmatpush.bf16.msra.mxu0 %v5536
    %6158 = vmatmul.bf16.gmra.mxu0 %v4296
    %v6159 = vpop.f32.mrf.mxu0
    %v6160 = vadd.f32 %v6147, %v6159
    %v6161 = vpop.f32.mrf.mxu0
    %6162 = vdwg.mxu0
    %6163 = vmatpush.bf16.msra.mxu0 %v5401
    %6164 = vmatpush.bf16.msra.mxu0 %v5393
    %6165 = vmatpush.bf16.msra.mxu0 %v5385
    %6166 = vmatpush.bf16.msra.mxu0 %v5377
    %6167 = vmatpush.bf16.msra.mxu0 %v5369
    %6168 = vmatpush.bf16.msra.mxu0 %v5361
    %6169 = vmatpush.bf16.msra.mxu0 %v5353
    %6170 = vmatpush.bf16.msra.mxu0 %v5345
    %6171 = vmatmul.bf16.gmra.mxu0 %v4293
    %v6172 = vpop.f32.mrf.mxu0
    %v6173 = vadd.f32 %v4561, %v6172
    %v6174 = vpop.f32.mrf.mxu0
    %6175 = vdwg.mxu0
    %6176 = vmatpush.bf16.msra.mxu0 %v5465
    %6177 = vmatpush.bf16.msra.mxu0 %v5457
    %6178 = vmatpush.bf16.msra.mxu0 %v5449
    %6179 = vmatpush.bf16.msra.mxu0 %v5441
    %6180 = vmatpush.bf16.msra.mxu0 %v5433
    %6181 = vmatpush.bf16.msra.mxu0 %v5425
    %6182 = vmatpush.bf16.msra.mxu0 %v5417
    %6183 = vmatpush.bf16.msra.mxu0 %v5409
    %6184 = vmatmul.bf16.gmra.mxu0 %v4294
    %v6185 = vpop.f32.mrf.mxu0
    %v6186 = vadd.f32 %v6173, %v6185
    %v6187 = vpop.f32.mrf.mxu0
    %6188 = vdwg.mxu0
    %6189 = vmatpush.bf16.msra.mxu0 %v5529
    %6190 = vmatpush.bf16.msra.mxu0 %v5521
    %6191 = vmatpush.bf16.msra.mxu0 %v5513
    %6192 = vmatpush.bf16.msra.mxu0 %v5505
    %6193 = vmatpush.bf16.msra.mxu0 %v5497
    %6194 = vmatpush.bf16.msra.mxu0 %v5489
    %6195 = vmatpush.bf16.msra.mxu0 %v5481
    %6196 = vmatpush.bf16.msra.mxu0 %v5473
    %6197 = vmatmul.bf16.gmra.mxu0 %v4295
    %v6198 = vpop.f32.mrf.mxu0
    %v6199 = vadd.f32 %v6186, %v6198
    %v6200 = vpop.f32.mrf.mxu0
    %6201 = vdwg.mxu0
    %6202 = vmatpush.bf16.msra.mxu0 %v5593
    %6203 = vmatpush.bf16.msra.mxu0 %v5585
    %6204 = vmatpush.bf16.msra.mxu0 %v5577
    %6205 = vmatpush.bf16.msra.mxu0 %v5569
    %6206 = vmatpush.bf16.msra.mxu0 %v5561
    %6207 = vmatpush.bf16.msra.mxu0 %v5553
    %6208 = vmatpush.bf16.msra.mxu0 %v5545
    %6209 = vmatpush.bf16.msra.mxu0 %v5537
    %6210 = vmatmul.bf16.gmra.mxu0 %v4296
    %v6211 = vpop.f32.mrf.mxu0
    %v6212 = vadd.f32 %v6199, %v6211
    %v6213 = vpop.f32.mrf.mxu0
    %6214 = vdwg.mxu0
    %6215 = vmatpush.bf16.msra.mxu0 %v5402
    %6216 = vmatpush.bf16.msra.mxu0 %v5394
    %6217 = vmatpush.bf16.msra.mxu0 %v5386
    %6218 = vmatpush.bf16.msra.mxu0 %v5378
    %6219 = vmatpush.bf16.msra.mxu0 %v5370
    %6220 = vmatpush.bf16.msra.mxu0 %v5362
    %6221 = vmatpush.bf16.msra.mxu0 %v5354
    %6222 = vmatpush.bf16.msra.mxu0 %v5346
    %6223 = vmatmul.bf16.gmra.mxu0 %v4293
    %v6224 = vpop.f32.mrf.mxu0
    %v6225 = vadd.f32 %v4562, %v6224
    %v6226 = vpop.f32.mrf.mxu0
    %6227 = vdwg.mxu0
    %6228 = vmatpush.bf16.msra.mxu0 %v5466
    %6229 = vmatpush.bf16.msra.mxu0 %v5458
    %6230 = vmatpush.bf16.msra.mxu0 %v5450
    %6231 = vmatpush.bf16.msra.mxu0 %v5442
    %6232 = vmatpush.bf16.msra.mxu0 %v5434
    %6233 = vmatpush.bf16.msra.mxu0 %v5426
    %6234 = vmatpush.bf16.msra.mxu0 %v5418
    %6235 = vmatpush.bf16.msra.mxu0 %v5410
    %6236 = vmatmul.bf16.gmra.mxu0 %v4294
    %v6237 = vpop.f32.mrf.mxu0
    %v6238 = vadd.f32 %v6225, %v6237
    %v6239 = vpop.f32.mrf.mxu0
    %6240 = vdwg.mxu0
    %6241 = vmatpush.bf16.msra.mxu0 %v5530
    %6242 = vmatpush.bf16.msra.mxu0 %v5522
    %6243 = vmatpush.bf16.msra.mxu0 %v5514
    %6244 = vmatpush.bf16.msra.mxu0 %v5506
    %6245 = vmatpush.bf16.msra.mxu0 %v5498
    %6246 = vmatpush.bf16.msra.mxu0 %v5490
    %6247 = vmatpush.bf16.msra.mxu0 %v5482
    %6248 = vmatpush.bf16.msra.mxu0 %v5474
    %6249 = vmatmul.bf16.gmra.mxu0 %v4295
    %v6250 = vpop.f32.mrf.mxu0
    %v6251 = vadd.f32 %v6238, %v6250
    %v6252 = vpop.f32.mrf.mxu0
    %6253 = vdwg.mxu0
    %6254 = vmatpush.bf16.msra.mxu0 %v5594
    %6255 = vmatpush.bf16.msra.mxu0 %v5586
    %6256 = vmatpush.bf16.msra.mxu0 %v5578
    %6257 = vmatpush.bf16.msra.mxu0 %v5570
    %6258 = vmatpush.bf16.msra.mxu0 %v5562
    %6259 = vmatpush.bf16.msra.mxu0 %v5554
    %6260 = vmatpush.bf16.msra.mxu0 %v5546
    %6261 = vmatpush.bf16.msra.mxu0 %v5538
    %6262 = vmatmul.bf16.gmra.mxu0 %v4296
    %v6263 = vpop.f32.mrf.mxu0
    %v6264 = vadd.f32 %v6251, %v6263
    %v6265 = vpop.f32.mrf.mxu0
    %6266 = vdwg.mxu0
    %s6267 = sld [smem:[#allocation7 + $0x5]]
    %vm6268 = vcmp.ge.f32.partialorder %v5900, 0.0
    %vm6269 = vcmp.ge.f32.partialorder %v5952, 0.0
    %vm6270 = vcmp.ge.f32.partialorder %v6004, 0.0
    %vm6271 = vcmp.ge.f32.partialorder %v6056, 0.0
    %vm6272 = vcmp.ge.f32.partialorder %v6108, 0.0
    %vm6273 = vcmp.ge.f32.partialorder %v6160, 0.0
    %vm6274 = vcmp.ge.f32.partialorder %v6212, 0.0
    %vm6275 = vcmp.ge.f32.partialorder %v6264, 0.0
    %v6276 = vstv %s6267
    %v6277 = vmul.f32 %v6276, %v5900
    %v6278 = vmul.f32 %v6276, %v5952
    %v6279 = vmul.f32 %v6276, %v6004
    %v6280 = vmul.f32 %v6276, %v6056
    %v6281 = vmul.f32 %v6276, %v6108
    %v6282 = vmul.f32 %v6276, %v6160
    %v6283 = vmul.f32 %v6276, %v6212
    %v6284 = vmul.f32 %v6276, %v6264
    %v6285 = vsel %vm6268, %v5900, %v6277
    %v6286 = vsel %vm6269, %v5952, %v6278
    %v6287 = vsel %vm6270, %v6004, %v6279
    %v6288 = vsel %vm6271, %v6056, %v6280
    %v6289 = vsel %vm6272, %v6108, %v6281
    %v6290 = vsel %vm6273, %v6160, %v6282
    %v6291 = vsel %vm6274, %v6212, %v6283
    %v6292 = vsel %vm6275, %v6264, %v6284
    %v6293 = vpack.c.bf16 %v6285, %v6285
    %v6294 = vpack.c.bf16 %v6286, %v6286
    %v6295 = vpack.c.bf16 %v6287, %v6287
    %v6296 = vpack.c.bf16 %v6288, %v6288
    %v6297 = vpack.c.bf16 %v6289, %v6289
    %v6298 = vpack.c.bf16 %v6290, %v6290
    %v6299 = vpack.c.bf16 %v6291, %v6291
    %v6300 = vpack.c.bf16 %v6292, %v6292
    %v6301 = vld [vmem:[%s13] sm:$0xff]
    %v6302 = vld [vmem:[%s13 + $0x8] sm:$0xff]
    %v6303 = vld [vmem:[%s13 + $0x10] sm:$0xff]
    %v6304 = vld [vmem:[%s13 + $0x18] sm:$0xff]
    %v6305 = vld [vmem:[%s13 + $0x20] sm:$0xff]
    %v6306 = vld [vmem:[%s13 + $0x28] sm:$0xff]
    %v6307 = vld [vmem:[%s13 + $0x30] sm:$0xff]
    %v6308 = vld [vmem:[%s13 + $0x38] sm:$0xff]
    %v6309 = vld [vmem:[%s13 + $0x40] sm:$0xff]
    %v6310 = vld [vmem:[%s13 + $0x48] sm:$0xff]
    %v6311 = vld [vmem:[%s13 + $0x50] sm:$0xff]
    %v6312 = vld [vmem:[%s13 + $0x58] sm:$0xff]
    %v6313 = vld [vmem:[%s13 + $0x60] sm:$0xff]
    %v6314 = vld [vmem:[%s13 + $0x68] sm:$0xff]
    %v6315 = vld [vmem:[%s13 + $0x70] sm:$0xff]
    %v6316 = vld [vmem:[%s13 + $0x78] sm:$0xff]
    %v6317 = vld [vmem:[%s13 + $0x80] sm:$0xff]
    %v6318 = vld [vmem:[%s13 + $0x88] sm:$0xff]
    %v6319 = vld [vmem:[%s13 + $0x90] sm:$0xff]
    %v6320 = vld [vmem:[%s13 + $0x98] sm:$0xff]
    %v6321 = vld [vmem:[%s13 + $0xa0] sm:$0xff]
    %v6322 = vld [vmem:[%s13 + $0xa8] sm:$0xff]
    %v6323 = vld [vmem:[%s13 + $0xb0] sm:$0xff]
    %v6324 = vld [vmem:[%s13 + $0xb8] sm:$0xff]
    %v6325 = vld [vmem:[%s13 + $0xc0] sm:$0xff]
    %v6326 = vld [vmem:[%s13 + $0xc8] sm:$0xff]
    %v6327 = vld [vmem:[%s13 + $0xd0] sm:$0xff]
    %v6328 = vld [vmem:[%s13 + $0xd8] sm:$0xff]
    %v6329 = vld [vmem:[%s13 + $0xe0] sm:$0xff]
    %v6330 = vld [vmem:[%s13 + $0xe8] sm:$0xff]
    %v6331 = vld [vmem:[%s13 + $0xf0] sm:$0xff]
    %v6332 = vld [vmem:[%s13 + $0xf8] sm:$0xff]
    %v6333 = vld [vmem:[%s13 + $0x100] sm:$0xff]
    %v6334 = vld [vmem:[%s13 + $0x108] sm:$0xff]
    %v6335 = vld [vmem:[%s13 + $0x110] sm:$0xff]
    %v6336 = vld [vmem:[%s13 + $0x118] sm:$0xff]
    %v6337 = vld [vmem:[%s13 + $0x120] sm:$0xff]
    %v6338 = vld [vmem:[%s13 + $0x128] sm:$0xff]
    %v6339 = vld [vmem:[%s13 + $0x130] sm:$0xff]
    %v6340 = vld [vmem:[%s13 + $0x138] sm:$0xff]
    %v6341 = vld [vmem:[%s13 + $0x140] sm:$0xff]
    %v6342 = vld [vmem:[%s13 + $0x148] sm:$0xff]
    %v6343 = vld [vmem:[%s13 + $0x150] sm:$0xff]
    %v6344 = vld [vmem:[%s13 + $0x158] sm:$0xff]
    %v6345 = vld [vmem:[%s13 + $0x160] sm:$0xff]
    %v6346 = vld [vmem:[%s13 + $0x168] sm:$0xff]
    %v6347 = vld [vmem:[%s13 + $0x170] sm:$0xff]
    %v6348 = vld [vmem:[%s13 + $0x178] sm:$0xff]
    %v6349 = vld [vmem:[%s13 + $0x180] sm:$0xff]
    %v6350 = vld [vmem:[%s13 + $0x188] sm:$0xff]
    %v6351 = vld [vmem:[%s13 + $0x190] sm:$0xff]
    %v6352 = vld [vmem:[%s13 + $0x198] sm:$0xff]
    %v6353 = vld [vmem:[%s13 + $0x1a0] sm:$0xff]
    %v6354 = vld [vmem:[%s13 + $0x1a8] sm:$0xff]
    %v6355 = vld [vmem:[%s13 + $0x1b0] sm:$0xff]
    %v6356 = vld [vmem:[%s13 + $0x1b8] sm:$0xff]
    %v6357 = vld [vmem:[%s13 + $0x1c0] sm:$0xff]
    %v6358 = vld [vmem:[%s13 + $0x1c8] sm:$0xff]
    %v6359 = vld [vmem:[%s13 + $0x1d0] sm:$0xff]
    %v6360 = vld [vmem:[%s13 + $0x1d8] sm:$0xff]
    %v6361 = vld [vmem:[%s13 + $0x1e0] sm:$0xff]
    %v6362 = vld [vmem:[%s13 + $0x1e8] sm:$0xff]
    %v6363 = vld [vmem:[%s13 + $0x1f0] sm:$0xff]
    %v6364 = vld [vmem:[%s13 + $0x1f8] sm:$0xff]
    %v6365 = vld [vmem:[%s13 + $0x200] sm:$0xff]
    %v6366 = vld [vmem:[%s13 + $0x208] sm:$0xff]
    %v6367 = vld [vmem:[%s13 + $0x210] sm:$0xff]
    %v6368 = vld [vmem:[%s13 + $0x218] sm:$0xff]
    %v6369 = vld [vmem:[%s13 + $0x220] sm:$0xff]
    %v6370 = vld [vmem:[%s13 + $0x228] sm:$0xff]
    %v6371 = vld [vmem:[%s13 + $0x230] sm:$0xff]
    %v6372 = vld [vmem:[%s13 + $0x238] sm:$0xff]
    %v6373 = vld [vmem:[%s13 + $0x240] sm:$0xff]
    %v6374 = vld [vmem:[%s13 + $0x248] sm:$0xff]
    %v6375 = vld [vmem:[%s13 + $0x250] sm:$0xff]
    %v6376 = vld [vmem:[%s13 + $0x258] sm:$0xff]
    %v6377 = vld [vmem:[%s13 + $0x260] sm:$0xff]
    %v6378 = vld [vmem:[%s13 + $0x268] sm:$0xff]
    %v6379 = vld [vmem:[%s13 + $0x270] sm:$0xff]
    %v6380 = vld [vmem:[%s13 + $0x278] sm:$0xff]
    %v6381 = vld [vmem:[%s13 + $0x280] sm:$0xff]
    %v6382 = vld [vmem:[%s13 + $0x288] sm:$0xff]
    %v6383 = vld [vmem:[%s13 + $0x290] sm:$0xff]
    %v6384 = vld [vmem:[%s13 + $0x298] sm:$0xff]
    %v6385 = vld [vmem:[%s13 + $0x2a0] sm:$0xff]
    %v6386 = vld [vmem:[%s13 + $0x2a8] sm:$0xff]
    %v6387 = vld [vmem:[%s13 + $0x2b0] sm:$0xff]
    %v6388 = vld [vmem:[%s13 + $0x2b8] sm:$0xff]
    %v6389 = vld [vmem:[%s13 + $0x2c0] sm:$0xff]
    %v6390 = vld [vmem:[%s13 + $0x2c8] sm:$0xff]
    %v6391 = vld [vmem:[%s13 + $0x2d0] sm:$0xff]
    %v6392 = vld [vmem:[%s13 + $0x2d8] sm:$0xff]
    %v6393 = vld [vmem:[%s13 + $0x2e0] sm:$0xff]
    %v6394 = vld [vmem:[%s13 + $0x2e8] sm:$0xff]
    %v6395 = vld [vmem:[%s13 + $0x2f0] sm:$0xff]
    %v6396 = vld [vmem:[%s13 + $0x2f8] sm:$0xff]
    %v6397 = vld [vmem:[%s13 + $0x300] sm:$0xff]
    %v6398 = vld [vmem:[%s13 + $0x308] sm:$0xff]
    %v6399 = vld [vmem:[%s13 + $0x310] sm:$0xff]
    %v6400 = vld [vmem:[%s13 + $0x318] sm:$0xff]
    %v6401 = vld [vmem:[%s13 + $0x320] sm:$0xff]
    %v6402 = vld [vmem:[%s13 + $0x328] sm:$0xff]
    %v6403 = vld [vmem:[%s13 + $0x330] sm:$0xff]
    %v6404 = vld [vmem:[%s13 + $0x338] sm:$0xff]
    %v6405 = vld [vmem:[%s13 + $0x340] sm:$0xff]
    %v6406 = vld [vmem:[%s13 + $0x348] sm:$0xff]
    %v6407 = vld [vmem:[%s13 + $0x350] sm:$0xff]
    %v6408 = vld [vmem:[%s13 + $0x358] sm:$0xff]
    %v6409 = vld [vmem:[%s13 + $0x360] sm:$0xff]
    %v6410 = vld [vmem:[%s13 + $0x368] sm:$0xff]
    %v6411 = vld [vmem:[%s13 + $0x370] sm:$0xff]
    %v6412 = vld [vmem:[%s13 + $0x378] sm:$0xff]
    %v6413 = vld [vmem:[%s13 + $0x380] sm:$0xff]
    %v6414 = vld [vmem:[%s13 + $0x388] sm:$0xff]
    %v6415 = vld [vmem:[%s13 + $0x390] sm:$0xff]
    %v6416 = vld [vmem:[%s13 + $0x398] sm:$0xff]
    %v6417 = vld [vmem:[%s13 + $0x3a0] sm:$0xff]
    %v6418 = vld [vmem:[%s13 + $0x3a8] sm:$0xff]
    %v6419 = vld [vmem:[%s13 + $0x3b0] sm:$0xff]
    %v6420 = vld [vmem:[%s13 + $0x3b8] sm:$0xff]
    %v6421 = vld [vmem:[%s13 + $0x3c0] sm:$0xff]
    %v6422 = vld [vmem:[%s13 + $0x3c8] sm:$0xff]
    %v6423 = vld [vmem:[%s13 + $0x3d0] sm:$0xff]
    %v6424 = vld [vmem:[%s13 + $0x3d8] sm:$0xff]
    %v6425 = vld [vmem:[%s13 + $0x3e0] sm:$0xff]
    %v6426 = vld [vmem:[%s13 + $0x3e8] sm:$0xff]
    %v6427 = vld [vmem:[%s13 + $0x3f0] sm:$0xff]
    %v6428 = vld [vmem:[%s13 + $0x3f8] sm:$0xff]
    %v6429 = vld [vmem:[%s13 + $0x400] sm:$0xff]
    %v6430 = vld [vmem:[%s13 + $0x408] sm:$0xff]
    %v6431 = vld [vmem:[%s13 + $0x410] sm:$0xff]
    %v6432 = vld [vmem:[%s13 + $0x418] sm:$0xff]
    %v6433 = vld [vmem:[%s13 + $0x420] sm:$0xff]
    %v6434 = vld [vmem:[%s13 + $0x428] sm:$0xff]
    %v6435 = vld [vmem:[%s13 + $0x430] sm:$0xff]
    %v6436 = vld [vmem:[%s13 + $0x438] sm:$0xff]
    %v6437 = vld [vmem:[%s13 + $0x440] sm:$0xff]
    %v6438 = vld [vmem:[%s13 + $0x448] sm:$0xff]
    %v6439 = vld [vmem:[%s13 + $0x450] sm:$0xff]
    %v6440 = vld [vmem:[%s13 + $0x458] sm:$0xff]
    %v6441 = vld [vmem:[%s13 + $0x460] sm:$0xff]
    %v6442 = vld [vmem:[%s13 + $0x468] sm:$0xff]
    %v6443 = vld [vmem:[%s13 + $0x470] sm:$0xff]
    %v6444 = vld [vmem:[%s13 + $0x478] sm:$0xff]
    %v6445 = vld [vmem:[%s13 + $0x480] sm:$0xff]
    %v6446 = vld [vmem:[%s13 + $0x488] sm:$0xff]
    %v6447 = vld [vmem:[%s13 + $0x490] sm:$0xff]
    %v6448 = vld [vmem:[%s13 + $0x498] sm:$0xff]
    %v6449 = vld [vmem:[%s13 + $0x4a0] sm:$0xff]
    %v6450 = vld [vmem:[%s13 + $0x4a8] sm:$0xff]
    %v6451 = vld [vmem:[%s13 + $0x4b0] sm:$0xff]
    %v6452 = vld [vmem:[%s13 + $0x4b8] sm:$0xff]
    %v6453 = vld [vmem:[%s13 + $0x4c0] sm:$0xff]
    %v6454 = vld [vmem:[%s13 + $0x4c8] sm:$0xff]
    %v6455 = vld [vmem:[%s13 + $0x4d0] sm:$0xff]
    %v6456 = vld [vmem:[%s13 + $0x4d8] sm:$0xff]
    %v6457 = vld [vmem:[%s13 + $0x4e0] sm:$0xff]
    %v6458 = vld [vmem:[%s13 + $0x4e8] sm:$0xff]
    %v6459 = vld [vmem:[%s13 + $0x4f0] sm:$0xff]
    %v6460 = vld [vmem:[%s13 + $0x4f8] sm:$0xff]
    %v6461 = vld [vmem:[%s13 + $0x500] sm:$0xff]
    %v6462 = vld [vmem:[%s13 + $0x508] sm:$0xff]
    %v6463 = vld [vmem:[%s13 + $0x510] sm:$0xff]
    %v6464 = vld [vmem:[%s13 + $0x518] sm:$0xff]
    %v6465 = vld [vmem:[%s13 + $0x520] sm:$0xff]
    %v6466 = vld [vmem:[%s13 + $0x528] sm:$0xff]
    %v6467 = vld [vmem:[%s13 + $0x530] sm:$0xff]
    %v6468 = vld [vmem:[%s13 + $0x538] sm:$0xff]
    %v6469 = vld [vmem:[%s13 + $0x540] sm:$0xff]
    %v6470 = vld [vmem:[%s13 + $0x548] sm:$0xff]
    %v6471 = vld [vmem:[%s13 + $0x550] sm:$0xff]
    %v6472 = vld [vmem:[%s13 + $0x558] sm:$0xff]
    %v6473 = vld [vmem:[%s13 + $0x560] sm:$0xff]
    %v6474 = vld [vmem:[%s13 + $0x568] sm:$0xff]
    %v6475 = vld [vmem:[%s13 + $0x570] sm:$0xff]
    %v6476 = vld [vmem:[%s13 + $0x578] sm:$0xff]
    %v6477 = vld [vmem:[%s13 + $0x580] sm:$0xff]
    %v6478 = vld [vmem:[%s13 + $0x588] sm:$0xff]
    %v6479 = vld [vmem:[%s13 + $0x590] sm:$0xff]
    %v6480 = vld [vmem:[%s13 + $0x598] sm:$0xff]
    %v6481 = vld [vmem:[%s13 + $0x5a0] sm:$0xff]
    %v6482 = vld [vmem:[%s13 + $0x5a8] sm:$0xff]
    %v6483 = vld [vmem:[%s13 + $0x5b0] sm:$0xff]
    %v6484 = vld [vmem:[%s13 + $0x5b8] sm:$0xff]
    %v6485 = vld [vmem:[%s13 + $0x5c0] sm:$0xff]
    %v6486 = vld [vmem:[%s13 + $0x5c8] sm:$0xff]
    %v6487 = vld [vmem:[%s13 + $0x5d0] sm:$0xff]
    %v6488 = vld [vmem:[%s13 + $0x5d8] sm:$0xff]
    %v6489 = vld [vmem:[%s13 + $0x5e0] sm:$0xff]
    %v6490 = vld [vmem:[%s13 + $0x5e8] sm:$0xff]
    %v6491 = vld [vmem:[%s13 + $0x5f0] sm:$0xff]
    %v6492 = vld [vmem:[%s13 + $0x5f8] sm:$0xff]
    %v6493 = vld [vmem:[%s13 + $0x600] sm:$0xff]
    %v6494 = vld [vmem:[%s13 + $0x608] sm:$0xff]
    %v6495 = vld [vmem:[%s13 + $0x610] sm:$0xff]
    %v6496 = vld [vmem:[%s13 + $0x618] sm:$0xff]
    %v6497 = vld [vmem:[%s13 + $0x620] sm:$0xff]
    %v6498 = vld [vmem:[%s13 + $0x628] sm:$0xff]
    %v6499 = vld [vmem:[%s13 + $0x630] sm:$0xff]
    %v6500 = vld [vmem:[%s13 + $0x638] sm:$0xff]
    %v6501 = vld [vmem:[%s13 + $0x640] sm:$0xff]
    %v6502 = vld [vmem:[%s13 + $0x648] sm:$0xff]
    %v6503 = vld [vmem:[%s13 + $0x650] sm:$0xff]
    %v6504 = vld [vmem:[%s13 + $0x658] sm:$0xff]
    %v6505 = vld [vmem:[%s13 + $0x660] sm:$0xff]
    %v6506 = vld [vmem:[%s13 + $0x668] sm:$0xff]
    %v6507 = vld [vmem:[%s13 + $0x670] sm:$0xff]
    %v6508 = vld [vmem:[%s13 + $0x678] sm:$0xff]
    %v6509 = vld [vmem:[%s13 + $0x680] sm:$0xff]
    %v6510 = vld [vmem:[%s13 + $0x688] sm:$0xff]
    %v6511 = vld [vmem:[%s13 + $0x690] sm:$0xff]
    %v6512 = vld [vmem:[%s13 + $0x698] sm:$0xff]
    %v6513 = vld [vmem:[%s13 + $0x6a0] sm:$0xff]
    %v6514 = vld [vmem:[%s13 + $0x6a8] sm:$0xff]
    %v6515 = vld [vmem:[%s13 + $0x6b0] sm:$0xff]
    %v6516 = vld [vmem:[%s13 + $0x6b8] sm:$0xff]
    %v6517 = vld [vmem:[%s13 + $0x6c0] sm:$0xff]
    %v6518 = vld [vmem:[%s13 + $0x6c8] sm:$0xff]
    %v6519 = vld [vmem:[%s13 + $0x6d0] sm:$0xff]
    %v6520 = vld [vmem:[%s13 + $0x6d8] sm:$0xff]
    %v6521 = vld [vmem:[%s13 + $0x6e0] sm:$0xff]
    %v6522 = vld [vmem:[%s13 + $0x6e8] sm:$0xff]
    %v6523 = vld [vmem:[%s13 + $0x6f0] sm:$0xff]
    %v6524 = vld [vmem:[%s13 + $0x6f8] sm:$0xff]
    %v6525 = vld [vmem:[%s13 + $0x700] sm:$0xff]
    %v6526 = vld [vmem:[%s13 + $0x708] sm:$0xff]
    %v6527 = vld [vmem:[%s13 + $0x710] sm:$0xff]
    %v6528 = vld [vmem:[%s13 + $0x718] sm:$0xff]
    %v6529 = vld [vmem:[%s13 + $0x720] sm:$0xff]
    %v6530 = vld [vmem:[%s13 + $0x728] sm:$0xff]
    %v6531 = vld [vmem:[%s13 + $0x730] sm:$0xff]
    %v6532 = vld [vmem:[%s13 + $0x738] sm:$0xff]
    %v6533 = vld [vmem:[%s13 + $0x740] sm:$0xff]
    %v6534 = vld [vmem:[%s13 + $0x748] sm:$0xff]
    %v6535 = vld [vmem:[%s13 + $0x750] sm:$0xff]
    %v6536 = vld [vmem:[%s13 + $0x758] sm:$0xff]
    %v6537 = vld [vmem:[%s13 + $0x760] sm:$0xff]
    %v6538 = vld [vmem:[%s13 + $0x768] sm:$0xff]
    %v6539 = vld [vmem:[%s13 + $0x770] sm:$0xff]
    %v6540 = vld [vmem:[%s13 + $0x778] sm:$0xff]
    %v6541 = vld [vmem:[%s13 + $0x780] sm:$0xff]
    %v6542 = vld [vmem:[%s13 + $0x788] sm:$0xff]
    %v6543 = vld [vmem:[%s13 + $0x790] sm:$0xff]
    %v6544 = vld [vmem:[%s13 + $0x798] sm:$0xff]
    %v6545 = vld [vmem:[%s13 + $0x7a0] sm:$0xff]
    %v6546 = vld [vmem:[%s13 + $0x7a8] sm:$0xff]
    %v6547 = vld [vmem:[%s13 + $0x7b0] sm:$0xff]
    %v6548 = vld [vmem:[%s13 + $0x7b8] sm:$0xff]
    %v6549 = vld [vmem:[%s13 + $0x7c0] sm:$0xff]
    %v6550 = vld [vmem:[%s13 + $0x7c8] sm:$0xff]
    %v6551 = vld [vmem:[%s13 + $0x7d0] sm:$0xff]
    %v6552 = vld [vmem:[%s13 + $0x7d8] sm:$0xff]
    %v6553 = vld [vmem:[%s13 + $0x7e0] sm:$0xff]
    %v6554 = vld [vmem:[%s13 + $0x7e8] sm:$0xff]
    %v6555 = vld [vmem:[%s13 + $0x7f0] sm:$0xff]
    %v6556 = vld [vmem:[%s13 + $0x7f8] sm:$0xff]
    %v6557 = vld [vmem:[%s20] sm:$0xf]
    %v6559 = vperm.slane %v6557, 0
    %v6560 = vperm.slane %v6557, 1
    %v6561 = vperm.slane %v6557, 2
    %v6562 = vperm.slane %v6557, 3
    %v6823 = vunpack.c.l.b16 %v6301
    %v6824 = vunpack.c.h.b16 %v6301
    %v6825 = vunpack.c.l.b16 %v6302
    %v6826 = vunpack.c.h.b16 %v6302
    %v6827 = vunpack.c.l.b16 %v6303
    %v6828 = vunpack.c.h.b16 %v6303
    %v6829 = vunpack.c.l.b16 %v6304
    %v6830 = vunpack.c.h.b16 %v6304
    %v6831 = vunpack.c.l.b16 %v6305
    %v6832 = vunpack.c.h.b16 %v6305
    %v6833 = vunpack.c.l.b16 %v6306
    %v6834 = vunpack.c.h.b16 %v6306
    %v6835 = vunpack.c.l.b16 %v6307
    %v6836 = vunpack.c.h.b16 %v6307
    %v6837 = vunpack.c.l.b16 %v6308
    %v6838 = vunpack.c.h.b16 %v6308
    %v6839 = vunpack.c.l.b16 %v6309
    %v6840 = vunpack.c.h.b16 %v6309
    %v6841 = vunpack.c.l.b16 %v6310
    %v6842 = vunpack.c.h.b16 %v6310
    %v6843 = vunpack.c.l.b16 %v6311
    %v6844 = vunpack.c.h.b16 %v6311
    %v6845 = vunpack.c.l.b16 %v6312
    %v6846 = vunpack.c.h.b16 %v6312
    %v6847 = vunpack.c.l.b16 %v6313
    %v6848 = vunpack.c.h.b16 %v6313
    %v6849 = vunpack.c.l.b16 %v6314
    %v6850 = vunpack.c.h.b16 %v6314
    %v6851 = vunpack.c.l.b16 %v6315
    %v6852 = vunpack.c.h.b16 %v6315
    %v6853 = vunpack.c.l.b16 %v6316
    %v6854 = vunpack.c.h.b16 %v6316
    %v6855 = vunpack.c.l.b16 %v6317
    %v6856 = vunpack.c.h.b16 %v6317
    %v6857 = vunpack.c.l.b16 %v6318
    %v6858 = vunpack.c.h.b16 %v6318
    %v6859 = vunpack.c.l.b16 %v6319
    %v6860 = vunpack.c.h.b16 %v6319
    %v6861 = vunpack.c.l.b16 %v6320
    %v6862 = vunpack.c.h.b16 %v6320
    %v6863 = vunpack.c.l.b16 %v6321
    %v6864 = vunpack.c.h.b16 %v6321
    %v6865 = vunpack.c.l.b16 %v6322
    %v6866 = vunpack.c.h.b16 %v6322
    %v6867 = vunpack.c.l.b16 %v6323
    %v6868 = vunpack.c.h.b16 %v6323
    %v6869 = vunpack.c.l.b16 %v6324
    %v6870 = vunpack.c.h.b16 %v6324
    %v6871 = vunpack.c.l.b16 %v6325
    %v6872 = vunpack.c.h.b16 %v6325
    %v6873 = vunpack.c.l.b16 %v6326
    %v6874 = vunpack.c.h.b16 %v6326
    %v6875 = vunpack.c.l.b16 %v6327
    %v6876 = vunpack.c.h.b16 %v6327
    %v6877 = vunpack.c.l.b16 %v6328
    %v6878 = vunpack.c.h.b16 %v6328
    %v6879 = vunpack.c.l.b16 %v6329
    %v6880 = vunpack.c.h.b16 %v6329
    %v6881 = vunpack.c.l.b16 %v6330
    %v6882 = vunpack.c.h.b16 %v6330
    %v6883 = vunpack.c.l.b16 %v6331
    %v6884 = vunpack.c.h.b16 %v6331
    %v6885 = vunpack.c.l.b16 %v6332
    %v6886 = vunpack.c.h.b16 %v6332
    %v6887 = vunpack.c.l.b16 %v6333
    %v6888 = vunpack.c.h.b16 %v6333
    %v6889 = vunpack.c.l.b16 %v6334
    %v6890 = vunpack.c.h.b16 %v6334
    %v6891 = vunpack.c.l.b16 %v6335
    %v6892 = vunpack.c.h.b16 %v6335
    %v6893 = vunpack.c.l.b16 %v6336
    %v6894 = vunpack.c.h.b16 %v6336
    %v6895 = vunpack.c.l.b16 %v6337
    %v6896 = vunpack.c.h.b16 %v6337
    %v6897 = vunpack.c.l.b16 %v6338
    %v6898 = vunpack.c.h.b16 %v6338
    %v6899 = vunpack.c.l.b16 %v6339
    %v6900 = vunpack.c.h.b16 %v6339
    %v6901 = vunpack.c.l.b16 %v6340
    %v6902 = vunpack.c.h.b16 %v6340
    %v6903 = vunpack.c.l.b16 %v6341
    %v6904 = vunpack.c.h.b16 %v6341
    %v6905 = vunpack.c.l.b16 %v6342
    %v6906 = vunpack.c.h.b16 %v6342
    %v6907 = vunpack.c.l.b16 %v6343
    %v6908 = vunpack.c.h.b16 %v6343
    %v6909 = vunpack.c.l.b16 %v6344
    %v6910 = vunpack.c.h.b16 %v6344
    %v6911 = vunpack.c.l.b16 %v6345
    %v6912 = vunpack.c.h.b16 %v6345
    %v6913 = vunpack.c.l.b16 %v6346
    %v6914 = vunpack.c.h.b16 %v6346
    %v6915 = vunpack.c.l.b16 %v6347
    %v6916 = vunpack.c.h.b16 %v6347
    %v6917 = vunpack.c.l.b16 %v6348
    %v6918 = vunpack.c.h.b16 %v6348
    %v6919 = vunpack.c.l.b16 %v6349
    %v6920 = vunpack.c.h.b16 %v6349
    %v6921 = vunpack.c.l.b16 %v6350
    %v6922 = vunpack.c.h.b16 %v6350
    %v6923 = vunpack.c.l.b16 %v6351
    %v6924 = vunpack.c.h.b16 %v6351
    %v6925 = vunpack.c.l.b16 %v6352
    %v6926 = vunpack.c.h.b16 %v6352
    %v6927 = vunpack.c.l.b16 %v6353
    %v6928 = vunpack.c.h.b16 %v6353
    %v6929 = vunpack.c.l.b16 %v6354
    %v6930 = vunpack.c.h.b16 %v6354
    %v6931 = vunpack.c.l.b16 %v6355
    %v6932 = vunpack.c.h.b16 %v6355
    %v6933 = vunpack.c.l.b16 %v6356
    %v6934 = vunpack.c.h.b16 %v6356
    %v6935 = vunpack.c.l.b16 %v6357
    %v6936 = vunpack.c.h.b16 %v6357
    %v6937 = vunpack.c.l.b16 %v6358
    %v6938 = vunpack.c.h.b16 %v6358
    %v6939 = vunpack.c.l.b16 %v6359
    %v6940 = vunpack.c.h.b16 %v6359
    %v6941 = vunpack.c.l.b16 %v6360
    %v6942 = vunpack.c.h.b16 %v6360
    %v6943 = vunpack.c.l.b16 %v6361
    %v6944 = vunpack.c.h.b16 %v6361
    %v6945 = vunpack.c.l.b16 %v6362
    %v6946 = vunpack.c.h.b16 %v6362
    %v6947 = vunpack.c.l.b16 %v6363
    %v6948 = vunpack.c.h.b16 %v6363
    %v6949 = vunpack.c.l.b16 %v6364
    %v6950 = vunpack.c.h.b16 %v6364
    %v6951 = vunpack.c.l.b16 %v6365
    %v6952 = vunpack.c.h.b16 %v6365
    %v6953 = vunpack.c.l.b16 %v6366
    %v6954 = vunpack.c.h.b16 %v6366
    %v6955 = vunpack.c.l.b16 %v6367
    %v6956 = vunpack.c.h.b16 %v6367
    %v6957 = vunpack.c.l.b16 %v6368
    %v6958 = vunpack.c.h.b16 %v6368
    %v6959 = vunpack.c.l.b16 %v6369
    %v6960 = vunpack.c.h.b16 %v6369
    %v6961 = vunpack.c.l.b16 %v6370
    %v6962 = vunpack.c.h.b16 %v6370
    %v6963 = vunpack.c.l.b16 %v6371
    %v6964 = vunpack.c.h.b16 %v6371
    %v6965 = vunpack.c.l.b16 %v6372
    %v6966 = vunpack.c.h.b16 %v6372
    %v6967 = vunpack.c.l.b16 %v6373
    %v6968 = vunpack.c.h.b16 %v6373
    %v6969 = vunpack.c.l.b16 %v6374
    %v6970 = vunpack.c.h.b16 %v6374
    %v6971 = vunpack.c.l.b16 %v6375
    %v6972 = vunpack.c.h.b16 %v6375
    %v6973 = vunpack.c.l.b16 %v6376
    %v6974 = vunpack.c.h.b16 %v6376
    %v6975 = vunpack.c.l.b16 %v6377
    %v6976 = vunpack.c.h.b16 %v6377
    %v6977 = vunpack.c.l.b16 %v6378
    %v6978 = vunpack.c.h.b16 %v6378
    %v6979 = vunpack.c.l.b16 %v6379
    %v6980 = vunpack.c.h.b16 %v6379
    %v6981 = vunpack.c.l.b16 %v6380
    %v6982 = vunpack.c.h.b16 %v6380
    %v6983 = vunpack.c.l.b16 %v6381
    %v6984 = vunpack.c.h.b16 %v6381
    %v6985 = vunpack.c.l.b16 %v6382
    %v6986 = vunpack.c.h.b16 %v6382
    %v6987 = vunpack.c.l.b16 %v6383
    %v6988 = vunpack.c.h.b16 %v6383
    %v6989 = vunpack.c.l.b16 %v6384
    %v6990 = vunpack.c.h.b16 %v6384
    %v6991 = vunpack.c.l.b16 %v6385
    %v6992 = vunpack.c.h.b16 %v6385
    %v6993 = vunpack.c.l.b16 %v6386
    %v6994 = vunpack.c.h.b16 %v6386
    %v6995 = vunpack.c.l.b16 %v6387
    %v6996 = vunpack.c.h.b16 %v6387
    %v6997 = vunpack.c.l.b16 %v6388
    %v6998 = vunpack.c.h.b16 %v6388
    %v6999 = vunpack.c.l.b16 %v6389
    %v7000 = vunpack.c.h.b16 %v6389
    %v7001 = vunpack.c.l.b16 %v6390
    %v7002 = vunpack.c.h.b16 %v6390
    %v7003 = vunpack.c.l.b16 %v6391
    %v7004 = vunpack.c.h.b16 %v6391
    %v7005 = vunpack.c.l.b16 %v6392
    %v7006 = vunpack.c.h.b16 %v6392
    %v7007 = vunpack.c.l.b16 %v6393
    %v7008 = vunpack.c.h.b16 %v6393
    %v7009 = vunpack.c.l.b16 %v6394
    %v7010 = vunpack.c.h.b16 %v6394
    %v7011 = vunpack.c.l.b16 %v6395
    %v7012 = vunpack.c.h.b16 %v6395
    %v7013 = vunpack.c.l.b16 %v6396
    %v7014 = vunpack.c.h.b16 %v6396
    %v7015 = vunpack.c.l.b16 %v6397
    %v7016 = vunpack.c.h.b16 %v6397
    %v7017 = vunpack.c.l.b16 %v6398
    %v7018 = vunpack.c.h.b16 %v6398
    %v7019 = vunpack.c.l.b16 %v6399
    %v7020 = vunpack.c.h.b16 %v6399
    %v7021 = vunpack.c.l.b16 %v6400
    %v7022 = vunpack.c.h.b16 %v6400
    %v7023 = vunpack.c.l.b16 %v6401
    %v7024 = vunpack.c.h.b16 %v6401
    %v7025 = vunpack.c.l.b16 %v6402
    %v7026 = vunpack.c.h.b16 %v6402
    %v7027 = vunpack.c.l.b16 %v6403
    %v7028 = vunpack.c.h.b16 %v6403
    %v7029 = vunpack.c.l.b16 %v6404
    %v7030 = vunpack.c.h.b16 %v6404
    %v7031 = vunpack.c.l.b16 %v6405
    %v7032 = vunpack.c.h.b16 %v6405
    %v7033 = vunpack.c.l.b16 %v6406
    %v7034 = vunpack.c.h.b16 %v6406
    %v7035 = vunpack.c.l.b16 %v6407
    %v7036 = vunpack.c.h.b16 %v6407
    %v7037 = vunpack.c.l.b16 %v6408
    %v7038 = vunpack.c.h.b16 %v6408
    %v7039 = vunpack.c.l.b16 %v6409
    %v7040 = vunpack.c.h.b16 %v6409
    %v7041 = vunpack.c.l.b16 %v6410
    %v7042 = vunpack.c.h.b16 %v6410
    %v7043 = vunpack.c.l.b16 %v6411
    %v7044 = vunpack.c.h.b16 %v6411
    %v7045 = vunpack.c.l.b16 %v6412
    %v7046 = vunpack.c.h.b16 %v6412
    %v7047 = vunpack.c.l.b16 %v6413
    %v7048 = vunpack.c.h.b16 %v6413
    %v7049 = vunpack.c.l.b16 %v6414
    %v7050 = vunpack.c.h.b16 %v6414
    %v7051 = vunpack.c.l.b16 %v6415
    %v7052 = vunpack.c.h.b16 %v6415
    %v7053 = vunpack.c.l.b16 %v6416
    %v7054 = vunpack.c.h.b16 %v6416
    %v7055 = vunpack.c.l.b16 %v6417
    %v7056 = vunpack.c.h.b16 %v6417
    %v7057 = vunpack.c.l.b16 %v6418
    %v7058 = vunpack.c.h.b16 %v6418
    %v7059 = vunpack.c.l.b16 %v6419
    %v7060 = vunpack.c.h.b16 %v6419
    %v7061 = vunpack.c.l.b16 %v6420
    %v7062 = vunpack.c.h.b16 %v6420
    %v7063 = vunpack.c.l.b16 %v6421
    %v7064 = vunpack.c.h.b16 %v6421
    %v7065 = vunpack.c.l.b16 %v6422
    %v7066 = vunpack.c.h.b16 %v6422
    %v7067 = vunpack.c.l.b16 %v6423
    %v7068 = vunpack.c.h.b16 %v6423
    %v7069 = vunpack.c.l.b16 %v6424
    %v7070 = vunpack.c.h.b16 %v6424
    %v7071 = vunpack.c.l.b16 %v6425
    %v7072 = vunpack.c.h.b16 %v6425
    %v7073 = vunpack.c.l.b16 %v6426
    %v7074 = vunpack.c.h.b16 %v6426
    %v7075 = vunpack.c.l.b16 %v6427
    %v7076 = vunpack.c.h.b16 %v6427
    %v7077 = vunpack.c.l.b16 %v6428
    %v7078 = vunpack.c.h.b16 %v6428
    %v7079 = vunpack.c.l.b16 %v6429
    %v7080 = vunpack.c.h.b16 %v6429
    %v7081 = vunpack.c.l.b16 %v6430
    %v7082 = vunpack.c.h.b16 %v6430
    %v7083 = vunpack.c.l.b16 %v6431
    %v7084 = vunpack.c.h.b16 %v6431
    %v7085 = vunpack.c.l.b16 %v6432
    %v7086 = vunpack.c.h.b16 %v6432
    %v7087 = vunpack.c.l.b16 %v6433
    %v7088 = vunpack.c.h.b16 %v6433
    %v7089 = vunpack.c.l.b16 %v6434
    %v7090 = vunpack.c.h.b16 %v6434
    %v7091 = vunpack.c.l.b16 %v6435
    %v7092 = vunpack.c.h.b16 %v6435
    %v7093 = vunpack.c.l.b16 %v6436
    %v7094 = vunpack.c.h.b16 %v6436
    %v7095 = vunpack.c.l.b16 %v6437
    %v7096 = vunpack.c.h.b16 %v6437
    %v7097 = vunpack.c.l.b16 %v6438
    %v7098 = vunpack.c.h.b16 %v6438
    %v7099 = vunpack.c.l.b16 %v6439
    %v7100 = vunpack.c.h.b16 %v6439
    %v7101 = vunpack.c.l.b16 %v6440
    %v7102 = vunpack.c.h.b16 %v6440
    %v7103 = vunpack.c.l.b16 %v6441
    %v7104 = vunpack.c.h.b16 %v6441
    %v7105 = vunpack.c.l.b16 %v6442
    %v7106 = vunpack.c.h.b16 %v6442
    %v7107 = vunpack.c.l.b16 %v6443
    %v7108 = vunpack.c.h.b16 %v6443
    %v7109 = vunpack.c.l.b16 %v6444
    %v7110 = vunpack.c.h.b16 %v6444
    %v7111 = vunpack.c.l.b16 %v6445
    %v7112 = vunpack.c.h.b16 %v6445
    %v7113 = vunpack.c.l.b16 %v6446
    %v7114 = vunpack.c.h.b16 %v6446
    %v7115 = vunpack.c.l.b16 %v6447
    %v7116 = vunpack.c.h.b16 %v6447
    %v7117 = vunpack.c.l.b16 %v6448
    %v7118 = vunpack.c.h.b16 %v6448
    %v7119 = vunpack.c.l.b16 %v6449
    %v7120 = vunpack.c.h.b16 %v6449
    %v7121 = vunpack.c.l.b16 %v6450
    %v7122 = vunpack.c.h.b16 %v6450
    %v7123 = vunpack.c.l.b16 %v6451
    %v7124 = vunpack.c.h.b16 %v6451
    %v7125 = vunpack.c.l.b16 %v6452
    %v7126 = vunpack.c.h.b16 %v6452
    %v7127 = vunpack.c.l.b16 %v6453
    %v7128 = vunpack.c.h.b16 %v6453
    %v7129 = vunpack.c.l.b16 %v6454
    %v7130 = vunpack.c.h.b16 %v6454
    %v7131 = vunpack.c.l.b16 %v6455
    %v7132 = vunpack.c.h.b16 %v6455
    %v7133 = vunpack.c.l.b16 %v6456
    %v7134 = vunpack.c.h.b16 %v6456
    %v7135 = vunpack.c.l.b16 %v6457
    %v7136 = vunpack.c.h.b16 %v6457
    %v7137 = vunpack.c.l.b16 %v6458
    %v7138 = vunpack.c.h.b16 %v6458
    %v7139 = vunpack.c.l.b16 %v6459
    %v7140 = vunpack.c.h.b16 %v6459
    %v7141 = vunpack.c.l.b16 %v6460
    %v7142 = vunpack.c.h.b16 %v6460
    %v7143 = vunpack.c.l.b16 %v6461
    %v7144 = vunpack.c.h.b16 %v6461
    %v7145 = vunpack.c.l.b16 %v6462
    %v7146 = vunpack.c.h.b16 %v6462
    %v7147 = vunpack.c.l.b16 %v6463
    %v7148 = vunpack.c.h.b16 %v6463
    %v7149 = vunpack.c.l.b16 %v6464
    %v7150 = vunpack.c.h.b16 %v6464
    %v7151 = vunpack.c.l.b16 %v6465
    %v7152 = vunpack.c.h.b16 %v6465
    %v7153 = vunpack.c.l.b16 %v6466
    %v7154 = vunpack.c.h.b16 %v6466
    %v7155 = vunpack.c.l.b16 %v6467
    %v7156 = vunpack.c.h.b16 %v6467
    %v7157 = vunpack.c.l.b16 %v6468
    %v7158 = vunpack.c.h.b16 %v6468
    %v7159 = vunpack.c.l.b16 %v6469
    %v7160 = vunpack.c.h.b16 %v6469
    %v7161 = vunpack.c.l.b16 %v6470
    %v7162 = vunpack.c.h.b16 %v6470
    %v7163 = vunpack.c.l.b16 %v6471
    %v7164 = vunpack.c.h.b16 %v6471
    %v7165 = vunpack.c.l.b16 %v6472
    %v7166 = vunpack.c.h.b16 %v6472
    %v7167 = vunpack.c.l.b16 %v6473
    %v7168 = vunpack.c.h.b16 %v6473
    %v7169 = vunpack.c.l.b16 %v6474
    %v7170 = vunpack.c.h.b16 %v6474
    %v7171 = vunpack.c.l.b16 %v6475
    %v7172 = vunpack.c.h.b16 %v6475
    %v7173 = vunpack.c.l.b16 %v6476
    %v7174 = vunpack.c.h.b16 %v6476
    %v7175 = vunpack.c.l.b16 %v6477
    %v7176 = vunpack.c.h.b16 %v6477
    %v7177 = vunpack.c.l.b16 %v6478
    %v7178 = vunpack.c.h.b16 %v6478
    %v7179 = vunpack.c.l.b16 %v6479
    %v7180 = vunpack.c.h.b16 %v6479
    %v7181 = vunpack.c.l.b16 %v6480
    %v7182 = vunpack.c.h.b16 %v6480
    %v7183 = vunpack.c.l.b16 %v6481
    %v7184 = vunpack.c.h.b16 %v6481
    %v7185 = vunpack.c.l.b16 %v6482
    %v7186 = vunpack.c.h.b16 %v6482
    %v7187 = vunpack.c.l.b16 %v6483
    %v7188 = vunpack.c.h.b16 %v6483
    %v7189 = vunpack.c.l.b16 %v6484
    %v7190 = vunpack.c.h.b16 %v6484
    %v7191 = vunpack.c.l.b16 %v6485
    %v7192 = vunpack.c.h.b16 %v6485
    %v7193 = vunpack.c.l.b16 %v6486
    %v7194 = vunpack.c.h.b16 %v6486
    %v7195 = vunpack.c.l.b16 %v6487
    %v7196 = vunpack.c.h.b16 %v6487
    %v7197 = vunpack.c.l.b16 %v6488
    %v7198 = vunpack.c.h.b16 %v6488
    %v7199 = vunpack.c.l.b16 %v6489
    %v7200 = vunpack.c.h.b16 %v6489
    %v7201 = vunpack.c.l.b16 %v6490
    %v7202 = vunpack.c.h.b16 %v6490
    %v7203 = vunpack.c.l.b16 %v6491
    %v7204 = vunpack.c.h.b16 %v6491
    %v7205 = vunpack.c.l.b16 %v6492
    %v7206 = vunpack.c.h.b16 %v6492
    %v7207 = vunpack.c.l.b16 %v6493
    %v7208 = vunpack.c.h.b16 %v6493
    %v7209 = vunpack.c.l.b16 %v6494
    %v7210 = vunpack.c.h.b16 %v6494
    %v7211 = vunpack.c.l.b16 %v6495
    %v7212 = vunpack.c.h.b16 %v6495
    %v7213 = vunpack.c.l.b16 %v6496
    %v7214 = vunpack.c.h.b16 %v6496
    %v7215 = vunpack.c.l.b16 %v6497
    %v7216 = vunpack.c.h.b16 %v6497
    %v7217 = vunpack.c.l.b16 %v6498
    %v7218 = vunpack.c.h.b16 %v6498
    %v7219 = vunpack.c.l.b16 %v6499
    %v7220 = vunpack.c.h.b16 %v6499
    %v7221 = vunpack.c.l.b16 %v6500
    %v7222 = vunpack.c.h.b16 %v6500
    %v7223 = vunpack.c.l.b16 %v6501
    %v7224 = vunpack.c.h.b16 %v6501
    %v7225 = vunpack.c.l.b16 %v6502
    %v7226 = vunpack.c.h.b16 %v6502
    %v7227 = vunpack.c.l.b16 %v6503
    %v7228 = vunpack.c.h.b16 %v6503
    %v7229 = vunpack.c.l.b16 %v6504
    %v7230 = vunpack.c.h.b16 %v6504
    %v7231 = vunpack.c.l.b16 %v6505
    %v7232 = vunpack.c.h.b16 %v6505
    %v7233 = vunpack.c.l.b16 %v6506
    %v7234 = vunpack.c.h.b16 %v6506
    %v7235 = vunpack.c.l.b16 %v6507
    %v7236 = vunpack.c.h.b16 %v6507
    %v7237 = vunpack.c.l.b16 %v6508
    %v7238 = vunpack.c.h.b16 %v6508
    %v7239 = vunpack.c.l.b16 %v6509
    %v7240 = vunpack.c.h.b16 %v6509
    %v7241 = vunpack.c.l.b16 %v6510
    %v7242 = vunpack.c.h.b16 %v6510
    %v7243 = vunpack.c.l.b16 %v6511
    %v7244 = vunpack.c.h.b16 %v6511
    %v7245 = vunpack.c.l.b16 %v6512
    %v7246 = vunpack.c.h.b16 %v6512
    %v7247 = vunpack.c.l.b16 %v6513
    %v7248 = vunpack.c.h.b16 %v6513
    %v7249 = vunpack.c.l.b16 %v6514
    %v7250 = vunpack.c.h.b16 %v6514
    %v7251 = vunpack.c.l.b16 %v6515
    %v7252 = vunpack.c.h.b16 %v6515
    %v7253 = vunpack.c.l.b16 %v6516
    %v7254 = vunpack.c.h.b16 %v6516
    %v7255 = vunpack.c.l.b16 %v6517
    %v7256 = vunpack.c.h.b16 %v6517
    %v7257 = vunpack.c.l.b16 %v6518
    %v7258 = vunpack.c.h.b16 %v6518
    %v7259 = vunpack.c.l.b16 %v6519
    %v7260 = vunpack.c.h.b16 %v6519
    %v7261 = vunpack.c.l.b16 %v6520
    %v7262 = vunpack.c.h.b16 %v6520
    %v7263 = vunpack.c.l.b16 %v6521
    %v7264 = vunpack.c.h.b16 %v6521
    %v7265 = vunpack.c.l.b16 %v6522
    %v7266 = vunpack.c.h.b16 %v6522
    %v7267 = vunpack.c.l.b16 %v6523
    %v7268 = vunpack.c.h.b16 %v6523
    %v7269 = vunpack.c.l.b16 %v6524
    %v7270 = vunpack.c.h.b16 %v6524
    %v7271 = vunpack.c.l.b16 %v6525
    %v7272 = vunpack.c.h.b16 %v6525
    %v7273 = vunpack.c.l.b16 %v6526
    %v7274 = vunpack.c.h.b16 %v6526
    %v7275 = vunpack.c.l.b16 %v6527
    %v7276 = vunpack.c.h.b16 %v6527
    %v7277 = vunpack.c.l.b16 %v6528
    %v7278 = vunpack.c.h.b16 %v6528
    %v7279 = vunpack.c.l.b16 %v6529
    %v7280 = vunpack.c.h.b16 %v6529
    %v7281 = vunpack.c.l.b16 %v6530
    %v7282 = vunpack.c.h.b16 %v6530
    %v7283 = vunpack.c.l.b16 %v6531
    %v7284 = vunpack.c.h.b16 %v6531
    %v7285 = vunpack.c.l.b16 %v6532
    %v7286 = vunpack.c.h.b16 %v6532
    %v7287 = vunpack.c.l.b16 %v6533
    %v7288 = vunpack.c.h.b16 %v6533
    %v7289 = vunpack.c.l.b16 %v6534
    %v7290 = vunpack.c.h.b16 %v6534
    %v7291 = vunpack.c.l.b16 %v6535
    %v7292 = vunpack.c.h.b16 %v6535
    %v7293 = vunpack.c.l.b16 %v6536
    %v7294 = vunpack.c.h.b16 %v6536
    %v7295 = vunpack.c.l.b16 %v6537
    %v7296 = vunpack.c.h.b16 %v6537
    %v7297 = vunpack.c.l.b16 %v6538
    %v7298 = vunpack.c.h.b16 %v6538
    %v7299 = vunpack.c.l.b16 %v6539
    %v7300 = vunpack.c.h.b16 %v6539
    %v7301 = vunpack.c.l.b16 %v6540
    %v7302 = vunpack.c.h.b16 %v6540
    %v7303 = vunpack.c.l.b16 %v6541
    %v7304 = vunpack.c.h.b16 %v6541
    %v7305 = vunpack.c.l.b16 %v6542
    %v7306 = vunpack.c.h.b16 %v6542
    %v7307 = vunpack.c.l.b16 %v6543
    %v7308 = vunpack.c.h.b16 %v6543
    %v7309 = vunpack.c.l.b16 %v6544
    %v7310 = vunpack.c.h.b16 %v6544
    %v7311 = vunpack.c.l.b16 %v6545
    %v7312 = vunpack.c.h.b16 %v6545
    %v7313 = vunpack.c.l.b16 %v6546
    %v7314 = vunpack.c.h.b16 %v6546
    %v7315 = vunpack.c.l.b16 %v6547
    %v7316 = vunpack.c.h.b16 %v6547
    %v7317 = vunpack.c.l.b16 %v6548
    %v7318 = vunpack.c.h.b16 %v6548
    %v7319 = vunpack.c.l.b16 %v6549
    %v7320 = vunpack.c.h.b16 %v6549
    %v7321 = vunpack.c.l.b16 %v6550
    %v7322 = vunpack.c.h.b16 %v6550
    %v7323 = vunpack.c.l.b16 %v6551
    %v7324 = vunpack.c.h.b16 %v6551
    %v7325 = vunpack.c.l.b16 %v6552
    %v7326 = vunpack.c.h.b16 %v6552
    %v7327 = vunpack.c.l.b16 %v6553
    %v7328 = vunpack.c.h.b16 %v6553
    %v7329 = vunpack.c.l.b16 %v6554
    %v7330 = vunpack.c.h.b16 %v6554
    %v7331 = vunpack.c.l.b16 %v6555
    %v7332 = vunpack.c.h.b16 %v6555
    %v7333 = vunpack.c.l.b16 %v6556
    %v7334 = vunpack.c.h.b16 %v6556
    %v7335 = vpack.c.b16 %v6827, %v6823
    %v7336 = vpack.c.b16 %v6828, %v6824
    %v7337 = vpack.c.b16 %v6829, %v6825
    %v7338 = vpack.c.b16 %v6830, %v6826
    %v7339 = vpack.c.b16 %v6835, %v6831
    %v7340 = vpack.c.b16 %v6836, %v6832
    %v7341 = vpack.c.b16 %v6837, %v6833
    %v7342 = vpack.c.b16 %v6838, %v6834
    %v7343 = vpack.c.b16 %v6843, %v6839
    %v7344 = vpack.c.b16 %v6844, %v6840
    %v7345 = vpack.c.b16 %v6845, %v6841
    %v7346 = vpack.c.b16 %v6846, %v6842
    %v7347 = vpack.c.b16 %v6851, %v6847
    %v7348 = vpack.c.b16 %v6852, %v6848
    %v7349 = vpack.c.b16 %v6853, %v6849
    %v7350 = vpack.c.b16 %v6854, %v6850
    %v7351 = vpack.c.b16 %v6859, %v6855
    %v7352 = vpack.c.b16 %v6860, %v6856
    %v7353 = vpack.c.b16 %v6861, %v6857
    %v7354 = vpack.c.b16 %v6862, %v6858
    %v7355 = vpack.c.b16 %v6867, %v6863
    %v7356 = vpack.c.b16 %v6868, %v6864
    %v7357 = vpack.c.b16 %v6869, %v6865
    %v7358 = vpack.c.b16 %v6870, %v6866
    %v7359 = vpack.c.b16 %v6875, %v6871
    %v7360 = vpack.c.b16 %v6876, %v6872
    %v7361 = vpack.c.b16 %v6877, %v6873
    %v7362 = vpack.c.b16 %v6878, %v6874
    %v7363 = vpack.c.b16 %v6883, %v6879
    %v7364 = vpack.c.b16 %v6884, %v6880
    %v7365 = vpack.c.b16 %v6885, %v6881
    %v7366 = vpack.c.b16 %v6886, %v6882
    %v7367 = vpack.c.b16 %v6891, %v6887
    %v7368 = vpack.c.b16 %v6892, %v6888
    %v7369 = vpack.c.b16 %v6893, %v6889
    %v7370 = vpack.c.b16 %v6894, %v6890
    %v7371 = vpack.c.b16 %v6899, %v6895
    %v7372 = vpack.c.b16 %v6900, %v6896
    %v7373 = vpack.c.b16 %v6901, %v6897
    %v7374 = vpack.c.b16 %v6902, %v6898
    %v7375 = vpack.c.b16 %v6907, %v6903
    %v7376 = vpack.c.b16 %v6908, %v6904
    %v7377 = vpack.c.b16 %v6909, %v6905
    %v7378 = vpack.c.b16 %v6910, %v6906
    %v7379 = vpack.c.b16 %v6915, %v6911
    %v7380 = vpack.c.b16 %v6916, %v6912
    %v7381 = vpack.c.b16 %v6917, %v6913
    %v7382 = vpack.c.b16 %v6918, %v6914
    %v7383 = vpack.c.b16 %v6923, %v6919
    %v7384 = vpack.c.b16 %v6924, %v6920
    %v7385 = vpack.c.b16 %v6925, %v6921
    %v7386 = vpack.c.b16 %v6926, %v6922
    %v7387 = vpack.c.b16 %v6931, %v6927
    %v7388 = vpack.c.b16 %v6932, %v6928
    %v7389 = vpack.c.b16 %v6933, %v6929
    %v7390 = vpack.c.b16 %v6934, %v6930
    %v7391 = vpack.c.b16 %v6939, %v6935
    %v7392 = vpack.c.b16 %v6940, %v6936
    %v7393 = vpack.c.b16 %v6941, %v6937
    %v7394 = vpack.c.b16 %v6942, %v6938
    %v7395 = vpack.c.b16 %v6947, %v6943
    %v7396 = vpack.c.b16 %v6948, %v6944
    %v7397 = vpack.c.b16 %v6949, %v6945
    %v7398 = vpack.c.b16 %v6950, %v6946
    %v7399 = vpack.c.b16 %v6955, %v6951
    %v7400 = vpack.c.b16 %v6956, %v6952
    %v7401 = vpack.c.b16 %v6957, %v6953
    %v7402 = vpack.c.b16 %v6958, %v6954
    %v7403 = vpack.c.b16 %v6963, %v6959
    %v7404 = vpack.c.b16 %v6964, %v6960
    %v7405 = vpack.c.b16 %v6965, %v6961
    %v7406 = vpack.c.b16 %v6966, %v6962
    %v7407 = vpack.c.b16 %v6971, %v6967
    %v7408 = vpack.c.b16 %v6972, %v6968
    %v7409 = vpack.c.b16 %v6973, %v6969
    %v7410 = vpack.c.b16 %v6974, %v6970
    %v7411 = vpack.c.b16 %v6979, %v6975
    %v7412 = vpack.c.b16 %v6980, %v6976
    %v7413 = vpack.c.b16 %v6981, %v6977
    %v7414 = vpack.c.b16 %v6982, %v6978
    %v7415 = vpack.c.b16 %v6987, %v6983
    %v7416 = vpack.c.b16 %v6988, %v6984
    %v7417 = vpack.c.b16 %v6989, %v6985
    %v7418 = vpack.c.b16 %v6990, %v6986
    %v7419 = vpack.c.b16 %v6995, %v6991
    %v7420 = vpack.c.b16 %v6996, %v6992
    %v7421 = vpack.c.b16 %v6997, %v6993
    %v7422 = vpack.c.b16 %v6998, %v6994
    %v7423 = vpack.c.b16 %v7003, %v6999
    %v7424 = vpack.c.b16 %v7004, %v7000
    %v7425 = vpack.c.b16 %v7005, %v7001
    %v7426 = vpack.c.b16 %v7006, %v7002
    %v7427 = vpack.c.b16 %v7011, %v7007
    %v7428 = vpack.c.b16 %v7012, %v7008
    %v7429 = vpack.c.b16 %v7013, %v7009
    %v7430 = vpack.c.b16 %v7014, %v7010
    %v7431 = vpack.c.b16 %v7019, %v7015
    %v7432 = vpack.c.b16 %v7020, %v7016
    %v7433 = vpack.c.b16 %v7021, %v7017
    %v7434 = vpack.c.b16 %v7022, %v7018
    %v7435 = vpack.c.b16 %v7027, %v7023
    %v7436 = vpack.c.b16 %v7028, %v7024
    %v7437 = vpack.c.b16 %v7029, %v7025
    %v7438 = vpack.c.b16 %v7030, %v7026
    %v7439 = vpack.c.b16 %v7035, %v7031
    %v7440 = vpack.c.b16 %v7036, %v7032
    %v7441 = vpack.c.b16 %v7037, %v7033
    %v7442 = vpack.c.b16 %v7038, %v7034
    %v7443 = vpack.c.b16 %v7043, %v7039
    %v7444 = vpack.c.b16 %v7044, %v7040
    %v7445 = vpack.c.b16 %v7045, %v7041
    %v7446 = vpack.c.b16 %v7046, %v7042
    %v7447 = vpack.c.b16 %v7051, %v7047
    %v7448 = vpack.c.b16 %v7052, %v7048
    %v7449 = vpack.c.b16 %v7053, %v7049
    %v7450 = vpack.c.b16 %v7054, %v7050
    %v7451 = vpack.c.b16 %v7059, %v7055
    %v7452 = vpack.c.b16 %v7060, %v7056
    %v7453 = vpack.c.b16 %v7061, %v7057
    %v7454 = vpack.c.b16 %v7062, %v7058
    %v7455 = vpack.c.b16 %v7067, %v7063
    %v7456 = vpack.c.b16 %v7068, %v7064
    %v7457 = vpack.c.b16 %v7069, %v7065
    %v7458 = vpack.c.b16 %v7070, %v7066
    %v7459 = vpack.c.b16 %v7075, %v7071
    %v7460 = vpack.c.b16 %v7076, %v7072
    %v7461 = vpack.c.b16 %v7077, %v7073
    %v7462 = vpack.c.b16 %v7078, %v7074
    %v7463 = vpack.c.b16 %v7083, %v7079
    %v7464 = vpack.c.b16 %v7084, %v7080
    %v7465 = vpack.c.b16 %v7085, %v7081
    %v7466 = vpack.c.b16 %v7086, %v7082
    %v7467 = vpack.c.b16 %v7091, %v7087
    %v7468 = vpack.c.b16 %v7092, %v7088
    %v7469 = vpack.c.b16 %v7093, %v7089
    %v7470 = vpack.c.b16 %v7094, %v7090
    %v7471 = vpack.c.b16 %v7099, %v7095
    %v7472 = vpack.c.b16 %v7100, %v7096
    %v7473 = vpack.c.b16 %v7101, %v7097
    %v7474 = vpack.c.b16 %v7102, %v7098
    %v7475 = vpack.c.b16 %v7107, %v7103
    %v7476 = vpack.c.b16 %v7108, %v7104
    %v7477 = vpack.c.b16 %v7109, %v7105
    %v7478 = vpack.c.b16 %v7110, %v7106
    %v7479 = vpack.c.b16 %v7115, %v7111
    %v7480 = vpack.c.b16 %v7116, %v7112
    %v7481 = vpack.c.b16 %v7117, %v7113
    %v7482 = vpack.c.b16 %v7118, %v7114
    %v7483 = vpack.c.b16 %v7123, %v7119
    %v7484 = vpack.c.b16 %v7124, %v7120
    %v7485 = vpack.c.b16 %v7125, %v7121
    %v7486 = vpack.c.b16 %v7126, %v7122
    %v7487 = vpack.c.b16 %v7131, %v7127
    %v7488 = vpack.c.b16 %v7132, %v7128
    %v7489 = vpack.c.b16 %v7133, %v7129
    %v7490 = vpack.c.b16 %v7134, %v7130
    %v7491 = vpack.c.b16 %v7139, %v7135
    %v7492 = vpack.c.b16 %v7140, %v7136
    %v7493 = vpack.c.b16 %v7141, %v7137
    %v7494 = vpack.c.b16 %v7142, %v7138
    %v7495 = vpack.c.b16 %v7147, %v7143
    %v7496 = vpack.c.b16 %v7148, %v7144
    %v7497 = vpack.c.b16 %v7149, %v7145
    %v7498 = vpack.c.b16 %v7150, %v7146
    %v7499 = vpack.c.b16 %v7155, %v7151
    %v7500 = vpack.c.b16 %v7156, %v7152
    %v7501 = vpack.c.b16 %v7157, %v7153
    %v7502 = vpack.c.b16 %v7158, %v7154
    %v7503 = vpack.c.b16 %v7163, %v7159
    %v7504 = vpack.c.b16 %v7164, %v7160
    %v7505 = vpack.c.b16 %v7165, %v7161
    %v7506 = vpack.c.b16 %v7166, %v7162
    %v7507 = vpack.c.b16 %v7171, %v7167
    %v7508 = vpack.c.b16 %v7172, %v7168
    %v7509 = vpack.c.b16 %v7173, %v7169
    %v7510 = vpack.c.b16 %v7174, %v7170
    %v7511 = vpack.c.b16 %v7179, %v7175
    %v7512 = vpack.c.b16 %v7180, %v7176
    %v7513 = vpack.c.b16 %v7181, %v7177
    %v7514 = vpack.c.b16 %v7182, %v7178
    %v7515 = vpack.c.b16 %v7187, %v7183
    %v7516 = vpack.c.b16 %v7188, %v7184
    %v7517 = vpack.c.b16 %v7189, %v7185
    %v7518 = vpack.c.b16 %v7190, %v7186
    %v7519 = vpack.c.b16 %v7195, %v7191
    %v7520 = vpack.c.b16 %v7196, %v7192
    %v7521 = vpack.c.b16 %v7197, %v7193
    %v7522 = vpack.c.b16 %v7198, %v7194
    %v7523 = vpack.c.b16 %v7203, %v7199
    %v7524 = vpack.c.b16 %v7204, %v7200
    %v7525 = vpack.c.b16 %v7205, %v7201
    %v7526 = vpack.c.b16 %v7206, %v7202
    %v7527 = vpack.c.b16 %v7211, %v7207
    %v7528 = vpack.c.b16 %v7212, %v7208
    %v7529 = vpack.c.b16 %v7213, %v7209
    %v7530 = vpack.c.b16 %v7214, %v7210
    %v7531 = vpack.c.b16 %v7219, %v7215
    %v7532 = vpack.c.b16 %v7220, %v7216
    %v7533 = vpack.c.b16 %v7221, %v7217
    %v7534 = vpack.c.b16 %v7222, %v7218
    %v7535 = vpack.c.b16 %v7227, %v7223
    %v7536 = vpack.c.b16 %v7228, %v7224
    %v7537 = vpack.c.b16 %v7229, %v7225
    %v7538 = vpack.c.b16 %v7230, %v7226
    %v7539 = vpack.c.b16 %v7235, %v7231
    %v7540 = vpack.c.b16 %v7236, %v7232
    %v7541 = vpack.c.b16 %v7237, %v7233
    %v7542 = vpack.c.b16 %v7238, %v7234
    %v7543 = vpack.c.b16 %v7243, %v7239
    %v7544 = vpack.c.b16 %v7244, %v7240
    %v7545 = vpack.c.b16 %v7245, %v7241
    %v7546 = vpack.c.b16 %v7246, %v7242
    %v7547 = vpack.c.b16 %v7251, %v7247
    %v7548 = vpack.c.b16 %v7252, %v7248
    %v7549 = vpack.c.b16 %v7253, %v7249
    %v7550 = vpack.c.b16 %v7254, %v7250
    %v7551 = vpack.c.b16 %v7259, %v7255
    %v7552 = vpack.c.b16 %v7260, %v7256
    %v7553 = vpack.c.b16 %v7261, %v7257
    %v7554 = vpack.c.b16 %v7262, %v7258
    %v7555 = vpack.c.b16 %v7267, %v7263
    %v7556 = vpack.c.b16 %v7268, %v7264
    %v7557 = vpack.c.b16 %v7269, %v7265
    %v7558 = vpack.c.b16 %v7270, %v7266
    %v7559 = vpack.c.b16 %v7275, %v7271
    %v7560 = vpack.c.b16 %v7276, %v7272
    %v7561 = vpack.c.b16 %v7277, %v7273
    %v7562 = vpack.c.b16 %v7278, %v7274
    %v7563 = vpack.c.b16 %v7283, %v7279
    %v7564 = vpack.c.b16 %v7284, %v7280
    %v7565 = vpack.c.b16 %v7285, %v7281
    %v7566 = vpack.c.b16 %v7286, %v7282
    %v7567 = vpack.c.b16 %v7291, %v7287
    %v7568 = vpack.c.b16 %v7292, %v7288
    %v7569 = vpack.c.b16 %v7293, %v7289
    %v7570 = vpack.c.b16 %v7294, %v7290
    %v7571 = vpack.c.b16 %v7299, %v7295
    %v7572 = vpack.c.b16 %v7300, %v7296
    %v7573 = vpack.c.b16 %v7301, %v7297
    %v7574 = vpack.c.b16 %v7302, %v7298
    %v7575 = vpack.c.b16 %v7307, %v7303
    %v7576 = vpack.c.b16 %v7308, %v7304
    %v7577 = vpack.c.b16 %v7309, %v7305
    %v7578 = vpack.c.b16 %v7310, %v7306
    %v7579 = vpack.c.b16 %v7315, %v7311
    %v7580 = vpack.c.b16 %v7316, %v7312
    %v7581 = vpack.c.b16 %v7317, %v7313
    %v7582 = vpack.c.b16 %v7318, %v7314
    %v7583 = vpack.c.b16 %v7323, %v7319
    %v7584 = vpack.c.b16 %v7324, %v7320
    %v7585 = vpack.c.b16 %v7325, %v7321
    %v7586 = vpack.c.b16 %v7326, %v7322
    %v7587 = vpack.c.b16 %v7331, %v7327
    %v7588 = vpack.c.b16 %v7332, %v7328
    %v7589 = vpack.c.b16 %v7333, %v7329
    %v7590 = vpack.c.b16 %v7334, %v7330
    %7847 = vmatpush.bf16.msra.mxu0 %v7363
    %7848 = vmatpush.bf16.msra.mxu0 %v7359
    %7849 = vmatpush.bf16.msra.mxu0 %v7355
    %7850 = vmatpush.bf16.msra.mxu0 %v7351
    %7851 = vmatpush.bf16.msra.mxu0 %v7347
    %7852 = vmatpush.bf16.msra.mxu0 %v7343
    %7853 = vmatpush.bf16.msra.mxu0 %v7339
    %7854 = vmatpush.bf16.msra.mxu0 %v7335
    %7855 = vmatmul.bf16.gmra.mxu0 %v6293
    %v7856 = vpop.f32.mrf.mxu0
    %v7857 = vadd.f32 %v6559, %v7856
    %v7858 = vpop.f32.mrf.mxu0
    %7859 = vdwg.mxu0
    %7860 = vmatpush.bf16.msra.mxu0 %v7395
    %7861 = vmatpush.bf16.msra.mxu0 %v7391
    %7862 = vmatpush.bf16.msra.mxu0 %v7387
    %7863 = vmatpush.bf16.msra.mxu0 %v7383
    %7864 = vmatpush.bf16.msra.mxu0 %v7379
    %7865 = vmatpush.bf16.msra.mxu0 %v7375
    %7866 = vmatpush.bf16.msra.mxu0 %v7371
    %7867 = vmatpush.bf16.msra.mxu0 %v7367
    %7868 = vmatmul.bf16.gmra.mxu0 %v6294
    %v7869 = vpop.f32.mrf.mxu0
    %v7870 = vadd.f32 %v7857, %v7869
    %v7871 = vpop.f32.mrf.mxu0
    %7872 = vdwg.mxu0
    %7873 = vmatpush.bf16.msra.mxu0 %v7427
    %7874 = vmatpush.bf16.msra.mxu0 %v7423
    %7875 = vmatpush.bf16.msra.mxu0 %v7419
    %7876 = vmatpush.bf16.msra.mxu0 %v7415
    %7877 = vmatpush.bf16.msra.mxu0 %v7411
    %7878 = vmatpush.bf16.msra.mxu0 %v7407
    %7879 = vmatpush.bf16.msra.mxu0 %v7403
    %7880 = vmatpush.bf16.msra.mxu0 %v7399
    %7881 = vmatmul.bf16.gmra.mxu0 %v6295
    %v7882 = vpop.f32.mrf.mxu0
    %v7883 = vadd.f32 %v7870, %v7882
    %v7884 = vpop.f32.mrf.mxu0
    %7885 = vdwg.mxu0
    %7886 = vmatpush.bf16.msra.mxu0 %v7459
    %7887 = vmatpush.bf16.msra.mxu0 %v7455
    %7888 = vmatpush.bf16.msra.mxu0 %v7451
    %7889 = vmatpush.bf16.msra.mxu0 %v7447
    %7890 = vmatpush.bf16.msra.mxu0 %v7443
    %7891 = vmatpush.bf16.msra.mxu0 %v7439
    %7892 = vmatpush.bf16.msra.mxu0 %v7435
    %7893 = vmatpush.bf16.msra.mxu0 %v7431
    %7894 = vmatmul.bf16.gmra.mxu0 %v6296
    %v7895 = vpop.f32.mrf.mxu0
    %v7896 = vadd.f32 %v7883, %v7895
    %v7897 = vpop.f32.mrf.mxu0
    %7898 = vdwg.mxu0
    %7899 = vmatpush.bf16.msra.mxu0 %v7491
    %7900 = vmatpush.bf16.msra.mxu0 %v7487
    %7901 = vmatpush.bf16.msra.mxu0 %v7483
    %7902 = vmatpush.bf16.msra.mxu0 %v7479
    %7903 = vmatpush.bf16.msra.mxu0 %v7475
    %7904 = vmatpush.bf16.msra.mxu0 %v7471
    %7905 = vmatpush.bf16.msra.mxu0 %v7467
    %7906 = vmatpush.bf16.msra.mxu0 %v7463
    %7907 = vmatmul.bf16.gmra.mxu0 %v6297
    %v7908 = vpop.f32.mrf.mxu0
    %v7909 = vadd.f32 %v7896, %v7908
    %v7910 = vpop.f32.mrf.mxu0
    %7911 = vdwg.mxu0
    %7912 = vmatpush.bf16.msra.mxu0 %v7523
    %7913 = vmatpush.bf16.msra.mxu0 %v7519
    %7914 = vmatpush.bf16.msra.mxu0 %v7515
    %7915 = vmatpush.bf16.msra.mxu0 %v7511
    %7916 = vmatpush.bf16.msra.mxu0 %v7507
    %7917 = vmatpush.bf16.msra.mxu0 %v7503
    %7918 = vmatpush.bf16.msra.mxu0 %v7499
    %7919 = vmatpush.bf16.msra.mxu0 %v7495
    %7920 = vmatmul.bf16.gmra.mxu0 %v6298
    %v7921 = vpop.f32.mrf.mxu0
    %v7922 = vadd.f32 %v7909, %v7921
    %v7923 = vpop.f32.mrf.mxu0
    %7924 = vdwg.mxu0
    %7925 = vmatpush.bf16.msra.mxu0 %v7555
    %7926 = vmatpush.bf16.msra.mxu0 %v7551
    %7927 = vmatpush.bf16.msra.mxu0 %v7547
    %7928 = vmatpush.bf16.msra.mxu0 %v7543
    %7929 = vmatpush.bf16.msra.mxu0 %v7539
    %7930 = vmatpush.bf16.msra.mxu0 %v7535
    %7931 = vmatpush.bf16.msra.mxu0 %v7531
    %7932 = vmatpush.bf16.msra.mxu0 %v7527
    %7933 = vmatmul.bf16.gmra.mxu0 %v6299
    %v7934 = vpop.f32.mrf.mxu0
    %v7935 = vadd.f32 %v7922, %v7934
    %v7936 = vpop.f32.mrf.mxu0
    %7937 = vdwg.mxu0
    %7938 = vmatpush.bf16.msra.mxu0 %v7587
    %7939 = vmatpush.bf16.msra.mxu0 %v7583
    %7940 = vmatpush.bf16.msra.mxu0 %v7579
    %7941 = vmatpush.bf16.msra.mxu0 %v7575
    %7942 = vmatpush.bf16.msra.mxu0 %v7571
    %7943 = vmatpush.bf16.msra.mxu0 %v7567
    %7944 = vmatpush.bf16.msra.mxu0 %v7563
    %7945 = vmatpush.bf16.msra.mxu0 %v7559
    %7946 = vmatmul.bf16.gmra.mxu0 %v6300
    %v7947 = vpop.f32.mrf.mxu0
    %v7948 = vadd.f32 %v7935, %v7947
    %v7949 = vpop.f32.mrf.mxu0
    %7950 = vdwg.mxu0
    %7951 = vmatpush.bf16.msra.mxu0 %v7364
    %7952 = vmatpush.bf16.msra.mxu0 %v7360
    %7953 = vmatpush.bf16.msra.mxu0 %v7356
    %7954 = vmatpush.bf16.msra.mxu0 %v7352
    %7955 = vmatpush.bf16.msra.mxu0 %v7348
    %7956 = vmatpush.bf16.msra.mxu0 %v7344
    %7957 = vmatpush.bf16.msra.mxu0 %v7340
    %7958 = vmatpush.bf16.msra.mxu0 %v7336
    %7959 = vmatmul.bf16.gmra.mxu0 %v6293
    %v7960 = vpop.f32.mrf.mxu0
    %v7961 = vadd.f32 %v6560, %v7960
    %v7962 = vpop.f32.mrf.mxu0
    %7963 = vdwg.mxu0
    %7964 = vmatpush.bf16.msra.mxu0 %v7396
    %7965 = vmatpush.bf16.msra.mxu0 %v7392
    %7966 = vmatpush.bf16.msra.mxu0 %v7388
    %7967 = vmatpush.bf16.msra.mxu0 %v7384
    %7968 = vmatpush.bf16.msra.mxu0 %v7380
    %7969 = vmatpush.bf16.msra.mxu0 %v7376
    %7970 = vmatpush.bf16.msra.mxu0 %v7372
    %7971 = vmatpush.bf16.msra.mxu0 %v7368
    %7972 = vmatmul.bf16.gmra.mxu0 %v6294
    %v7973 = vpop.f32.mrf.mxu0
    %v7974 = vadd.f32 %v7961, %v7973
    %v7975 = vpop.f32.mrf.mxu0
    %7976 = vdwg.mxu0
    %7977 = vmatpush.bf16.msra.mxu0 %v7428
    %7978 = vmatpush.bf16.msra.mxu0 %v7424
    %7979 = vmatpush.bf16.msra.mxu0 %v7420
    %7980 = vmatpush.bf16.msra.mxu0 %v7416
    %7981 = vmatpush.bf16.msra.mxu0 %v7412
    %7982 = vmatpush.bf16.msra.mxu0 %v7408
    %7983 = vmatpush.bf16.msra.mxu0 %v7404
    %7984 = vmatpush.bf16.msra.mxu0 %v7400
    %7985 = vmatmul.bf16.gmra.mxu0 %v6295
    %v7986 = vpop.f32.mrf.mxu0
    %v7987 = vadd.f32 %v7974, %v7986
    %v7988 = vpop.f32.mrf.mxu0
    %7989 = vdwg.mxu0
    %7990 = vmatpush.bf16.msra.mxu0 %v7460
    %7991 = vmatpush.bf16.msra.mxu0 %v7456
    %7992 = vmatpush.bf16.msra.mxu0 %v7452
    %7993 = vmatpush.bf16.msra.mxu0 %v7448
    %7994 = vmatpush.bf16.msra.mxu0 %v7444
    %7995 = vmatpush.bf16.msra.mxu0 %v7440
    %7996 = vmatpush.bf16.msra.mxu0 %v7436
    %7997 = vmatpush.bf16.msra.mxu0 %v7432
    %7998 = vmatmul.bf16.gmra.mxu0 %v6296
    %v7999 = vpop.f32.mrf.mxu0
    %v8000 = vadd.f32 %v7987, %v7999
    %v8001 = vpop.f32.mrf.mxu0
    %8002 = vdwg.mxu0
    %8003 = vmatpush.bf16.msra.mxu0 %v7492
    %8004 = vmatpush.bf16.msra.mxu0 %v7488
    %8005 = vmatpush.bf16.msra.mxu0 %v7484
    %8006 = vmatpush.bf16.msra.mxu0 %v7480
    %8007 = vmatpush.bf16.msra.mxu0 %v7476
    %8008 = vmatpush.bf16.msra.mxu0 %v7472
    %8009 = vmatpush.bf16.msra.mxu0 %v7468
    %8010 = vmatpush.bf16.msra.mxu0 %v7464
    %8011 = vmatmul.bf16.gmra.mxu0 %v6297
    %v8012 = vpop.f32.mrf.mxu0
    %v8013 = vadd.f32 %v8000, %v8012
    %v8014 = vpop.f32.mrf.mxu0
    %8015 = vdwg.mxu0
    %8016 = vmatpush.bf16.msra.mxu0 %v7524
    %8017 = vmatpush.bf16.msra.mxu0 %v7520
    %8018 = vmatpush.bf16.msra.mxu0 %v7516
    %8019 = vmatpush.bf16.msra.mxu0 %v7512
    %8020 = vmatpush.bf16.msra.mxu0 %v7508
    %8021 = vmatpush.bf16.msra.mxu0 %v7504
    %8022 = vmatpush.bf16.msra.mxu0 %v7500
    %8023 = vmatpush.bf16.msra.mxu0 %v7496
    %8024 = vmatmul.bf16.gmra.mxu0 %v6298
    %v8025 = vpop.f32.mrf.mxu0
    %v8026 = vadd.f32 %v8013, %v8025
    %v8027 = vpop.f32.mrf.mxu0
    %8028 = vdwg.mxu0
    %8029 = vmatpush.bf16.msra.mxu0 %v7556
    %8030 = vmatpush.bf16.msra.mxu0 %v7552
    %8031 = vmatpush.bf16.msra.mxu0 %v7548
    %8032 = vmatpush.bf16.msra.mxu0 %v7544
    %8033 = vmatpush.bf16.msra.mxu0 %v7540
    %8034 = vmatpush.bf16.msra.mxu0 %v7536
    %8035 = vmatpush.bf16.msra.mxu0 %v7532
    %8036 = vmatpush.bf16.msra.mxu0 %v7528
    %8037 = vmatmul.bf16.gmra.mxu0 %v6299
    %v8038 = vpop.f32.mrf.mxu0
    %v8039 = vadd.f32 %v8026, %v8038
    %v8040 = vpop.f32.mrf.mxu0
    %8041 = vdwg.mxu0
    %8042 = vmatpush.bf16.msra.mxu0 %v7588
    %8043 = vmatpush.bf16.msra.mxu0 %v7584
    %8044 = vmatpush.bf16.msra.mxu0 %v7580
    %8045 = vmatpush.bf16.msra.mxu0 %v7576
    %8046 = vmatpush.bf16.msra.mxu0 %v7572
    %8047 = vmatpush.bf16.msra.mxu0 %v7568
    %8048 = vmatpush.bf16.msra.mxu0 %v7564
    %8049 = vmatpush.bf16.msra.mxu0 %v7560
    %8050 = vmatmul.bf16.gmra.mxu0 %v6300
    %v8051 = vpop.f32.mrf.mxu0
    %v8052 = vadd.f32 %v8039, %v8051
    %v8053 = vpop.f32.mrf.mxu0
    %8054 = vdwg.mxu0
    %8055 = vmatpush.bf16.msra.mxu0 %v7365
    %8056 = vmatpush.bf16.msra.mxu0 %v7361
    %8057 = vmatpush.bf16.msra.mxu0 %v7357
    %8058 = vmatpush.bf16.msra.mxu0 %v7353
    %8059 = vmatpush.bf16.msra.mxu0 %v7349
    %8060 = vmatpush.bf16.msra.mxu0 %v7345
    %8061 = vmatpush.bf16.msra.mxu0 %v7341
    %8062 = vmatpush.bf16.msra.mxu0 %v7337
    %8063 = vmatmul.bf16.gmra.mxu0 %v6293
    %v8064 = vpop.f32.mrf.mxu0
    %v8065 = vadd.f32 %v6561, %v8064
    %v8066 = vpop.f32.mrf.mxu0
    %8067 = vdwg.mxu0
    %8068 = vmatpush.bf16.msra.mxu0 %v7397
    %8069 = vmatpush.bf16.msra.mxu0 %v7393
    %8070 = vmatpush.bf16.msra.mxu0 %v7389
    %8071 = vmatpush.bf16.msra.mxu0 %v7385
    %8072 = vmatpush.bf16.msra.mxu0 %v7381
    %8073 = vmatpush.bf16.msra.mxu0 %v7377
    %8074 = vmatpush.bf16.msra.mxu0 %v7373
    %8075 = vmatpush.bf16.msra.mxu0 %v7369
    %8076 = vmatmul.bf16.gmra.mxu0 %v6294
    %v8077 = vpop.f32.mrf.mxu0
    %v8078 = vadd.f32 %v8065, %v8077
    %v8079 = vpop.f32.mrf.mxu0
    %8080 = vdwg.mxu0
    %8081 = vmatpush.bf16.msra.mxu0 %v7429
    %8082 = vmatpush.bf16.msra.mxu0 %v7425
    %8083 = vmatpush.bf16.msra.mxu0 %v7421
    %8084 = vmatpush.bf16.msra.mxu0 %v7417
    %8085 = vmatpush.bf16.msra.mxu0 %v7413
    %8086 = vmatpush.bf16.msra.mxu0 %v7409
    %8087 = vmatpush.bf16.msra.mxu0 %v7405
    %8088 = vmatpush.bf16.msra.mxu0 %v7401
    %8089 = vmatmul.bf16.gmra.mxu0 %v6295
    %v8090 = vpop.f32.mrf.mxu0
    %v8091 = vadd.f32 %v8078, %v8090
    %v8092 = vpop.f32.mrf.mxu0
    %8093 = vdwg.mxu0
    %8094 = vmatpush.bf16.msra.mxu0 %v7461
    %8095 = vmatpush.bf16.msra.mxu0 %v7457
    %8096 = vmatpush.bf16.msra.mxu0 %v7453
    %8097 = vmatpush.bf16.msra.mxu0 %v7449
    %8098 = vmatpush.bf16.msra.mxu0 %v7445
    %8099 = vmatpush.bf16.msra.mxu0 %v7441
    %8100 = vmatpush.bf16.msra.mxu0 %v7437
    %8101 = vmatpush.bf16.msra.mxu0 %v7433
    %8102 = vmatmul.bf16.gmra.mxu0 %v6296
    %v8103 = vpop.f32.mrf.mxu0
    %v8104 = vadd.f32 %v8091, %v8103
    %v8105 = vpop.f32.mrf.mxu0
    %8106 = vdwg.mxu0
    %8107 = vmatpush.bf16.msra.mxu0 %v7493
    %8108 = vmatpush.bf16.msra.mxu0 %v7489
    %8109 = vmatpush.bf16.msra.mxu0 %v7485
    %8110 = vmatpush.bf16.msra.mxu0 %v7481
    %8111 = vmatpush.bf16.msra.mxu0 %v7477
    %8112 = vmatpush.bf16.msra.mxu0 %v7473
    %8113 = vmatpush.bf16.msra.mxu0 %v7469
    %8114 = vmatpush.bf16.msra.mxu0 %v7465
    %8115 = vmatmul.bf16.gmra.mxu0 %v6297
    %v8116 = vpop.f32.mrf.mxu0
    %v8117 = vadd.f32 %v8104, %v8116
    %v8118 = vpop.f32.mrf.mxu0
    %8119 = vdwg.mxu0
    %8120 = vmatpush.bf16.msra.mxu0 %v7525
    %8121 = vmatpush.bf16.msra.mxu0 %v7521
    %8122 = vmatpush.bf16.msra.mxu0 %v7517
    %8123 = vmatpush.bf16.msra.mxu0 %v7513
    %8124 = vmatpush.bf16.msra.mxu0 %v7509
    %8125 = vmatpush.bf16.msra.mxu0 %v7505
    %8126 = vmatpush.bf16.msra.mxu0 %v7501
    %8127 = vmatpush.bf16.msra.mxu0 %v7497
    %8128 = vmatmul.bf16.gmra.mxu0 %v6298
    %v8129 = vpop.f32.mrf.mxu0
    %v8130 = vadd.f32 %v8117, %v8129
    %v8131 = vpop.f32.mrf.mxu0
    %8132 = vdwg.mxu0
    %8133 = vmatpush.bf16.msra.mxu0 %v7557
    %8134 = vmatpush.bf16.msra.mxu0 %v7553
    %8135 = vmatpush.bf16.msra.mxu0 %v7549
    %8136 = vmatpush.bf16.msra.mxu0 %v7545
    %8137 = vmatpush.bf16.msra.mxu0 %v7541
    %8138 = vmatpush.bf16.msra.mxu0 %v7537
    %8139 = vmatpush.bf16.msra.mxu0 %v7533
    %8140 = vmatpush.bf16.msra.mxu0 %v7529
    %8141 = vmatmul.bf16.gmra.mxu0 %v6299
    %v8142 = vpop.f32.mrf.mxu0
    %v8143 = vadd.f32 %v8130, %v8142
    %v8144 = vpop.f32.mrf.mxu0
    %8145 = vdwg.mxu0
    %8146 = vmatpush.bf16.msra.mxu0 %v7589
    %8147 = vmatpush.bf16.msra.mxu0 %v7585
    %8148 = vmatpush.bf16.msra.mxu0 %v7581
    %8149 = vmatpush.bf16.msra.mxu0 %v7577
    %8150 = vmatpush.bf16.msra.mxu0 %v7573
    %8151 = vmatpush.bf16.msra.mxu0 %v7569
    %8152 = vmatpush.bf16.msra.mxu0 %v7565
    %8153 = vmatpush.bf16.msra.mxu0 %v7561
    %8154 = vmatmul.bf16.gmra.mxu0 %v6300
    %v8155 = vpop.f32.mrf.mxu0
    %v8156 = vadd.f32 %v8143, %v8155
    %v8157 = vpop.f32.mrf.mxu0
    %8158 = vdwg.mxu0
    %8159 = vmatpush.bf16.msra.mxu0 %v7366
    %8160 = vmatpush.bf16.msra.mxu0 %v7362
    %8161 = vmatpush.bf16.msra.mxu0 %v7358
    %8162 = vmatpush.bf16.msra.mxu0 %v7354
    %8163 = vmatpush.bf16.msra.mxu0 %v7350
    %8164 = vmatpush.bf16.msra.mxu0 %v7346
    %8165 = vmatpush.bf16.msra.mxu0 %v7342
    %8166 = vmatpush.bf16.msra.mxu0 %v7338
    %8167 = vmatmul.bf16.gmra.mxu0 %v6293
    %v8168 = vpop.f32.mrf.mxu0
    %v8169 = vadd.f32 %v6562, %v8168
    %v8170 = vpop.f32.mrf.mxu0
    %8171 = vdwg.mxu0
    %8172 = vmatpush.bf16.msra.mxu0 %v7398
    %8173 = vmatpush.bf16.msra.mxu0 %v7394
    %8174 = vmatpush.bf16.msra.mxu0 %v7390
    %8175 = vmatpush.bf16.msra.mxu0 %v7386
    %8176 = vmatpush.bf16.msra.mxu0 %v7382
    %8177 = vmatpush.bf16.msra.mxu0 %v7378
    %8178 = vmatpush.bf16.msra.mxu0 %v7374
    %8179 = vmatpush.bf16.msra.mxu0 %v7370
    %8180 = vmatmul.bf16.gmra.mxu0 %v6294
    %v8181 = vpop.f32.mrf.mxu0
    %v8182 = vadd.f32 %v8169, %v8181
    %v8183 = vpop.f32.mrf.mxu0
    %8184 = vdwg.mxu0
    %8185 = vmatpush.bf16.msra.mxu0 %v7430
    %8186 = vmatpush.bf16.msra.mxu0 %v7426
    %8187 = vmatpush.bf16.msra.mxu0 %v7422
    %8188 = vmatpush.bf16.msra.mxu0 %v7418
    %8189 = vmatpush.bf16.msra.mxu0 %v7414
    %8190 = vmatpush.bf16.msra.mxu0 %v7410
    %8191 = vmatpush.bf16.msra.mxu0 %v7406
    %8192 = vmatpush.bf16.msra.mxu0 %v7402
    %8193 = vmatmul.bf16.gmra.mxu0 %v6295
    %v8194 = vpop.f32.mrf.mxu0
    %v8195 = vadd.f32 %v8182, %v8194
    %v8196 = vpop.f32.mrf.mxu0
    %8197 = vdwg.mxu0
    %8198 = vmatpush.bf16.msra.mxu0 %v7462
    %8199 = vmatpush.bf16.msra.mxu0 %v7458
    %8200 = vmatpush.bf16.msra.mxu0 %v7454
    %8201 = vmatpush.bf16.msra.mxu0 %v7450
    %8202 = vmatpush.bf16.msra.mxu0 %v7446
    %8203 = vmatpush.bf16.msra.mxu0 %v7442
    %8204 = vmatpush.bf16.msra.mxu0 %v7438
    %8205 = vmatpush.bf16.msra.mxu0 %v7434
    %8206 = vmatmul.bf16.gmra.mxu0 %v6296
    %v8207 = vpop.f32.mrf.mxu0
    %v8208 = vadd.f32 %v8195, %v8207
    %v8209 = vpop.f32.mrf.mxu0
    %8210 = vdwg.mxu0
    %8211 = vmatpush.bf16.msra.mxu0 %v7494
    %8212 = vmatpush.bf16.msra.mxu0 %v7490
    %8213 = vmatpush.bf16.msra.mxu0 %v7486
    %8214 = vmatpush.bf16.msra.mxu0 %v7482
    %8215 = vmatpush.bf16.msra.mxu0 %v7478
    %8216 = vmatpush.bf16.msra.mxu0 %v7474
    %8217 = vmatpush.bf16.msra.mxu0 %v7470
    %8218 = vmatpush.bf16.msra.mxu0 %v7466
    %8219 = vmatmul.bf16.gmra.mxu0 %v6297
    %v8220 = vpop.f32.mrf.mxu0
    %v8221 = vadd.f32 %v8208, %v8220
    %v8222 = vpop.f32.mrf.mxu0
    %8223 = vdwg.mxu0
    %8224 = vmatpush.bf16.msra.mxu0 %v7526
    %8225 = vmatpush.bf16.msra.mxu0 %v7522
    %8226 = vmatpush.bf16.msra.mxu0 %v7518
    %8227 = vmatpush.bf16.msra.mxu0 %v7514
    %8228 = vmatpush.bf16.msra.mxu0 %v7510
    %8229 = vmatpush.bf16.msra.mxu0 %v7506
    %8230 = vmatpush.bf16.msra.mxu0 %v7502
    %8231 = vmatpush.bf16.msra.mxu0 %v7498
    %8232 = vmatmul.bf16.gmra.mxu0 %v6298
    %v8233 = vpop.f32.mrf.mxu0
    %v8234 = vadd.f32 %v8221, %v8233
    %v8235 = vpop.f32.mrf.mxu0
    %8236 = vdwg.mxu0
    %8237 = vmatpush.bf16.msra.mxu0 %v7558
    %8238 = vmatpush.bf16.msra.mxu0 %v7554
    %8239 = vmatpush.bf16.msra.mxu0 %v7550
    %8240 = vmatpush.bf16.msra.mxu0 %v7546
    %8241 = vmatpush.bf16.msra.mxu0 %v7542
    %8242 = vmatpush.bf16.msra.mxu0 %v7538
    %8243 = vmatpush.bf16.msra.mxu0 %v7534
    %8244 = vmatpush.bf16.msra.mxu0 %v7530
    %8245 = vmatmul.bf16.gmra.mxu0 %v6299
    %v8246 = vpop.f32.mrf.mxu0
    %v8247 = vadd.f32 %v8234, %v8246
    %v8248 = vpop.f32.mrf.mxu0
    %8249 = vdwg.mxu0
    %8250 = vmatpush.bf16.msra.mxu0 %v7590
    %8251 = vmatpush.bf16.msra.mxu0 %v7586
    %8252 = vmatpush.bf16.msra.mxu0 %v7582
    %8253 = vmatpush.bf16.msra.mxu0 %v7578
    %8254 = vmatpush.bf16.msra.mxu0 %v7574
    %8255 = vmatpush.bf16.msra.mxu0 %v7570
    %8256 = vmatpush.bf16.msra.mxu0 %v7566
    %8257 = vmatpush.bf16.msra.mxu0 %v7562
    %8258 = vmatmul.bf16.gmra.mxu0 %v6300
    %v8259 = vpop.f32.mrf.mxu0
    %v8260 = vadd.f32 %v8247, %v8259
    %v8261 = vpop.f32.mrf.mxu0
    %8262 = vdwg.mxu0
    %s8263 = sld [smem:[#allocation7 + $0x6]]
    %vm8264 = vcmp.ge.f32.partialorder %v7948, 0.0
    %vm8265 = vcmp.ge.f32.partialorder %v8052, 0.0
    %vm8266 = vcmp.ge.f32.partialorder %v8156, 0.0
    %vm8267 = vcmp.ge.f32.partialorder %v8260, 0.0
    %v8268 = vstv %s8263
    %v8269 = vmul.f32 %v8268, %v7948
    %v8270 = vmul.f32 %v8268, %v8052
    %v8271 = vmul.f32 %v8268, %v8156
    %v8272 = vmul.f32 %v8268, %v8260
    %v8273 = vsel %vm8264, %v7948, %v8269
    %v8274 = vsel %vm8265, %v8052, %v8270
    %v8275 = vsel %vm8266, %v8156, %v8271
    %v8276 = vsel %vm8267, %v8260, %v8272
    %v8277 = vpack.c.bf16 %v8273, %v8273
    %v8278 = vpack.c.bf16 %v8274, %v8274
    %v8279 = vpack.c.bf16 %v8275, %v8275
    %v8280 = vpack.c.bf16 %v8276, %v8276
    %v8281 = vld [vmem:[%s14] sm:$0xff]
    %v8282 = vld [vmem:[%s14 + $0x8] sm:$0xff]
    %v8283 = vld [vmem:[%s14 + $0x10] sm:$0xff]
    %v8284 = vld [vmem:[%s14 + $0x18] sm:$0xff]
    %v8285 = vld [vmem:[%s14 + $0x20] sm:$0xff]
    %v8286 = vld [vmem:[%s14 + $0x28] sm:$0xff]
    %v8287 = vld [vmem:[%s14 + $0x30] sm:$0xff]
    %v8288 = vld [vmem:[%s14 + $0x38] sm:$0xff]
    %v8289 = vld [vmem:[%s14 + $0x40] sm:$0xff]
    %v8290 = vld [vmem:[%s14 + $0x48] sm:$0xff]
    %v8291 = vld [vmem:[%s14 + $0x50] sm:$0xff]
    %v8292 = vld [vmem:[%s14 + $0x58] sm:$0xff]
    %v8293 = vld [vmem:[%s14 + $0x60] sm:$0xff]
    %v8294 = vld [vmem:[%s14 + $0x68] sm:$0xff]
    %v8295 = vld [vmem:[%s14 + $0x70] sm:$0xff]
    %v8296 = vld [vmem:[%s14 + $0x78] sm:$0xff]
    %v8297 = vld [vmem:[%s14 + $0x80] sm:$0xff]
    %v8298 = vld [vmem:[%s14 + $0x88] sm:$0xff]
    %v8299 = vld [vmem:[%s14 + $0x90] sm:$0xff]
    %v8300 = vld [vmem:[%s14 + $0x98] sm:$0xff]
    %v8301 = vld [vmem:[%s14 + $0xa0] sm:$0xff]
    %v8302 = vld [vmem:[%s14 + $0xa8] sm:$0xff]
    %v8303 = vld [vmem:[%s14 + $0xb0] sm:$0xff]
    %v8304 = vld [vmem:[%s14 + $0xb8] sm:$0xff]
    %v8305 = vld [vmem:[%s14 + $0xc0] sm:$0xff]
    %v8306 = vld [vmem:[%s14 + $0xc8] sm:$0xff]
    %v8307 = vld [vmem:[%s14 + $0xd0] sm:$0xff]
    %v8308 = vld [vmem:[%s14 + $0xd8] sm:$0xff]
    %v8309 = vld [vmem:[%s14 + $0xe0] sm:$0xff]
    %v8310 = vld [vmem:[%s14 + $0xe8] sm:$0xff]
    %v8311 = vld [vmem:[%s14 + $0xf0] sm:$0xff]
    %v8312 = vld [vmem:[%s14 + $0xf8] sm:$0xff]
    %v8313 = vld [vmem:[%s14 + $0x100] sm:$0xff]
    %v8314 = vld [vmem:[%s14 + $0x108] sm:$0xff]
    %v8315 = vld [vmem:[%s14 + $0x110] sm:$0xff]
    %v8316 = vld [vmem:[%s14 + $0x118] sm:$0xff]
    %v8317 = vld [vmem:[%s14 + $0x120] sm:$0xff]
    %v8318 = vld [vmem:[%s14 + $0x128] sm:$0xff]
    %v8319 = vld [vmem:[%s14 + $0x130] sm:$0xff]
    %v8320 = vld [vmem:[%s14 + $0x138] sm:$0xff]
    %v8321 = vld [vmem:[%s14 + $0x140] sm:$0xff]
    %v8322 = vld [vmem:[%s14 + $0x148] sm:$0xff]
    %v8323 = vld [vmem:[%s14 + $0x150] sm:$0xff]
    %v8324 = vld [vmem:[%s14 + $0x158] sm:$0xff]
    %v8325 = vld [vmem:[%s14 + $0x160] sm:$0xff]
    %v8326 = vld [vmem:[%s14 + $0x168] sm:$0xff]
    %v8327 = vld [vmem:[%s14 + $0x170] sm:$0xff]
    %v8328 = vld [vmem:[%s14 + $0x178] sm:$0xff]
    %v8329 = vld [vmem:[%s14 + $0x180] sm:$0xff]
    %v8330 = vld [vmem:[%s14 + $0x188] sm:$0xff]
    %v8331 = vld [vmem:[%s14 + $0x190] sm:$0xff]
    %v8332 = vld [vmem:[%s14 + $0x198] sm:$0xff]
    %v8333 = vld [vmem:[%s14 + $0x1a0] sm:$0xff]
    %v8334 = vld [vmem:[%s14 + $0x1a8] sm:$0xff]
    %v8335 = vld [vmem:[%s14 + $0x1b0] sm:$0xff]
    %v8336 = vld [vmem:[%s14 + $0x1b8] sm:$0xff]
    %v8337 = vld [vmem:[%s14 + $0x1c0] sm:$0xff]
    %v8338 = vld [vmem:[%s14 + $0x1c8] sm:$0xff]
    %v8339 = vld [vmem:[%s14 + $0x1d0] sm:$0xff]
    %v8340 = vld [vmem:[%s14 + $0x1d8] sm:$0xff]
    %v8341 = vld [vmem:[%s14 + $0x1e0] sm:$0xff]
    %v8342 = vld [vmem:[%s14 + $0x1e8] sm:$0xff]
    %v8343 = vld [vmem:[%s14 + $0x1f0] sm:$0xff]
    %v8344 = vld [vmem:[%s14 + $0x1f8] sm:$0xff]
    %v8345 = vld [vmem:[%s21] sm:$0x3]
    %v8347 = vperm.slane %v8345, 0
    %v8348 = vperm.slane %v8345, 1
    %v8415 = vunpack.c.l.b16 %v8281
    %v8416 = vunpack.c.h.b16 %v8281
    %v8417 = vunpack.c.l.b16 %v8282
    %v8418 = vunpack.c.h.b16 %v8282
    %v8419 = vunpack.c.l.b16 %v8283
    %v8420 = vunpack.c.h.b16 %v8283
    %v8421 = vunpack.c.l.b16 %v8284
    %v8422 = vunpack.c.h.b16 %v8284
    %v8423 = vunpack.c.l.b16 %v8285
    %v8424 = vunpack.c.h.b16 %v8285
    %v8425 = vunpack.c.l.b16 %v8286
    %v8426 = vunpack.c.h.b16 %v8286
    %v8427 = vunpack.c.l.b16 %v8287
    %v8428 = vunpack.c.h.b16 %v8287
    %v8429 = vunpack.c.l.b16 %v8288
    %v8430 = vunpack.c.h.b16 %v8288
    %v8431 = vunpack.c.l.b16 %v8289
    %v8432 = vunpack.c.h.b16 %v8289
    %v8433 = vunpack.c.l.b16 %v8290
    %v8434 = vunpack.c.h.b16 %v8290
    %v8435 = vunpack.c.l.b16 %v8291
    %v8436 = vunpack.c.h.b16 %v8291
    %v8437 = vunpack.c.l.b16 %v8292
    %v8438 = vunpack.c.h.b16 %v8292
    %v8439 = vunpack.c.l.b16 %v8293
    %v8440 = vunpack.c.h.b16 %v8293
    %v8441 = vunpack.c.l.b16 %v8294
    %v8442 = vunpack.c.h.b16 %v8294
    %v8443 = vunpack.c.l.b16 %v8295
    %v8444 = vunpack.c.h.b16 %v8295
    %v8445 = vunpack.c.l.b16 %v8296
    %v8446 = vunpack.c.h.b16 %v8296
    %v8447 = vunpack.c.l.b16 %v8297
    %v8448 = vunpack.c.h.b16 %v8297
    %v8449 = vunpack.c.l.b16 %v8298
    %v8450 = vunpack.c.h.b16 %v8298
    %v8451 = vunpack.c.l.b16 %v8299
    %v8452 = vunpack.c.h.b16 %v8299
    %v8453 = vunpack.c.l.b16 %v8300
    %v8454 = vunpack.c.h.b16 %v8300
    %v8455 = vunpack.c.l.b16 %v8301
    %v8456 = vunpack.c.h.b16 %v8301
    %v8457 = vunpack.c.l.b16 %v8302
    %v8458 = vunpack.c.h.b16 %v8302
    %v8459 = vunpack.c.l.b16 %v8303
    %v8460 = vunpack.c.h.b16 %v8303
    %v8461 = vunpack.c.l.b16 %v8304
    %v8462 = vunpack.c.h.b16 %v8304
    %v8463 = vunpack.c.l.b16 %v8305
    %v8464 = vunpack.c.h.b16 %v8305
    %v8465 = vunpack.c.l.b16 %v8306
    %v8466 = vunpack.c.h.b16 %v8306
    %v8467 = vunpack.c.l.b16 %v8307
    %v8468 = vunpack.c.h.b16 %v8307
    %v8469 = vunpack.c.l.b16 %v8308
    %v8470 = vunpack.c.h.b16 %v8308
    %v8471 = vunpack.c.l.b16 %v8309
    %v8472 = vunpack.c.h.b16 %v8309
    %v8473 = vunpack.c.l.b16 %v8310
    %v8474 = vunpack.c.h.b16 %v8310
    %v8475 = vunpack.c.l.b16 %v8311
    %v8476 = vunpack.c.h.b16 %v8311
    %v8477 = vunpack.c.l.b16 %v8312
    %v8478 = vunpack.c.h.b16 %v8312
    %v8479 = vunpack.c.l.b16 %v8313
    %v8480 = vunpack.c.h.b16 %v8313
    %v8481 = vunpack.c.l.b16 %v8314
    %v8482 = vunpack.c.h.b16 %v8314
    %v8483 = vunpack.c.l.b16 %v8315
    %v8484 = vunpack.c.h.b16 %v8315
    %v8485 = vunpack.c.l.b16 %v8316
    %v8486 = vunpack.c.h.b16 %v8316
    %v8487 = vunpack.c.l.b16 %v8317
    %v8488 = vunpack.c.h.b16 %v8317
    %v8489 = vunpack.c.l.b16 %v8318
    %v8490 = vunpack.c.h.b16 %v8318
    %v8491 = vunpack.c.l.b16 %v8319
    %v8492 = vunpack.c.h.b16 %v8319
    %v8493 = vunpack.c.l.b16 %v8320
    %v8494 = vunpack.c.h.b16 %v8320
    %v8495 = vunpack.c.l.b16 %v8321
    %v8496 = vunpack.c.h.b16 %v8321
    %v8497 = vunpack.c.l.b16 %v8322
    %v8498 = vunpack.c.h.b16 %v8322
    %v8499 = vunpack.c.l.b16 %v8323
    %v8500 = vunpack.c.h.b16 %v8323
    %v8501 = vunpack.c.l.b16 %v8324
    %v8502 = vunpack.c.h.b16 %v8324
    %v8503 = vunpack.c.l.b16 %v8325
    %v8504 = vunpack.c.h.b16 %v8325
    %v8505 = vunpack.c.l.b16 %v8326
    %v8506 = vunpack.c.h.b16 %v8326
    %v8507 = vunpack.c.l.b16 %v8327
    %v8508 = vunpack.c.h.b16 %v8327
    %v8509 = vunpack.c.l.b16 %v8328
    %v8510 = vunpack.c.h.b16 %v8328
    %v8511 = vunpack.c.l.b16 %v8329
    %v8512 = vunpack.c.h.b16 %v8329
    %v8513 = vunpack.c.l.b16 %v8330
    %v8514 = vunpack.c.h.b16 %v8330
    %v8515 = vunpack.c.l.b16 %v8331
    %v8516 = vunpack.c.h.b16 %v8331
    %v8517 = vunpack.c.l.b16 %v8332
    %v8518 = vunpack.c.h.b16 %v8332
    %v8519 = vunpack.c.l.b16 %v8333
    %v8520 = vunpack.c.h.b16 %v8333
    %v8521 = vunpack.c.l.b16 %v8334
    %v8522 = vunpack.c.h.b16 %v8334
    %v8523 = vunpack.c.l.b16 %v8335
    %v8524 = vunpack.c.h.b16 %v8335
    %v8525 = vunpack.c.l.b16 %v8336
    %v8526 = vunpack.c.h.b16 %v8336
    %v8527 = vunpack.c.l.b16 %v8337
    %v8528 = vunpack.c.h.b16 %v8337
    %v8529 = vunpack.c.l.b16 %v8338
    %v8530 = vunpack.c.h.b16 %v8338
    %v8531 = vunpack.c.l.b16 %v8339
    %v8532 = vunpack.c.h.b16 %v8339
    %v8533 = vunpack.c.l.b16 %v8340
    %v8534 = vunpack.c.h.b16 %v8340
    %v8535 = vunpack.c.l.b16 %v8341
    %v8536 = vunpack.c.h.b16 %v8341
    %v8537 = vunpack.c.l.b16 %v8342
    %v8538 = vunpack.c.h.b16 %v8342
    %v8539 = vunpack.c.l.b16 %v8343
    %v8540 = vunpack.c.h.b16 %v8343
    %v8541 = vunpack.c.l.b16 %v8344
    %v8542 = vunpack.c.h.b16 %v8344
    %v8543 = vpack.c.b16 %v8417, %v8415
    %v8544 = vpack.c.b16 %v8418, %v8416
    %v8545 = vpack.c.b16 %v8421, %v8419
    %v8546 = vpack.c.b16 %v8422, %v8420
    %v8547 = vpack.c.b16 %v8425, %v8423
    %v8548 = vpack.c.b16 %v8426, %v8424
    %v8549 = vpack.c.b16 %v8429, %v8427
    %v8550 = vpack.c.b16 %v8430, %v8428
    %v8551 = vpack.c.b16 %v8433, %v8431
    %v8552 = vpack.c.b16 %v8434, %v8432
    %v8553 = vpack.c.b16 %v8437, %v8435
    %v8554 = vpack.c.b16 %v8438, %v8436
    %v8555 = vpack.c.b16 %v8441, %v8439
    %v8556 = vpack.c.b16 %v8442, %v8440
    %v8557 = vpack.c.b16 %v8445, %v8443
    %v8558 = vpack.c.b16 %v8446, %v8444
    %v8559 = vpack.c.b16 %v8449, %v8447
    %v8560 = vpack.c.b16 %v8450, %v8448
    %v8561 = vpack.c.b16 %v8453, %v8451
    %v8562 = vpack.c.b16 %v8454, %v8452
    %v8563 = vpack.c.b16 %v8457, %v8455
    %v8564 = vpack.c.b16 %v8458, %v8456
    %v8565 = vpack.c.b16 %v8461, %v8459
    %v8566 = vpack.c.b16 %v8462, %v8460
    %v8567 = vpack.c.b16 %v8465, %v8463
    %v8568 = vpack.c.b16 %v8466, %v8464
    %v8569 = vpack.c.b16 %v8469, %v8467
    %v8570 = vpack.c.b16 %v8470, %v8468
    %v8571 = vpack.c.b16 %v8473, %v8471
    %v8572 = vpack.c.b16 %v8474, %v8472
    %v8573 = vpack.c.b16 %v8477, %v8475
    %v8574 = vpack.c.b16 %v8478, %v8476
    %v8575 = vpack.c.b16 %v8481, %v8479
    %v8576 = vpack.c.b16 %v8482, %v8480
    %v8577 = vpack.c.b16 %v8485, %v8483
    %v8578 = vpack.c.b16 %v8486, %v8484
    %v8579 = vpack.c.b16 %v8489, %v8487
    %v8580 = vpack.c.b16 %v8490, %v8488
    %v8581 = vpack.c.b16 %v8493, %v8491
    %v8582 = vpack.c.b16 %v8494, %v8492
    %v8583 = vpack.c.b16 %v8497, %v8495
    %v8584 = vpack.c.b16 %v8498, %v8496
    %v8585 = vpack.c.b16 %v8501, %v8499
    %v8586 = vpack.c.b16 %v8502, %v8500
    %v8587 = vpack.c.b16 %v8505, %v8503
    %v8588 = vpack.c.b16 %v8506, %v8504
    %v8589 = vpack.c.b16 %v8509, %v8507
    %v8590 = vpack.c.b16 %v8510, %v8508
    %v8591 = vpack.c.b16 %v8513, %v8511
    %v8592 = vpack.c.b16 %v8514, %v8512
    %v8593 = vpack.c.b16 %v8517, %v8515
    %v8594 = vpack.c.b16 %v8518, %v8516
    %v8595 = vpack.c.b16 %v8521, %v8519
    %v8596 = vpack.c.b16 %v8522, %v8520
    %v8597 = vpack.c.b16 %v8525, %v8523
    %v8598 = vpack.c.b16 %v8526, %v8524
    %v8599 = vpack.c.b16 %v8529, %v8527
    %v8600 = vpack.c.b16 %v8530, %v8528
    %v8601 = vpack.c.b16 %v8533, %v8531
    %v8602 = vpack.c.b16 %v8534, %v8532
    %v8603 = vpack.c.b16 %v8537, %v8535
    %v8604 = vpack.c.b16 %v8538, %v8536
    %v8605 = vpack.c.b16 %v8541, %v8539
    %v8606 = vpack.c.b16 %v8542, %v8540
    %8671 = vmatpush.bf16.msra.mxu0 %v8557
    %8672 = vmatpush.bf16.msra.mxu0 %v8555
    %8673 = vmatpush.bf16.msra.mxu0 %v8553
    %8674 = vmatpush.bf16.msra.mxu0 %v8551
    %8675 = vmatpush.bf16.msra.mxu0 %v8549
    %8676 = vmatpush.bf16.msra.mxu0 %v8547
    %8677 = vmatpush.bf16.msra.mxu0 %v8545
    %8678 = vmatpush.bf16.msra.mxu0 %v8543
    %8679 = vmatmul.bf16.gmra.mxu0 %v8277
    %v8680 = vpop.f32.mrf.mxu0
    %v8681 = vadd.f32 %v8347, %v8680
    %v8682 = vpop.f32.mrf.mxu0
    %8683 = vdwg.mxu0
    %8684 = vmatpush.bf16.msra.mxu0 %v8573
    %8685 = vmatpush.bf16.msra.mxu0 %v8571
    %8686 = vmatpush.bf16.msra.mxu0 %v8569
    %8687 = vmatpush.bf16.msra.mxu0 %v8567
    %8688 = vmatpush.bf16.msra.mxu0 %v8565
    %8689 = vmatpush.bf16.msra.mxu0 %v8563
    %8690 = vmatpush.bf16.msra.mxu0 %v8561
    %8691 = vmatpush.bf16.msra.mxu0 %v8559
    %8692 = vmatmul.bf16.gmra.mxu0 %v8278
    %v8693 = vpop.f32.mrf.mxu0
    %v8694 = vadd.f32 %v8681, %v8693
    %v8695 = vpop.f32.mrf.mxu0
    %8696 = vdwg.mxu0
    %8697 = vmatpush.bf16.msra.mxu0 %v8589
    %8698 = vmatpush.bf16.msra.mxu0 %v8587
    %8699 = vmatpush.bf16.msra.mxu0 %v8585
    %8700 = vmatpush.bf16.msra.mxu0 %v8583
    %8701 = vmatpush.bf16.msra.mxu0 %v8581
    %8702 = vmatpush.bf16.msra.mxu0 %v8579
    %8703 = vmatpush.bf16.msra.mxu0 %v8577
    %8704 = vmatpush.bf16.msra.mxu0 %v8575
    %8705 = vmatmul.bf16.gmra.mxu0 %v8279
    %v8706 = vpop.f32.mrf.mxu0
    %v8707 = vadd.f32 %v8694, %v8706
    %v8708 = vpop.f32.mrf.mxu0
    %8709 = vdwg.mxu0
    %8710 = vmatpush.bf16.msra.mxu0 %v8605
    %8711 = vmatpush.bf16.msra.mxu0 %v8603
    %8712 = vmatpush.bf16.msra.mxu0 %v8601
    %8713 = vmatpush.bf16.msra.mxu0 %v8599
    %8714 = vmatpush.bf16.msra.mxu0 %v8597
    %8715 = vmatpush.bf16.msra.mxu0 %v8595
    %8716 = vmatpush.bf16.msra.mxu0 %v8593
    %8717 = vmatpush.bf16.msra.mxu0 %v8591
    %8718 = vmatmul.bf16.gmra.mxu0 %v8280
    %v8719 = vpop.f32.mrf.mxu0
    %v8720 = vadd.f32 %v8707, %v8719
    %v8721 = vpop.f32.mrf.mxu0
    %8722 = vdwg.mxu0
    %8723 = vmatpush.bf16.msra.mxu0 %v8558
    %8724 = vmatpush.bf16.msra.mxu0 %v8556
    %8725 = vmatpush.bf16.msra.mxu0 %v8554
    %8726 = vmatpush.bf16.msra.mxu0 %v8552
    %8727 = vmatpush.bf16.msra.mxu0 %v8550
    %8728 = vmatpush.bf16.msra.mxu0 %v8548
    %8729 = vmatpush.bf16.msra.mxu0 %v8546
    %8730 = vmatpush.bf16.msra.mxu0 %v8544
    %8731 = vmatmul.bf16.gmra.mxu0 %v8277
    %v8732 = vpop.f32.mrf.mxu0
    %v8733 = vadd.f32 %v8348, %v8732
    %v8734 = vpop.f32.mrf.mxu0
    %8735 = vdwg.mxu0
    %8736 = vmatpush.bf16.msra.mxu0 %v8574
    %8737 = vmatpush.bf16.msra.mxu0 %v8572
    %8738 = vmatpush.bf16.msra.mxu0 %v8570
    %8739 = vmatpush.bf16.msra.mxu0 %v8568
    %8740 = vmatpush.bf16.msra.mxu0 %v8566
    %8741 = vmatpush.bf16.msra.mxu0 %v8564
    %8742 = vmatpush.bf16.msra.mxu0 %v8562
    %8743 = vmatpush.bf16.msra.mxu0 %v8560
    %8744 = vmatmul.bf16.gmra.mxu0 %v8278
    %v8745 = vpop.f32.mrf.mxu0
    %v8746 = vadd.f32 %v8733, %v8745
    %v8747 = vpop.f32.mrf.mxu0
    %8748 = vdwg.mxu0
    %8749 = vmatpush.bf16.msra.mxu0 %v8590
    %8750 = vmatpush.bf16.msra.mxu0 %v8588
    %8751 = vmatpush.bf16.msra.mxu0 %v8586
    %8752 = vmatpush.bf16.msra.mxu0 %v8584
    %8753 = vmatpush.bf16.msra.mxu0 %v8582
    %8754 = vmatpush.bf16.msra.mxu0 %v8580
    %8755 = vmatpush.bf16.msra.mxu0 %v8578
    %8756 = vmatpush.bf16.msra.mxu0 %v8576
    %8757 = vmatmul.bf16.gmra.mxu0 %v8279
    %v8758 = vpop.f32.mrf.mxu0
    %v8759 = vadd.f32 %v8746, %v8758
    %v8760 = vpop.f32.mrf.mxu0
    %8761 = vdwg.mxu0
    %8762 = vmatpush.bf16.msra.mxu0 %v8606
    %8763 = vmatpush.bf16.msra.mxu0 %v8604
    %8764 = vmatpush.bf16.msra.mxu0 %v8602
    %8765 = vmatpush.bf16.msra.mxu0 %v8600
    %8766 = vmatpush.bf16.msra.mxu0 %v8598
    %8767 = vmatpush.bf16.msra.mxu0 %v8596
    %8768 = vmatpush.bf16.msra.mxu0 %v8594
    %8769 = vmatpush.bf16.msra.mxu0 %v8592
    %8770 = vmatmul.bf16.gmra.mxu0 %v8280
    %v8771 = vpop.f32.mrf.mxu0
    %v8772 = vadd.f32 %v8759, %v8771
    %v8773 = vpop.f32.mrf.mxu0
    %8774 = vdwg.mxu0
    %s8775 = sld [smem:[#allocation7 + $0x7]]
    %vm8776 = vcmp.ge.f32.partialorder %v8720, 0.0
    %vm8777 = vcmp.ge.f32.partialorder %v8772, 0.0
    %v8778 = vstv %s8775
    %v8779 = vmul.f32 %v8778, %v8720
    %v8780 = vmul.f32 %v8778, %v8772
    %v8781 = vsel %vm8776, %v8720, %v8779
    %v8782 = vsel %vm8777, %v8772, %v8780
    %v8783 = vpack.c.bf16 %v8781, %v8781
    %v8784 = vpack.c.bf16 %v8782, %v8782
    %v8785 = vld [vmem:[%s15] sm:$0xf]
    %v8786 = vld [vmem:[%s15 + $0x4] sm:$0xf]
    %v8787 = vld [vmem:[%s15 + $0x8] sm:$0xf]
    %v8788 = vld [vmem:[%s15 + $0xc] sm:$0xf]
    %v8789 = vld [vmem:[%s15 + $0x10] sm:$0xf]
    %v8790 = vld [vmem:[%s15 + $0x14] sm:$0xf]
    %v8791 = vld [vmem:[%s15 + $0x18] sm:$0xf]
    %v8792 = vld [vmem:[%s15 + $0x1c] sm:$0xf]
    %v8793 = vld [vmem:[%s15 + $0x20] sm:$0xf]
    %v8794 = vld [vmem:[%s15 + $0x24] sm:$0xf]
    %v8795 = vld [vmem:[%s15 + $0x28] sm:$0xf]
    %v8796 = vld [vmem:[%s15 + $0x2c] sm:$0xf]
    %v8797 = vld [vmem:[%s15 + $0x30] sm:$0xf]
    %v8798 = vld [vmem:[%s15 + $0x34] sm:$0xf]
    %v8799 = vld [vmem:[%s15 + $0x38] sm:$0xf]
    %v8800 = vld [vmem:[%s15 + $0x3c] sm:$0xf]
    %v8801 = vld [vmem:[%s15 + $0x40] sm:$0xf]
    %v8802 = vld [vmem:[%s15 + $0x44] sm:$0xf]
    %v8803 = vld [vmem:[%s15 + $0x48] sm:$0xf]
    %v8804 = vld [vmem:[%s15 + $0x4c] sm:$0xf]
    %v8805 = vld [vmem:[%s15 + $0x50] sm:$0xf]
    %v8806 = vld [vmem:[%s15 + $0x54] sm:$0xf]
    %v8807 = vld [vmem:[%s15 + $0x58] sm:$0xf]
    %v8808 = vld [vmem:[%s15 + $0x5c] sm:$0xf]
    %v8809 = vld [vmem:[%s15 + $0x60] sm:$0xf]
    %v8810 = vld [vmem:[%s15 + $0x64] sm:$0xf]
    %v8811 = vld [vmem:[%s15 + $0x68] sm:$0xf]
    %v8812 = vld [vmem:[%s15 + $0x6c] sm:$0xf]
    %v8813 = vld [vmem:[%s15 + $0x70] sm:$0xf]
    %v8814 = vld [vmem:[%s15 + $0x74] sm:$0xf]
    %v8815 = vld [vmem:[%s15 + $0x78] sm:$0xf]
    %v8816 = vld [vmem:[%s15 + $0x7c] sm:$0xf]
    %v8817 = vld [vmem:[%s22] sm:$0x1]
    %v8819 = vperm.slane %v8817, 0
    %v8853 = vunpack.c.l.b16 %v8785
    %v8854 = vunpack.c.l.b16 %v8786
    %v8855 = vunpack.c.l.b16 %v8787
    %v8856 = vunpack.c.l.b16 %v8788
    %v8857 = vunpack.c.l.b16 %v8789
    %v8858 = vunpack.c.l.b16 %v8790
    %v8859 = vunpack.c.l.b16 %v8791
    %v8860 = vunpack.c.l.b16 %v8792
    %v8861 = vunpack.c.l.b16 %v8793
    %v8862 = vunpack.c.l.b16 %v8794
    %v8863 = vunpack.c.l.b16 %v8795
    %v8864 = vunpack.c.l.b16 %v8796
    %v8865 = vunpack.c.l.b16 %v8797
    %v8866 = vunpack.c.l.b16 %v8798
    %v8867 = vunpack.c.l.b16 %v8799
    %v8868 = vunpack.c.l.b16 %v8800
    %v8869 = vunpack.c.l.b16 %v8801
    %v8870 = vunpack.c.l.b16 %v8802
    %v8871 = vunpack.c.l.b16 %v8803
    %v8872 = vunpack.c.l.b16 %v8804
    %v8873 = vunpack.c.l.b16 %v8805
    %v8874 = vunpack.c.l.b16 %v8806
    %v8875 = vunpack.c.l.b16 %v8807
    %v8876 = vunpack.c.l.b16 %v8808
    %v8877 = vunpack.c.l.b16 %v8809
    %v8878 = vunpack.c.l.b16 %v8810
    %v8879 = vunpack.c.l.b16 %v8811
    %v8880 = vunpack.c.l.b16 %v8812
    %v8881 = vunpack.c.l.b16 %v8813
    %v8882 = vunpack.c.l.b16 %v8814
    %v8883 = vunpack.c.l.b16 %v8815
    %v8884 = vunpack.c.l.b16 %v8816
    %v8885 = vpack.c.b16 %v8854, %v8853
    %v8886 = vpack.c.b16 %v8856, %v8855
    %v8887 = vpack.c.b16 %v8858, %v8857
    %v8888 = vpack.c.b16 %v8860, %v8859
    %v8889 = vpack.c.b16 %v8862, %v8861
    %v8890 = vpack.c.b16 %v8864, %v8863
    %v8891 = vpack.c.b16 %v8866, %v8865
    %v8892 = vpack.c.b16 %v8868, %v8867
    %v8893 = vpack.c.b16 %v8870, %v8869
    %v8894 = vpack.c.b16 %v8872, %v8871
    %v8895 = vpack.c.b16 %v8874, %v8873
    %v8896 = vpack.c.b16 %v8876, %v8875
    %v8897 = vpack.c.b16 %v8878, %v8877
    %v8898 = vpack.c.b16 %v8880, %v8879
    %v8899 = vpack.c.b16 %v8882, %v8881
    %v8900 = vpack.c.b16 %v8884, %v8883
    %8917 = vmatpush.bf16.msra.mxu0 %v8892
    %8918 = vmatpush.bf16.msra.mxu0 %v8891
    %8919 = vmatpush.bf16.msra.mxu0 %v8890
    %8920 = vmatpush.bf16.msra.mxu0 %v8889
    %8921 = vmatpush.bf16.msra.mxu0 %v8888
    %8922 = vmatpush.bf16.msra.mxu0 %v8887
    %8923 = vmatpush.bf16.msra.mxu0 %v8886
    %8924 = vmatpush.bf16.msra.mxu0 %v8885
    %8925 = vmatmul.bf16.gmra.mxu0 %v8783
    %v8926 = vpop.f32.mrf.mxu0
    %v8927 = vadd.f32 %v8819, %v8926
    %v8928 = vpop.f32.mrf.mxu0
    %8929 = vdwg.mxu0
    %8930 = vmatpush.bf16.msra.mxu0 %v8900
    %8931 = vmatpush.bf16.msra.mxu0 %v8899
    %8932 = vmatpush.bf16.msra.mxu0 %v8898
    %8933 = vmatpush.bf16.msra.mxu0 %v8897
    %8934 = vmatpush.bf16.msra.mxu0 %v8896
    %8935 = vmatpush.bf16.msra.mxu0 %v8895
    %8936 = vmatpush.bf16.msra.mxu0 %v8894
    %8937 = vmatpush.bf16.msra.mxu0 %v8893
    %8938 = vmatmul.bf16.gmra.mxu0 %v8784
    %v8939 = vpop.f32.mrf.mxu0
    %v8940 = vadd.f32 %v8927, %v8939
    %v8941 = vpop.f32.mrf.mxu0
    %8942 = vdwg.mxu0
    %s8943 = sld [smem:[#allocation7 + $0x8]]
    %vm8944 = vcmp.ge.f32.partialorder %v8940, 0.0
    %v8945 = vstv %s8943
    %v8946 = vmul.f32 %v8945, %v8940
    %v8947 = vsel %vm8944, %v8940, %v8946
    %v8948 = vpack.c.bf16 %v8947, %v8947
    %v8949 = vld [vmem:[%s16] sm:$0xf]
    %v8950 = vld [vmem:[%s16 + $0x4] sm:$0xf]
    %v8951 = vld [vmem:[%s16 + $0x8] sm:$0xf]
    %v8952 = vld [vmem:[%s16 + $0xc] sm:$0xf]
    %v8953 = vld [vmem:[%s16 + $0x10] sm:$0xf]
    %v8954 = vld [vmem:[%s16 + $0x14] sm:$0xf]
    %v8955 = vld [vmem:[%s16 + $0x18] sm:$0xf]
    %v8956 = vld [vmem:[%s16 + $0x1c] sm:$0xf]
    %v8957 = vld [vmem:[%s16 + $0x20] sm:$0xf]
    %v8958 = vld [vmem:[%s16 + $0x24] sm:$0xf]
    %v8959 = vld [vmem:[%s16 + $0x28] sm:$0xf]
    %v8960 = vld [vmem:[%s16 + $0x2c] sm:$0xf]
    %v8961 = vld [vmem:[%s16 + $0x30] sm:$0xf]
    %v8962 = vld [vmem:[%s16 + $0x34] sm:$0xf]
    %v8963 = vld [vmem:[%s16 + $0x38] sm:$0xf]
    %v8964 = vld [vmem:[%s16 + $0x3c] sm:$0xf]
    %v8965 = vld [vmem:[%s23] sm:$0x1]
    %v8967 = vperm.slane %v8965, 0
    %v8985 = vunpack.c.l.b16 %v8949
    %v8986 = vunpack.c.l.b16 %v8950
    %v8987 = vunpack.c.l.b16 %v8951
    %v8988 = vunpack.c.l.b16 %v8952
    %v8989 = vunpack.c.l.b16 %v8953
    %v8990 = vunpack.c.l.b16 %v8954
    %v8991 = vunpack.c.l.b16 %v8955
    %v8992 = vunpack.c.l.b16 %v8956
    %v8993 = vunpack.c.l.b16 %v8957
    %v8994 = vunpack.c.l.b16 %v8958
    %v8995 = vunpack.c.l.b16 %v8959
    %v8996 = vunpack.c.l.b16 %v8960
    %v8997 = vunpack.c.l.b16 %v8961
    %v8998 = vunpack.c.l.b16 %v8962
    %v8999 = vunpack.c.l.b16 %v8963
    %v9000 = vunpack.c.l.b16 %v8964
    %v9001 = vpack.c.b16 %v8986, %v8985
    %v9002 = vpack.c.b16 %v8988, %v8987
    %v9003 = vpack.c.b16 %v8990, %v8989
    %v9004 = vpack.c.b16 %v8992, %v8991
    %v9005 = vpack.c.b16 %v8994, %v8993
    %v9006 = vpack.c.b16 %v8996, %v8995
    %v9007 = vpack.c.b16 %v8998, %v8997
    %v9008 = vpack.c.b16 %v9000, %v8999
    %9017 = vmatpush.bf16.msra.mxu0 %v9008
    %9018 = vmatpush.bf16.msra.mxu0 %v9007
    %9019 = vmatpush.bf16.msra.mxu0 %v9006
    %9020 = vmatpush.bf16.msra.mxu0 %v9005
    %9021 = vmatpush.bf16.msra.mxu0 %v9004
    %9022 = vmatpush.bf16.msra.mxu0 %v9003
    %9023 = vmatpush.bf16.msra.mxu0 %v9002
    %9024 = vmatpush.bf16.msra.mxu0 %v9001
    %9025 = vmatmul.bf16.gmra.mxu0 %v8948
    %v9026 = vpop.f32.mrf.mxu0
    %v9027 = vadd.f32 %v8967, %v9026
    %v9028 = vpop.f32.mrf.mxu0
    %9029 = vdwg.mxu0
    %9030 = vst [vmem:[#allocation10] sm:$0x3] %v9027
    // Predicated region
    $region106: #{forward.1} parent=1 // pred_check
      _
    $region107: #{forward.1} parent=1 // pred_check_branch
      %9032 = sbr.rel (0) target = $region109
    $region108: #{forward.1} parent=1 // pred_region
      %9034 = vsyncadd [#allocation8], 0
      %s9036 = sshll.u32 [#allocation10], 4
      %s9037 = int_to_ptr.vmem [resolvable:$true] %s9036
      %s9038 = sshll.u32 %s25, 4
      %s9039 = int_to_ptr.hbm [resolvable:$true] %s9038
      %9041 = dma.vmem_to_hbm [thread:$0]  %s9037, 32, %s9039, [#allocation8]
    $region109: #{forward.1} parent=1 // pred_fallthru
      _
    // Predicated region
    $region110: #{forward.1} parent=1 // pred_check
      _
    $region111: #{forward.1} parent=1 // pred_check_branch
      %9043 = sbr.rel (0) target = $region113
    $region112: #{forward.1} parent=1 // pred_region
      %9045 = dma.done [#allocation8], 32
    $region113: #{forward.1} parent=1 // pred_fallthru
      _
    %9046 = vsyncpa [#allocation8], 1
    %9047 = vsyncpa [#allocation9], 1

</llo_original>
